<compile_context>
chip_gen: v7x
topology: tpu7x:2x2x1
jax: 0.10.0
libtpu: 0.0.40
codegen_flags: <defaults>
</compile_context>

<pallas_src>
import functools

import jax
import jax.numpy as jnp
from jax import lax
from jax.experimental import pallas as pl
from jax.experimental.pallas import tpu as pltpu

_VMEM_LIMIT = 48 * 1024 * 1024  # > 32 MiB scoped default, < v7x 64 MiB physical


def _round_up(n, m):
    return ((n + m - 1) // m) * m


# ----------------------------------------------------------------------------
# Kernel 1: preblock conv (taps folded into one matmul) -> ReLU -> folded BN.
# Input mel is zero-padded in T by the wrapper, so the "same"-conv semantics at
# the true-T boundary are exact without any in-kernel masking here.
# ----------------------------------------------------------------------------
def _pre_conv_kernel(x_ref, w_ref, b_ref, s_ref, t_ref, o_ref, *, K, pad, T_out):
    x = x_ref[...]                                      # (C_in, T) bf16
    c_in = x.shape[0]
    if pad > 0:
        z = jnp.zeros((c_in, pad), x.dtype)
        xp = jnp.concatenate([z, x, z], axis=1)         # zero-pad in VMEM, bf16
    else:
        xp = x
    taps = [xp[:, k:k + T_out] for k in range(K)]       # dilation = 1
    rhs = taps[0] if K == 1 else jnp.concatenate(taps, axis=0)   # (K*C_in, T) bf16
    acc = jnp.dot(w_ref[...], rhs, preferred_element_type=jnp.float32)
    acc = jnp.maximum(acc + b_ref[...], 0.0)            # Conv -> ReLU
    o_ref[...] = (acc * s_ref[...] + t_ref[...]).astype(o_ref.dtype)   # -> BN affine


def pre_conv(x, w_fold, b, bn_s, bn_t, *, K):
    B, C_in, T = x.shape
    C = w_fold.shape[0]
    pad = K // 2
    T_out = T + 2 * pad - (K - 1)
    kernel = functools.partial(_pre_conv_kernel, K=K, pad=pad, T_out=T_out)
    return pl.pallas_call(
        kernel,
        out_shape=jax.ShapeDtypeStruct((B, C, T_out), jnp.bfloat16),
        grid=(B,),
        in_specs=[
            pl.BlockSpec((None, C_in, T), lambda bi: (bi, 0, 0)),
            pl.BlockSpec((C, K * C_in), lambda bi: (0, 0)),
            pl.BlockSpec((C, 1), lambda bi: (0, 0)),
            pl.BlockSpec((C, 1), lambda bi: (0, 0)),
            pl.BlockSpec((C, 1), lambda bi: (0, 0)),
        ],
        out_specs=pl.BlockSpec((None, C, T_out), lambda bi: (bi, 0, 0)),
        compiler_params=pltpu.CompilerParams(
            dimension_semantics=("parallel",), vmem_limit_bytes=_VMEM_LIMIT),
    )(x, w_fold, b, bn_s, bn_t)


# ----------------------------------------------------------------------------
# Kernel 2: fully fused SERes2Block (pre 1x1 -> Res2 dilated convs -> post 1x1 ->
# squeeze-excitation -> residual), one batch element per grid step.
# ----------------------------------------------------------------------------
def _se_res2_kernel(x_ref, prew_ref, preb_ref, pres_ref, pret_ref,
                    resw_ref, resb_ref, ress_ref, rest_ref,
                    postw_ref, postb_ref, posts_ref, postt_ref,
                    sew1_ref, seb1_ref, sew2_ref, seb2_ref,
                    o_ref, *, scale, K, dilation, t_true):
    x = x_ref[...]                                      # (C, T) bf16
    C, T = x.shape
    width = C // scale
    pad = (K - 1) * dilation // 2                       # "same" conv (K odd)

    need_mask = t_true < T                              # static
    if need_mask:
        col = lax.broadcasted_iota(jnp.int32, (1, T), 1)
        valid = col < t_true                            # (1, T) bool

    # preblock: Conv1x1 -> ReLU -> BN affine (full-depth MXU, f32 epilogue)
    h = jnp.dot(prew_ref[...], x, preferred_element_type=jnp.float32)
    h = jnp.maximum(h + preb_ref[...], 0.0) * pres_ref[...] + pret_ref[...]

    # Res2Block: channel chunks; first chunk passes straight through.
    # Chunk outputs are kept bf16 (only consumed by the bf16 postblock matmul);
    # the residual chain `base` stays f32.
    outs = [h[0:width, :].astype(jnp.bfloat16)]
    base = jnp.zeros((width, T), jnp.float32)
    for i in range(scale - 1):
        xi = h[(i + 1) * width:(i + 2) * width, :] + base
        if need_mask:
            # Zero padded columns so taps past the true T read zeros (reference
            # zero "same"-padding semantics at the sequence end).
            xi = jnp.where(valid, xi, 0.0)
        xi_bf = xi.astype(jnp.bfloat16)                 # bf16 tap stacking
        if pad > 0:
            z = jnp.zeros((width, pad), jnp.bfloat16)
            xi_p = jnp.concatenate([z, xi_bf, z], axis=1)
        else:
            xi_p = xi_bf
        taps = [xi_p[:, k * dilation:k * dilation + T] for k in range(K)]
        rhs = taps[0] if K == 1 else jnp.concatenate(taps, axis=0)   # (K*width, T)
        conv = jnp.dot(resw_ref[i], rhs, preferred_element_type=jnp.float32)
        base = jnp.maximum(conv + resb_ref[i], 0.0) * ress_ref[i] + rest_ref[i]
        outs.append(base.astype(jnp.bfloat16))

    # postblock Conv1x1: single full-depth (C,C)x(C,T) matmul on the channel concat
    # (sublane-axis concat of bf16 chunks), instead of depth-`width` partial dots.
    h2 = jnp.concatenate(outs, axis=0)                  # (C, T) bf16
    acc = jnp.dot(postw_ref[...], h2, preferred_element_type=jnp.float32)
    h3 = jnp.maximum(acc + postb_ref[...], 0.0) * posts_ref[...] + postt_ref[...]

    # Squeeze-Excitation (mean over TRUE T -> 2 linears -> sigmoid) + residual.
    h3m = jnp.where(valid, h3, 0.0) if need_mask else h3
    m = jnp.sum(h3m, axis=1, keepdims=True) * (1.0 / t_true)       # (C, 1)
    hh = jnp.maximum(
        jnp.dot(sew1_ref[...], m, preferred_element_type=jnp.float32)
        + seb1_ref[...], 0.0)
    sc = jax.nn.sigmoid(
        jnp.dot(sew2_ref[...], hh, preferred_element_type=jnp.float32)
        + seb2_ref[...])
    o_ref[...] = (h3 * sc + x.astype(jnp.float32)).astype(o_ref.dtype)


def se_res2_block(x, blk, *, scale, K, dilation, t_true):
    B, C, T = x.shape
    width = C // scale
    S1 = scale - 1
    kernel = functools.partial(_se_res2_kernel, scale=scale, K=K,
                               dilation=dilation, t_true=t_true)

    def full(shape):
        return pl.BlockSpec(shape, lambda bi, _n=len(shape): (0,) * _n)

    return pl.pallas_call(
        kernel,
        out_shape=jax.ShapeDtypeStruct((B, C, T), jnp.bfloat16),
        grid=(B,),
        in_specs=[
            pl.BlockSpec((None, C, T), lambda bi: (bi, 0, 0)),
            full((C, C)), full((C, 1)), full((C, 1)), full((C, 1)),
            full((S1, width, K * width)),
            full((S1, width, 1)), full((S1, width, 1)), full((S1, width, 1)),
            full((C, C)), full((C, 1)), full((C, 1)), full((C, 1)),
            full(blk["se_w1"].shape), full(blk["se_b1"].shape),
            full(blk["se_w2"].shape), full(blk["se_b2"].shape),
        ],
        out_specs=pl.BlockSpec((None, C, T), lambda bi: (bi, 0, 0)),
        compiler_params=pltpu.CompilerParams(
            dimension_semantics=("parallel",), vmem_limit_bytes=_VMEM_LIMIT),
    )(x, blk["pre_w"], blk["pre_b"], blk["pre_s"], blk["pre_t"],
      blk["res_w"], blk["res_b"], blk["res_s"], blk["res_t"],
      blk["post_w"], blk["post_b"], blk["post_s"], blk["post_t"],
      blk["se_w1"], blk["se_b1"], blk["se_w2"], blk["se_b2"])


# ----------------------------------------------------------------------------
# Kernel 3: fused mfa 1x1-conv (+ReLU) over the three block outputs (partial dots
# of full depth C, no concat) + attentive statistics pooling, channel-major.
# Softmax logits of padded time columns are masked to -1e30.
# ----------------------------------------------------------------------------
def _mfa_asp_kernel(*refs, n_blocks, t_true):
    x_refs = refs[:n_blocks]
    wm_ref, mb_ref, w1_ref, b1_ref, w2_ref, b2_ref, o_ref = refs[n_blocks:]
    H = wm_ref.shape[1]
    T = x_refs[0].shape[-1]

    acc = jnp.zeros((H, T), jnp.float32)
    for j in range(n_blocks):
        acc = acc + jnp.dot(wm_ref[j], x_refs[j][...],
                            preferred_element_type=jnp.float32)
    mfa = jnp.maximum(acc + mb_ref[...], 0.0)           # Conv1x1 -> ReLU (f32)
    mfa_bf = mfa.astype(jnp.bfloat16)

    # attention: Conv1x1 -> Tanh -> Conv1x1 -> Softmax over time (lane axis)
    a = jnp.tanh(jnp.dot(w1_ref[...], mfa_bf,
                         preferred_element_type=jnp.float32) + b1_ref[...])
    logits = jnp.dot(w2_ref[...], a.astype(jnp.bfloat16),
                     preferred_element_type=jnp.float32) + b2_ref[...]
    if t_true < T:
        col = lax.broadcasted_iota(jnp.int32, (1, T), 1)
        logits = jnp.where(col < t_true, logits, -1e30)  # padded cols -> weight 0
    w = jax.nn.softmax(logits, axis=-1)                 # (H, T)

    wm_x = w * mfa
    mean = jnp.sum(wm_x, axis=-1, keepdims=True)        # (H, 1)
    msq = jnp.sum(wm_x * mfa, axis=-1, keepdims=True)
    var = jnp.maximum(msq - mean * mean, 0.0)           # guard cancellation
    std = jnp.sqrt(var + 1e-7)
    o_ref[0:H, :] = mean
    o_ref[H:2 * H, :] = std


def mfa_asp(xs, wm, mb, w1, b1, w2, b2, *, t_true):
    n_blocks = len(xs)
    B, C, T = xs[0].shape
    H = wm.shape[1]
    kernel = functools.partial(_mfa_asp_kernel, n_blocks=n_blocks, t_true=t_true)

    def full(a):
        return pl.BlockSpec(a.shape, lambda bi, _n=a.ndim: (0,) * _n)

    x_specs = [pl.BlockSpec((None, C, T), lambda bi: (bi, 0, 0))
               for _ in range(n_blocks)]
    stats3 = pl.pallas_call(
        kernel,
        out_shape=jax.ShapeDtypeStruct((B, 2 * H, 1), jnp.float32),
        grid=(B,),
        in_specs=x_specs + [full(wm), full(mb), full(w1), full(b1), full(w2), full(b2)],
        out_specs=pl.BlockSpec((None, 2 * H, 1), lambda bi: (bi, 0, 0)),
        compiler_params=pltpu.CompilerParams(
            dimension_semantics=("parallel",), vmem_limit_bytes=_VMEM_LIMIT),
    )(*xs, wm, mb, w1, b1, w2, b2)
    # (B, 2H, 1) -> (B, 2H): trivial XLA squeeze; the head then consumes a
    # lane-dense (B, 2H) row.
    return stats3[:, :, 0]


# ----------------------------------------------------------------------------
# Kernel 4: head — BN(2H) -> Linear -> BN -> L2-normalize -> fc -> BN (class_emb),
# then ReLU -> fc(num_speakers) -> BN (speaker_emb).  Whole batch in one block;
# class/speaker lane dims padded to multiples of 128 (unmasked stores).
# ----------------------------------------------------------------------------
def _head_kernel(stats_ref, bn1s_ref, bn1t_ref, wl_ref, bl_ref, bn2s_ref, bn2t_ref,
                 wf_ref, bf_ref, bn3s_ref, bn3t_ref, wf2_ref, bf2_ref,
                 bn4s_ref, bn4t_ref, cls_ref, spk_ref):
    s = stats_ref[...] * bn1s_ref[...] + bn1t_ref[...]
    emb = jnp.dot(s, wl_ref[...], preferred_element_type=jnp.float32) + bl_ref[...]
    emb = emb * bn2s_ref[...] + bn2t_ref[...]
    nrm = jnp.sqrt(jnp.sum(emb * emb, axis=-1, keepdims=True))
    g = emb / jnp.maximum(nrm, 1e-12)                   # F.normalize(p=2, dim=-1)
    cls = jnp.dot(g, wf_ref[...], preferred_element_type=jnp.float32) + bf_ref[...]
    cls = cls * bn3s_ref[...] + bn3t_ref[...]
    cls_ref[...] = cls
    spk = jnp.dot(jnp.maximum(cls, 0.0).astype(jnp.bfloat16), wf2_ref[...],
                  preferred_element_type=jnp.float32) + bf2_ref[...]
    spk_ref[...] = spk * bn4s_ref[...] + bn4t_ref[...]


def head(stats, p):
    B = stats.shape[0]
    n_cls_p = p["fc_w"].shape[1]
    n_spk_p = p["fc2_w"].shape[1]

    def full(a):
        return pl.BlockSpec(a.shape, lambda i, _n=a.ndim: (0,) * _n)

    args = (stats, p["bn1_s"], p["bn1_t"], p["lin_w"], p["lin_b"], p["bn2_s"],
            p["bn2_t"], p["fc_w"], p["fc_b"], p["bn3_s"], p["bn3_t"],
            p["fc2_w"], p["fc2_b"], p["bn4_s"], p["bn4_t"])
    return pl.pallas_call(
        _head_kernel,
        out_shape=(jax.ShapeDtypeStruct((B, n_cls_p), jnp.float32),
                   jax.ShapeDtypeStruct((B, n_spk_p), jnp.float32)),
        grid=(1,),
        in_specs=[full(a) for a in args],
        out_specs=(pl.BlockSpec((B, n_cls_p), lambda i: (0, 0)),
                   pl.BlockSpec((B, n_spk_p), lambda i: (0, 0))),
        compiler_params=pltpu.CompilerParams(vmem_limit_bytes=_VMEM_LIMIT),
    )(*args)


# ----------------------------------------------------------------------------
# Model wrapper.  Time axis padded to a multiple of 128 (lane-dense blocks);
# true length is baked statically into the kernels for masking.
# ----------------------------------------------------------------------------
def vove_forward(mel, params, cfg):
    B, C_in, T = mel.shape
    T_pad = _round_up(T, 128)
    if T_pad != T:
        mel = jnp.pad(mel, ((0, 0), (0, 0), (0, T_pad - T)))
    x = pre_conv(mel.astype(jnp.bfloat16), params["pre"]["w"], params["pre"]["b"],
                 params["pre"]["bn_s"], params["pre"]["bn_t"], K=cfg["prekernels"])
    xs = []
    for blk, d in zip(params["blocks"], cfg["dilations"]):
        x = se_res2_block(x, blk, scale=cfg["scale"], K=cfg["kernels"],
                          dilation=d, t_true=T)
        xs.append(x)
    stats = mfa_asp(xs, params["mfa_w"], params["mfa_b"],
                    params["asp_w1"], params["asp_b1"],
                    params["asp_w2"], params["asp_b2"], t_true=T)
    cls_p, spk_p = head(stats, params["head"])
    return cls_p[:, :cfg["num_classes"]], spk_p[:, :cfg["num_speakers"]]


# ----------------------------------------------------------------------------
# Deterministic synthetic parameters (no checkpoint loading).
# ----------------------------------------------------------------------------
class KeyGen:
    def __init__(self, seed):
        self.key = jax.random.PRNGKey(seed)

    def __call__(self):
        self.key, sub = jax.random.split(self.key)
        return sub


def _bn_fold(key, c):
    k1, k2, k3, k4 = jax.random.split(key, 4)
    gamma = 1.0 + 0.1 * jax.random.normal(k1, (c,), jnp.float32)
    beta = 0.1 * jax.random.normal(k2, (c,), jnp.float32)
    rmean = 0.1 * jax.random.normal(k3, (c,), jnp.float32)
    rvar = 0.9 + 0.2 * jax.random.uniform(k4, (c,), jnp.float32)
    scale = gamma / jnp.sqrt(rvar + 1e-5)
    shift = beta - rmean * scale
    return scale, shift


def _fold_conv(w):
    # (C_out, C_in, K) -> (C_out, K*C_in), matching k-major stacked shifted RHS.
    co, ci, k = w.shape
    return jnp.transpose(w, (0, 2, 1)).reshape(co, k * ci)


def init_params(kg, cfg):
    C = cfg["channels"]; bneck = cfg["bottleneck"]; H = cfg["hiddens"]
    scale = cfg["scale"]; K = cfg["kernels"]; Kpre = cfg["prekernels"]
    width = C // scale; S1 = scale - 1
    nblk = len(cfg["dilations"]); in_ch = cfg["in_channels"]

    def w(shape, s=0.1):
        return s * jax.random.normal(kg(), shape, jnp.float32)

    p = {}
    pre_s, pre_t = _bn_fold(kg(), C)
    p["pre"] = dict(w=_fold_conv(w((C, in_ch, Kpre))).astype(jnp.bfloat16),
                    b=w((C,)).reshape(C, 1),
                    bn_s=pre_s.reshape(C, 1), bn_t=pre_t.reshape(C, 1))

    p["blocks"] = []
    for _ in range(nblk):
        ps_, pt_ = _bn_fold(kg(), C)
        qs_, qt_ = _bn_fold(kg(), C)
        rw, rb, rs, rt = [], [], [], []
        for _ in range(S1):
            rw.append(_fold_conv(w((width, width, K))))
            rb.append(w((width,)))
            s_, t_ = _bn_fold(kg(), width)
            rs.append(s_); rt.append(t_)
        blk = dict(
            pre_w=w((C, C)).astype(jnp.bfloat16), pre_b=w((C,)).reshape(C, 1),
            pre_s=ps_.reshape(C, 1), pre_t=pt_.reshape(C, 1),
            res_w=jnp.stack(rw).astype(jnp.bfloat16),      # (S1, width, K*width)
            res_b=jnp.stack(rb)[:, :, None],
            res_s=jnp.stack(rs)[:, :, None],
            res_t=jnp.stack(rt)[:, :, None],
            post_w=w((C, C)).astype(jnp.bfloat16), post_b=w((C,)).reshape(C, 1),
            post_s=qs_.reshape(C, 1), post_t=qt_.reshape(C, 1),
            se_w1=w((bneck, C)), se_b1=w((bneck,)).reshape(bneck, 1),
            se_w2=w((C, bneck)), se_b2=w((C,)).reshape(C, 1),
        )
        p["blocks"].append(blk)

    mfa_w = w((H, nblk * C))
    p["mfa_w"] = jnp.stack([mfa_w[:, j * C:(j + 1) * C]
                            for j in range(nblk)]).astype(jnp.bfloat16)
    p["mfa_b"] = w((H,)).reshape(H, 1)
    p["asp_w1"] = w((bneck, H)).astype(jnp.bfloat16)
    p["asp_b1"] = w((bneck,)).reshape(bneck, 1)
    p["asp_w2"] = w((H, bneck)).astype(jnp.bfloat16)
    p["asp_b2"] = w((H,)).reshape(H, 1)

    out_ch = cfg["out_channels"]
    n_cls = cfg["num_classes"]; n_spk = cfg["num_speakers"]
    n_cls_p = _round_up(n_cls, 128); n_spk_p = _round_up(n_spk, 128)
    bn1_s, bn1_t = _bn_fold(kg(), 2 * H)
    bn2_s, bn2_t = _bn_fold(kg(), out_ch)
    bn3_s, bn3_t = _bn_fold(kg(), n_cls)
    bn4_s, bn4_t = _bn_fold(kg(), n_spk)

    def pad_lane(a, n):
        return jnp.pad(a, [(0, 0)] * (a.ndim - 1) + [(0, n - a.shape[-1])])

    p["head"] = dict(
        bn1_s=bn1_s.reshape(1, -1), bn1_t=bn1_t.reshape(1, -1),
        lin_w=w((2 * H, out_ch)), lin_b=w((out_ch,)).reshape(1, -1),
        bn2_s=bn2_s.reshape(1, -1), bn2_t=bn2_t.reshape(1, -1),
        fc_w=pad_lane(w((out_ch, n_cls)), n_cls_p),
        fc_b=pad_lane(w((n_cls,)).reshape(1, -1), n_cls_p),
        bn3_s=pad_lane(bn3_s.reshape(1, -1), n_cls_p),
        bn3_t=pad_lane(bn3_t.reshape(1, -1), n_cls_p),
        fc2_w=jnp.pad(w((n_cls, n_spk)),
                      ((0, n_cls_p - n_cls), (0, n_spk_p - n_spk))).astype(jnp.bfloat16),
        fc2_b=pad_lane(w((n_spk,)).reshape(1, -1), n_spk_p),
        bn4_s=pad_lane(bn4_s.reshape(1, -1), n_spk_p),
        bn4_t=pad_lane(bn4_t.reshape(1, -1), n_spk_p),
    )
    return p


if __name__ == "__main__":
    cfg = dict(
        in_channels=8,        # stand-in for 80 mel bins (small-shape test)
        out_channels=16,
        num_classes=44,       # len(attributes)
        channels=16,
        prekernels=5,
        scale=4,
        kernels=3,
        dilations=(2, 3, 4),
        bottleneck=8,
        hiddens=32,
        num_speakers=2443,
    )
    kg = KeyGen(0)
    params = init_params(kg, cfg)

    B, T = 2, 16
    mel = jax.random.normal(jax.random.PRNGKey(0), (B, cfg["in_channels"], T),
                            jnp.float32)

    fwd = jax.jit(functools.partial(vove_forward, cfg=cfg))
    class_emb, speaker_emb = fwd(mel, params)
    jax.block_until_ready((class_emb, speaker_emb))

    assert class_emb.shape == (B, cfg["num_classes"])
    assert speaker_emb.shape == (B, cfg["num_speakers"])
    assert bool(jnp.all(jnp.isfinite(class_emb)))
    assert bool(jnp.all(jnp.isfinite(speaker_emb)))
    print("KERNEL_OK")
</pallas_src>

<mosaic_0001>
module attributes {stable_mosaic.version = 11 : i64} {
  func.func @_pre_conv_kernel(%arg0: i32, %arg1: memref<1x8x128xbf16, #tpu.memory_space<vmem>>, %arg2: memref<16x40xbf16, #tpu.memory_space<vmem>>, %arg3: memref<16x1xf32, #tpu.memory_space<vmem>>, %arg4: memref<16x1xf32, #tpu.memory_space<vmem>>, %arg5: memref<16x1xf32, #tpu.memory_space<vmem>>, %arg6: memref<1x16x128xbf16, #tpu.memory_space<vmem>>) attributes {dimension_semantics = [#tpu.dimension_semantics<parallel>], iteration_bounds = array<i64: 2>, scalar_prefetch = 0 : i64, scratch_operands = 0 : i64, tpu.core_type = #tpu.core_type<tc>, window_params = [{transform_indices = @transform_0, window_bounds = array<i64: 1, 8, 128>}, {pipeline_mode = #tpu.pipeline_mode<synchronous>, transform_indices = @transform_1, window_bounds = array<i64: 16, 40>}, {pipeline_mode = #tpu.pipeline_mode<synchronous>, transform_indices = @transform_2, window_bounds = array<i64: 16, 1>}, {pipeline_mode = #tpu.pipeline_mode<synchronous>, transform_indices = @transform_3, window_bounds = array<i64: 16, 1>}, {pipeline_mode = #tpu.pipeline_mode<synchronous>, transform_indices = @transform_4, window_bounds = array<i64: 16, 1>}, {transform_indices = @transform_5, window_bounds = array<i64: 1, 16, 128>}]} {
    %c0 = arith.constant 0 : index
    %c0_0 = arith.constant 0 : index
    %c0_1 = arith.constant 0 : index
    %0 = vector.load %arg1[%c0, %c0_0, %c0_1] : memref<1x8x128xbf16, #tpu.memory_space<vmem>>, vector<1x8x128xbf16>
    %1 = vector.shape_cast %0 : vector<1x8x128xbf16> to vector<8x128xbf16>
    %cst = arith.constant 0.000000e+00 : bf16
    %2 = vector.broadcast %cst : bf16 to vector<8x2xbf16>
    %3 = tpu.concatenate %2, %1, %2 in 1 : vector<8x2xbf16>, vector<8x128xbf16>, vector<8x2xbf16> -> vector<8x132xbf16>
    %4 = vector.extract_strided_slice %3 {offsets = [0, 0], sizes = [8, 128], strides = [1, 1]} : vector<8x132xbf16> to vector<8x128xbf16>
    %5 = vector.extract_strided_slice %3 {offsets = [0, 1], sizes = [8, 128], strides = [1, 1]} : vector<8x132xbf16> to vector<8x128xbf16>
    %6 = vector.extract_strided_slice %3 {offsets = [0, 2], sizes = [8, 128], strides = [1, 1]} : vector<8x132xbf16> to vector<8x128xbf16>
    %7 = vector.extract_strided_slice %3 {offsets = [0, 3], sizes = [8, 128], strides = [1, 1]} : vector<8x132xbf16> to vector<8x128xbf16>
    %8 = vector.extract_strided_slice %3 {offsets = [0, 4], sizes = [8, 128], strides = [1, 1]} : vector<8x132xbf16> to vector<8x128xbf16>
    %9 = tpu.concatenate %4, %5, %6, %7, %8 in 0 : vector<8x128xbf16>, vector<8x128xbf16>, vector<8x128xbf16>, vector<8x128xbf16>, vector<8x128xbf16> -> vector<40x128xbf16>
    %c0_2 = arith.constant 0 : index
    %c0_3 = arith.constant 0 : index
    %10 = vector.load %arg2[%c0_2, %c0_3] : memref<16x40xbf16, #tpu.memory_space<vmem>>, vector<16x40xbf16>
    %cst_4 = arith.constant dense<0.000000e+00> : vector<16x128xf32>
    %11 = tpu.matmul %10, %9, %cst_4 {dimension_numbers = #tpu.dot_dimension_numbers<[1], [0], [0], [1], [0, 0, 1, 1], [], []>} : vector<16x40xbf16>, vector<40x128xbf16>, vector<16x128xf32> -> vector<16x128xf32>
    %c0_5 = arith.constant 0 : index
    %c0_6 = arith.constant 0 : index
    %12 = vector.load %arg3[%c0_5, %c0_6] : memref<16x1xf32, #tpu.memory_space<vmem>>, vector<16x1xf32>
    %13 = vector.broadcast %12 : vector<16x1xf32> to vector<16x128xf32>
    %14 = arith.addf %11, %13 : vector<16x128xf32>
    %cst_7 = arith.constant 0.000000e+00 : f32
    %15 = vector.broadcast %cst_7 : f32 to vector<16x128xf32>
    %16 = arith.maximumf %14, %15 : vector<16x128xf32>
    %c0_8 = arith.constant 0 : index
    %c0_9 = arith.constant 0 : index
    %17 = vector.load %arg4[%c0_8, %c0_9] : memref<16x1xf32, #tpu.memory_space<vmem>>, vector<16x1xf32>
    %18 = vector.broadcast %17 : vector<16x1xf32> to vector<16x128xf32>
    %19 = arith.mulf %16, %18 : vector<16x128xf32>
    %c0_10 = arith.constant 0 : index
    %c0_11 = arith.constant 0 : index
    %20 = vector.load %arg5[%c0_10, %c0_11] : memref<16x1xf32, #tpu.memory_space<vmem>>, vector<16x1xf32>
    %21 = vector.broadcast %20 : vector<16x1xf32> to vector<16x128xf32>
    %22 = arith.addf %19, %21 : vector<16x128xf32>
    %23 = arith.truncf %22 : vector<16x128xf32> to vector<16x128xbf16>
    %c0_12 = arith.constant 0 : index
    %c0_13 = arith.constant 0 : index
    %c0_14 = arith.constant 0 : index
    %24 = vector.load %arg6[%c0_12, %c0_13, %c0_14] : memref<1x16x128xbf16, #tpu.memory_space<vmem>>, vector<1x16x128xbf16>
    %25 = vector.shape_cast %24 : vector<1x16x128xbf16> to vector<16x128xbf16>
    %26 = vector.shape_cast %23 : vector<16x128xbf16> to vector<1x16x128xbf16>
    tpu.vector_store %arg6[%c0_12, %c0_13, %c0_14], %26 {strides = array<i32>} : memref<1x16x128xbf16, #tpu.memory_space<vmem>>, vector<1x16x128xbf16>,
    return
  }
  func.func @transform_0(%arg0: i32) -> (i32, i32, i32) {
    %c0_i32 = arith.constant 0 : i32
    %c0_i32_0 = arith.constant 0 : i32
    %c0_i32_1 = arith.constant 0 : i32
    return %arg0, %c0_i32, %c0_i32_0 : i32, i32, i32
  }
  func.func @transform_1(%arg0: i32) -> (i32, i32) {
    %c0_i32 = arith.constant 0 : i32
    %c0_i32_0 = arith.constant 0 : i32
    %c0_i32_1 = arith.constant 0 : i32
    return %c0_i32, %c0_i32_0 : i32, i32
  }
  func.func @transform_2(%arg0: i32) -> (i32, i32) {
    %c0_i32 = arith.constant 0 : i32
    %c0_i32_0 = arith.constant 0 : i32
    %c0_i32_1 = arith.constant 0 : i32
    return %c0_i32, %c0_i32_0 : i32, i32
  }
  func.func @transform_3(%arg0: i32) -> (i32, i32) {
    %c0_i32 = arith.constant 0 : i32
    %c0_i32_0 = arith.constant 0 : i32
    %c0_i32_1 = arith.constant 0 : i32
    return %c0_i32, %c0_i32_0 : i32, i32
  }
  func.func @transform_4(%arg0: i32) -> (i32, i32) {
    %c0_i32 = arith.constant 0 : i32
    %c0_i32_0 = arith.constant 0 : i32
    %c0_i32_1 = arith.constant 0 : i32
    return %c0_i32, %c0_i32_0 : i32, i32
  }
  func.func @transform_5(%arg0: i32) -> (i32, i32, i32) {
    %c0_i32 = arith.constant 0 : i32
    %c0_i32_0 = arith.constant 0 : i32
    %c0_i32_1 = arith.constant 0 : i32
    return %arg0, %c0_i32, %c0_i32_0 : i32, i32, i32
  }
}

module attributes {stable_mosaic.version = 11 : i64} {
  func.func @_se_res2_kernel(%arg0: i32, %arg1: memref<1x16x128xbf16, #tpu.memory_space<vmem>>, %arg2: memref<16x16xbf16, #tpu.memory_space<vmem>>, %arg3: memref<16x1xf32, #tpu.memory_space<vmem>>, %arg4: memref<16x1xf32, #tpu.memory_space<vmem>>, %arg5: memref<16x1xf32, #tpu.memory_space<vmem>>, %arg6: memref<3x4x12xbf16, #tpu.memory_space<vmem>>, %arg7: memref<3x4x1xf32, #tpu.memory_space<vmem>>, %arg8: memref<3x4x1xf32, #tpu.memory_space<vmem>>, %arg9: memref<3x4x1xf32, #tpu.memory_space<vmem>>, %arg10: memref<16x16xbf16, #tpu.memory_space<vmem>>, %arg11: memref<16x1xf32, #tpu.memory_space<vmem>>, %arg12: memref<16x1xf32, #tpu.memory_space<vmem>>, %arg13: memref<16x1xf32, #tpu.memory_space<vmem>>, %arg14: memref<8x16xf32, #tpu.memory_space<vmem>>, %arg15: memref<8x1xf32, #tpu.memory_space<vmem>>, %arg16: memref<16x8xf32, #tpu.memory_space<vmem>>, %arg17: memref<16x1xf32, #tpu.memory_space<vmem>>, %arg18: memref<1x16x128xbf16, #tpu.memory_space<vmem>>) attributes {dimension_semantics = [#tpu.dimension_semantics<parallel>], iteration_bounds = array<i64: 2>, scalar_prefetch = 0 : i64, scratch_operands = 0 : i64, tpu.core_type = #tpu.core_type<tc>, window_params = [{transform_indices = @transform_0, window_bounds = array<i64: 1, 16, 128>}, {pipeline_mode = #tpu.pipeline_mode<synchronous>, transform_indices = @transform_1, window_bounds = array<i64: 16, 16>}, {pipeline_mode = #tpu.pipeline_mode<synchronous>, transform_indices = @transform_2, window_bounds = array<i64: 16, 1>}, {pipeline_mode = #tpu.pipeline_mode<synchronous>, transform_indices = @transform_3, window_bounds = array<i64: 16, 1>}, {pipeline_mode = #tpu.pipeline_mode<synchronous>, transform_indices = @transform_4, window_bounds = array<i64: 16, 1>}, {pipeline_mode = #tpu.pipeline_mode<synchronous>, transform_indices = @transform_5, window_bounds = array<i64: 3, 4, 12>}, {pipeline_mode = #tpu.pipeline_mode<synchronous>, transform_indices = @transform_6, window_bounds = array<i64: 3, 4, 1>}, {pipeline_mode = #tpu.pipeline_mode<synchronous>, transform_indices = @transform_7, window_bounds = array<i64: 3, 4, 1>}, {pipeline_mode = #tpu.pipeline_mode<synchronous>, transform_indices = @transform_8, window_bounds = array<i64: 3, 4, 1>}, {pipeline_mode = #tpu.pipeline_mode<synchronous>, transform_indices = @transform_9, window_bounds = array<i64: 16, 16>}, {pipeline_mode = #tpu.pipeline_mode<synchronous>, transform_indices = @transform_10, window_bounds = array<i64: 16, 1>}, {pipeline_mode = #tpu.pipeline_mode<synchronous>, transform_indices = @transform_11, window_bounds = array<i64: 16, 1>}, {pipeline_mode = #tpu.pipeline_mode<synchronous>, transform_indices = @transform_12, window_bounds = array<i64: 16, 1>}, {pipeline_mode = #tpu.pipeline_mode<synchronous>, transform_indices = @transform_13, window_bounds = array<i64: 8, 16>}, {pipeline_mode = #tpu.pipeline_mode<synchronous>, transform_indices = @transform_14, window_bounds = array<i64: 8, 1>}, {pipeline_mode = #tpu.pipeline_mode<synchronous>, transform_indices = @transform_15, window_bounds = array<i64: 16, 8>}, {pipeline_mode = #tpu.pipeline_mode<synchronous>, transform_indices = @transform_16, window_bounds = array<i64: 16, 1>}, {transform_indices = @transform_17, window_bounds = array<i64: 1, 16, 128>}]} {
    %c0 = arith.constant 0 : index
    %c0_0 = arith.constant 0 : index
    %c0_1 = arith.constant 0 : index
    %0 = vector.load %arg1[%c0, %c0_0, %c0_1] : memref<1x16x128xbf16, #tpu.memory_space<vmem>>, vector<1x16x128xbf16>
    %1 = vector.shape_cast %0 : vector<1x16x128xbf16> to vector<16x128xbf16>
    %2 = tpu.iota {dimensions = array<i32: 1>} : vector<1x128xi32>
    %c16_i32 = arith.constant 16 : i32
    %3 = vector.broadcast %c16_i32 : i32 to vector<1x128xi32>
    %4 = arith.cmpi slt, %2, %3 : vector<1x128xi32>
    %c0_2 = arith.constant 0 : index
    %c0_3 = arith.constant 0 : index
    %5 = vector.load %arg2[%c0_2, %c0_3] : memref<16x16xbf16, #tpu.memory_space<vmem>>, vector<16x16xbf16>
    %cst = arith.constant dense<0.000000e+00> : vector<16x128xf32>
    %6 = tpu.matmul %5, %1, %cst {dimension_numbers = #tpu.dot_dimension_numbers<[1], [0], [0], [1], [0, 0, 1, 1], [], []>} : vector<16x16xbf16>, vector<16x128xbf16>, vector<16x128xf32> -> vector<16x128xf32>
    %c0_4 = arith.constant 0 : index
    %c0_5 = arith.constant 0 : index
    %7 = vector.load %arg3[%c0_4, %c0_5] : memref<16x1xf32, #tpu.memory_space<vmem>>, vector<16x1xf32>
    %8 = vector.broadcast %7 : vector<16x1xf32> to vector<16x128xf32>
    %9 = arith.addf %6, %8 : vector<16x128xf32>
    %cst_6 = arith.constant 0.000000e+00 : f32
    %10 = vector.broadcast %cst_6 : f32 to vector<16x128xf32>
    %11 = arith.maximumf %9, %10 : vector<16x128xf32>
    %c0_7 = arith.constant 0 : index
    %c0_8 = arith.constant 0 : index
    %12 = vector.load %arg4[%c0_7, %c0_8] : memref<16x1xf32, #tpu.memory_space<vmem>>, vector<16x1xf32>
    %13 = vector.broadcast %12 : vector<16x1xf32> to vector<16x128xf32>
    %14 = arith.mulf %11, %13 : vector<16x128xf32>
    %c0_9 = arith.constant 0 : index
    %c0_10 = arith.constant 0 : index
    %15 = vector.load %arg5[%c0_9, %c0_10] : memref<16x1xf32, #tpu.memory_space<vmem>>, vector<16x1xf32>
    %16 = vector.broadcast %15 : vector<16x1xf32> to vector<16x128xf32>
    %17 = arith.addf %14, %16 : vector<16x128xf32>
    %18 = vector.extract_strided_slice %17 {offsets = [0, 0], sizes = [4, 128], strides = [1, 1]} : vector<16x128xf32> to vector<4x128xf32>
    %19 = arith.truncf %18 : vector<4x128xf32> to vector<4x128xbf16>
    %cst_11 = arith.constant 0.000000e+00 : f32
    %20 = vector.broadcast %cst_11 : f32 to vector<4x128xf32>
    %21 = vector.extract_strided_slice %17 {offsets = [4, 0], sizes = [4, 128], strides = [1, 1]} : vector<16x128xf32> to vector<4x128xf32>
    %22 = arith.addf %21, %20 : vector<4x128xf32>
    %cst_12 = arith.constant 0.000000e+00 : f32
    %23 = vector.shape_cast %4 : vector<1x128xi1> to vector<1x128xi1>
    %24 = vector.broadcast %23 : vector<1x128xi1> to vector<4x128xi1>
    %25 = vector.broadcast %cst_12 : f32 to vector<4x128xf32>
    %26 = arith.select %24, %22, %25 : vector<4x128xi1>, vector<4x128xf32>
    %27 = arith.truncf %26 : vector<4x128xf32> to vector<4x128xbf16>
    %cst_13 = arith.constant 0.000000e+00 : bf16
    %28 = vector.broadcast %cst_13 : bf16 to vector<4x2xbf16>
    %29 = tpu.concatenate %28, %27, %28 in 1 : vector<4x2xbf16>, vector<4x128xbf16>, vector<4x2xbf16> -> vector<4x132xbf16>
    %30 = vector.extract_strided_slice %29 {offsets = [0, 0], sizes = [4, 128], strides = [1, 1]} : vector<4x132xbf16> to vector<4x128xbf16>
    %31 = vector.extract_strided_slice %29 {offsets = [0, 2], sizes = [4, 128], strides = [1, 1]} : vector<4x132xbf16> to vector<4x128xbf16>
    %32 = vector.extract_strided_slice %29 {offsets = [0, 4], sizes = [4, 128], strides = [1, 1]} : vector<4x132xbf16> to vector<4x128xbf16>
    %33 = tpu.concatenate %30, %31, %32 in 0 : vector<4x128xbf16>, vector<4x128xbf16>, vector<4x128xbf16> -> vector<12x128xbf16>
    %c0_14 = arith.constant 0 : index
    %c0_15 = arith.constant 0 : index
    %c0_16 = arith.constant 0 : index
    %34 = vector.load %arg6[%c0_14, %c0_15, %c0_16] : memref<3x4x12xbf16, #tpu.memory_space<vmem>>, vector<1x4x12xbf16>
    %35 = vector.shape_cast %34 : vector<1x4x12xbf16> to vector<4x12xbf16>
    %cst_17 = arith.constant dense<0.000000e+00> : vector<4x128xf32>
    %36 = tpu.matmul %35, %33, %cst_17 {dimension_numbers = #tpu.dot_dimension_numbers<[1], [0], [0], [1], [0, 0, 1, 1], [], []>} : vector<4x12xbf16>, vector<12x128xbf16>, vector<4x128xf32> -> vector<4x128xf32>
    %c0_18 = arith.constant 0 : index
    %c0_19 = arith.constant 0 : index
    %c0_20 = arith.constant 0 : index
    %37 = vector.load %arg7[%c0_18, %c0_19, %c0_20] : memref<3x4x1xf32, #tpu.memory_space<vmem>>, vector<1x4x1xf32>
    %38 = vector.shape_cast %37 : vector<1x4x1xf32> to vector<4x1xf32>
    %39 = vector.broadcast %38 : vector<4x1xf32> to vector<4x128xf32>
    %40 = arith.addf %36, %39 : vector<4x128xf32>
    %cst_21 = arith.constant 0.000000e+00 : f32
    %41 = vector.broadcast %cst_21 : f32 to vector<4x128xf32>
    %42 = arith.maximumf %40, %41 : vector<4x128xf32>
    %c0_22 = arith.constant 0 : index
    %c0_23 = arith.constant 0 : index
    %c0_24 = arith.constant 0 : index
    %43 = vector.load %arg8[%c0_22, %c0_23, %c0_24] : memref<3x4x1xf32, #tpu.memory_space<vmem>>, vector<1x4x1xf32>
    %44 = vector.shape_cast %43 : vector<1x4x1xf32> to vector<4x1xf32>
    %45 = vector.broadcast %44 : vector<4x1xf32> to vector<4x128xf32>
    %46 = arith.mulf %42, %45 : vector<4x128xf32>
    %c0_25 = arith.constant 0 : index
    %c0_26 = arith.constant 0 : index
    %c0_27 = arith.constant 0 : index
    %47 = vector.load %arg9[%c0_25, %c0_26, %c0_27] : memref<3x4x1xf32, #tpu.memory_space<vmem>>, vector<1x4x1xf32>
    %48 = vector.shape_cast %47 : vector<1x4x1xf32> to vector<4x1xf32>
    %49 = vector.broadcast %48 : vector<4x1xf32> to vector<4x128xf32>
    %50 = arith.addf %46, %49 : vector<4x128xf32>
    %51 = arith.truncf %50 : vector<4x128xf32> to vector<4x128xbf16>
    %52 = vector.extract_strided_slice %17 {offsets = [8, 0], sizes = [4, 128], strides = [1, 1]} : vector<16x128xf32> to vector<4x128xf32>
    %53 = arith.addf %52, %50 : vector<4x128xf32>
    %cst_28 = arith.constant 0.000000e+00 : f32
    %54 = vector.shape_cast %4 : vector<1x128xi1> to vector<1x128xi1>
    %55 = vector.broadcast %54 : vector<1x128xi1> to vector<4x128xi1>
    %56 = vector.broadcast %cst_28 : f32 to vector<4x128xf32>
    %57 = arith.select %55, %53, %56 : vector<4x128xi1>, vector<4x128xf32>
    %58 = arith.truncf %57 : vector<4x128xf32> to vector<4x128xbf16>
    %cst_29 = arith.constant 0.000000e+00 : bf16
    %59 = vector.broadcast %cst_29 : bf16 to vector<4x2xbf16>
    %60 = tpu.concatenate %59, %58, %59 in 1 : vector<4x2xbf16>, vector<4x128xbf16>, vector<4x2xbf16> -> vector<4x132xbf16>
    %61 = vector.extract_strided_slice %60 {offsets = [0, 0], sizes = [4, 128], strides = [1, 1]} : vector<4x132xbf16> to vector<4x128xbf16>
    %62 = vector.extract_strided_slice %60 {offsets = [0, 2], sizes = [4, 128], strides = [1, 1]} : vector<4x132xbf16> to vector<4x128xbf16>
    %63 = vector.extract_strided_slice %60 {offsets = [0, 4], sizes = [4, 128], strides = [1, 1]} : vector<4x132xbf16> to vector<4x128xbf16>
    %64 = tpu.concatenate %61, %62, %63 in 0 : vector<4x128xbf16>, vector<4x128xbf16>, vector<4x128xbf16> -> vector<12x128xbf16>
    %c1 = arith.constant 1 : index
    %c0_30 = arith.constant 0 : index
    %c0_31 = arith.constant 0 : index
    %65 = vector.load %arg6[%c1, %c0_30, %c0_31] : memref<3x4x12xbf16, #tpu.memory_space<vmem>>, vector<1x4x12xbf16>
    %66 = vector.shape_cast %65 : vector<1x4x12xbf16> to vector<4x12xbf16>
    %cst_32 = arith.constant dense<0.000000e+00> : vector<4x128xf32>
    %67 = tpu.matmul %66, %64, %cst_32 {dimension_numbers = #tpu.dot_dimension_numbers<[1], [0], [0], [1], [0, 0, 1, 1], [], []>} : vector<4x12xbf16>, vector<12x128xbf16>, vector<4x128xf32> -> vector<4x128xf32>
    %c1_33 = arith.constant 1 : index
    %c0_34 = arith.constant 0 : index
    %c0_35 = arith.constant 0 : index
    %68 = vector.load %arg7[%c1_33, %c0_34, %c0_35] : memref<3x4x1xf32, #tpu.memory_space<vmem>>, vector<1x4x1xf32>
    %69 = vector.shape_cast %68 : vector<1x4x1xf32> to vector<4x1xf32>
    %70 = vector.broadcast %69 : vector<4x1xf32> to vector<4x128xf32>
    %71 = arith.addf %67, %70 : vector<4x128xf32>
    %cst_36 = arith.constant 0.000000e+00 : f32
    %72 = vector.broadcast %cst_36 : f32 to vector<4x128xf32>
    %73 = arith.maximumf %71, %72 : vector<4x128xf32>
    %c1_37 = arith.constant 1 : index
    %c0_38 = arith.constant 0 : index
    %c0_39 = arith.constant 0 : index
    %74 = vector.load %arg8[%c1_37, %c0_38, %c0_39] : memref<3x4x1xf32, #tpu.memory_space<vmem>>, vector<1x4x1xf32>
    %75 = vector.shape_cast %74 : vector<1x4x1xf32> to vector<4x1xf32>
    %76 = vector.broadcast %75 : vector<4x1xf32> to vector<4x128xf32>
    %77 = arith.mulf %73, %76 : vector<4x128xf32>
    %c1_40 = arith.constant 1 : index
    %c0_41 = arith.constant 0 : index
    %c0_42 = arith.constant 0 : index
    %78 = vector.load %arg9[%c1_40, %c0_41, %c0_42] : memref<3x4x1xf32, #tpu.memory_space<vmem>>, vector<1x4x1xf32>
    %79 = vector.shape_cast %78 : vector<1x4x1xf32> to vector<4x1xf32>
    %80 = vector.broadcast %79 : vector<4x1xf32> to vector<4x128xf32>
    %81 = arith.addf %77, %80 : vector<4x128xf32>
    %82 = arith.truncf %81 : vector<4x128xf32> to vector<4x128xbf16>
    %83 = vector.extract_strided_slice %17 {offsets = [12, 0], sizes = [4, 128], strides = [1, 1]} : vector<16x128xf32> to vector<4x128xf32>
    %84 = arith.addf %83, %81 : vector<4x128xf32>
    %cst_43 = arith.constant 0.000000e+00 : f32
    %85 = vector.shape_cast %4 : vector<1x128xi1> to vector<1x128xi1>
    %86 = vector.broadcast %85 : vector<1x128xi1> to vector<4x128xi1>
    %87 = vector.broadcast %cst_43 : f32 to vector<4x128xf32>
    %88 = arith.select %86, %84, %87 : vector<4x128xi1>, vector<4x128xf32>
    %89 = arith.truncf %88 : vector<4x128xf32> to vector<4x128xbf16>
    %cst_44 = arith.constant 0.000000e+00 : bf16
    %90 = vector.broadcast %cst_44 : bf16 to vector<4x2xbf16>
    %91 = tpu.concatenate %90, %89, %90 in 1 : vector<4x2xbf16>, vector<4x128xbf16>, vector<4x2xbf16> -> vector<4x132xbf16>
    %92 = vector.extract_strided_slice %91 {offsets = [0, 0], sizes = [4, 128], strides = [1, 1]} : vector<4x132xbf16> to vector<4x128xbf16>
    %93 = vector.extract_strided_slice %91 {offsets = [0, 2], sizes = [4, 128], strides = [1, 1]} : vector<4x132xbf16> to vector<4x128xbf16>
    %94 = vector.extract_strided_slice %91 {offsets = [0, 4], sizes = [4, 128], strides = [1, 1]} : vector<4x132xbf16> to vector<4x128xbf16>
    %95 = tpu.concatenate %92, %93, %94 in 0 : vector<4x128xbf16>, vector<4x128xbf16>, vector<4x128xbf16> -> vector<12x128xbf16>
    %c2 = arith.constant 2 : index
    %c0_45 = arith.constant 0 : index
    %c0_46 = arith.constant 0 : index
    %96 = vector.load %arg6[%c2, %c0_45, %c0_46] : memref<3x4x12xbf16, #tpu.memory_space<vmem>>, vector<1x4x12xbf16>
    %97 = vector.shape_cast %96 : vector<1x4x12xbf16> to vector<4x12xbf16>
    %cst_47 = arith.constant dense<0.000000e+00> : vector<4x128xf32>
    %98 = tpu.matmul %97, %95, %cst_47 {dimension_numbers = #tpu.dot_dimension_numbers<[1], [0], [0], [1], [0, 0, 1, 1], [], []>} : vector<4x12xbf16>, vector<12x128xbf16>, vector<4x128xf32> -> vector<4x128xf32>
    %c2_48 = arith.constant 2 : index
    %c0_49 = arith.constant 0 : index
    %c0_50 = arith.constant 0 : index
    %99 = vector.load %arg7[%c2_48, %c0_49, %c0_50] : memref<3x4x1xf32, #tpu.memory_space<vmem>>, vector<1x4x1xf32>
    %100 = vector.shape_cast %99 : vector<1x4x1xf32> to vector<4x1xf32>
    %101 = vector.broadcast %100 : vector<4x1xf32> to vector<4x128xf32>
    %102 = arith.addf %98, %101 : vector<4x128xf32>
    %cst_51 = arith.constant 0.000000e+00 : f32
    %103 = vector.broadcast %cst_51 : f32 to vector<4x128xf32>
    %104 = arith.maximumf %102, %103 : vector<4x128xf32>
    %c2_52 = arith.constant 2 : index
    %c0_53 = arith.constant 0 : index
    %c0_54 = arith.constant 0 : index
    %105 = vector.load %arg8[%c2_52, %c0_53, %c0_54] : memref<3x4x1xf32, #tpu.memory_space<vmem>>, vector<1x4x1xf32>
    %106 = vector.shape_cast %105 : vector<1x4x1xf32> to vector<4x1xf32>
    %107 = vector.broadcast %106 : vector<4x1xf32> to vector<4x128xf32>
    %108 = arith.mulf %104, %107 : vector<4x128xf32>
    %c2_55 = arith.constant 2 : index
    %c0_56 = arith.constant 0 : index
    %c0_57 = arith.constant 0 : index
    %109 = vector.load %arg9[%c2_55, %c0_56, %c0_57] : memref<3x4x1xf32, #tpu.memory_space<vmem>>, vector<1x4x1xf32>
    %110 = vector.shape_cast %109 : vector<1x4x1xf32> to vector<4x1xf32>
    %111 = vector.broadcast %110 : vector<4x1xf32> to vector<4x128xf32>
    %112 = arith.addf %108, %111 : vector<4x128xf32>
    %113 = arith.truncf %112 : vector<4x128xf32> to vector<4x128xbf16>
    %114 = tpu.concatenate %19, %51, %82, %113 in 0 : vector<4x128xbf16>, vector<4x128xbf16>, vector<4x128xbf16>, vector<4x128xbf16> -> vector<16x128xbf16>
    %c0_58 = arith.constant 0 : index
    %c0_59 = arith.constant 0 : index
    %115 = vector.load %arg10[%c0_58, %c0_59] : memref<16x16xbf16, #tpu.memory_space<vmem>>, vector<16x16xbf16>
    %cst_60 = arith.constant dense<0.000000e+00> : vector<16x128xf32>
    %116 = tpu.matmul %115, %114, %cst_60 {dimension_numbers = #tpu.dot_dimension_numbers<[1], [0], [0], [1], [0, 0, 1, 1], [], []>} : vector<16x16xbf16>, vector<16x128xbf16>, vector<16x128xf32> -> vector<16x128xf32>
    %c0_61 = arith.constant 0 : index
    %c0_62 = arith.constant 0 : index
    %117 = vector.load %arg11[%c0_61, %c0_62] : memref<16x1xf32, #tpu.memory_space<vmem>>, vector<16x1xf32>
    %118 = vector.broadcast %117 : vector<16x1xf32> to vector<16x128xf32>
    %119 = arith.addf %116, %118 : vector<16x128xf32>
    %cst_63 = arith.constant 0.000000e+00 : f32
    %120 = vector.broadcast %cst_63 : f32 to vector<16x128xf32>
    %121 = arith.maximumf %119, %120 : vector<16x128xf32>
    %c0_64 = arith.constant 0 : index
    %c0_65 = arith.constant 0 : index
    %122 = vector.load %arg12[%c0_64, %c0_65] : memref<16x1xf32, #tpu.memory_space<vmem>>, vector<16x1xf32>
    %123 = vector.broadcast %122 : vector<16x1xf32> to vector<16x128xf32>
    %124 = arith.mulf %121, %123 : vector<16x128xf32>
    %c0_66 = arith.constant 0 : index
    %c0_67 = arith.constant 0 : index
    %125 = vector.load %arg13[%c0_66, %c0_67] : memref<16x1xf32, #tpu.memory_space<vmem>>, vector<16x1xf32>
    %126 = vector.broadcast %125 : vector<16x1xf32> to vector<16x128xf32>
    %127 = arith.addf %124, %126 : vector<16x128xf32>
    %cst_68 = arith.constant 0.000000e+00 : f32
    %128 = vector.shape_cast %4 : vector<1x128xi1> to vector<1x128xi1>
    %129 = vector.broadcast %128 : vector<1x128xi1> to vector<16x128xi1>
    %130 = vector.broadcast %cst_68 : f32 to vector<16x128xf32>
    %131 = arith.select %129, %127, %130 : vector<16x128xi1>, vector<16x128xf32>
    %cst_69 = arith.constant dense<0.000000e+00> : vector<16xf32>
    %132 = vector.multi_reduction <add>, %131, %cst_69 [1] : vector<16x128xf32> to vector<16xf32>
    %133 = vector.shape_cast %132 : vector<16xf32> to vector<16x1xf32>
    %cst_70 = arith.constant 6.250000e-02 : f32
    %134 = vector.broadcast %cst_70 : f32 to vector<16x1xf32>
    %135 = arith.mulf %133, %134 : vector<16x1xf32>
    %c0_71 = arith.constant 0 : index
    %c0_72 = arith.constant 0 : index
    %136 = vector.load %arg14[%c0_71, %c0_72] : memref<8x16xf32, #tpu.memory_space<vmem>>, vector<8x16xf32>
    %cst_73 = arith.constant dense<0.000000e+00> : vector<8x1xf32>
    %137 = tpu.matmul %136, %135, %cst_73 {dimension_numbers = #tpu.dot_dimension_numbers<[1], [0], [0], [1], [0, 0, 1, 1], [], []>} : vector<8x16xf32>, vector<16x1xf32>, vector<8x1xf32> -> vector<8x1xf32>
    %c0_74 = arith.constant 0 : index
    %c0_75 = arith.constant 0 : index
    %138 = vector.load %arg15[%c0_74, %c0_75] : memref<8x1xf32, #tpu.memory_space<vmem>>, vector<8x1xf32>
    %139 = arith.addf %137, %138 : vector<8x1xf32>
    %cst_76 = arith.constant 0.000000e+00 : f32
    %140 = vector.broadcast %cst_76 : f32 to vector<8x1xf32>
    %141 = arith.maximumf %139, %140 : vector<8x1xf32>
    %c0_77 = arith.constant 0 : index
    %c0_78 = arith.constant 0 : index
    %142 = vector.load %arg16[%c0_77, %c0_78] : memref<16x8xf32, #tpu.memory_space<vmem>>, vector<16x8xf32>
    %cst_79 = arith.constant dense<0.000000e+00> : vector<16x1xf32>
    %143 = tpu.matmul %142, %141, %cst_79 {dimension_numbers = #tpu.dot_dimension_numbers<[1], [0], [0], [1], [0, 0, 1, 1], [], []>} : vector<16x8xf32>, vector<8x1xf32>, vector<16x1xf32> -> vector<16x1xf32>
    %c0_80 = arith.constant 0 : index
    %c0_81 = arith.constant 0 : index
    %144 = vector.load %arg17[%c0_80, %c0_81] : memref<16x1xf32, #tpu.memory_space<vmem>>, vector<16x1xf32>
    %145 = arith.addf %143, %144 : vector<16x1xf32>
    %146 = arith.negf %145 : vector<16x1xf32>
    %147 = math.exp %146 : vector<16x1xf32>
    %cst_82 = arith.constant 1.000000e+00 : f32
    %148 = vector.broadcast %cst_82 : f32 to vector<16x1xf32>
    %149 = arith.addf %148, %147 : vector<16x1xf32>
    %150 = arith.divf %148, %149 : vector<16x1xf32>
    %151 = vector.broadcast %150 : vector<16x1xf32> to vector<16x128xf32>
    %152 = arith.mulf %127, %151 : vector<16x128xf32>
    %153 = arith.extf %1 : vector<16x128xbf16> to vector<16x128xf32>
    %154 = arith.addf %152, %153 : vector<16x128xf32>
    %155 = arith.truncf %154 : vector<16x128xf32> to vector<16x128xbf16>
    %c0_83 = arith.constant 0 : index
    %c0_84 = arith.constant 0 : index
    %c0_85 = arith.constant 0 : index
    %156 = vector.load %arg18[%c0_83, %c0_84, %c0_85] : memref<1x16x128xbf16, #tpu.memory_space<vmem>>, vector<1x16x128xbf16>
    %157 = vector.shape_cast %156 : vector<1x16x128xbf16> to vector<16x128xbf16>
    %158 = vector.shape_cast %155 : vector<16x128xbf16> to vector<1x16x128xbf16>
    tpu.vector_store %arg18[%c0_83, %c0_84, %c0_85], %158 {strides = array<i32>} : memref<1x16x128xbf16, #tpu.memory_space<vmem>>, vector<1x16x128xbf16>,
    return
  }
  func.func @transform_0(%arg0: i32) -> (i32, i32, i32) {
    %c0_i32 = arith.constant 0 : i32
    %c0_i32_0 = arith.constant 0 : i32
    %c0_i32_1 = arith.constant 0 : i32
    return %arg0, %c0_i32, %c0_i32_0 : i32, i32, i32
  }
  func.func @transform_1(%arg0: i32) -> (i32, i32) {
    %c0_i32 = arith.constant 0 : i32
    %c0_i32_0 = arith.constant 0 : i32
    %c0_i32_1 = arith.constant 0 : i32
    return %c0_i32, %c0_i32_0 : i32, i32
  }
  func.func @transform_2(%arg0: i32) -> (i32, i32) {
    %c0_i32 = arith.constant 0 : i32
    %c0_i32_0 = arith.constant 0 : i32
    %c0_i32_1 = arith.constant 0 : i32
    return %c0_i32, %c0_i32_0 : i32, i32
  }
  func.func @transform_3(%arg0: i32) -> (i32, i32) {
    %c0_i32 = arith.constant 0 : i32
    %c0_i32_0 = arith.constant 0 : i32
    %c0_i32_1 = arith.constant 0 : i32
    return %c0_i32, %c0_i32_0 : i32, i32
  }
  func.func @transform_4(%arg0: i32) -> (i32, i32) {
    %c0_i32 = arith.constant 0 : i32
    %c0_i32_0 = arith.constant 0 : i32
    %c0_i32_1 = arith.constant 0 : i32
    return %c0_i32, %c0_i32_0 : i32, i32
  }
  func.func @transform_5(%arg0: i32) -> (i32, i32, i32) {
    %c0_i32 = arith.constant 0 : i32
    %c0_i32_0 = arith.constant 0 : i32
    %c0_i32_1 = arith.constant 0 : i32
    %c0_i32_2 = arith.constant 0 : i32
    return %c0_i32, %c0_i32_0, %c0_i32_1 : i32, i32, i32
  }
  func.func @transform_6(%arg0: i32) -> (i32, i32, i32) {
    %c0_i32 = arith.constant 0 : i32
    %c0_i32_0 = arith.constant 0 : i32
    %c0_i32_1 = arith.constant 0 : i32
    %c0_i32_2 = arith.constant 0 : i32
    return %c0_i32, %c0_i32_0, %c0_i32_1 : i32, i32, i32
  }
  func.func @transform_7(%arg0: i32) -> (i32, i32, i32) {
    %c0_i32 = arith.constant 0 : i32
    %c0_i32_0 = arith.constant 0 : i32
    %c0_i32_1 = arith.constant 0 : i32
    %c0_i32_2 = arith.constant 0 : i32
    return %c0_i32, %c0_i32_0, %c0_i32_1 : i32, i32, i32
  }
  func.func @transform_8(%arg0: i32) -> (i32, i32, i32) {
    %c0_i32 = arith.constant 0 : i32
    %c0_i32_0 = arith.constant 0 : i32
    %c0_i32_1 = arith.constant 0 : i32
    %c0_i32_2 = arith.constant 0 : i32
    return %c0_i32, %c0_i32_0, %c0_i32_1 : i32, i32, i32
  }
  func.func @transform_9(%arg0: i32) -> (i32, i32) {
    %c0_i32 = arith.constant 0 : i32
    %c0_i32_0 = arith.constant 0 : i32
    %c0_i32_1 = arith.constant 0 : i32
    return %c0_i32, %c0_i32_0 : i32, i32
  }
  func.func @transform_10(%arg0: i32) -> (i32, i32) {
    %c0_i32 = arith.constant 0 : i32
    %c0_i32_0 = arith.constant 0 : i32
    %c0_i32_1 = arith.constant 0 : i32
    return %c0_i32, %c0_i32_0 : i32, i32
  }
  func.func @transform_11(%arg0: i32) -> (i32, i32) {
    %c0_i32 = arith.constant 0 : i32
    %c0_i32_0 = arith.constant 0 : i32
    %c0_i32_1 = arith.constant 0 : i32
    return %c0_i32, %c0_i32_0 : i32, i32
  }
  func.func @transform_12(%arg0: i32) -> (i32, i32) {
    %c0_i32 = arith.constant 0 : i32
    %c0_i32_0 = arith.constant 0 : i32
    %c0_i32_1 = arith.constant 0 : i32
    return %c0_i32, %c0_i32_0 : i32, i32
  }
  func.func @transform_13(%arg0: i32) -> (i32, i32) {
    %c0_i32 = arith.constant 0 : i32
    %c0_i32_0 = arith.constant 0 : i32
    %c0_i32_1 = arith.constant 0 : i32
    return %c0_i32, %c0_i32_0 : i32, i32
  }
  func.func @transform_14(%arg0: i32) -> (i32, i32) {
    %c0_i32 = arith.constant 0 : i32
    %c0_i32_0 = arith.constant 0 : i32
    %c0_i32_1 = arith.constant 0 : i32
    return %c0_i32, %c0_i32_0 : i32, i32
  }
  func.func @transform_15(%arg0: i32) -> (i32, i32) {
    %c0_i32 = arith.constant 0 : i32
    %c0_i32_0 = arith.constant 0 : i32
    %c0_i32_1 = arith.constant 0 : i32
    return %c0_i32, %c0_i32_0 : i32, i32
  }
  func.func @transform_16(%arg0: i32) -> (i32, i32) {
    %c0_i32 = arith.constant 0 : i32
    %c0_i32_0 = arith.constant 0 : i32
    %c0_i32_1 = arith.constant 0 : i32
    return %c0_i32, %c0_i32_0 : i32, i32
  }
  func.func @transform_17(%arg0: i32) -> (i32, i32, i32) {
    %c0_i32 = arith.constant 0 : i32
    %c0_i32_0 = arith.constant 0 : i32
    %c0_i32_1 = arith.constant 0 : i32
    return %arg0, %c0_i32, %c0_i32_0 : i32, i32, i32
  }
}

module attributes {stable_mosaic.version = 11 : i64} {
  func.func @_se_res2_kernel(%arg0: i32, %arg1: memref<1x16x128xbf16, #tpu.memory_space<vmem>>, %arg2: memref<16x16xbf16, #tpu.memory_space<vmem>>, %arg3: memref<16x1xf32, #tpu.memory_space<vmem>>, %arg4: memref<16x1xf32, #tpu.memory_space<vmem>>, %arg5: memref<16x1xf32, #tpu.memory_space<vmem>>, %arg6: memref<3x4x12xbf16, #tpu.memory_space<vmem>>, %arg7: memref<3x4x1xf32, #tpu.memory_space<vmem>>, %arg8: memref<3x4x1xf32, #tpu.memory_space<vmem>>, %arg9: memref<3x4x1xf32, #tpu.memory_space<vmem>>, %arg10: memref<16x16xbf16, #tpu.memory_space<vmem>>, %arg11: memref<16x1xf32, #tpu.memory_space<vmem>>, %arg12: memref<16x1xf32, #tpu.memory_space<vmem>>, %arg13: memref<16x1xf32, #tpu.memory_space<vmem>>, %arg14: memref<8x16xf32, #tpu.memory_space<vmem>>, %arg15: memref<8x1xf32, #tpu.memory_space<vmem>>, %arg16: memref<16x8xf32, #tpu.memory_space<vmem>>, %arg17: memref<16x1xf32, #tpu.memory_space<vmem>>, %arg18: memref<1x16x128xbf16, #tpu.memory_space<vmem>>) attributes {dimension_semantics = [#tpu.dimension_semantics<parallel>], iteration_bounds = array<i64: 2>, scalar_prefetch = 0 : i64, scratch_operands = 0 : i64, tpu.core_type = #tpu.core_type<tc>, window_params = [{transform_indices = @transform_0, window_bounds = array<i64: 1, 16, 128>}, {pipeline_mode = #tpu.pipeline_mode<synchronous>, transform_indices = @transform_1, window_bounds = array<i64: 16, 16>}, {pipeline_mode = #tpu.pipeline_mode<synchronous>, transform_indices = @transform_2, window_bounds = array<i64: 16, 1>}, {pipeline_mode = #tpu.pipeline_mode<synchronous>, transform_indices = @transform_3, window_bounds = array<i64: 16, 1>}, {pipeline_mode = #tpu.pipeline_mode<synchronous>, transform_indices = @transform_4, window_bounds = array<i64: 16, 1>}, {pipeline_mode = #tpu.pipeline_mode<synchronous>, transform_indices = @transform_5, window_bounds = array<i64: 3, 4, 12>}, {pipeline_mode = #tpu.pipeline_mode<synchronous>, transform_indices = @transform_6, window_bounds = array<i64: 3, 4, 1>}, {pipeline_mode = #tpu.pipeline_mode<synchronous>, transform_indices = @transform_7, window_bounds = array<i64: 3, 4, 1>}, {pipeline_mode = #tpu.pipeline_mode<synchronous>, transform_indices = @transform_8, window_bounds = array<i64: 3, 4, 1>}, {pipeline_mode = #tpu.pipeline_mode<synchronous>, transform_indices = @transform_9, window_bounds = array<i64: 16, 16>}, {pipeline_mode = #tpu.pipeline_mode<synchronous>, transform_indices = @transform_10, window_bounds = array<i64: 16, 1>}, {pipeline_mode = #tpu.pipeline_mode<synchronous>, transform_indices = @transform_11, window_bounds = array<i64: 16, 1>}, {pipeline_mode = #tpu.pipeline_mode<synchronous>, transform_indices = @transform_12, window_bounds = array<i64: 16, 1>}, {pipeline_mode = #tpu.pipeline_mode<synchronous>, transform_indices = @transform_13, window_bounds = array<i64: 8, 16>}, {pipeline_mode = #tpu.pipeline_mode<synchronous>, transform_indices = @transform_14, window_bounds = array<i64: 8, 1>}, {pipeline_mode = #tpu.pipeline_mode<synchronous>, transform_indices = @transform_15, window_bounds = array<i64: 16, 8>}, {pipeline_mode = #tpu.pipeline_mode<synchronous>, transform_indices = @transform_16, window_bounds = array<i64: 16, 1>}, {transform_indices = @transform_17, window_bounds = array<i64: 1, 16, 128>}]} {
    %c0 = arith.constant 0 : index
    %c0_0 = arith.constant 0 : index
    %c0_1 = arith.constant 0 : index
    %0 = vector.load %arg1[%c0, %c0_0, %c0_1] : memref<1x16x128xbf16, #tpu.memory_space<vmem>>, vector<1x16x128xbf16>
    %1 = vector.shape_cast %0 : vector<1x16x128xbf16> to vector<16x128xbf16>
    %2 = tpu.iota {dimensions = array<i32: 1>} : vector<1x128xi32>
    %c16_i32 = arith.constant 16 : i32
    %3 = vector.broadcast %c16_i32 : i32 to vector<1x128xi32>
    %4 = arith.cmpi slt, %2, %3 : vector<1x128xi32>
    %c0_2 = arith.constant 0 : index
    %c0_3 = arith.constant 0 : index
    %5 = vector.load %arg2[%c0_2, %c0_3] : memref<16x16xbf16, #tpu.memory_space<vmem>>, vector<16x16xbf16>
    %cst = arith.constant dense<0.000000e+00> : vector<16x128xf32>
    %6 = tpu.matmul %5, %1, %cst {dimension_numbers = #tpu.dot_dimension_numbers<[1], [0], [0], [1], [0, 0, 1, 1], [], []>} : vector<16x16xbf16>, vector<16x128xbf16>, vector<16x128xf32> -> vector<16x128xf32>
    %c0_4 = arith.constant 0 : index
    %c0_5 = arith.constant 0 : index
    %7 = vector.load %arg3[%c0_4, %c0_5] : memref<16x1xf32, #tpu.memory_space<vmem>>, vector<16x1xf32>
    %8 = vector.broadcast %7 : vector<16x1xf32> to vector<16x128xf32>
    %9 = arith.addf %6, %8 : vector<16x128xf32>
    %cst_6 = arith.constant 0.000000e+00 : f32
    %10 = vector.broadcast %cst_6 : f32 to vector<16x128xf32>
    %11 = arith.maximumf %9, %10 : vector<16x128xf32>
    %c0_7 = arith.constant 0 : index
    %c0_8 = arith.constant 0 : index
    %12 = vector.load %arg4[%c0_7, %c0_8] : memref<16x1xf32, #tpu.memory_space<vmem>>, vector<16x1xf32>
    %13 = vector.broadcast %12 : vector<16x1xf32> to vector<16x128xf32>
    %14 = arith.mulf %11, %13 : vector<16x128xf32>
    %c0_9 = arith.constant 0 : index
    %c0_10 = arith.constant 0 : index
    %15 = vector.load %arg5[%c0_9, %c0_10] : memref<16x1xf32, #tpu.memory_space<vmem>>, vector<16x1xf32>
    %16 = vector.broadcast %15 : vector<16x1xf32> to vector<16x128xf32>
    %17 = arith.addf %14, %16 : vector<16x128xf32>
    %18 = vector.extract_strided_slice %17 {offsets = [0, 0], sizes = [4, 128], strides = [1, 1]} : vector<16x128xf32> to vector<4x128xf32>
    %19 = arith.truncf %18 : vector<4x128xf32> to vector<4x128xbf16>
    %cst_11 = arith.constant 0.000000e+00 : f32
    %20 = vector.broadcast %cst_11 : f32 to vector<4x128xf32>
    %21 = vector.extract_strided_slice %17 {offsets = [4, 0], sizes = [4, 128], strides = [1, 1]} : vector<16x128xf32> to vector<4x128xf32>
    %22 = arith.addf %21, %20 : vector<4x128xf32>
    %cst_12 = arith.constant 0.000000e+00 : f32
    %23 = vector.shape_cast %4 : vector<1x128xi1> to vector<1x128xi1>
    %24 = vector.broadcast %23 : vector<1x128xi1> to vector<4x128xi1>
    %25 = vector.broadcast %cst_12 : f32 to vector<4x128xf32>
    %26 = arith.select %24, %22, %25 : vector<4x128xi1>, vector<4x128xf32>
    %27 = arith.truncf %26 : vector<4x128xf32> to vector<4x128xbf16>
    %cst_13 = arith.constant 0.000000e+00 : bf16
    %28 = vector.broadcast %cst_13 : bf16 to vector<4x3xbf16>
    %29 = tpu.concatenate %28, %27, %28 in 1 : vector<4x3xbf16>, vector<4x128xbf16>, vector<4x3xbf16> -> vector<4x134xbf16>
    %30 = vector.extract_strided_slice %29 {offsets = [0, 0], sizes = [4, 128], strides = [1, 1]} : vector<4x134xbf16> to vector<4x128xbf16>
    %31 = vector.extract_strided_slice %29 {offsets = [0, 3], sizes = [4, 128], strides = [1, 1]} : vector<4x134xbf16> to vector<4x128xbf16>
    %32 = vector.extract_strided_slice %29 {offsets = [0, 6], sizes = [4, 128], strides = [1, 1]} : vector<4x134xbf16> to vector<4x128xbf16>
    %33 = tpu.concatenate %30, %31, %32 in 0 : vector<4x128xbf16>, vector<4x128xbf16>, vector<4x128xbf16> -> vector<12x128xbf16>
    %c0_14 = arith.constant 0 : index
    %c0_15 = arith.constant 0 : index
    %c0_16 = arith.constant 0 : index
    %34 = vector.load %arg6[%c0_14, %c0_15, %c0_16] : memref<3x4x12xbf16, #tpu.memory_space<vmem>>, vector<1x4x12xbf16>
    %35 = vector.shape_cast %34 : vector<1x4x12xbf16> to vector<4x12xbf16>
    %cst_17 = arith.constant dense<0.000000e+00> : vector<4x128xf32>
    %36 = tpu.matmul %35, %33, %cst_17 {dimension_numbers = #tpu.dot_dimension_numbers<[1], [0], [0], [1], [0, 0, 1, 1], [], []>} : vector<4x12xbf16>, vector<12x128xbf16>, vector<4x128xf32> -> vector<4x128xf32>
    %c0_18 = arith.constant 0 : index
    %c0_19 = arith.constant 0 : index
    %c0_20 = arith.constant 0 : index
    %37 = vector.load %arg7[%c0_18, %c0_19, %c0_20] : memref<3x4x1xf32, #tpu.memory_space<vmem>>, vector<1x4x1xf32>
    %38 = vector.shape_cast %37 : vector<1x4x1xf32> to vector<4x1xf32>
    %39 = vector.broadcast %38 : vector<4x1xf32> to vector<4x128xf32>
    %40 = arith.addf %36, %39 : vector<4x128xf32>
    %cst_21 = arith.constant 0.000000e+00 : f32
    %41 = vector.broadcast %cst_21 : f32 to vector<4x128xf32>
    %42 = arith.maximumf %40, %41 : vector<4x128xf32>
    %c0_22 = arith.constant 0 : index
    %c0_23 = arith.constant 0 : index
    %c0_24 = arith.constant 0 : index
    %43 = vector.load %arg8[%c0_22, %c0_23, %c0_24] : memref<3x4x1xf32, #tpu.memory_space<vmem>>, vector<1x4x1xf32>
    %44 = vector.shape_cast %43 : vector<1x4x1xf32> to vector<4x1xf32>
    %45 = vector.broadcast %44 : vector<4x1xf32> to vector<4x128xf32>
    %46 = arith.mulf %42, %45 : vector<4x128xf32>
    %c0_25 = arith.constant 0 : index
    %c0_26 = arith.constant 0 : index
    %c0_27 = arith.constant 0 : index
    %47 = vector.load %arg9[%c0_25, %c0_26, %c0_27] : memref<3x4x1xf32, #tpu.memory_space<vmem>>, vector<1x4x1xf32>
    %48 = vector.shape_cast %47 : vector<1x4x1xf32> to vector<4x1xf32>
    %49 = vector.broadcast %48 : vector<4x1xf32> to vector<4x128xf32>
    %50 = arith.addf %46, %49 : vector<4x128xf32>
    %51 = arith.truncf %50 : vector<4x128xf32> to vector<4x128xbf16>
    %52 = vector.extract_strided_slice %17 {offsets = [8, 0], sizes = [4, 128], strides = [1, 1]} : vector<16x128xf32> to vector<4x128xf32>
    %53 = arith.addf %52, %50 : vector<4x128xf32>
    %cst_28 = arith.constant 0.000000e+00 : f32
    %54 = vector.shape_cast %4 : vector<1x128xi1> to vector<1x128xi1>
    %55 = vector.broadcast %54 : vector<1x128xi1> to vector<4x128xi1>
    %56 = vector.broadcast %cst_28 : f32 to vector<4x128xf32>
    %57 = arith.select %55, %53, %56 : vector<4x128xi1>, vector<4x128xf32>
    %58 = arith.truncf %57 : vector<4x128xf32> to vector<4x128xbf16>
    %cst_29 = arith.constant 0.000000e+00 : bf16
    %59 = vector.broadcast %cst_29 : bf16 to vector<4x3xbf16>
    %60 = tpu.concatenate %59, %58, %59 in 1 : vector<4x3xbf16>, vector<4x128xbf16>, vector<4x3xbf16> -> vector<4x134xbf16>
    %61 = vector.extract_strided_slice %60 {offsets = [0, 0], sizes = [4, 128], strides = [1, 1]} : vector<4x134xbf16> to vector<4x128xbf16>
    %62 = vector.extract_strided_slice %60 {offsets = [0, 3], sizes = [4, 128], strides = [1, 1]} : vector<4x134xbf16> to vector<4x128xbf16>
    %63 = vector.extract_strided_slice %60 {offsets = [0, 6], sizes = [4, 128], strides = [1, 1]} : vector<4x134xbf16> to vector<4x128xbf16>
    %64 = tpu.concatenate %61, %62, %63 in 0 : vector<4x128xbf16>, vector<4x128xbf16>, vector<4x128xbf16> -> vector<12x128xbf16>
    %c1 = arith.constant 1 : index
    %c0_30 = arith.constant 0 : index
    %c0_31 = arith.constant 0 : index
    %65 = vector.load %arg6[%c1, %c0_30, %c0_31] : memref<3x4x12xbf16, #tpu.memory_space<vmem>>, vector<1x4x12xbf16>
    %66 = vector.shape_cast %65 : vector<1x4x12xbf16> to vector<4x12xbf16>
    %cst_32 = arith.constant dense<0.000000e+00> : vector<4x128xf32>
    %67 = tpu.matmul %66, %64, %cst_32 {dimension_numbers = #tpu.dot_dimension_numbers<[1], [0], [0], [1], [0, 0, 1, 1], [], []>} : vector<4x12xbf16>, vector<12x128xbf16>, vector<4x128xf32> -> vector<4x128xf32>
    %c1_33 = arith.constant 1 : index
    %c0_34 = arith.constant 0 : index
    %c0_35 = arith.constant 0 : index
    %68 = vector.load %arg7[%c1_33, %c0_34, %c0_35] : memref<3x4x1xf32, #tpu.memory_space<vmem>>, vector<1x4x1xf32>
    %69 = vector.shape_cast %68 : vector<1x4x1xf32> to vector<4x1xf32>
    %70 = vector.broadcast %69 : vector<4x1xf32> to vector<4x128xf32>
    %71 = arith.addf %67, %70 : vector<4x128xf32>
    %cst_36 = arith.constant 0.000000e+00 : f32
    %72 = vector.broadcast %cst_36 : f32 to vector<4x128xf32>
    %73 = arith.maximumf %71, %72 : vector<4x128xf32>
    %c1_37 = arith.constant 1 : index
    %c0_38 = arith.constant 0 : index
    %c0_39 = arith.constant 0 : index
    %74 = vector.load %arg8[%c1_37, %c0_38, %c0_39] : memref<3x4x1xf32, #tpu.memory_space<vmem>>, vector<1x4x1xf32>
    %75 = vector.shape_cast %74 : vector<1x4x1xf32> to vector<4x1xf32>
    %76 = vector.broadcast %75 : vector<4x1xf32> to vector<4x128xf32>
    %77 = arith.mulf %73, %76 : vector<4x128xf32>
    %c1_40 = arith.constant 1 : index
    %c0_41 = arith.constant 0 : index
    %c0_42 = arith.constant 0 : index
    %78 = vector.load %arg9[%c1_40, %c0_41, %c0_42] : memref<3x4x1xf32, #tpu.memory_space<vmem>>, vector<1x4x1xf32>
    %79 = vector.shape_cast %78 : vector<1x4x1xf32> to vector<4x1xf32>
    %80 = vector.broadcast %79 : vector<4x1xf32> to vector<4x128xf32>
    %81 = arith.addf %77, %80 : vector<4x128xf32>
    %82 = arith.truncf %81 : vector<4x128xf32> to vector<4x128xbf16>
    %83 = vector.extract_strided_slice %17 {offsets = [12, 0], sizes = [4, 128], strides = [1, 1]} : vector<16x128xf32> to vector<4x128xf32>
    %84 = arith.addf %83, %81 : vector<4x128xf32>
    %cst_43 = arith.constant 0.000000e+00 : f32
    %85 = vector.shape_cast %4 : vector<1x128xi1> to vector<1x128xi1>
    %86 = vector.broadcast %85 : vector<1x128xi1> to vector<4x128xi1>
    %87 = vector.broadcast %cst_43 : f32 to vector<4x128xf32>
    %88 = arith.select %86, %84, %87 : vector<4x128xi1>, vector<4x128xf32>
    %89 = arith.truncf %88 : vector<4x128xf32> to vector<4x128xbf16>
    %cst_44 = arith.constant 0.000000e+00 : bf16
    %90 = vector.broadcast %cst_44 : bf16 to vector<4x3xbf16>
    %91 = tpu.concatenate %90, %89, %90 in 1 : vector<4x3xbf16>, vector<4x128xbf16>, vector<4x3xbf16> -> vector<4x134xbf16>
    %92 = vector.extract_strided_slice %91 {offsets = [0, 0], sizes = [4, 128], strides = [1, 1]} : vector<4x134xbf16> to vector<4x128xbf16>
    %93 = vector.extract_strided_slice %91 {offsets = [0, 3], sizes = [4, 128], strides = [1, 1]} : vector<4x134xbf16> to vector<4x128xbf16>
    %94 = vector.extract_strided_slice %91 {offsets = [0, 6], sizes = [4, 128], strides = [1, 1]} : vector<4x134xbf16> to vector<4x128xbf16>
    %95 = tpu.concatenate %92, %93, %94 in 0 : vector<4x128xbf16>, vector<4x128xbf16>, vector<4x128xbf16> -> vector<12x128xbf16>
    %c2 = arith.constant 2 : index
    %c0_45 = arith.constant 0 : index
    %c0_46 = arith.constant 0 : index
    %96 = vector.load %arg6[%c2, %c0_45, %c0_46] : memref<3x4x12xbf16, #tpu.memory_space<vmem>>, vector<1x4x12xbf16>
    %97 = vector.shape_cast %96 : vector<1x4x12xbf16> to vector<4x12xbf16>
    %cst_47 = arith.constant dense<0.000000e+00> : vector<4x128xf32>
    %98 = tpu.matmul %97, %95, %cst_47 {dimension_numbers = #tpu.dot_dimension_numbers<[1], [0], [0], [1], [0, 0, 1, 1], [], []>} : vector<4x12xbf16>, vector<12x128xbf16>, vector<4x128xf32> -> vector<4x128xf32>
    %c2_48 = arith.constant 2 : index
    %c0_49 = arith.constant 0 : index
    %c0_50 = arith.constant 0 : index
    %99 = vector.load %arg7[%c2_48, %c0_49, %c0_50] : memref<3x4x1xf32, #tpu.memory_space<vmem>>, vector<1x4x1xf32>
    %100 = vector.shape_cast %99 : vector<1x4x1xf32> to vector<4x1xf32>
    %101 = vector.broadcast %100 : vector<4x1xf32> to vector<4x128xf32>
    %102 = arith.addf %98, %101 : vector<4x128xf32>
    %cst_51 = arith.constant 0.000000e+00 : f32
    %103 = vector.broadcast %cst_51 : f32 to vector<4x128xf32>
    %104 = arith.maximumf %102, %103 : vector<4x128xf32>
    %c2_52 = arith.constant 2 : index
    %c0_53 = arith.constant 0 : index
    %c0_54 = arith.constant 0 : index
    %105 = vector.load %arg8[%c2_52, %c0_53, %c0_54] : memref<3x4x1xf32, #tpu.memory_space<vmem>>, vector<1x4x1xf32>
    %106 = vector.shape_cast %105 : vector<1x4x1xf32> to vector<4x1xf32>
    %107 = vector.broadcast %106 : vector<4x1xf32> to vector<4x128xf32>
    %108 = arith.mulf %104, %107 : vector<4x128xf32>
    %c2_55 = arith.constant 2 : index
    %c0_56 = arith.constant 0 : index
    %c0_57 = arith.constant 0 : index
    %109 = vector.load %arg9[%c2_55, %c0_56, %c0_57] : memref<3x4x1xf32, #tpu.memory_space<vmem>>, vector<1x4x1xf32>
    %110 = vector.shape_cast %109 : vector<1x4x1xf32> to vector<4x1xf32>
    %111 = vector.broadcast %110 : vector<4x1xf32> to vector<4x128xf32>
    %112 = arith.addf %108, %111 : vector<4x128xf32>
    %113 = arith.truncf %112 : vector<4x128xf32> to vector<4x128xbf16>
    %114 = tpu.concatenate %19, %51, %82, %113 in 0 : vector<4x128xbf16>, vector<4x128xbf16>, vector<4x128xbf16>, vector<4x128xbf16> -> vector<16x128xbf16>
    %c0_58 = arith.constant 0 : index
    %c0_59 = arith.constant 0 : index
    %115 = vector.load %arg10[%c0_58, %c0_59] : memref<16x16xbf16, #tpu.memory_space<vmem>>, vector<16x16xbf16>
    %cst_60 = arith.constant dense<0.000000e+00> : vector<16x128xf32>
    %116 = tpu.matmul %115, %114, %cst_60 {dimension_numbers = #tpu.dot_dimension_numbers<[1], [0], [0], [1], [0, 0, 1, 1], [], []>} : vector<16x16xbf16>, vector<16x128xbf16>, vector<16x128xf32> -> vector<16x128xf32>
    %c0_61 = arith.constant 0 : index
    %c0_62 = arith.constant 0 : index
    %117 = vector.load %arg11[%c0_61, %c0_62] : memref<16x1xf32, #tpu.memory_space<vmem>>, vector<16x1xf32>
    %118 = vector.broadcast %117 : vector<16x1xf32> to vector<16x128xf32>
    %119 = arith.addf %116, %118 : vector<16x128xf32>
    %cst_63 = arith.constant 0.000000e+00 : f32
    %120 = vector.broadcast %cst_63 : f32 to vector<16x128xf32>
    %121 = arith.maximumf %119, %120 : vector<16x128xf32>
    %c0_64 = arith.constant 0 : index
    %c0_65 = arith.constant 0 : index
    %122 = vector.load %arg12[%c0_64, %c0_65] : memref<16x1xf32, #tpu.memory_space<vmem>>, vector<16x1xf32>
    %123 = vector.broadcast %122 : vector<16x1xf32> to vector<16x128xf32>
    %124 = arith.mulf %121, %123 : vector<16x128xf32>
    %c0_66 = arith.constant 0 : index
    %c0_67 = arith.constant 0 : index
    %125 = vector.load %arg13[%c0_66, %c0_67] : memref<16x1xf32, #tpu.memory_space<vmem>>, vector<16x1xf32>
    %126 = vector.broadcast %125 : vector<16x1xf32> to vector<16x128xf32>
    %127 = arith.addf %124, %126 : vector<16x128xf32>
    %cst_68 = arith.constant 0.000000e+00 : f32
    %128 = vector.shape_cast %4 : vector<1x128xi1> to vector<1x128xi1>
    %129 = vector.broadcast %128 : vector<1x128xi1> to vector<16x128xi1>
    %130 = vector.broadcast %cst_68 : f32 to vector<16x128xf32>
    %131 = arith.select %129, %127, %130 : vector<16x128xi1>, vector<16x128xf32>
    %cst_69 = arith.constant dense<0.000000e+00> : vector<16xf32>
    %132 = vector.multi_reduction <add>, %131, %cst_69 [1] : vector<16x128xf32> to vector<16xf32>
    %133 = vector.shape_cast %132 : vector<16xf32> to vector<16x1xf32>
    %cst_70 = arith.constant 6.250000e-02 : f32
    %134 = vector.broadcast %cst_70 : f32 to vector<16x1xf32>
    %135 = arith.mulf %133, %134 : vector<16x1xf32>
    %c0_71 = arith.constant 0 : index
    %c0_72 = arith.constant 0 : index
    %136 = vector.load %arg14[%c0_71, %c0_72] : memref<8x16xf32, #tpu.memory_space<vmem>>, vector<8x16xf32>
    %cst_73 = arith.constant dense<0.000000e+00> : vector<8x1xf32>
    %137 = tpu.matmul %136, %135, %cst_73 {dimension_numbers = #tpu.dot_dimension_numbers<[1], [0], [0], [1], [0, 0, 1, 1], [], []>} : vector<8x16xf32>, vector<16x1xf32>, vector<8x1xf32> -> vector<8x1xf32>
    %c0_74 = arith.constant 0 : index
    %c0_75 = arith.constant 0 : index
    %138 = vector.load %arg15[%c0_74, %c0_75] : memref<8x1xf32, #tpu.memory_space<vmem>>, vector<8x1xf32>
    %139 = arith.addf %137, %138 : vector<8x1xf32>
    %cst_76 = arith.constant 0.000000e+00 : f32
    %140 = vector.broadcast %cst_76 : f32 to vector<8x1xf32>
    %141 = arith.maximumf %139, %140 : vector<8x1xf32>
    %c0_77 = arith.constant 0 : index
    %c0_78 = arith.constant 0 : index
    %142 = vector.load %arg16[%c0_77, %c0_78] : memref<16x8xf32, #tpu.memory_space<vmem>>, vector<16x8xf32>
    %cst_79 = arith.constant dense<0.000000e+00> : vector<16x1xf32>
    %143 = tpu.matmul %142, %141, %cst_79 {dimension_numbers = #tpu.dot_dimension_numbers<[1], [0], [0], [1], [0, 0, 1, 1], [], []>} : vector<16x8xf32>, vector<8x1xf32>, vector<16x1xf32> -> vector<16x1xf32>
    %c0_80 = arith.constant 0 : index
    %c0_81 = arith.constant 0 : index
    %144 = vector.load %arg17[%c0_80, %c0_81] : memref<16x1xf32, #tpu.memory_space<vmem>>, vector<16x1xf32>
    %145 = arith.addf %143, %144 : vector<16x1xf32>
    %146 = arith.negf %145 : vector<16x1xf32>
    %147 = math.exp %146 : vector<16x1xf32>
    %cst_82 = arith.constant 1.000000e+00 : f32
    %148 = vector.broadcast %cst_82 : f32 to vector<16x1xf32>
    %149 = arith.addf %148, %147 : vector<16x1xf32>
    %150 = arith.divf %148, %149 : vector<16x1xf32>
    %151 = vector.broadcast %150 : vector<16x1xf32> to vector<16x128xf32>
    %152 = arith.mulf %127, %151 : vector<16x128xf32>
    %153 = arith.extf %1 : vector<16x128xbf16> to vector<16x128xf32>
    %154 = arith.addf %152, %153 : vector<16x128xf32>
    %155 = arith.truncf %154 : vector<16x128xf32> to vector<16x128xbf16>
    %c0_83 = arith.constant 0 : index
    %c0_84 = arith.constant 0 : index
    %c0_85 = arith.constant 0 : index
    %156 = vector.load %arg18[%c0_83, %c0_84, %c0_85] : memref<1x16x128xbf16, #tpu.memory_space<vmem>>, vector<1x16x128xbf16>
    %157 = vector.shape_cast %156 : vector<1x16x128xbf16> to vector<16x128xbf16>
    %158 = vector.shape_cast %155 : vector<16x128xbf16> to vector<1x16x128xbf16>
    tpu.vector_store %arg18[%c0_83, %c0_84, %c0_85], %158 {strides = array<i32>} : memref<1x16x128xbf16, #tpu.memory_space<vmem>>, vector<1x16x128xbf16>,
    return
  }
  func.func @transform_0(%arg0: i32) -> (i32, i32, i32) {
    %c0_i32 = arith.constant 0 : i32
    %c0_i32_0 = arith.constant 0 : i32
    %c0_i32_1 = arith.constant 0 : i32
    return %arg0, %c0_i32, %c0_i32_0 : i32, i32, i32
  }
  func.func @transform_1(%arg0: i32) -> (i32, i32) {
    %c0_i32 = arith.constant 0 : i32
    %c0_i32_0 = arith.constant 0 : i32
    %c0_i32_1 = arith.constant 0 : i32
    return %c0_i32, %c0_i32_0 : i32, i32
  }
  func.func @transform_2(%arg0: i32) -> (i32, i32) {
    %c0_i32 = arith.constant 0 : i32
    %c0_i32_0 = arith.constant 0 : i32
    %c0_i32_1 = arith.constant 0 : i32
    return %c0_i32, %c0_i32_0 : i32, i32
  }
  func.func @transform_3(%arg0: i32) -> (i32, i32) {
    %c0_i32 = arith.constant 0 : i32
    %c0_i32_0 = arith.constant 0 : i32
    %c0_i32_1 = arith.constant 0 : i32
    return %c0_i32, %c0_i32_0 : i32, i32
  }
  func.func @transform_4(%arg0: i32) -> (i32, i32) {
    %c0_i32 = arith.constant 0 : i32
    %c0_i32_0 = arith.constant 0 : i32
    %c0_i32_1 = arith.constant 0 : i32
    return %c0_i32, %c0_i32_0 : i32, i32
  }
  func.func @transform_5(%arg0: i32) -> (i32, i32, i32) {
    %c0_i32 = arith.constant 0 : i32
    %c0_i32_0 = arith.constant 0 : i32
    %c0_i32_1 = arith.constant 0 : i32
    %c0_i32_2 = arith.constant 0 : i32
    return %c0_i32, %c0_i32_0, %c0_i32_1 : i32, i32, i32
  }
  func.func @transform_6(%arg0: i32) -> (i32, i32, i32) {
    %c0_i32 = arith.constant 0 : i32
    %c0_i32_0 = arith.constant 0 : i32
    %c0_i32_1 = arith.constant 0 : i32
    %c0_i32_2 = arith.constant 0 : i32
    return %c0_i32, %c0_i32_0, %c0_i32_1 : i32, i32, i32
  }
  func.func @transform_7(%arg0: i32) -> (i32, i32, i32) {
    %c0_i32 = arith.constant 0 : i32
    %c0_i32_0 = arith.constant 0 : i32
    %c0_i32_1 = arith.constant 0 : i32
    %c0_i32_2 = arith.constant 0 : i32
    return %c0_i32, %c0_i32_0, %c0_i32_1 : i32, i32, i32
  }
  func.func @transform_8(%arg0: i32) -> (i32, i32, i32) {
    %c0_i32 = arith.constant 0 : i32
    %c0_i32_0 = arith.constant 0 : i32
    %c0_i32_1 = arith.constant 0 : i32
    %c0_i32_2 = arith.constant 0 : i32
    return %c0_i32, %c0_i32_0, %c0_i32_1 : i32, i32, i32
  }
  func.func @transform_9(%arg0: i32) -> (i32, i32) {
    %c0_i32 = arith.constant 0 : i32
    %c0_i32_0 = arith.constant 0 : i32
    %c0_i32_1 = arith.constant 0 : i32
    return %c0_i32, %c0_i32_0 : i32, i32
  }
  func.func @transform_10(%arg0: i32) -> (i32, i32) {
    %c0_i32 = arith.constant 0 : i32
    %c0_i32_0 = arith.constant 0 : i32
    %c0_i32_1 = arith.constant 0 : i32
    return %c0_i32, %c0_i32_0 : i32, i32
  }
  func.func @transform_11(%arg0: i32) -> (i32, i32) {
    %c0_i32 = arith.constant 0 : i32
    %c0_i32_0 = arith.constant 0 : i32
    %c0_i32_1 = arith.constant 0 : i32
    return %c0_i32, %c0_i32_0 : i32, i32
  }
  func.func @transform_12(%arg0: i32) -> (i32, i32) {
    %c0_i32 = arith.constant 0 : i32
    %c0_i32_0 = arith.constant 0 : i32
    %c0_i32_1 = arith.constant 0 : i32
    return %c0_i32, %c0_i32_0 : i32, i32
  }
  func.func @transform_13(%arg0: i32) -> (i32, i32) {
    %c0_i32 = arith.constant 0 : i32
    %c0_i32_0 = arith.constant 0 : i32
    %c0_i32_1 = arith.constant 0 : i32
    return %c0_i32, %c0_i32_0 : i32, i32
  }
  func.func @transform_14(%arg0: i32) -> (i32, i32) {
    %c0_i32 = arith.constant 0 : i32
    %c0_i32_0 = arith.constant 0 : i32
    %c0_i32_1 = arith.constant 0 : i32
    return %c0_i32, %c0_i32_0 : i32, i32
  }
  func.func @transform_15(%arg0: i32) -> (i32, i32) {
    %c0_i32 = arith.constant 0 : i32
    %c0_i32_0 = arith.constant 0 : i32
    %c0_i32_1 = arith.constant 0 : i32
    return %c0_i32, %c0_i32_0 : i32, i32
  }
  func.func @transform_16(%arg0: i32) -> (i32, i32) {
    %c0_i32 = arith.constant 0 : i32
    %c0_i32_0 = arith.constant 0 : i32
    %c0_i32_1 = arith.constant 0 : i32
    return %c0_i32, %c0_i32_0 : i32, i32
  }
  func.func @transform_17(%arg0: i32) -> (i32, i32, i32) {
    %c0_i32 = arith.constant 0 : i32
    %c0_i32_0 = arith.constant 0 : i32
    %c0_i32_1 = arith.constant 0 : i32
    return %arg0, %c0_i32, %c0_i32_0 : i32, i32, i32
  }
}

module attributes {stable_mosaic.version = 11 : i64} {
  func.func @_se_res2_kernel(%arg0: i32, %arg1: memref<1x16x128xbf16, #tpu.memory_space<vmem>>, %arg2: memref<16x16xbf16, #tpu.memory_space<vmem>>, %arg3: memref<16x1xf32, #tpu.memory_space<vmem>>, %arg4: memref<16x1xf32, #tpu.memory_space<vmem>>, %arg5: memref<16x1xf32, #tpu.memory_space<vmem>>, %arg6: memref<3x4x12xbf16, #tpu.memory_space<vmem>>, %arg7: memref<3x4x1xf32, #tpu.memory_space<vmem>>, %arg8: memref<3x4x1xf32, #tpu.memory_space<vmem>>, %arg9: memref<3x4x1xf32, #tpu.memory_space<vmem>>, %arg10: memref<16x16xbf16, #tpu.memory_space<vmem>>, %arg11: memref<16x1xf32, #tpu.memory_space<vmem>>, %arg12: memref<16x1xf32, #tpu.memory_space<vmem>>, %arg13: memref<16x1xf32, #tpu.memory_space<vmem>>, %arg14: memref<8x16xf32, #tpu.memory_space<vmem>>, %arg15: memref<8x1xf32, #tpu.memory_space<vmem>>, %arg16: memref<16x8xf32, #tpu.memory_space<vmem>>, %arg17: memref<16x1xf32, #tpu.memory_space<vmem>>, %arg18: memref<1x16x128xbf16, #tpu.memory_space<vmem>>) attributes {dimension_semantics = [#tpu.dimension_semantics<parallel>], iteration_bounds = array<i64: 2>, scalar_prefetch = 0 : i64, scratch_operands = 0 : i64, tpu.core_type = #tpu.core_type<tc>, window_params = [{transform_indices = @transform_0, window_bounds = array<i64: 1, 16, 128>}, {pipeline_mode = #tpu.pipeline_mode<synchronous>, transform_indices = @transform_1, window_bounds = array<i64: 16, 16>}, {pipeline_mode = #tpu.pipeline_mode<synchronous>, transform_indices = @transform_2, window_bounds = array<i64: 16, 1>}, {pipeline_mode = #tpu.pipeline_mode<synchronous>, transform_indices = @transform_3, window_bounds = array<i64: 16, 1>}, {pipeline_mode = #tpu.pipeline_mode<synchronous>, transform_indices = @transform_4, window_bounds = array<i64: 16, 1>}, {pipeline_mode = #tpu.pipeline_mode<synchronous>, transform_indices = @transform_5, window_bounds = array<i64: 3, 4, 12>}, {pipeline_mode = #tpu.pipeline_mode<synchronous>, transform_indices = @transform_6, window_bounds = array<i64: 3, 4, 1>}, {pipeline_mode = #tpu.pipeline_mode<synchronous>, transform_indices = @transform_7, window_bounds = array<i64: 3, 4, 1>}, {pipeline_mode = #tpu.pipeline_mode<synchronous>, transform_indices = @transform_8, window_bounds = array<i64: 3, 4, 1>}, {pipeline_mode = #tpu.pipeline_mode<synchronous>, transform_indices = @transform_9, window_bounds = array<i64: 16, 16>}, {pipeline_mode = #tpu.pipeline_mode<synchronous>, transform_indices = @transform_10, window_bounds = array<i64: 16, 1>}, {pipeline_mode = #tpu.pipeline_mode<synchronous>, transform_indices = @transform_11, window_bounds = array<i64: 16, 1>}, {pipeline_mode = #tpu.pipeline_mode<synchronous>, transform_indices = @transform_12, window_bounds = array<i64: 16, 1>}, {pipeline_mode = #tpu.pipeline_mode<synchronous>, transform_indices = @transform_13, window_bounds = array<i64: 8, 16>}, {pipeline_mode = #tpu.pipeline_mode<synchronous>, transform_indices = @transform_14, window_bounds = array<i64: 8, 1>}, {pipeline_mode = #tpu.pipeline_mode<synchronous>, transform_indices = @transform_15, window_bounds = array<i64: 16, 8>}, {pipeline_mode = #tpu.pipeline_mode<synchronous>, transform_indices = @transform_16, window_bounds = array<i64: 16, 1>}, {transform_indices = @transform_17, window_bounds = array<i64: 1, 16, 128>}]} {
    %c0 = arith.constant 0 : index
    %c0_0 = arith.constant 0 : index
    %c0_1 = arith.constant 0 : index
    %0 = vector.load %arg1[%c0, %c0_0, %c0_1] : memref<1x16x128xbf16, #tpu.memory_space<vmem>>, vector<1x16x128xbf16>
    %1 = vector.shape_cast %0 : vector<1x16x128xbf16> to vector<16x128xbf16>
    %2 = tpu.iota {dimensions = array<i32: 1>} : vector<1x128xi32>
    %c16_i32 = arith.constant 16 : i32
    %3 = vector.broadcast %c16_i32 : i32 to vector<1x128xi32>
    %4 = arith.cmpi slt, %2, %3 : vector<1x128xi32>
    %c0_2 = arith.constant 0 : index
    %c0_3 = arith.constant 0 : index
    %5 = vector.load %arg2[%c0_2, %c0_3] : memref<16x16xbf16, #tpu.memory_space<vmem>>, vector<16x16xbf16>
    %cst = arith.constant dense<0.000000e+00> : vector<16x128xf32>
    %6 = tpu.matmul %5, %1, %cst {dimension_numbers = #tpu.dot_dimension_numbers<[1], [0], [0], [1], [0, 0, 1, 1], [], []>} : vector<16x16xbf16>, vector<16x128xbf16>, vector<16x128xf32> -> vector<16x128xf32>
    %c0_4 = arith.constant 0 : index
    %c0_5 = arith.constant 0 : index
    %7 = vector.load %arg3[%c0_4, %c0_5] : memref<16x1xf32, #tpu.memory_space<vmem>>, vector<16x1xf32>
    %8 = vector.broadcast %7 : vector<16x1xf32> to vector<16x128xf32>
    %9 = arith.addf %6, %8 : vector<16x128xf32>
    %cst_6 = arith.constant 0.000000e+00 : f32
    %10 = vector.broadcast %cst_6 : f32 to vector<16x128xf32>
    %11 = arith.maximumf %9, %10 : vector<16x128xf32>
    %c0_7 = arith.constant 0 : index
    %c0_8 = arith.constant 0 : index
    %12 = vector.load %arg4[%c0_7, %c0_8] : memref<16x1xf32, #tpu.memory_space<vmem>>, vector<16x1xf32>
    %13 = vector.broadcast %12 : vector<16x1xf32> to vector<16x128xf32>
    %14 = arith.mulf %11, %13 : vector<16x128xf32>
    %c0_9 = arith.constant 0 : index
    %c0_10 = arith.constant 0 : index
    %15 = vector.load %arg5[%c0_9, %c0_10] : memref<16x1xf32, #tpu.memory_space<vmem>>, vector<16x1xf32>
    %16 = vector.broadcast %15 : vector<16x1xf32> to vector<16x128xf32>
    %17 = arith.addf %14, %16 : vector<16x128xf32>
    %18 = vector.extract_strided_slice %17 {offsets = [0, 0], sizes = [4, 128], strides = [1, 1]} : vector<16x128xf32> to vector<4x128xf32>
    %19 = arith.truncf %18 : vector<4x128xf32> to vector<4x128xbf16>
    %cst_11 = arith.constant 0.000000e+00 : f32
    %20 = vector.broadcast %cst_11 : f32 to vector<4x128xf32>
    %21 = vector.extract_strided_slice %17 {offsets = [4, 0], sizes = [4, 128], strides = [1, 1]} : vector<16x128xf32> to vector<4x128xf32>
    %22 = arith.addf %21, %20 : vector<4x128xf32>
    %cst_12 = arith.constant 0.000000e+00 : f32
    %23 = vector.shape_cast %4 : vector<1x128xi1> to vector<1x128xi1>
    %24 = vector.broadcast %23 : vector<1x128xi1> to vector<4x128xi1>
    %25 = vector.broadcast %cst_12 : f32 to vector<4x128xf32>
    %26 = arith.select %24, %22, %25 : vector<4x128xi1>, vector<4x128xf32>
    %27 = arith.truncf %26 : vector<4x128xf32> to vector<4x128xbf16>
    %cst_13 = arith.constant 0.000000e+00 : bf16
    %28 = vector.broadcast %cst_13 : bf16 to vector<4x4xbf16>
    %29 = tpu.concatenate %28, %27, %28 in 1 : vector<4x4xbf16>, vector<4x128xbf16>, vector<4x4xbf16> -> vector<4x136xbf16>
    %30 = vector.extract_strided_slice %29 {offsets = [0, 0], sizes = [4, 128], strides = [1, 1]} : vector<4x136xbf16> to vector<4x128xbf16>
    %31 = vector.extract_strided_slice %29 {offsets = [0, 4], sizes = [4, 128], strides = [1, 1]} : vector<4x136xbf16> to vector<4x128xbf16>
    %32 = vector.extract_strided_slice %29 {offsets = [0, 8], sizes = [4, 128], strides = [1, 1]} : vector<4x136xbf16> to vector<4x128xbf16>
    %33 = tpu.concatenate %30, %31, %32 in 0 : vector<4x128xbf16>, vector<4x128xbf16>, vector<4x128xbf16> -> vector<12x128xbf16>
    %c0_14 = arith.constant 0 : index
    %c0_15 = arith.constant 0 : index
    %c0_16 = arith.constant 0 : index
    %34 = vector.load %arg6[%c0_14, %c0_15, %c0_16] : memref<3x4x12xbf16, #tpu.memory_space<vmem>>, vector<1x4x12xbf16>
    %35 = vector.shape_cast %34 : vector<1x4x12xbf16> to vector<4x12xbf16>
    %cst_17 = arith.constant dense<0.000000e+00> : vector<4x128xf32>
    %36 = tpu.matmul %35, %33, %cst_17 {dimension_numbers = #tpu.dot_dimension_numbers<[1], [0], [0], [1], [0, 0, 1, 1], [], []>} : vector<4x12xbf16>, vector<12x128xbf16>, vector<4x128xf32> -> vector<4x128xf32>
    %c0_18 = arith.constant 0 : index
    %c0_19 = arith.constant 0 : index
    %c0_20 = arith.constant 0 : index
    %37 = vector.load %arg7[%c0_18, %c0_19, %c0_20] : memref<3x4x1xf32, #tpu.memory_space<vmem>>, vector<1x4x1xf32>
    %38 = vector.shape_cast %37 : vector<1x4x1xf32> to vector<4x1xf32>
    %39 = vector.broadcast %38 : vector<4x1xf32> to vector<4x128xf32>
    %40 = arith.addf %36, %39 : vector<4x128xf32>
    %cst_21 = arith.constant 0.000000e+00 : f32
    %41 = vector.broadcast %cst_21 : f32 to vector<4x128xf32>
    %42 = arith.maximumf %40, %41 : vector<4x128xf32>
    %c0_22 = arith.constant 0 : index
    %c0_23 = arith.constant 0 : index
    %c0_24 = arith.constant 0 : index
    %43 = vector.load %arg8[%c0_22, %c0_23, %c0_24] : memref<3x4x1xf32, #tpu.memory_space<vmem>>, vector<1x4x1xf32>
    %44 = vector.shape_cast %43 : vector<1x4x1xf32> to vector<4x1xf32>
    %45 = vector.broadcast %44 : vector<4x1xf32> to vector<4x128xf32>
    %46 = arith.mulf %42, %45 : vector<4x128xf32>
    %c0_25 = arith.constant 0 : index
    %c0_26 = arith.constant 0 : index
    %c0_27 = arith.constant 0 : index
    %47 = vector.load %arg9[%c0_25, %c0_26, %c0_27] : memref<3x4x1xf32, #tpu.memory_space<vmem>>, vector<1x4x1xf32>
    %48 = vector.shape_cast %47 : vector<1x4x1xf32> to vector<4x1xf32>
    %49 = vector.broadcast %48 : vector<4x1xf32> to vector<4x128xf32>
    %50 = arith.addf %46, %49 : vector<4x128xf32>
    %51 = arith.truncf %50 : vector<4x128xf32> to vector<4x128xbf16>
    %52 = vector.extract_strided_slice %17 {offsets = [8, 0], sizes = [4, 128], strides = [1, 1]} : vector<16x128xf32> to vector<4x128xf32>
    %53 = arith.addf %52, %50 : vector<4x128xf32>
    %cst_28 = arith.constant 0.000000e+00 : f32
    %54 = vector.shape_cast %4 : vector<1x128xi1> to vector<1x128xi1>
    %55 = vector.broadcast %54 : vector<1x128xi1> to vector<4x128xi1>
    %56 = vector.broadcast %cst_28 : f32 to vector<4x128xf32>
    %57 = arith.select %55, %53, %56 : vector<4x128xi1>, vector<4x128xf32>
    %58 = arith.truncf %57 : vector<4x128xf32> to vector<4x128xbf16>
    %cst_29 = arith.constant 0.000000e+00 : bf16
    %59 = vector.broadcast %cst_29 : bf16 to vector<4x4xbf16>
    %60 = tpu.concatenate %59, %58, %59 in 1 : vector<4x4xbf16>, vector<4x128xbf16>, vector<4x4xbf16> -> vector<4x136xbf16>
    %61 = vector.extract_strided_slice %60 {offsets = [0, 0], sizes = [4, 128], strides = [1, 1]} : vector<4x136xbf16> to vector<4x128xbf16>
    %62 = vector.extract_strided_slice %60 {offsets = [0, 4], sizes = [4, 128], strides = [1, 1]} : vector<4x136xbf16> to vector<4x128xbf16>
    %63 = vector.extract_strided_slice %60 {offsets = [0, 8], sizes = [4, 128], strides = [1, 1]} : vector<4x136xbf16> to vector<4x128xbf16>
    %64 = tpu.concatenate %61, %62, %63 in 0 : vector<4x128xbf16>, vector<4x128xbf16>, vector<4x128xbf16> -> vector<12x128xbf16>
    %c1 = arith.constant 1 : index
    %c0_30 = arith.constant 0 : index
    %c0_31 = arith.constant 0 : index
    %65 = vector.load %arg6[%c1, %c0_30, %c0_31] : memref<3x4x12xbf16, #tpu.memory_space<vmem>>, vector<1x4x12xbf16>
    %66 = vector.shape_cast %65 : vector<1x4x12xbf16> to vector<4x12xbf16>
    %cst_32 = arith.constant dense<0.000000e+00> : vector<4x128xf32>
    %67 = tpu.matmul %66, %64, %cst_32 {dimension_numbers = #tpu.dot_dimension_numbers<[1], [0], [0], [1], [0, 0, 1, 1], [], []>} : vector<4x12xbf16>, vector<12x128xbf16>, vector<4x128xf32> -> vector<4x128xf32>
    %c1_33 = arith.constant 1 : index
    %c0_34 = arith.constant 0 : index
    %c0_35 = arith.constant 0 : index
    %68 = vector.load %arg7[%c1_33, %c0_34, %c0_35] : memref<3x4x1xf32, #tpu.memory_space<vmem>>, vector<1x4x1xf32>
    %69 = vector.shape_cast %68 : vector<1x4x1xf32> to vector<4x1xf32>
    %70 = vector.broadcast %69 : vector<4x1xf32> to vector<4x128xf32>
    %71 = arith.addf %67, %70 : vector<4x128xf32>
    %cst_36 = arith.constant 0.000000e+00 : f32
    %72 = vector.broadcast %cst_36 : f32 to vector<4x128xf32>
    %73 = arith.maximumf %71, %72 : vector<4x128xf32>
    %c1_37 = arith.constant 1 : index
    %c0_38 = arith.constant 0 : index
    %c0_39 = arith.constant 0 : index
    %74 = vector.load %arg8[%c1_37, %c0_38, %c0_39] : memref<3x4x1xf32, #tpu.memory_space<vmem>>, vector<1x4x1xf32>
    %75 = vector.shape_cast %74 : vector<1x4x1xf32> to vector<4x1xf32>
    %76 = vector.broadcast %75 : vector<4x1xf32> to vector<4x128xf32>
    %77 = arith.mulf %73, %76 : vector<4x128xf32>
    %c1_40 = arith.constant 1 : index
    %c0_41 = arith.constant 0 : index
    %c0_42 = arith.constant 0 : index
    %78 = vector.load %arg9[%c1_40, %c0_41, %c0_42] : memref<3x4x1xf32, #tpu.memory_space<vmem>>, vector<1x4x1xf32>
    %79 = vector.shape_cast %78 : vector<1x4x1xf32> to vector<4x1xf32>
    %80 = vector.broadcast %79 : vector<4x1xf32> to vector<4x128xf32>
    %81 = arith.addf %77, %80 : vector<4x128xf32>
    %82 = arith.truncf %81 : vector<4x128xf32> to vector<4x128xbf16>
    %83 = vector.extract_strided_slice %17 {offsets = [12, 0], sizes = [4, 128], strides = [1, 1]} : vector<16x128xf32> to vector<4x128xf32>
    %84 = arith.addf %83, %81 : vector<4x128xf32>
    %cst_43 = arith.constant 0.000000e+00 : f32
    %85 = vector.shape_cast %4 : vector<1x128xi1> to vector<1x128xi1>
    %86 = vector.broadcast %85 : vector<1x128xi1> to vector<4x128xi1>
    %87 = vector.broadcast %cst_43 : f32 to vector<4x128xf32>
    %88 = arith.select %86, %84, %87 : vector<4x128xi1>, vector<4x128xf32>
    %89 = arith.truncf %88 : vector<4x128xf32> to vector<4x128xbf16>
    %cst_44 = arith.constant 0.000000e+00 : bf16
    %90 = vector.broadcast %cst_44 : bf16 to vector<4x4xbf16>
    %91 = tpu.concatenate %90, %89, %90 in 1 : vector<4x4xbf16>, vector<4x128xbf16>, vector<4x4xbf16> -> vector<4x136xbf16>
    %92 = vector.extract_strided_slice %91 {offsets = [0, 0], sizes = [4, 128], strides = [1, 1]} : vector<4x136xbf16> to vector<4x128xbf16>
    %93 = vector.extract_strided_slice %91 {offsets = [0, 4], sizes = [4, 128], strides = [1, 1]} : vector<4x136xbf16> to vector<4x128xbf16>
    %94 = vector.extract_strided_slice %91 {offsets = [0, 8], sizes = [4, 128], strides = [1, 1]} : vector<4x136xbf16> to vector<4x128xbf16>
    %95 = tpu.concatenate %92, %93, %94 in 0 : vector<4x128xbf16>, vector<4x128xbf16>, vector<4x128xbf16> -> vector<12x128xbf16>
    %c2 = arith.constant 2 : index
    %c0_45 = arith.constant 0 : index
    %c0_46 = arith.constant 0 : index
    %96 = vector.load %arg6[%c2, %c0_45, %c0_46] : memref<3x4x12xbf16, #tpu.memory_space<vmem>>, vector<1x4x12xbf16>
    %97 = vector.shape_cast %96 : vector<1x4x12xbf16> to vector<4x12xbf16>
    %cst_47 = arith.constant dense<0.000000e+00> : vector<4x128xf32>
    %98 = tpu.matmul %97, %95, %cst_47 {dimension_numbers = #tpu.dot_dimension_numbers<[1], [0], [0], [1], [0, 0, 1, 1], [], []>} : vector<4x12xbf16>, vector<12x128xbf16>, vector<4x128xf32> -> vector<4x128xf32>
    %c2_48 = arith.constant 2 : index
    %c0_49 = arith.constant 0 : index
    %c0_50 = arith.constant 0 : index
    %99 = vector.load %arg7[%c2_48, %c0_49, %c0_50] : memref<3x4x1xf32, #tpu.memory_space<vmem>>, vector<1x4x1xf32>
    %100 = vector.shape_cast %99 : vector<1x4x1xf32> to vector<4x1xf32>
    %101 = vector.broadcast %100 : vector<4x1xf32> to vector<4x128xf32>
    %102 = arith.addf %98, %101 : vector<4x128xf32>
    %cst_51 = arith.constant 0.000000e+00 : f32
    %103 = vector.broadcast %cst_51 : f32 to vector<4x128xf32>
    %104 = arith.maximumf %102, %103 : vector<4x128xf32>
    %c2_52 = arith.constant 2 : index
    %c0_53 = arith.constant 0 : index
    %c0_54 = arith.constant 0 : index
    %105 = vector.load %arg8[%c2_52, %c0_53, %c0_54] : memref<3x4x1xf32, #tpu.memory_space<vmem>>, vector<1x4x1xf32>
    %106 = vector.shape_cast %105 : vector<1x4x1xf32> to vector<4x1xf32>
    %107 = vector.broadcast %106 : vector<4x1xf32> to vector<4x128xf32>
    %108 = arith.mulf %104, %107 : vector<4x128xf32>
    %c2_55 = arith.constant 2 : index
    %c0_56 = arith.constant 0 : index
    %c0_57 = arith.constant 0 : index
    %109 = vector.load %arg9[%c2_55, %c0_56, %c0_57] : memref<3x4x1xf32, #tpu.memory_space<vmem>>, vector<1x4x1xf32>
    %110 = vector.shape_cast %109 : vector<1x4x1xf32> to vector<4x1xf32>
    %111 = vector.broadcast %110 : vector<4x1xf32> to vector<4x128xf32>
    %112 = arith.addf %108, %111 : vector<4x128xf32>
    %113 = arith.truncf %112 : vector<4x128xf32> to vector<4x128xbf16>
    %114 = tpu.concatenate %19, %51, %82, %113 in 0 : vector<4x128xbf16>, vector<4x128xbf16>, vector<4x128xbf16>, vector<4x128xbf16> -> vector<16x128xbf16>
    %c0_58 = arith.constant 0 : index
    %c0_59 = arith.constant 0 : index
    %115 = vector.load %arg10[%c0_58, %c0_59] : memref<16x16xbf16, #tpu.memory_space<vmem>>, vector<16x16xbf16>
    %cst_60 = arith.constant dense<0.000000e+00> : vector<16x128xf32>
    %116 = tpu.matmul %115, %114, %cst_60 {dimension_numbers = #tpu.dot_dimension_numbers<[1], [0], [0], [1], [0, 0, 1, 1], [], []>} : vector<16x16xbf16>, vector<16x128xbf16>, vector<16x128xf32> -> vector<16x128xf32>
    %c0_61 = arith.constant 0 : index
    %c0_62 = arith.constant 0 : index
    %117 = vector.load %arg11[%c0_61, %c0_62] : memref<16x1xf32, #tpu.memory_space<vmem>>, vector<16x1xf32>
    %118 = vector.broadcast %117 : vector<16x1xf32> to vector<16x128xf32>
    %119 = arith.addf %116, %118 : vector<16x128xf32>
    %cst_63 = arith.constant 0.000000e+00 : f32
    %120 = vector.broadcast %cst_63 : f32 to vector<16x128xf32>
    %121 = arith.maximumf %119, %120 : vector<16x128xf32>
    %c0_64 = arith.constant 0 : index
    %c0_65 = arith.constant 0 : index
    %122 = vector.load %arg12[%c0_64, %c0_65] : memref<16x1xf32, #tpu.memory_space<vmem>>, vector<16x1xf32>
    %123 = vector.broadcast %122 : vector<16x1xf32> to vector<16x128xf32>
    %124 = arith.mulf %121, %123 : vector<16x128xf32>
    %c0_66 = arith.constant 0 : index
    %c0_67 = arith.constant 0 : index
    %125 = vector.load %arg13[%c0_66, %c0_67] : memref<16x1xf32, #tpu.memory_space<vmem>>, vector<16x1xf32>
    %126 = vector.broadcast %125 : vector<16x1xf32> to vector<16x128xf32>
    %127 = arith.addf %124, %126 : vector<16x128xf32>
    %cst_68 = arith.constant 0.000000e+00 : f32
    %128 = vector.shape_cast %4 : vector<1x128xi1> to vector<1x128xi1>
    %129 = vector.broadcast %128 : vector<1x128xi1> to vector<16x128xi1>
    %130 = vector.broadcast %cst_68 : f32 to vector<16x128xf32>
    %131 = arith.select %129, %127, %130 : vector<16x128xi1>, vector<16x128xf32>
    %cst_69 = arith.constant dense<0.000000e+00> : vector<16xf32>
    %132 = vector.multi_reduction <add>, %131, %cst_69 [1] : vector<16x128xf32> to vector<16xf32>
    %133 = vector.shape_cast %132 : vector<16xf32> to vector<16x1xf32>
    %cst_70 = arith.constant 6.250000e-02 : f32
    %134 = vector.broadcast %cst_70 : f32 to vector<16x1xf32>
    %135 = arith.mulf %133, %134 : vector<16x1xf32>
    %c0_71 = arith.constant 0 : index
    %c0_72 = arith.constant 0 : index
    %136 = vector.load %arg14[%c0_71, %c0_72] : memref<8x16xf32, #tpu.memory_space<vmem>>, vector<8x16xf32>
    %cst_73 = arith.constant dense<0.000000e+00> : vector<8x1xf32>
    %137 = tpu.matmul %136, %135, %cst_73 {dimension_numbers = #tpu.dot_dimension_numbers<[1], [0], [0], [1], [0, 0, 1, 1], [], []>} : vector<8x16xf32>, vector<16x1xf32>, vector<8x1xf32> -> vector<8x1xf32>
    %c0_74 = arith.constant 0 : index
    %c0_75 = arith.constant 0 : index
    %138 = vector.load %arg15[%c0_74, %c0_75] : memref<8x1xf32, #tpu.memory_space<vmem>>, vector<8x1xf32>
    %139 = arith.addf %137, %138 : vector<8x1xf32>
    %cst_76 = arith.constant 0.000000e+00 : f32
    %140 = vector.broadcast %cst_76 : f32 to vector<8x1xf32>
    %141 = arith.maximumf %139, %140 : vector<8x1xf32>
    %c0_77 = arith.constant 0 : index
    %c0_78 = arith.constant 0 : index
    %142 = vector.load %arg16[%c0_77, %c0_78] : memref<16x8xf32, #tpu.memory_space<vmem>>, vector<16x8xf32>
    %cst_79 = arith.constant dense<0.000000e+00> : vector<16x1xf32>
    %143 = tpu.matmul %142, %141, %cst_79 {dimension_numbers = #tpu.dot_dimension_numbers<[1], [0], [0], [1], [0, 0, 1, 1], [], []>} : vector<16x8xf32>, vector<8x1xf32>, vector<16x1xf32> -> vector<16x1xf32>
    %c0_80 = arith.constant 0 : index
    %c0_81 = arith.constant 0 : index
    %144 = vector.load %arg17[%c0_80, %c0_81] : memref<16x1xf32, #tpu.memory_space<vmem>>, vector<16x1xf32>
    %145 = arith.addf %143, %144 : vector<16x1xf32>
    %146 = arith.negf %145 : vector<16x1xf32>
    %147 = math.exp %146 : vector<16x1xf32>
    %cst_82 = arith.constant 1.000000e+00 : f32
    %148 = vector.broadcast %cst_82 : f32 to vector<16x1xf32>
    %149 = arith.addf %148, %147 : vector<16x1xf32>
    %150 = arith.divf %148, %149 : vector<16x1xf32>
    %151 = vector.broadcast %150 : vector<16x1xf32> to vector<16x128xf32>
    %152 = arith.mulf %127, %151 : vector<16x128xf32>
    %153 = arith.extf %1 : vector<16x128xbf16> to vector<16x128xf32>
    %154 = arith.addf %152, %153 : vector<16x128xf32>
    %155 = arith.truncf %154 : vector<16x128xf32> to vector<16x128xbf16>
    %c0_83 = arith.constant 0 : index
    %c0_84 = arith.constant 0 : index
    %c0_85 = arith.constant 0 : index
    %156 = vector.load %arg18[%c0_83, %c0_84, %c0_85] : memref<1x16x128xbf16, #tpu.memory_space<vmem>>, vector<1x16x128xbf16>
    %157 = vector.shape_cast %156 : vector<1x16x128xbf16> to vector<16x128xbf16>
    %158 = vector.shape_cast %155 : vector<16x128xbf16> to vector<1x16x128xbf16>
    tpu.vector_store %arg18[%c0_83, %c0_84, %c0_85], %158 {strides = array<i32>} : memref<1x16x128xbf16, #tpu.memory_space<vmem>>, vector<1x16x128xbf16>,
    return
  }
  func.func @transform_0(%arg0: i32) -> (i32, i32, i32) {
    %c0_i32 = arith.constant 0 : i32
    %c0_i32_0 = arith.constant 0 : i32
    %c0_i32_1 = arith.constant 0 : i32
    return %arg0, %c0_i32, %c0_i32_0 : i32, i32, i32
  }
  func.func @transform_1(%arg0: i32) -> (i32, i32) {
    %c0_i32 = arith.constant 0 : i32
    %c0_i32_0 = arith.constant 0 : i32
    %c0_i32_1 = arith.constant 0 : i32
    return %c0_i32, %c0_i32_0 : i32, i32
  }
  func.func @transform_2(%arg0: i32) -> (i32, i32) {
    %c0_i32 = arith.constant 0 : i32
    %c0_i32_0 = arith.constant 0 : i32
    %c0_i32_1 = arith.constant 0 : i32
    return %c0_i32, %c0_i32_0 : i32, i32
  }
  func.func @transform_3(%arg0: i32) -> (i32, i32) {
    %c0_i32 = arith.constant 0 : i32
    %c0_i32_0 = arith.constant 0 : i32
    %c0_i32_1 = arith.constant 0 : i32
    return %c0_i32, %c0_i32_0 : i32, i32
  }
  func.func @transform_4(%arg0: i32) -> (i32, i32) {
    %c0_i32 = arith.constant 0 : i32
    %c0_i32_0 = arith.constant 0 : i32
    %c0_i32_1 = arith.constant 0 : i32
    return %c0_i32, %c0_i32_0 : i32, i32
  }
  func.func @transform_5(%arg0: i32) -> (i32, i32, i32) {
    %c0_i32 = arith.constant 0 : i32
    %c0_i32_0 = arith.constant 0 : i32
    %c0_i32_1 = arith.constant 0 : i32
    %c0_i32_2 = arith.constant 0 : i32
    return %c0_i32, %c0_i32_0, %c0_i32_1 : i32, i32, i32
  }
  func.func @transform_6(%arg0: i32) -> (i32, i32, i32) {
    %c0_i32 = arith.constant 0 : i32
    %c0_i32_0 = arith.constant 0 : i32
    %c0_i32_1 = arith.constant 0 : i32
    %c0_i32_2 = arith.constant 0 : i32
    return %c0_i32, %c0_i32_0, %c0_i32_1 : i32, i32, i32
  }
  func.func @transform_7(%arg0: i32) -> (i32, i32, i32) {
    %c0_i32 = arith.constant 0 : i32
    %c0_i32_0 = arith.constant 0 : i32
    %c0_i32_1 = arith.constant 0 : i32
    %c0_i32_2 = arith.constant 0 : i32
    return %c0_i32, %c0_i32_0, %c0_i32_1 : i32, i32, i32
  }
  func.func @transform_8(%arg0: i32) -> (i32, i32, i32) {
    %c0_i32 = arith.constant 0 : i32
    %c0_i32_0 = arith.constant 0 : i32
    %c0_i32_1 = arith.constant 0 : i32
    %c0_i32_2 = arith.constant 0 : i32
    return %c0_i32, %c0_i32_0, %c0_i32_1 : i32, i32, i32
  }
  func.func @transform_9(%arg0: i32) -> (i32, i32) {
    %c0_i32 = arith.constant 0 : i32
    %c0_i32_0 = arith.constant 0 : i32
    %c0_i32_1 = arith.constant 0 : i32
    return %c0_i32, %c0_i32_0 : i32, i32
  }
  func.func @transform_10(%arg0: i32) -> (i32, i32) {
    %c0_i32 = arith.constant 0 : i32
    %c0_i32_0 = arith.constant 0 : i32
    %c0_i32_1 = arith.constant 0 : i32
    return %c0_i32, %c0_i32_0 : i32, i32
  }
  func.func @transform_11(%arg0: i32) -> (i32, i32) {
    %c0_i32 = arith.constant 0 : i32
    %c0_i32_0 = arith.constant 0 : i32
    %c0_i32_1 = arith.constant 0 : i32
    return %c0_i32, %c0_i32_0 : i32, i32
  }
  func.func @transform_12(%arg0: i32) -> (i32, i32) {
    %c0_i32 = arith.constant 0 : i32
    %c0_i32_0 = arith.constant 0 : i32
    %c0_i32_1 = arith.constant 0 : i32
    return %c0_i32, %c0_i32_0 : i32, i32
  }
  func.func @transform_13(%arg0: i32) -> (i32, i32) {
    %c0_i32 = arith.constant 0 : i32
    %c0_i32_0 = arith.constant 0 : i32
    %c0_i32_1 = arith.constant 0 : i32
    return %c0_i32, %c0_i32_0 : i32, i32
  }
  func.func @transform_14(%arg0: i32) -> (i32, i32) {
    %c0_i32 = arith.constant 0 : i32
    %c0_i32_0 = arith.constant 0 : i32
    %c0_i32_1 = arith.constant 0 : i32
    return %c0_i32, %c0_i32_0 : i32, i32
  }
  func.func @transform_15(%arg0: i32) -> (i32, i32) {
    %c0_i32 = arith.constant 0 : i32
    %c0_i32_0 = arith.constant 0 : i32
    %c0_i32_1 = arith.constant 0 : i32
    return %c0_i32, %c0_i32_0 : i32, i32
  }
  func.func @transform_16(%arg0: i32) -> (i32, i32) {
    %c0_i32 = arith.constant 0 : i32
    %c0_i32_0 = arith.constant 0 : i32
    %c0_i32_1 = arith.constant 0 : i32
    return %c0_i32, %c0_i32_0 : i32, i32
  }
  func.func @transform_17(%arg0: i32) -> (i32, i32, i32) {
    %c0_i32 = arith.constant 0 : i32
    %c0_i32_0 = arith.constant 0 : i32
    %c0_i32_1 = arith.constant 0 : i32
    return %arg0, %c0_i32, %c0_i32_0 : i32, i32, i32
  }
}

module attributes {stable_mosaic.version = 11 : i64} {
  func.func @_mfa_asp_kernel(%arg0: i32, %arg1: memref<1x16x128xbf16, #tpu.memory_space<vmem>>, %arg2: memref<1x16x128xbf16, #tpu.memory_space<vmem>>, %arg3: memref<1x16x128xbf16, #tpu.memory_space<vmem>>, %arg4: memref<3x32x16xbf16, #tpu.memory_space<vmem>>, %arg5: memref<32x1xf32, #tpu.memory_space<vmem>>, %arg6: memref<8x32xbf16, #tpu.memory_space<vmem>>, %arg7: memref<8x1xf32, #tpu.memory_space<vmem>>, %arg8: memref<32x8xbf16, #tpu.memory_space<vmem>>, %arg9: memref<32x1xf32, #tpu.memory_space<vmem>>, %arg10: memref<1x64x1xf32, #tpu.memory_space<vmem>>) attributes {dimension_semantics = [#tpu.dimension_semantics<parallel>], iteration_bounds = array<i64: 2>, scalar_prefetch = 0 : i64, scratch_operands = 0 : i64, tpu.core_type = #tpu.core_type<tc>, window_params = [{transform_indices = @transform_0, window_bounds = array<i64: 1, 16, 128>}, {transform_indices = @transform_1, window_bounds = array<i64: 1, 16, 128>}, {transform_indices = @transform_2, window_bounds = array<i64: 1, 16, 128>}, {pipeline_mode = #tpu.pipeline_mode<synchronous>, transform_indices = @transform_3, window_bounds = array<i64: 3, 32, 16>}, {pipeline_mode = #tpu.pipeline_mode<synchronous>, transform_indices = @transform_4, window_bounds = array<i64: 32, 1>}, {pipeline_mode = #tpu.pipeline_mode<synchronous>, transform_indices = @transform_5, window_bounds = array<i64: 8, 32>}, {pipeline_mode = #tpu.pipeline_mode<synchronous>, transform_indices = @transform_6, window_bounds = array<i64: 8, 1>}, {pipeline_mode = #tpu.pipeline_mode<synchronous>, transform_indices = @transform_7, window_bounds = array<i64: 32, 8>}, {pipeline_mode = #tpu.pipeline_mode<synchronous>, transform_indices = @transform_8, window_bounds = array<i64: 32, 1>}, {transform_indices = @transform_9, window_bounds = array<i64: 1, 64, 1>}]} {
    %cst = arith.constant 0.000000e+00 : f32
    %0 = vector.broadcast %cst : f32 to vector<32x128xf32>
    %c0 = arith.constant 0 : index
    %c0_0 = arith.constant 0 : index
    %c0_1 = arith.constant 0 : index
    %1 = vector.load %arg4[%c0, %c0_0, %c0_1] : memref<3x32x16xbf16, #tpu.memory_space<vmem>>, vector<1x32x16xbf16>
    %2 = vector.shape_cast %1 : vector<1x32x16xbf16> to vector<32x16xbf16>
    %c0_2 = arith.constant 0 : index
    %c0_3 = arith.constant 0 : index
    %c0_4 = arith.constant 0 : index
    %3 = vector.load %arg1[%c0_2, %c0_3, %c0_4] : memref<1x16x128xbf16, #tpu.memory_space<vmem>>, vector<1x16x128xbf16>
    %4 = vector.shape_cast %3 : vector<1x16x128xbf16> to vector<16x128xbf16>
    %cst_5 = arith.constant dense<0.000000e+00> : vector<32x128xf32>
    %5 = tpu.matmul %2, %4, %cst_5 {dimension_numbers = #tpu.dot_dimension_numbers<[1], [0], [0], [1], [0, 0, 1, 1], [], []>} : vector<32x16xbf16>, vector<16x128xbf16>, vector<32x128xf32> -> vector<32x128xf32>
    %6 = arith.addf %0, %5 : vector<32x128xf32>
    %c1 = arith.constant 1 : index
    %c0_6 = arith.constant 0 : index
    %c0_7 = arith.constant 0 : index
    %7 = vector.load %arg4[%c1, %c0_6, %c0_7] : memref<3x32x16xbf16, #tpu.memory_space<vmem>>, vector<1x32x16xbf16>
    %8 = vector.shape_cast %7 : vector<1x32x16xbf16> to vector<32x16xbf16>
    %c0_8 = arith.constant 0 : index
    %c0_9 = arith.constant 0 : index
    %c0_10 = arith.constant 0 : index
    %9 = vector.load %arg2[%c0_8, %c0_9, %c0_10] : memref<1x16x128xbf16, #tpu.memory_space<vmem>>, vector<1x16x128xbf16>
    %10 = vector.shape_cast %9 : vector<1x16x128xbf16> to vector<16x128xbf16>
    %cst_11 = arith.constant dense<0.000000e+00> : vector<32x128xf32>
    %11 = tpu.matmul %8, %10, %cst_11 {dimension_numbers = #tpu.dot_dimension_numbers<[1], [0], [0], [1], [0, 0, 1, 1], [], []>} : vector<32x16xbf16>, vector<16x128xbf16>, vector<32x128xf32> -> vector<32x128xf32>
    %12 = arith.addf %6, %11 : vector<32x128xf32>
    %c2 = arith.constant 2 : index
    %c0_12 = arith.constant 0 : index
    %c0_13 = arith.constant 0 : index
    %13 = vector.load %arg4[%c2, %c0_12, %c0_13] : memref<3x32x16xbf16, #tpu.memory_space<vmem>>, vector<1x32x16xbf16>
    %14 = vector.shape_cast %13 : vector<1x32x16xbf16> to vector<32x16xbf16>
    %c0_14 = arith.constant 0 : index
    %c0_15 = arith.constant 0 : index
    %c0_16 = arith.constant 0 : index
    %15 = vector.load %arg3[%c0_14, %c0_15, %c0_16] : memref<1x16x128xbf16, #tpu.memory_space<vmem>>, vector<1x16x128xbf16>
    %16 = vector.shape_cast %15 : vector<1x16x128xbf16> to vector<16x128xbf16>
    %cst_17 = arith.constant dense<0.000000e+00> : vector<32x128xf32>
    %17 = tpu.matmul %14, %16, %cst_17 {dimension_numbers = #tpu.dot_dimension_numbers<[1], [0], [0], [1], [0, 0, 1, 1], [], []>} : vector<32x16xbf16>, vector<16x128xbf16>, vector<32x128xf32> -> vector<32x128xf32>
    %18 = arith.addf %12, %17 : vector<32x128xf32>
    %c0_18 = arith.constant 0 : index
    %c0_19 = arith.constant 0 : index
    %19 = vector.load %arg5[%c0_18, %c0_19] : memref<32x1xf32, #tpu.memory_space<vmem>>, vector<32x1xf32>
    %20 = vector.broadcast %19 : vector<32x1xf32> to vector<32x128xf32>
    %21 = arith.addf %18, %20 : vector<32x128xf32>
    %cst_20 = arith.constant 0.000000e+00 : f32
    %22 = vector.broadcast %cst_20 : f32 to vector<32x128xf32>
    %23 = arith.maximumf %21, %22 : vector<32x128xf32>
    %24 = arith.truncf %23 : vector<32x128xf32> to vector<32x128xbf16>
    %c0_21 = arith.constant 0 : index
    %c0_22 = arith.constant 0 : index
    %25 = vector.load %arg6[%c0_21, %c0_22] : memref<8x32xbf16, #tpu.memory_space<vmem>>, vector<8x32xbf16>
    %cst_23 = arith.constant dense<0.000000e+00> : vector<8x128xf32>
    %26 = tpu.matmul %25, %24, %cst_23 {dimension_numbers = #tpu.dot_dimension_numbers<[1], [0], [0], [1], [0, 0, 1, 1], [], []>} : vector<8x32xbf16>, vector<32x128xbf16>, vector<8x128xf32> -> vector<8x128xf32>
    %c0_24 = arith.constant 0 : index
    %c0_25 = arith.constant 0 : index
    %27 = vector.load %arg7[%c0_24, %c0_25] : memref<8x1xf32, #tpu.memory_space<vmem>>, vector<8x1xf32>
    %28 = vector.broadcast %27 : vector<8x1xf32> to vector<8x128xf32>
    %29 = arith.addf %26, %28 : vector<8x128xf32>
    %30 = math.tanh %29 : vector<8x128xf32>
    %c0_26 = arith.constant 0 : index
    %c0_27 = arith.constant 0 : index
    %31 = vector.load %arg8[%c0_26, %c0_27] : memref<32x8xbf16, #tpu.memory_space<vmem>>, vector<32x8xbf16>
    %32 = arith.truncf %30 : vector<8x128xf32> to vector<8x128xbf16>
    %cst_28 = arith.constant dense<0.000000e+00> : vector<32x128xf32>
    %33 = tpu.matmul %31, %32, %cst_28 {dimension_numbers = #tpu.dot_dimension_numbers<[1], [0], [0], [1], [0, 0, 1, 1], [], []>} : vector<32x8xbf16>, vector<8x128xbf16>, vector<32x128xf32> -> vector<32x128xf32>
    %c0_29 = arith.constant 0 : index
    %c0_30 = arith.constant 0 : index
    %34 = vector.load %arg9[%c0_29, %c0_30] : memref<32x1xf32, #tpu.memory_space<vmem>>, vector<32x1xf32>
    %35 = vector.broadcast %34 : vector<32x1xf32> to vector<32x128xf32>
    %36 = arith.addf %33, %35 : vector<32x128xf32>
    %37 = tpu.iota {dimensions = array<i32: 1>} : vector<1x128xi32>
    %c16_i32 = arith.constant 16 : i32
    %38 = vector.broadcast %c16_i32 : i32 to vector<1x128xi32>
    %39 = arith.cmpi slt, %37, %38 : vector<1x128xi32>
    %cst_31 = arith.constant -1.000000e+30 : f32
    %40 = vector.shape_cast %39 : vector<1x128xi1> to vector<1x128xi1>
    %41 = vector.broadcast %40 : vector<1x128xi1> to vector<32x128xi1>
    %42 = vector.broadcast %cst_31 : f32 to vector<32x128xf32>
    %43 = arith.select %41, %36, %42 : vector<32x128xi1>, vector<32x128xf32>
    %cst_32 = arith.constant dense<0xFF800000> : vector<32xf32>
    %44 = vector.multi_reduction <maximumf>, %43, %cst_32 [1] : vector<32x128xf32> to vector<32xf32>
    %cst_33 = arith.constant 0xFF800000 : f32
    %45 = vector.broadcast %cst_33 : f32 to vector<32xf32>
    %46 = arith.maximumf %45, %44 : vector<32xf32>
    %47 = vector.shape_cast %46 : vector<32xf32> to vector<32x1xf32>
    %48 = vector.broadcast %47 : vector<32x1xf32> to vector<32x128xf32>
    %49 = arith.subf %43, %48 : vector<32x128xf32>
    %50 = math.exp %49 : vector<32x128xf32>
    %cst_34 = arith.constant dense<0.000000e+00> : vector<32xf32>
    %51 = vector.multi_reduction <add>, %50, %cst_34 [1] : vector<32x128xf32> to vector<32xf32>
    %52 = vector.shape_cast %51 : vector<32xf32> to vector<32x1xf32>
    %53 = vector.broadcast %52 : vector<32x1xf32> to vector<32x128xf32>
    %54 = arith.divf %50, %53 : vector<32x128xf32>
    %55 = arith.mulf %54, %23 : vector<32x128xf32>
    %cst_35 = arith.constant dense<0.000000e+00> : vector<32xf32>
    %56 = vector.multi_reduction <add>, %55, %cst_35 [1] : vector<32x128xf32> to vector<32xf32>
    %57 = vector.shape_cast %56 : vector<32xf32> to vector<32x1xf32>
    %58 = arith.mulf %55, %23 : vector<32x128xf32>
    %cst_36 = arith.constant dense<0.000000e+00> : vector<32xf32>
    %59 = vector.multi_reduction <add>, %58, %cst_36 [1] : vector<32x128xf32> to vector<32xf32>
    %60 = vector.shape_cast %59 : vector<32xf32> to vector<32x1xf32>
    %61 = arith.mulf %57, %57 : vector<32x1xf32>
    %62 = arith.subf %60, %61 : vector<32x1xf32>
    %cst_37 = arith.constant 0.000000e+00 : f32
    %63 = vector.broadcast %cst_37 : f32 to vector<32x1xf32>
    %64 = arith.maximumf %62, %63 : vector<32x1xf32>
    %cst_38 = arith.constant 1.000000e-07 : f32
    %65 = vector.broadcast %cst_38 : f32 to vector<32x1xf32>
    %66 = arith.addf %64, %65 : vector<32x1xf32>
    %67 = math.sqrt %66 : vector<32x1xf32>
    %c0_39 = arith.constant 0 : index
    %c0_40 = arith.constant 0 : index
    %c0_41 = arith.constant 0 : index
    %68 = vector.load %arg10[%c0_39, %c0_40, %c0_41] : memref<1x64x1xf32, #tpu.memory_space<vmem>>, vector<1x32x1xf32>
    %69 = vector.shape_cast %68 : vector<1x32x1xf32> to vector<32x1xf32>
    %70 = vector.shape_cast %57 : vector<32x1xf32> to vector<1x32x1xf32>
    tpu.vector_store %arg10[%c0_39, %c0_40, %c0_41], %70 {strides = array<i32>} : memref<1x64x1xf32, #tpu.memory_space<vmem>>, vector<1x32x1xf32>,
    %c0_42 = arith.constant 0 : index
    %c32 = arith.constant 32 : index
    %c0_43 = arith.constant 0 : index
    %71 = vector.load %arg10[%c0_42, %c32, %c0_43] : memref<1x64x1xf32, #tpu.memory_space<vmem>>, vector<1x32x1xf32>
    %72 = vector.shape_cast %71 : vector<1x32x1xf32> to vector<32x1xf32>
    %73 = vector.shape_cast %67 : vector<32x1xf32> to vector<1x32x1xf32>
    tpu.vector_store %arg10[%c0_42, %c32, %c0_43], %73 {strides = array<i32>} : memref<1x64x1xf32, #tpu.memory_space<vmem>>, vector<1x32x1xf32>,
    return
  }
  func.func @transform_0(%arg0: i32) -> (i32, i32, i32) {
    %c0_i32 = arith.constant 0 : i32
    %c0_i32_0 = arith.constant 0 : i32
    %c0_i32_1 = arith.constant 0 : i32
    return %arg0, %c0_i32, %c0_i32_0 : i32, i32, i32
  }
  func.func @transform_1(%arg0: i32) -> (i32, i32, i32) {
    %c0_i32 = arith.constant 0 : i32
    %c0_i32_0 = arith.constant 0 : i32
    %c0_i32_1 = arith.constant 0 : i32
    return %arg0, %c0_i32, %c0_i32_0 : i32, i32, i32
  }
  func.func @transform_2(%arg0: i32) -> (i32, i32, i32) {
    %c0_i32 = arith.constant 0 : i32
    %c0_i32_0 = arith.constant 0 : i32
    %c0_i32_1 = arith.constant 0 : i32
    return %arg0, %c0_i32, %c0_i32_0 : i32, i32, i32
  }
  func.func @transform_3(%arg0: i32) -> (i32, i32, i32) {
    %c0_i32 = arith.constant 0 : i32
    %c0_i32_0 = arith.constant 0 : i32
    %c0_i32_1 = arith.constant 0 : i32
    %c0_i32_2 = arith.constant 0 : i32
    return %c0_i32, %c0_i32_0, %c0_i32_1 : i32, i32, i32
  }
  func.func @transform_4(%arg0: i32) -> (i32, i32) {
    %c0_i32 = arith.constant 0 : i32
    %c0_i32_0 = arith.constant 0 : i32
    %c0_i32_1 = arith.constant 0 : i32
    return %c0_i32, %c0_i32_0 : i32, i32
  }
  func.func @transform_5(%arg0: i32) -> (i32, i32) {
    %c0_i32 = arith.constant 0 : i32
    %c0_i32_0 = arith.constant 0 : i32
    %c0_i32_1 = arith.constant 0 : i32
    return %c0_i32, %c0_i32_0 : i32, i32
  }
  func.func @transform_6(%arg0: i32) -> (i32, i32) {
    %c0_i32 = arith.constant 0 : i32
    %c0_i32_0 = arith.constant 0 : i32
    %c0_i32_1 = arith.constant 0 : i32
    return %c0_i32, %c0_i32_0 : i32, i32
  }
  func.func @transform_7(%arg0: i32) -> (i32, i32) {
    %c0_i32 = arith.constant 0 : i32
    %c0_i32_0 = arith.constant 0 : i32
    %c0_i32_1 = arith.constant 0 : i32
    return %c0_i32, %c0_i32_0 : i32, i32
  }
  func.func @transform_8(%arg0: i32) -> (i32, i32) {
    %c0_i32 = arith.constant 0 : i32
    %c0_i32_0 = arith.constant 0 : i32
    %c0_i32_1 = arith.constant 0 : i32
    return %c0_i32, %c0_i32_0 : i32, i32
  }
  func.func @transform_9(%arg0: i32) -> (i32, i32, i32) {
    %c0_i32 = arith.constant 0 : i32
    %c0_i32_0 = arith.constant 0 : i32
    %c0_i32_1 = arith.constant 0 : i32
    return %arg0, %c0_i32, %c0_i32_0 : i32, i32, i32
  }
}

module attributes {stable_mosaic.version = 11 : i64} {
  func.func @_head_kernel(%arg0: i32, %arg1: memref<2x64xf32, #tpu.memory_space<vmem>>, %arg2: memref<1x64xf32, #tpu.memory_space<vmem>>, %arg3: memref<1x64xf32, #tpu.memory_space<vmem>>, %arg4: memref<64x16xf32, #tpu.memory_space<vmem>>, %arg5: memref<1x16xf32, #tpu.memory_space<vmem>>, %arg6: memref<1x16xf32, #tpu.memory_space<vmem>>, %arg7: memref<1x16xf32, #tpu.memory_space<vmem>>, %arg8: memref<16x128xf32, #tpu.memory_space<vmem>>, %arg9: memref<1x128xf32, #tpu.memory_space<vmem>>, %arg10: memref<1x128xf32, #tpu.memory_space<vmem>>, %arg11: memref<1x128xf32, #tpu.memory_space<vmem>>, %arg12: memref<128x2560xbf16, #tpu.memory_space<vmem>>, %arg13: memref<1x2560xf32, #tpu.memory_space<vmem>>, %arg14: memref<1x2560xf32, #tpu.memory_space<vmem>>, %arg15: memref<1x2560xf32, #tpu.memory_space<vmem>>, %arg16: memref<2x128xf32, #tpu.memory_space<vmem>>, %arg17: memref<2x2560xf32, #tpu.memory_space<vmem>>) attributes {dimension_semantics = [#tpu.dimension_semantics<arbitrary>], iteration_bounds = array<i64: 1>, scalar_prefetch = 0 : i64, scratch_operands = 0 : i64, tpu.core_type = #tpu.core_type<tc>, window_params = [{pipeline_mode = #tpu.pipeline_mode<synchronous>, transform_indices = @transform_0, window_bounds = array<i64: 2, 64>}, {pipeline_mode = #tpu.pipeline_mode<synchronous>, transform_indices = @transform_1, window_bounds = array<i64: 1, 64>}, {pipeline_mode = #tpu.pipeline_mode<synchronous>, transform_indices = @transform_2, window_bounds = array<i64: 1, 64>}, {pipeline_mode = #tpu.pipeline_mode<synchronous>, transform_indices = @transform_3, window_bounds = array<i64: 64, 16>}, {pipeline_mode = #tpu.pipeline_mode<synchronous>, transform_indices = @transform_4, window_bounds = array<i64: 1, 16>}, {pipeline_mode = #tpu.pipeline_mode<synchronous>, transform_indices = @transform_5, window_bounds = array<i64: 1, 16>}, {pipeline_mode = #tpu.pipeline_mode<synchronous>, transform_indices = @transform_6, window_bounds = array<i64: 1, 16>}, {pipeline_mode = #tpu.pipeline_mode<synchronous>, transform_indices = @transform_7, window_bounds = array<i64: 16, 128>}, {pipeline_mode = #tpu.pipeline_mode<synchronous>, transform_indices = @transform_8, window_bounds = array<i64: 1, 128>}, {pipeline_mode = #tpu.pipeline_mode<synchronous>, transform_indices = @transform_9, window_bounds = array<i64: 1, 128>}, {pipeline_mode = #tpu.pipeline_mode<synchronous>, transform_indices = @transform_10, window_bounds = array<i64: 1, 128>}, {pipeline_mode = #tpu.pipeline_mode<synchronous>, transform_indices = @transform_11, window_bounds = array<i64: 128, 2560>}, {pipeline_mode = #tpu.pipeline_mode<synchronous>, transform_indices = @transform_12, window_bounds = array<i64: 1, 2560>}, {pipeline_mode = #tpu.pipeline_mode<synchronous>, transform_indices = @transform_13, window_bounds = array<i64: 1, 2560>}, {pipeline_mode = #tpu.pipeline_mode<synchronous>, transform_indices = @transform_14, window_bounds = array<i64: 1, 2560>}, {pipeline_mode = #tpu.pipeline_mode<synchronous>, transform_indices = @transform_15, window_bounds = array<i64: 2, 128>}, {pipeline_mode = #tpu.pipeline_mode<synchronous>, transform_indices = @transform_16, window_bounds = array<i64: 2, 2560>}]} {
    %c0 = arith.constant 0 : index
    %c0_0 = arith.constant 0 : index
    %0 = vector.load %arg1[%c0, %c0_0] : memref<2x64xf32, #tpu.memory_space<vmem>>, vector<2x64xf32>
    %c0_1 = arith.constant 0 : index
    %c0_2 = arith.constant 0 : index
    %1 = vector.load %arg2[%c0_1, %c0_2] : memref<1x64xf32, #tpu.memory_space<vmem>>, vector<1x64xf32>
    %2 = vector.broadcast %1 : vector<1x64xf32> to vector<2x64xf32>
    %3 = arith.mulf %0, %2 : vector<2x64xf32>
    %c0_3 = arith.constant 0 : index
    %c0_4 = arith.constant 0 : index
    %4 = vector.load %arg3[%c0_3, %c0_4] : memref<1x64xf32, #tpu.memory_space<vmem>>, vector<1x64xf32>
    %5 = vector.broadcast %4 : vector<1x64xf32> to vector<2x64xf32>
    %6 = arith.addf %3, %5 : vector<2x64xf32>
    %c0_5 = arith.constant 0 : index
    %c0_6 = arith.constant 0 : index
    %7 = vector.load %arg4[%c0_5, %c0_6] : memref<64x16xf32, #tpu.memory_space<vmem>>, vector<64x16xf32>
    %cst = arith.constant dense<0.000000e+00> : vector<2x16xf32>
    %8 = tpu.matmul %6, %7, %cst {dimension_numbers = #tpu.dot_dimension_numbers<[1], [0], [0], [1], [0, 0, 1, 1], [], []>} : vector<2x64xf32>, vector<64x16xf32>, vector<2x16xf32> -> vector<2x16xf32>
    %c0_7 = arith.constant 0 : index
    %c0_8 = arith.constant 0 : index
    %9 = vector.load %arg5[%c0_7, %c0_8] : memref<1x16xf32, #tpu.memory_space<vmem>>, vector<1x16xf32>
    %10 = vector.broadcast %9 : vector<1x16xf32> to vector<2x16xf32>
    %11 = arith.addf %8, %10 : vector<2x16xf32>
    %c0_9 = arith.constant 0 : index
    %c0_10 = arith.constant 0 : index
    %12 = vector.load %arg6[%c0_9, %c0_10] : memref<1x16xf32, #tpu.memory_space<vmem>>, vector<1x16xf32>
    %13 = vector.broadcast %12 : vector<1x16xf32> to vector<2x16xf32>
    %14 = arith.mulf %11, %13 : vector<2x16xf32>
    %c0_11 = arith.constant 0 : index
    %c0_12 = arith.constant 0 : index
    %15 = vector.load %arg7[%c0_11, %c0_12] : memref<1x16xf32, #tpu.memory_space<vmem>>, vector<1x16xf32>
    %16 = vector.broadcast %15 : vector<1x16xf32> to vector<2x16xf32>
    %17 = arith.addf %14, %16 : vector<2x16xf32>
    %18 = arith.mulf %17, %17 : vector<2x16xf32>
    %cst_13 = arith.constant dense<0.000000e+00> : vector<2xf32>
    %19 = vector.multi_reduction <add>, %18, %cst_13 [1] : vector<2x16xf32> to vector<2xf32>
    %20 = vector.shape_cast %19 : vector<2xf32> to vector<2x1xf32>
    %21 = math.sqrt %20 : vector<2x1xf32>
    %cst_14 = arith.constant 9.99999996E-13 : f32
    %22 = vector.broadcast %cst_14 : f32 to vector<2x1xf32>
    %23 = arith.maximumf %21, %22 : vector<2x1xf32>
    %24 = vector.broadcast %23 : vector<2x1xf32> to vector<2x16xf32>
    %25 = arith.divf %17, %24 : vector<2x16xf32>
    %c0_15 = arith.constant 0 : index
    %c0_16 = arith.constant 0 : index
    %26 = vector.load %arg8[%c0_15, %c0_16] : memref<16x128xf32, #tpu.memory_space<vmem>>, vector<16x128xf32>
    %cst_17 = arith.constant dense<0.000000e+00> : vector<2x128xf32>
    %27 = tpu.matmul %25, %26, %cst_17 {dimension_numbers = #tpu.dot_dimension_numbers<[1], [0], [0], [1], [0, 0, 1, 1], [], []>} : vector<2x16xf32>, vector<16x128xf32>, vector<2x128xf32> -> vector<2x128xf32>
    %c0_18 = arith.constant 0 : index
    %c0_19 = arith.constant 0 : index
    %28 = vector.load %arg9[%c0_18, %c0_19] : memref<1x128xf32, #tpu.memory_space<vmem>>, vector<1x128xf32>
    %29 = vector.broadcast %28 : vector<1x128xf32> to vector<2x128xf32>
    %30 = arith.addf %27, %29 : vector<2x128xf32>
    %c0_20 = arith.constant 0 : index
    %c0_21 = arith.constant 0 : index
    %31 = vector.load %arg10[%c0_20, %c0_21] : memref<1x128xf32, #tpu.memory_space<vmem>>, vector<1x128xf32>
    %32 = vector.broadcast %31 : vector<1x128xf32> to vector<2x128xf32>
    %33 = arith.mulf %30, %32 : vector<2x128xf32>
    %c0_22 = arith.constant 0 : index
    %c0_23 = arith.constant 0 : index
    %34 = vector.load %arg11[%c0_22, %c0_23] : memref<1x128xf32, #tpu.memory_space<vmem>>, vector<1x128xf32>
    %35 = vector.broadcast %34 : vector<1x128xf32> to vector<2x128xf32>
    %36 = arith.addf %33, %35 : vector<2x128xf32>
    %c0_24 = arith.constant 0 : index
    %c0_25 = arith.constant 0 : index
    %37 = vector.load %arg16[%c0_24, %c0_25] : memref<2x128xf32, #tpu.memory_space<vmem>>, vector<2x128xf32>
    tpu.vector_store %arg16[%c0_24, %c0_25], %36 {strides = array<i32>} : memref<2x128xf32, #tpu.memory_space<vmem>>, vector<2x128xf32>,
    %cst_26 = arith.constant 0.000000e+00 : f32
    %38 = vector.broadcast %cst_26 : f32 to vector<2x128xf32>
    %39 = arith.maximumf %36, %38 : vector<2x128xf32>
    %40 = arith.truncf %39 : vector<2x128xf32> to vector<2x128xbf16>
    %c0_27 = arith.constant 0 : index
    %c0_28 = arith.constant 0 : index
    %41 = vector.load %arg12[%c0_27, %c0_28] : memref<128x2560xbf16, #tpu.memory_space<vmem>>, vector<128x2560xbf16>
    %cst_29 = arith.constant dense<0.000000e+00> : vector<2x2560xf32>
    %42 = tpu.matmul %40, %41, %cst_29 {dimension_numbers = #tpu.dot_dimension_numbers<[1], [0], [0], [1], [0, 0, 1, 1], [], []>} : vector<2x128xbf16>, vector<128x2560xbf16>, vector<2x2560xf32> -> vector<2x2560xf32>
    %c0_30 = arith.constant 0 : index
    %c0_31 = arith.constant 0 : index
    %43 = vector.load %arg13[%c0_30, %c0_31] : memref<1x2560xf32, #tpu.memory_space<vmem>>, vector<1x2560xf32>
    %44 = vector.broadcast %43 : vector<1x2560xf32> to vector<2x2560xf32>
    %45 = arith.addf %42, %44 : vector<2x2560xf32>
    %c0_32 = arith.constant 0 : index
    %c0_33 = arith.constant 0 : index
    %46 = vector.load %arg14[%c0_32, %c0_33] : memref<1x2560xf32, #tpu.memory_space<vmem>>, vector<1x2560xf32>
    %47 = vector.broadcast %46 : vector<1x2560xf32> to vector<2x2560xf32>
    %48 = arith.mulf %45, %47 : vector<2x2560xf32>
    %c0_34 = arith.constant 0 : index
    %c0_35 = arith.constant 0 : index
    %49 = vector.load %arg15[%c0_34, %c0_35] : memref<1x2560xf32, #tpu.memory_space<vmem>>, vector<1x2560xf32>
    %50 = vector.broadcast %49 : vector<1x2560xf32> to vector<2x2560xf32>
    %51 = arith.addf %48, %50 : vector<2x2560xf32>
    %c0_36 = arith.constant 0 : index
    %c0_37 = arith.constant 0 : index
    %52 = vector.load %arg17[%c0_36, %c0_37] : memref<2x2560xf32, #tpu.memory_space<vmem>>, vector<2x2560xf32>
    tpu.vector_store %arg17[%c0_36, %c0_37], %51 {strides = array<i32>} : memref<2x2560xf32, #tpu.memory_space<vmem>>, vector<2x2560xf32>,
    return
  }
  func.func @transform_0(%arg0: i32) -> (i32, i32) {
    %c0_i32 = arith.constant 0 : i32
    %c0_i32_0 = arith.constant 0 : i32
    %c0_i32_1 = arith.constant 0 : i32
    return %c0_i32, %c0_i32_0 : i32, i32
  }
  func.func @transform_1(%arg0: i32) -> (i32, i32) {
    %c0_i32 = arith.constant 0 : i32
    %c0_i32_0 = arith.constant 0 : i32
    %c0_i32_1 = arith.constant 0 : i32
    return %c0_i32, %c0_i32_0 : i32, i32
  }
  func.func @transform_2(%arg0: i32) -> (i32, i32) {
    %c0_i32 = arith.constant 0 : i32
    %c0_i32_0 = arith.constant 0 : i32
    %c0_i32_1 = arith.constant 0 : i32
    return %c0_i32, %c0_i32_0 : i32, i32
  }
  func.func @transform_3(%arg0: i32) -> (i32, i32) {
    %c0_i32 = arith.constant 0 : i32
    %c0_i32_0 = arith.constant 0 : i32
    %c0_i32_1 = arith.constant 0 : i32
    return %c0_i32, %c0_i32_0 : i32, i32
  }
  func.func @transform_4(%arg0: i32) -> (i32, i32) {
    %c0_i32 = arith.constant 0 : i32
    %c0_i32_0 = arith.constant 0 : i32
    %c0_i32_1 = arith.constant 0 : i32
    return %c0_i32, %c0_i32_0 : i32, i32
  }
  func.func @transform_5(%arg0: i32) -> (i32, i32) {
    %c0_i32 = arith.constant 0 : i32
    %c0_i32_0 = arith.constant 0 : i32
    %c0_i32_1 = arith.constant 0 : i32
    return %c0_i32, %c0_i32_0 : i32, i32
  }
  func.func @transform_6(%arg0: i32) -> (i32, i32) {
    %c0_i32 = arith.constant 0 : i32
    %c0_i32_0 = arith.constant 0 : i32
    %c0_i32_1 = arith.constant 0 : i32
    return %c0_i32, %c0_i32_0 : i32, i32
  }
  func.func @transform_7(%arg0: i32) -> (i32, i32) {
    %c0_i32 = arith.constant 0 : i32
    %c0_i32_0 = arith.constant 0 : i32
    %c0_i32_1 = arith.constant 0 : i32
    return %c0_i32, %c0_i32_0 : i32, i32
  }
  func.func @transform_8(%arg0: i32) -> (i32, i32) {
    %c0_i32 = arith.constant 0 : i32
    %c0_i32_0 = arith.constant 0 : i32
    %c0_i32_1 = arith.constant 0 : i32
    return %c0_i32, %c0_i32_0 : i32, i32
  }
  func.func @transform_9(%arg0: i32) -> (i32, i32) {
    %c0_i32 = arith.constant 0 : i32
    %c0_i32_0 = arith.constant 0 : i32
    %c0_i32_1 = arith.constant 0 : i32
    return %c0_i32, %c0_i32_0 : i32, i32
  }
  func.func @transform_10(%arg0: i32) -> (i32, i32) {
    %c0_i32 = arith.constant 0 : i32
    %c0_i32_0 = arith.constant 0 : i32
    %c0_i32_1 = arith.constant 0 : i32
    return %c0_i32, %c0_i32_0 : i32, i32
  }
  func.func @transform_11(%arg0: i32) -> (i32, i32) {
    %c0_i32 = arith.constant 0 : i32
    %c0_i32_0 = arith.constant 0 : i32
    %c0_i32_1 = arith.constant 0 : i32
    return %c0_i32, %c0_i32_0 : i32, i32
  }
  func.func @transform_12(%arg0: i32) -> (i32, i32) {
    %c0_i32 = arith.constant 0 : i32
    %c0_i32_0 = arith.constant 0 : i32
    %c0_i32_1 = arith.constant 0 : i32
    return %c0_i32, %c0_i32_0 : i32, i32
  }
  func.func @transform_13(%arg0: i32) -> (i32, i32) {
    %c0_i32 = arith.constant 0 : i32
    %c0_i32_0 = arith.constant 0 : i32
    %c0_i32_1 = arith.constant 0 : i32
    return %c0_i32, %c0_i32_0 : i32, i32
  }
  func.func @transform_14(%arg0: i32) -> (i32, i32) {
    %c0_i32 = arith.constant 0 : i32
    %c0_i32_0 = arith.constant 0 : i32
    %c0_i32_1 = arith.constant 0 : i32
    return %c0_i32, %c0_i32_0 : i32, i32
  }
  func.func @transform_15(%arg0: i32) -> (i32, i32) {
    %c0_i32 = arith.constant 0 : i32
    %c0_i32_0 = arith.constant 0 : i32
    %c0_i32_1 = arith.constant 0 : i32
    return %c0_i32, %c0_i32_0 : i32, i32
  }
  func.func @transform_16(%arg0: i32) -> (i32, i32) {
    %c0_i32 = arith.constant 0 : i32
    %c0_i32_0 = arith.constant 0 : i32
    %c0_i32_1 = arith.constant 0 : i32
    return %c0_i32, %c0_i32_0 : i32, i32
  }
}

</mosaic_0001>

<llo_original>
// kernel: vove_forward.6
$region0: #{vove_forward.6}
  #allocation0 [shape = 'u32[]', space=smem, size = 0x4, offset = 0x4, fixed_abs, tag = 'smem constant byte address 0x4 - core index']
  #allocation1 [shape = 'u32[144,128]{1,0:T(1,128)}', space=vmem, size = 0x12000, scoped, tag = 'internal scratch']
  %s0 = inlined_call_operand.vmem [shape: bf16[2,8,128], index: 0, kind: input, shape index: {}]
  %s1 = inlined_call_operand.vmem [shape: bf16[16,40], index: 1, kind: input, shape index: {}]
  %s2 = inlined_call_operand.vmem [shape: f32[16,1], index: 2, kind: input, shape index: {}]
  %s3 = inlined_call_operand.vmem [shape: f32[16,1], index: 3, kind: input, shape index: {}]
  %s4 = inlined_call_operand.vmem [shape: f32[16,1], index: 4, kind: input, shape index: {}]
  %s5 = inlined_call_operand.vmem [shape: bf16[2,16,128], index: 5, kind: output, shape index: {}]
  %s6 = sld [smem:[#allocation0]]
  $region53: #{vove_forward.6} parent=0
    _
  %s8 = ssub.s32 1, %s6
  %s9 = scalar_select 0, %s8, %s6
  loop: start=0, step=1, limit=4
  $region2: #{vove_forward.6} parent=0 // loop_pre_header
    _
  $region3: #{vove_forward.6} parent=0 // loop_header
    %s11 = sphi 0, %s15
    %p12 = scmp.ge.s32.totalorder %s11, 4
    %s21 = sphi 0, %s23
    %s24 = sphi 0, %s21
    %s25 = sphi 0, %s24
    %s41 = sphi 0, %s25
    %s45 = sphi 0, %s45
    %s47 = sphi 0, %s45
    %s48 = sphi 0, %s47
    %s62 = sphi 0, %s48
    %s66 = sphi 0, %s66
    %s68 = sphi 0, %s66
    %s69 = sphi 0, %s68
    %s83 = sphi 0, %s69
    %s87 = sphi 0, %s87
    %s89 = sphi 0, %s87
    %s90 = sphi 0, %s89
    %s104 = sphi 0, %s90
    %s108 = sphi 0, %s108
    %s110 = sphi 0, %s108
    %s111 = sphi 0, %s110
    %s125 = sphi 0, %s111
    %s131 = sphi 0, %s133
    %s134 = sphi 0, %s131
    %s135 = sphi 0, %s134
    %s151 = sphi 0, %s135
  $region4: #{vove_forward.6} parent=0 // loop_header_branch
    %14 = sbr.rel (%p12) target = $region8
  $region5: #{vove_forward.6} parent=0 // loop_body
    %s16 = ssub.s32 %s11, 1
    %s17 = ssub.s32 %s11, 2
    %s18 = sadd.s32 %s11, 1
    %s19 = ssub.s32 %s11, %s18
    %p20 = scmp.eq.s32.totalorder %s19, 0
    %s22 = sadd.s32 %s21, 1
    %s23 = scalar_select %p20, %s21, %s22
    %p26 = pneg %p20
    %p27 = scmp.eq.s32.totalorder %s11, 1
    %p28 = por %p26, %p27
    %p29 = scmp.ne.s32.totalorder %s21, %s24
    %p30 = scmp.eq.s32.totalorder %s11, 0
    %p31 = por %p29, %p30
    %p32 = scmp.ne.s32.totalorder %s21, %s24
    %p33 = scmp.eq.s32.totalorder %s16, 1
    %p34 = por %p32, %p33
    %p35 = scmp.ne.s32.totalorder %s24, %s25
    %p36 = scmp.eq.s32.totalorder %s16, 0
    %p37 = por %p35, %p36
    %p38 = scmp.ne.s32.totalorder %s24, %s25
    %p39 = scmp.eq.s32.totalorder %s17, 1
    %p40 = por %p38, %p39
    %p42 = scmp.ne.s32.totalorder %s25, %s41
    %p43 = scmp.eq.s32.totalorder %s17, 0
    %p44 = por %p42, %p43
    %s46 = sadd.s32 %s45, 1
    %p49 = scmp.eq.s32.totalorder %s11, 1
    %p50 = scmp.ne.s32.totalorder %s45, %s47
    %p51 = scmp.eq.s32.totalorder %s11, 0
    %p52 = por %p50, %p51
    %p53 = scmp.ne.s32.totalorder %s45, %s47
    %p54 = scmp.eq.s32.totalorder %s16, 1
    %p55 = por %p53, %p54
    %p56 = scmp.ne.s32.totalorder %s47, %s48
    %p57 = scmp.eq.s32.totalorder %s16, 0
    %p58 = por %p56, %p57
    %p59 = scmp.ne.s32.totalorder %s47, %s48
    %p60 = scmp.eq.s32.totalorder %s17, 1
    %p61 = por %p59, %p60
    %p63 = scmp.ne.s32.totalorder %s48, %s62
    %p64 = scmp.eq.s32.totalorder %s17, 0
    %p65 = por %p63, %p64
    %s67 = sadd.s32 %s66, 1
    %p70 = scmp.eq.s32.totalorder %s11, 1
    %p71 = scmp.ne.s32.totalorder %s66, %s68
    %p72 = scmp.eq.s32.totalorder %s11, 0
    %p73 = por %p71, %p72
    %p74 = scmp.ne.s32.totalorder %s66, %s68
    %p75 = scmp.eq.s32.totalorder %s16, 1
    %p76 = por %p74, %p75
    %p77 = scmp.ne.s32.totalorder %s68, %s69
    %p78 = scmp.eq.s32.totalorder %s16, 0
    %p79 = por %p77, %p78
    %p80 = scmp.ne.s32.totalorder %s68, %s69
    %p81 = scmp.eq.s32.totalorder %s17, 1
    %p82 = por %p80, %p81
    %p84 = scmp.ne.s32.totalorder %s69, %s83
    %p85 = scmp.eq.s32.totalorder %s17, 0
    %p86 = por %p84, %p85
    %s88 = sadd.s32 %s87, 1
    %p91 = scmp.eq.s32.totalorder %s11, 1
    %p92 = scmp.ne.s32.totalorder %s87, %s89
    %p93 = scmp.eq.s32.totalorder %s11, 0
    %p94 = por %p92, %p93
    %p95 = scmp.ne.s32.totalorder %s87, %s89
    %p96 = scmp.eq.s32.totalorder %s16, 1
    %p97 = por %p95, %p96
    %p98 = scmp.ne.s32.totalorder %s89, %s90
    %p99 = scmp.eq.s32.totalorder %s16, 0
    %p100 = por %p98, %p99
    %p101 = scmp.ne.s32.totalorder %s89, %s90
    %p102 = scmp.eq.s32.totalorder %s17, 1
    %p103 = por %p101, %p102
    %p105 = scmp.ne.s32.totalorder %s90, %s104
    %p106 = scmp.eq.s32.totalorder %s17, 0
    %p107 = por %p105, %p106
    %s109 = sadd.s32 %s108, 1
    %p112 = scmp.eq.s32.totalorder %s11, 1
    %p113 = scmp.ne.s32.totalorder %s108, %s110
    %p114 = scmp.eq.s32.totalorder %s11, 0
    %p115 = por %p113, %p114
    %p116 = scmp.ne.s32.totalorder %s108, %s110
    %p117 = scmp.eq.s32.totalorder %s16, 1
    %p118 = por %p116, %p117
    %p119 = scmp.ne.s32.totalorder %s110, %s111
    %p120 = scmp.eq.s32.totalorder %s16, 0
    %p121 = por %p119, %p120
    %p122 = scmp.ne.s32.totalorder %s110, %s111
    %p123 = scmp.eq.s32.totalorder %s17, 1
    %p124 = por %p122, %p123
    %p126 = scmp.ne.s32.totalorder %s111, %s125
    %p127 = scmp.eq.s32.totalorder %s17, 0
    %p128 = por %p126, %p127
    %s129 = ssub.s32 %s11, %s18
    %p130 = scmp.eq.s32.totalorder %s129, 0
    %s132 = sadd.s32 %s131, 1
    %s133 = scalar_select %p130, %s131, %s132
    %p136 = pneg %p130
    %p137 = scmp.eq.s32.totalorder %s11, 1
    %p138 = por %p136, %p137
    %p139 = scmp.ne.s32.totalorder %s131, %s134
    %p140 = scmp.eq.s32.totalorder %s11, 0
    %p141 = por %p139, %p140
    %p142 = scmp.ne.s32.totalorder %s131, %s134
    %p143 = scmp.eq.s32.totalorder %s16, 1
    %p144 = por %p142, %p143
    %p145 = scmp.ne.s32.totalorder %s134, %s135
    %p146 = scmp.eq.s32.totalorder %s16, 0
    %p147 = por %p145, %p146
    %p148 = scmp.ne.s32.totalorder %s134, %s135
    %p149 = scmp.eq.s32.totalorder %s17, 1
    %p150 = por %p148, %p149
    %p152 = scmp.ne.s32.totalorder %s135, %s151
    %p153 = scmp.eq.s32.totalorder %s17, 0
    %p154 = por %p152, %p153
    %p155 = scmp.le.s32.totalorder 1, %s11
    %p156 = scmp.lt.s32.totalorder %s11, 3
    %p157 = pnand %p155, %p156
    %p158 = pneg %p157
    // Predicated region
    $region9: #{vove_forward.6} parent=5 // pred_check
      _
    $region10: #{vove_forward.6} parent=5 // pred_check_branch
      %160 = sbr.rel (%p157) target = $region12
    $region11: #{vove_forward.6} parent=5 // pred_region
      %s161 = ssub.s32 %s11, 1
      // Predicated region
      $region13: #{vove_forward.6} parent=11 // pred_check
        %p162 = pneg %p58
      $region14: #{vove_forward.6} parent=11 // pred_check_branch
        %164 = sbr.rel (%p162) target = $region16
      $region15: #{vove_forward.6} parent=11 // pred_region
        _
      $region16: #{vove_forward.6} parent=11 // pred_fallthru
        _
      // Predicated region
      $region17: #{vove_forward.6} parent=11 // pred_check
        %p165 = pneg %p79
      $region18: #{vove_forward.6} parent=11 // pred_check_branch
        %167 = sbr.rel (%p165) target = $region20
      $region19: #{vove_forward.6} parent=11 // pred_region
        _
      $region20: #{vove_forward.6} parent=11 // pred_fallthru
        _
      // Predicated region
      $region21: #{vove_forward.6} parent=11 // pred_check
        %p168 = pneg %p100
      $region22: #{vove_forward.6} parent=11 // pred_check_branch
        %170 = sbr.rel (%p168) target = $region24
      $region23: #{vove_forward.6} parent=11 // pred_region
        _
      $region24: #{vove_forward.6} parent=11 // pred_fallthru
        _
      // Predicated region
      $region25: #{vove_forward.6} parent=11 // pred_check
        %p171 = pneg %p121
      $region26: #{vove_forward.6} parent=11 // pred_check_branch
        %173 = sbr.rel (%p171) target = $region28
      $region27: #{vove_forward.6} parent=11 // pred_region
        _
      $region28: #{vove_forward.6} parent=11 // pred_fallthru
        _
    $region12: #{vove_forward.6} parent=5 // pred_fallthru
      _
    %p174 = scmp.lt.s32.totalorder %s11, 2
    // Predicated region
    $region29: #{vove_forward.6} parent=5 // pred_check
      %p175 = pneg %p174
    $region30: #{vove_forward.6} parent=5 // pred_check_branch
      %177 = sbr.rel (%p175) target = $region32
    $region31: #{vove_forward.6} parent=5 // pred_region
      // Predicated region
      $region33: #{vove_forward.6} parent=31 // pred_check
        %p178 = pneg %p31
      $region34: #{vove_forward.6} parent=31 // pred_check_branch
        %180 = sbr.rel (%p178) target = $region36
      $region35: #{vove_forward.6} parent=31 // pred_region
        %p181 = scmp.lt.s32.totalorder %s11, 1
        %s182 = scalar_select %p181, %s11, 1
        %s183 = smul.addr %s182, 4
        %s184 = scalar_lea.vmem %s0, %s183
      $region36: #{vove_forward.6} parent=31 // pred_fallthru
        _
    $region32: #{vove_forward.6} parent=5 // pred_fallthru
      _
    %p185 = scmp.le.s32.totalorder 1, %s11
    %p186 = scmp.lt.s32.totalorder %s11, 3
    %p187 = pnand %p185, %p186
    %p188 = pneg %p187
    // Predicated region
    $region37: #{vove_forward.6} parent=5 // pred_check
      _
    $region38: #{vove_forward.6} parent=5 // pred_check_branch
      %190 = sbr.rel (%p187) target = $region40
    $region39: #{vove_forward.6} parent=5 // pred_region
      %s191 = ssub.s32 %s11, 1
      %p192 = scmp.lt.s32.totalorder %s16, 1
      %s193 = scalar_select %p192, %s16, 1
      %s194 = smul.addr %s193, 4
      %s195 = scalar_lea.vmem %s0, %s194
      %p196 = pneg %p37
      %p197 = pneg %p34
      %p198 = pneg %p58
      %p199 = pneg %p55
      %p200 = pneg %p79
      %p201 = pneg %p76
      %p202 = pneg %p100
      %p203 = pneg %p97
      %p204 = pneg %p121
      %p205 = pneg %p118
      %p206 = pneg %p147
      %p207 = pneg %p144
      %p208 = scmp.lt.s32.totalorder %s16, 1
      %s209 = scalar_select %p208, %s16, 1
      %s210 = smul.addr %s209, 2
      %s211 = smul.addr %s210, 4
      %s212 = scalar_lea.vmem %s5, %s211
      %p213 = scmp.lt.s32.totalorder %s16, 1
      %s214 = scalar_select %p213, %s16, 1
      %s215 = smul.addr %s214, 4
      %s216 = scalar_lea.vmem %s0, %s215
      %p217 = scmp.lt.s32.totalorder %s16, 1
      %s218 = scalar_select %p217, %s16, 1
      %s219 = smul.addr %s218, 2
      %s220 = smul.addr %s219, 4
      %s221 = scalar_lea.vmem %s5, %s220
      %v223 = vld [vmem:[%s216] sm:$0xf]
      %v225 = vunpack.c.l.b16 %v223
      %v226 = vpack.c.b16 %v225, %v225
      %227 = vrot.lane.b32.xlu0 %v226, 2
      %v228 = vpop.permute.xlu0 %227
      %vm229 = vcmask 15360
      %v232 = vsel %vm229, 0, %v228
      %v233 = vsel %vm229, %v228, 0
      %v236 = vrot.slane %v232, 4
      %v237 = vrot.slane %v233, 4
      %238 = vrot.lane.b32.xlu0 %v236, 127
      %v239 = vpop.permute.xlu0 %238
      %240 = vrot.lane.b32.xlu0 %v237, 127
      %v241 = vpop.permute.xlu0 %240
      %vm242 = vcmask 1039360
      %v243 = vsel %vm242, %v239, %v241
      %244 = vrot.lane.b32.xlu0 %v232, 126
      %v245 = vpop.permute.xlu0 %244
      %246 = vrot.lane.b32.xlu0 %v233, 126
      %v247 = vpop.permute.xlu0 %246
      %vm248 = vcmask 1031168
      %v249 = vsel %vm248, %v245, %v247
      %250 = vrot.lane.b32.xlu0 %v236, 125
      %v251 = vpop.permute.xlu0 %250
      %252 = vrot.lane.b32.xlu0 %v237, 125
      %v253 = vpop.permute.xlu0 %252
      %vm254 = vcmask 1022976
      %v255 = vsel %vm254, %v251, %v253
      %256 = vrot.lane.b32.xlu0 %v232, 124
      %v257 = vpop.permute.xlu0 %256
      %258 = vrot.lane.b32.xlu0 %v233, 124
      %v259 = vpop.permute.xlu0 %258
      %vm260 = vcmask 1014784
      %v261 = vsel %vm260, %v257, %v259
      %vm262 = vcmask 1043456
      %v264 = vsel %vm262, %v232, %v243
      %v268 = vsel %vm262, %v249, %v255
      %v270 = vld [vmem:[%s1] sm:$0xf]
      %v271 = vld [vmem:[%s1 + $0x4] sm:$0xf]
      %v272 = vld [vmem:[%s2] sm:$0xff]
      %v273 = vld [vmem:[%s2 + $0x8] sm:$0xff]
      %275 = vset.pattern.permute.xlu0 0
      %276 = vperm.xlu0 %275, %v272
      %v277 = vpop.permute.xlu0 %276
      %280 = vset.pattern.permute.xlu0 0
      %281 = vperm.xlu0 %280, %v273
      %v282 = vpop.permute.xlu0 %281
      %v286 = vunpack.c.l.b16 %v270
      %v287 = vunpack.c.l.b16 %v271
      %v288 = vpack.c.b16 %v287, %v286
      %vm289 = vcmask 326656
      %v291 = vsel %vm289, %v288, 0
      %v294 = vsel %vm262, %v261, 0
      %296 = vmatprep.subr.bf16.mxu0 0
      %297 = vmatpush1.bf16.msra.mxu0 %v264
      %298 = vmatprep.subr.bf16.mxu0 0
      %299 = vmatpush1.bf16.msra.mxu0 %v268
      %300 = vmatprep.subr.bf16.mxu0 0
      %301 = vmatpush1.bf16.msra.mxu0 %v294
      %302 = vmatprep.subr.bf16.mxu0 0
      %303 = vmatpush1.bf16.msra.mxu0 0
      %304 = vmatprep.subr.bf16.mxu0 0
      %305 = vmatpush1.bf16.msra.mxu0 0
      %306 = vmatprep.subr.bf16.mxu0 0
      %307 = vmatpush1.bf16.msra.mxu0 0
      %308 = vmatprep.subr.bf16.mxu0 0
      %309 = vmatpush1.bf16.msra.mxu0 0
      %310 = vmatprep.subr.bf16.mxu0 0
      %311 = vmatpush1.bf16.msra.mxu0 0
      %312 = vmatprep.subr.bf16.mxu0 0
      %313 = vmatpush1.bf16.msra.mxu0 0
      %314 = vmatprep.subr.bf16.mxu0 0
      %315 = vmatpush1.bf16.msra.mxu0 0
      %316 = vmatprep.subr.bf16.mxu0 0
      %317 = vmatpush1.bf16.msra.mxu0 0
      %318 = vmatprep.subr.bf16.mxu0 0
      %319 = vmatpush1.bf16.msra.mxu0 0
      %320 = vmatprep.subr.bf16.mxu0 0
      %321 = vmatpush1.bf16.msra.mxu0 0
      %322 = vmatprep.subr.bf16.mxu0 0
      %323 = vmatpush1.bf16.msra.mxu0 0
      %324 = vmatprep.subr.bf16.mxu0 0
      %325 = vmatpush1.bf16.msra.mxu0 0
      %326 = vmatprep.subr.bf16.mxu0 0
      %327 = vmatpush1.bf16.msra.mxu0 0
      %328 = vmatprep.mubr.bf16.mxu0 0
      %329 = vmatmul.mubr.bf16.gmra.mrb[0].mxu0 %v291
      %v330 = vpop.f32.mrb[0].mxu0
      %v331 = vadd.f32 %v277, %v330
      %v332 = vpop.f32.mrb[0].mxu0
      %v333 = vpop.f32.mrb[0].mxu0
      %v334 = vadd.f32 %v282, %v333
      %v335 = vpop.f32.mrb[0].mxu0
      %336 = vdwg.mxu0
      %v337 = vmax.f32 %v331, 0.0
      %v338 = vmax.f32 %v334, 0.0
      %v339 = vld [vmem:[%s3] sm:$0xff]
      %v340 = vld [vmem:[%s3 + $0x8] sm:$0xff]
      %342 = vset.pattern.permute.xlu0 0
      %343 = vperm.xlu0 %342, %v339
      %v344 = vpop.permute.xlu0 %343
      %347 = vset.pattern.permute.xlu0 0
      %348 = vperm.xlu0 %347, %v340
      %v349 = vpop.permute.xlu0 %348
      %v351 = vmul.f32 %v337, %v344
      %v352 = vmul.f32 %v338, %v349
      %v353 = vld [vmem:[%s4] sm:$0xff]
      %v354 = vld [vmem:[%s4 + $0x8] sm:$0xff]
      %356 = vset.pattern.permute.xlu0 0
      %357 = vperm.xlu0 %356, %v353
      %v358 = vpop.permute.xlu0 %357
      %361 = vset.pattern.permute.xlu0 0
      %362 = vperm.xlu0 %361, %v354
      %v363 = vpop.permute.xlu0 %362
      %v365 = vadd.f32 %v351, %v358
      %v366 = vadd.f32 %v352, %v363
      %v367 = vpack.c.bf16 %v366, %v365
      %v369 = vunpack.c.l.b16 %v367
      %v370 = vunpack.c.h.b16 %v367
      %v371 = vpack.c.b16 %v369, %v369
      %v372 = vpack.c.b16 %v370, %v370
      %375 = vst [vmem:[%s221] sm:$0xf] %v371
      %376 = vst [vmem:[%s221 + $0x4] sm:$0xf] %v372
      %p377 = scmp.lt.s32.totalorder %s16, 1
      %s378 = scalar_select %p377, %s16, 1
      %s379 = smul.addr %s378, 2
      %s380 = smul.addr %s379, 4
      %s381 = scalar_lea.vmem %s5, %s380
      // Predicated region
      $region41: #{vove_forward.6} parent=39 // pred_check
        %p382 = pneg %p144
      $region42: #{vove_forward.6} parent=39 // pred_check_branch
        %384 = sbr.rel (%p382) target = $region44
      $region43: #{vove_forward.6} parent=39 // pred_region
        _
      $region44: #{vove_forward.6} parent=39 // pred_fallthru
        _
    $region40: #{vove_forward.6} parent=5 // pred_fallthru
      _
    %p385 = scmp.le.s32.totalorder 2, %s11
    // Predicated region
    $region45: #{vove_forward.6} parent=5 // pred_check
      %p386 = pneg %p385
    $region46: #{vove_forward.6} parent=5 // pred_check_branch
      %388 = sbr.rel (%p386) target = $region48
    $region47: #{vove_forward.6} parent=5 // pred_region
      %s389 = ssub.s32 %s11, 2
      // Predicated region
      $region49: #{vove_forward.6} parent=47 // pred_check
        %p390 = pneg %p150
      $region50: #{vove_forward.6} parent=47 // pred_check_branch
        %392 = sbr.rel (%p390) target = $region52
      $region51: #{vove_forward.6} parent=47 // pred_region
        %p393 = scmp.lt.s32.totalorder %s17, 1
        %s394 = scalar_select %p393, %s17, 1
        %s395 = smul.addr %s394, 2
        %s396 = smul.addr %s395, 4
        %s397 = scalar_lea.vmem %s5, %s396
      $region52: #{vove_forward.6} parent=47 // pred_fallthru
        _
    $region48: #{vove_forward.6} parent=5 // pred_fallthru
      _
  $region6: #{vove_forward.6} parent=0 // loop_footer
    %s15 = sadd.s32 1, %s11
  $region7: #{vove_forward.6} parent=0 // loop_footer_branch
    %10 = sbr.rel target = $region3
  $region8: #{vove_forward.6} parent=0 // loop_exit
    _

// kernel: vove_forward.7
$region0: #{vove_forward.7}
  #allocation0 [shape = 'u32[]', space=smem, size = 0x4, offset = 0x4, fixed_abs, tag = 'smem constant byte address 0x4 - core index']
  #allocation1 [shape = 'u32[144,128]{1,0:T(1,128)}', space=vmem, size = 0x12000, scoped, tag = 'internal scratch']
  %s0 = inlined_call_operand.vmem [shape: bf16[2,16,128], index: 0, kind: input, shape index: {}]
  %s1 = inlined_call_operand.vmem [shape: bf16[16,16], index: 1, kind: input, shape index: {}]
  %s2 = inlined_call_operand.vmem [shape: f32[16,1], index: 2, kind: input, shape index: {}]
  %s3 = inlined_call_operand.vmem [shape: f32[16,1], index: 3, kind: input, shape index: {}]
  %s4 = inlined_call_operand.vmem [shape: f32[16,1], index: 4, kind: input, shape index: {}]
  %s5 = inlined_call_operand.vmem [shape: bf16[3,4,12], index: 5, kind: input, shape index: {}]
  %s6 = inlined_call_operand.vmem [shape: f32[3,4,1], index: 6, kind: input, shape index: {}]
  %s7 = inlined_call_operand.vmem [shape: f32[3,4,1], index: 7, kind: input, shape index: {}]
  %s8 = inlined_call_operand.vmem [shape: f32[3,4,1], index: 8, kind: input, shape index: {}]
  %s9 = inlined_call_operand.vmem [shape: bf16[16,16], index: 9, kind: input, shape index: {}]
  %s10 = inlined_call_operand.vmem [shape: f32[16,1], index: 10, kind: input, shape index: {}]
  %s11 = inlined_call_operand.vmem [shape: f32[16,1], index: 11, kind: input, shape index: {}]
  %s12 = inlined_call_operand.vmem [shape: f32[16,1], index: 12, kind: input, shape index: {}]
  %s13 = inlined_call_operand.vmem [shape: f32[8,16], index: 13, kind: input, shape index: {}]
  %s14 = inlined_call_operand.vmem [shape: f32[8,1], index: 14, kind: input, shape index: {}]
  %s15 = inlined_call_operand.vmem [shape: f32[16,8], index: 15, kind: input, shape index: {}]
  %s16 = inlined_call_operand.vmem [shape: f32[16,1], index: 16, kind: input, shape index: {}]
  %s17 = inlined_call_operand.vmem [shape: bf16[2,16,128], index: 17, kind: output, shape index: {}]
  %s18 = sld [smem:[#allocation0]]
  $region101: #{vove_forward.7} parent=0
    _
  %s20 = ssub.s32 1, %s18
  %s21 = scalar_select 0, %s20, %s18
  loop: start=0, step=1, limit=4
  $region2: #{vove_forward.7} parent=0 // loop_pre_header
    _
  $region3: #{vove_forward.7} parent=0 // loop_header
    %s23 = sphi 0, %s27
    %p24 = scmp.ge.s32.totalorder %s23, 4
    %s33 = sphi 0, %s35
    %s36 = sphi 0, %s33
    %s37 = sphi 0, %s36
    %s53 = sphi 0, %s37
    %s57 = sphi 0, %s57
    %s59 = sphi 0, %s57
    %s60 = sphi 0, %s59
    %s74 = sphi 0, %s60
    %s78 = sphi 0, %s78
    %s80 = sphi 0, %s78
    %s81 = sphi 0, %s80
    %s95 = sphi 0, %s81
    %s99 = sphi 0, %s99
    %s101 = sphi 0, %s99
    %s102 = sphi 0, %s101
    %s116 = sphi 0, %s102
    %s120 = sphi 0, %s120
    %s122 = sphi 0, %s120
    %s123 = sphi 0, %s122
    %s137 = sphi 0, %s123
    %s141 = sphi 0, %s141
    %s143 = sphi 0, %s141
    %s144 = sphi 0, %s143
    %s158 = sphi 0, %s144
    %s162 = sphi 0, %s162
    %s164 = sphi 0, %s162
    %s165 = sphi 0, %s164
    %s179 = sphi 0, %s165
    %s183 = sphi 0, %s183
    %s185 = sphi 0, %s183
    %s186 = sphi 0, %s185
    %s200 = sphi 0, %s186
    %s204 = sphi 0, %s204
    %s206 = sphi 0, %s204
    %s207 = sphi 0, %s206
    %s221 = sphi 0, %s207
    %s225 = sphi 0, %s225
    %s227 = sphi 0, %s225
    %s228 = sphi 0, %s227
    %s242 = sphi 0, %s228
    %s246 = sphi 0, %s246
    %s248 = sphi 0, %s246
    %s249 = sphi 0, %s248
    %s263 = sphi 0, %s249
    %s267 = sphi 0, %s267
    %s269 = sphi 0, %s267
    %s270 = sphi 0, %s269
    %s284 = sphi 0, %s270
    %s288 = sphi 0, %s288
    %s290 = sphi 0, %s288
    %s291 = sphi 0, %s290
    %s305 = sphi 0, %s291
    %s309 = sphi 0, %s309
    %s311 = sphi 0, %s309
    %s312 = sphi 0, %s311
    %s326 = sphi 0, %s312
    %s330 = sphi 0, %s330
    %s332 = sphi 0, %s330
    %s333 = sphi 0, %s332
    %s347 = sphi 0, %s333
    %s351 = sphi 0, %s351
    %s353 = sphi 0, %s351
    %s354 = sphi 0, %s353
    %s368 = sphi 0, %s354
    %s372 = sphi 0, %s372
    %s374 = sphi 0, %s372
    %s375 = sphi 0, %s374
    %s389 = sphi 0, %s375
    %s395 = sphi 0, %s397
    %s398 = sphi 0, %s395
    %s399 = sphi 0, %s398
    %s415 = sphi 0, %s399
  $region4: #{vove_forward.7} parent=0 // loop_header_branch
    %26 = sbr.rel (%p24) target = $region8
  $region5: #{vove_forward.7} parent=0 // loop_body
    %s28 = ssub.s32 %s23, 1
    %s29 = ssub.s32 %s23, 2
    %s30 = sadd.s32 %s23, 1
    %s31 = ssub.s32 %s23, %s30
    %p32 = scmp.eq.s32.totalorder %s31, 0
    %s34 = sadd.s32 %s33, 1
    %s35 = scalar_select %p32, %s33, %s34
    %p38 = pneg %p32
    %p39 = scmp.eq.s32.totalorder %s23, 1
    %p40 = por %p38, %p39
    %p41 = scmp.ne.s32.totalorder %s33, %s36
    %p42 = scmp.eq.s32.totalorder %s23, 0
    %p43 = por %p41, %p42
    %p44 = scmp.ne.s32.totalorder %s33, %s36
    %p45 = scmp.eq.s32.totalorder %s28, 1
    %p46 = por %p44, %p45
    %p47 = scmp.ne.s32.totalorder %s36, %s37
    %p48 = scmp.eq.s32.totalorder %s28, 0
    %p49 = por %p47, %p48
    %p50 = scmp.ne.s32.totalorder %s36, %s37
    %p51 = scmp.eq.s32.totalorder %s29, 1
    %p52 = por %p50, %p51
    %p54 = scmp.ne.s32.totalorder %s37, %s53
    %p55 = scmp.eq.s32.totalorder %s29, 0
    %p56 = por %p54, %p55
    %s58 = sadd.s32 %s57, 1
    %p61 = scmp.eq.s32.totalorder %s23, 1
    %p62 = scmp.ne.s32.totalorder %s57, %s59
    %p63 = scmp.eq.s32.totalorder %s23, 0
    %p64 = por %p62, %p63
    %p65 = scmp.ne.s32.totalorder %s57, %s59
    %p66 = scmp.eq.s32.totalorder %s28, 1
    %p67 = por %p65, %p66
    %p68 = scmp.ne.s32.totalorder %s59, %s60
    %p69 = scmp.eq.s32.totalorder %s28, 0
    %p70 = por %p68, %p69
    %p71 = scmp.ne.s32.totalorder %s59, %s60
    %p72 = scmp.eq.s32.totalorder %s29, 1
    %p73 = por %p71, %p72
    %p75 = scmp.ne.s32.totalorder %s60, %s74
    %p76 = scmp.eq.s32.totalorder %s29, 0
    %p77 = por %p75, %p76
    %s79 = sadd.s32 %s78, 1
    %p82 = scmp.eq.s32.totalorder %s23, 1
    %p83 = scmp.ne.s32.totalorder %s78, %s80
    %p84 = scmp.eq.s32.totalorder %s23, 0
    %p85 = por %p83, %p84
    %p86 = scmp.ne.s32.totalorder %s78, %s80
    %p87 = scmp.eq.s32.totalorder %s28, 1
    %p88 = por %p86, %p87
    %p89 = scmp.ne.s32.totalorder %s80, %s81
    %p90 = scmp.eq.s32.totalorder %s28, 0
    %p91 = por %p89, %p90
    %p92 = scmp.ne.s32.totalorder %s80, %s81
    %p93 = scmp.eq.s32.totalorder %s29, 1
    %p94 = por %p92, %p93
    %p96 = scmp.ne.s32.totalorder %s81, %s95
    %p97 = scmp.eq.s32.totalorder %s29, 0
    %p98 = por %p96, %p97
    %s100 = sadd.s32 %s99, 1
    %p103 = scmp.eq.s32.totalorder %s23, 1
    %p104 = scmp.ne.s32.totalorder %s99, %s101
    %p105 = scmp.eq.s32.totalorder %s23, 0
    %p106 = por %p104, %p105
    %p107 = scmp.ne.s32.totalorder %s99, %s101
    %p108 = scmp.eq.s32.totalorder %s28, 1
    %p109 = por %p107, %p108
    %p110 = scmp.ne.s32.totalorder %s101, %s102
    %p111 = scmp.eq.s32.totalorder %s28, 0
    %p112 = por %p110, %p111
    %p113 = scmp.ne.s32.totalorder %s101, %s102
    %p114 = scmp.eq.s32.totalorder %s29, 1
    %p115 = por %p113, %p114
    %p117 = scmp.ne.s32.totalorder %s102, %s116
    %p118 = scmp.eq.s32.totalorder %s29, 0
    %p119 = por %p117, %p118
    %s121 = sadd.s32 %s120, 1
    %p124 = scmp.eq.s32.totalorder %s23, 1
    %p125 = scmp.ne.s32.totalorder %s120, %s122
    %p126 = scmp.eq.s32.totalorder %s23, 0
    %p127 = por %p125, %p126
    %p128 = scmp.ne.s32.totalorder %s120, %s122
    %p129 = scmp.eq.s32.totalorder %s28, 1
    %p130 = por %p128, %p129
    %p131 = scmp.ne.s32.totalorder %s122, %s123
    %p132 = scmp.eq.s32.totalorder %s28, 0
    %p133 = por %p131, %p132
    %p134 = scmp.ne.s32.totalorder %s122, %s123
    %p135 = scmp.eq.s32.totalorder %s29, 1
    %p136 = por %p134, %p135
    %p138 = scmp.ne.s32.totalorder %s123, %s137
    %p139 = scmp.eq.s32.totalorder %s29, 0
    %p140 = por %p138, %p139
    %s142 = sadd.s32 %s141, 1
    %p145 = scmp.eq.s32.totalorder %s23, 1
    %p146 = scmp.ne.s32.totalorder %s141, %s143
    %p147 = scmp.eq.s32.totalorder %s23, 0
    %p148 = por %p146, %p147
    %p149 = scmp.ne.s32.totalorder %s141, %s143
    %p150 = scmp.eq.s32.totalorder %s28, 1
    %p151 = por %p149, %p150
    %p152 = scmp.ne.s32.totalorder %s143, %s144
    %p153 = scmp.eq.s32.totalorder %s28, 0
    %p154 = por %p152, %p153
    %p155 = scmp.ne.s32.totalorder %s143, %s144
    %p156 = scmp.eq.s32.totalorder %s29, 1
    %p157 = por %p155, %p156
    %p159 = scmp.ne.s32.totalorder %s144, %s158
    %p160 = scmp.eq.s32.totalorder %s29, 0
    %p161 = por %p159, %p160
    %s163 = sadd.s32 %s162, 1
    %p166 = scmp.eq.s32.totalorder %s23, 1
    %p167 = scmp.ne.s32.totalorder %s162, %s164
    %p168 = scmp.eq.s32.totalorder %s23, 0
    %p169 = por %p167, %p168
    %p170 = scmp.ne.s32.totalorder %s162, %s164
    %p171 = scmp.eq.s32.totalorder %s28, 1
    %p172 = por %p170, %p171
    %p173 = scmp.ne.s32.totalorder %s164, %s165
    %p174 = scmp.eq.s32.totalorder %s28, 0
    %p175 = por %p173, %p174
    %p176 = scmp.ne.s32.totalorder %s164, %s165
    %p177 = scmp.eq.s32.totalorder %s29, 1
    %p178 = por %p176, %p177
    %p180 = scmp.ne.s32.totalorder %s165, %s179
    %p181 = scmp.eq.s32.totalorder %s29, 0
    %p182 = por %p180, %p181
    %s184 = sadd.s32 %s183, 1
    %p187 = scmp.eq.s32.totalorder %s23, 1
    %p188 = scmp.ne.s32.totalorder %s183, %s185
    %p189 = scmp.eq.s32.totalorder %s23, 0
    %p190 = por %p188, %p189
    %p191 = scmp.ne.s32.totalorder %s183, %s185
    %p192 = scmp.eq.s32.totalorder %s28, 1
    %p193 = por %p191, %p192
    %p194 = scmp.ne.s32.totalorder %s185, %s186
    %p195 = scmp.eq.s32.totalorder %s28, 0
    %p196 = por %p194, %p195
    %p197 = scmp.ne.s32.totalorder %s185, %s186
    %p198 = scmp.eq.s32.totalorder %s29, 1
    %p199 = por %p197, %p198
    %p201 = scmp.ne.s32.totalorder %s186, %s200
    %p202 = scmp.eq.s32.totalorder %s29, 0
    %p203 = por %p201, %p202
    %s205 = sadd.s32 %s204, 1
    %p208 = scmp.eq.s32.totalorder %s23, 1
    %p209 = scmp.ne.s32.totalorder %s204, %s206
    %p210 = scmp.eq.s32.totalorder %s23, 0
    %p211 = por %p209, %p210
    %p212 = scmp.ne.s32.totalorder %s204, %s206
    %p213 = scmp.eq.s32.totalorder %s28, 1
    %p214 = por %p212, %p213
    %p215 = scmp.ne.s32.totalorder %s206, %s207
    %p216 = scmp.eq.s32.totalorder %s28, 0
    %p217 = por %p215, %p216
    %p218 = scmp.ne.s32.totalorder %s206, %s207
    %p219 = scmp.eq.s32.totalorder %s29, 1
    %p220 = por %p218, %p219
    %p222 = scmp.ne.s32.totalorder %s207, %s221
    %p223 = scmp.eq.s32.totalorder %s29, 0
    %p224 = por %p222, %p223
    %s226 = sadd.s32 %s225, 1
    %p229 = scmp.eq.s32.totalorder %s23, 1
    %p230 = scmp.ne.s32.totalorder %s225, %s227
    %p231 = scmp.eq.s32.totalorder %s23, 0
    %p232 = por %p230, %p231
    %p233 = scmp.ne.s32.totalorder %s225, %s227
    %p234 = scmp.eq.s32.totalorder %s28, 1
    %p235 = por %p233, %p234
    %p236 = scmp.ne.s32.totalorder %s227, %s228
    %p237 = scmp.eq.s32.totalorder %s28, 0
    %p238 = por %p236, %p237
    %p239 = scmp.ne.s32.totalorder %s227, %s228
    %p240 = scmp.eq.s32.totalorder %s29, 1
    %p241 = por %p239, %p240
    %p243 = scmp.ne.s32.totalorder %s228, %s242
    %p244 = scmp.eq.s32.totalorder %s29, 0
    %p245 = por %p243, %p244
    %s247 = sadd.s32 %s246, 1
    %p250 = scmp.eq.s32.totalorder %s23, 1
    %p251 = scmp.ne.s32.totalorder %s246, %s248
    %p252 = scmp.eq.s32.totalorder %s23, 0
    %p253 = por %p251, %p252
    %p254 = scmp.ne.s32.totalorder %s246, %s248
    %p255 = scmp.eq.s32.totalorder %s28, 1
    %p256 = por %p254, %p255
    %p257 = scmp.ne.s32.totalorder %s248, %s249
    %p258 = scmp.eq.s32.totalorder %s28, 0
    %p259 = por %p257, %p258
    %p260 = scmp.ne.s32.totalorder %s248, %s249
    %p261 = scmp.eq.s32.totalorder %s29, 1
    %p262 = por %p260, %p261
    %p264 = scmp.ne.s32.totalorder %s249, %s263
    %p265 = scmp.eq.s32.totalorder %s29, 0
    %p266 = por %p264, %p265
    %s268 = sadd.s32 %s267, 1
    %p271 = scmp.eq.s32.totalorder %s23, 1
    %p272 = scmp.ne.s32.totalorder %s267, %s269
    %p273 = scmp.eq.s32.totalorder %s23, 0
    %p274 = por %p272, %p273
    %p275 = scmp.ne.s32.totalorder %s267, %s269
    %p276 = scmp.eq.s32.totalorder %s28, 1
    %p277 = por %p275, %p276
    %p278 = scmp.ne.s32.totalorder %s269, %s270
    %p279 = scmp.eq.s32.totalorder %s28, 0
    %p280 = por %p278, %p279
    %p281 = scmp.ne.s32.totalorder %s269, %s270
    %p282 = scmp.eq.s32.totalorder %s29, 1
    %p283 = por %p281, %p282
    %p285 = scmp.ne.s32.totalorder %s270, %s284
    %p286 = scmp.eq.s32.totalorder %s29, 0
    %p287 = por %p285, %p286
    %s289 = sadd.s32 %s288, 1
    %p292 = scmp.eq.s32.totalorder %s23, 1
    %p293 = scmp.ne.s32.totalorder %s288, %s290
    %p294 = scmp.eq.s32.totalorder %s23, 0
    %p295 = por %p293, %p294
    %p296 = scmp.ne.s32.totalorder %s288, %s290
    %p297 = scmp.eq.s32.totalorder %s28, 1
    %p298 = por %p296, %p297
    %p299 = scmp.ne.s32.totalorder %s290, %s291
    %p300 = scmp.eq.s32.totalorder %s28, 0
    %p301 = por %p299, %p300
    %p302 = scmp.ne.s32.totalorder %s290, %s291
    %p303 = scmp.eq.s32.totalorder %s29, 1
    %p304 = por %p302, %p303
    %p306 = scmp.ne.s32.totalorder %s291, %s305
    %p307 = scmp.eq.s32.totalorder %s29, 0
    %p308 = por %p306, %p307
    %s310 = sadd.s32 %s309, 1
    %p313 = scmp.eq.s32.totalorder %s23, 1
    %p314 = scmp.ne.s32.totalorder %s309, %s311
    %p315 = scmp.eq.s32.totalorder %s23, 0
    %p316 = por %p314, %p315
    %p317 = scmp.ne.s32.totalorder %s309, %s311
    %p318 = scmp.eq.s32.totalorder %s28, 1
    %p319 = por %p317, %p318
    %p320 = scmp.ne.s32.totalorder %s311, %s312
    %p321 = scmp.eq.s32.totalorder %s28, 0
    %p322 = por %p320, %p321
    %p323 = scmp.ne.s32.totalorder %s311, %s312
    %p324 = scmp.eq.s32.totalorder %s29, 1
    %p325 = por %p323, %p324
    %p327 = scmp.ne.s32.totalorder %s312, %s326
    %p328 = scmp.eq.s32.totalorder %s29, 0
    %p329 = por %p327, %p328
    %s331 = sadd.s32 %s330, 1
    %p334 = scmp.eq.s32.totalorder %s23, 1
    %p335 = scmp.ne.s32.totalorder %s330, %s332
    %p336 = scmp.eq.s32.totalorder %s23, 0
    %p337 = por %p335, %p336
    %p338 = scmp.ne.s32.totalorder %s330, %s332
    %p339 = scmp.eq.s32.totalorder %s28, 1
    %p340 = por %p338, %p339
    %p341 = scmp.ne.s32.totalorder %s332, %s333
    %p342 = scmp.eq.s32.totalorder %s28, 0
    %p343 = por %p341, %p342
    %p344 = scmp.ne.s32.totalorder %s332, %s333
    %p345 = scmp.eq.s32.totalorder %s29, 1
    %p346 = por %p344, %p345
    %p348 = scmp.ne.s32.totalorder %s333, %s347
    %p349 = scmp.eq.s32.totalorder %s29, 0
    %p350 = por %p348, %p349
    %s352 = sadd.s32 %s351, 1
    %p355 = scmp.eq.s32.totalorder %s23, 1
    %p356 = scmp.ne.s32.totalorder %s351, %s353
    %p357 = scmp.eq.s32.totalorder %s23, 0
    %p358 = por %p356, %p357
    %p359 = scmp.ne.s32.totalorder %s351, %s353
    %p360 = scmp.eq.s32.totalorder %s28, 1
    %p361 = por %p359, %p360
    %p362 = scmp.ne.s32.totalorder %s353, %s354
    %p363 = scmp.eq.s32.totalorder %s28, 0
    %p364 = por %p362, %p363
    %p365 = scmp.ne.s32.totalorder %s353, %s354
    %p366 = scmp.eq.s32.totalorder %s29, 1
    %p367 = por %p365, %p366
    %p369 = scmp.ne.s32.totalorder %s354, %s368
    %p370 = scmp.eq.s32.totalorder %s29, 0
    %p371 = por %p369, %p370
    %s373 = sadd.s32 %s372, 1
    %p376 = scmp.eq.s32.totalorder %s23, 1
    %p377 = scmp.ne.s32.totalorder %s372, %s374
    %p378 = scmp.eq.s32.totalorder %s23, 0
    %p379 = por %p377, %p378
    %p380 = scmp.ne.s32.totalorder %s372, %s374
    %p381 = scmp.eq.s32.totalorder %s28, 1
    %p382 = por %p380, %p381
    %p383 = scmp.ne.s32.totalorder %s374, %s375
    %p384 = scmp.eq.s32.totalorder %s28, 0
    %p385 = por %p383, %p384
    %p386 = scmp.ne.s32.totalorder %s374, %s375
    %p387 = scmp.eq.s32.totalorder %s29, 1
    %p388 = por %p386, %p387
    %p390 = scmp.ne.s32.totalorder %s375, %s389
    %p391 = scmp.eq.s32.totalorder %s29, 0
    %p392 = por %p390, %p391
    %s393 = ssub.s32 %s23, %s30
    %p394 = scmp.eq.s32.totalorder %s393, 0
    %s396 = sadd.s32 %s395, 1
    %s397 = scalar_select %p394, %s395, %s396
    %p400 = pneg %p394
    %p401 = scmp.eq.s32.totalorder %s23, 1
    %p402 = por %p400, %p401
    %p403 = scmp.ne.s32.totalorder %s395, %s398
    %p404 = scmp.eq.s32.totalorder %s23, 0
    %p405 = por %p403, %p404
    %p406 = scmp.ne.s32.totalorder %s395, %s398
    %p407 = scmp.eq.s32.totalorder %s28, 1
    %p408 = por %p406, %p407
    %p409 = scmp.ne.s32.totalorder %s398, %s399
    %p410 = scmp.eq.s32.totalorder %s28, 0
    %p411 = por %p409, %p410
    %p412 = scmp.ne.s32.totalorder %s398, %s399
    %p413 = scmp.eq.s32.totalorder %s29, 1
    %p414 = por %p412, %p413
    %p416 = scmp.ne.s32.totalorder %s399, %s415
    %p417 = scmp.eq.s32.totalorder %s29, 0
    %p418 = por %p416, %p417
    %p419 = scmp.le.s32.totalorder 1, %s23
    %p420 = scmp.lt.s32.totalorder %s23, 3
    %p421 = pnand %p419, %p420
    %p422 = pneg %p421
    // Predicated region
    $region9: #{vove_forward.7} parent=5 // pred_check
      _
    $region10: #{vove_forward.7} parent=5 // pred_check_branch
      %424 = sbr.rel (%p421) target = $region12
    $region11: #{vove_forward.7} parent=5 // pred_region
      %s425 = ssub.s32 %s23, 1
      // Predicated region
      $region13: #{vove_forward.7} parent=11 // pred_check
        %p426 = pneg %p70
      $region14: #{vove_forward.7} parent=11 // pred_check_branch
        %428 = sbr.rel (%p426) target = $region16
      $region15: #{vove_forward.7} parent=11 // pred_region
        _
      $region16: #{vove_forward.7} parent=11 // pred_fallthru
        _
      // Predicated region
      $region17: #{vove_forward.7} parent=11 // pred_check
        %p429 = pneg %p91
      $region18: #{vove_forward.7} parent=11 // pred_check_branch
        %431 = sbr.rel (%p429) target = $region20
      $region19: #{vove_forward.7} parent=11 // pred_region
        _
      $region20: #{vove_forward.7} parent=11 // pred_fallthru
        _
      // Predicated region
      $region21: #{vove_forward.7} parent=11 // pred_check
        %p432 = pneg %p112
      $region22: #{vove_forward.7} parent=11 // pred_check_branch
        %434 = sbr.rel (%p432) target = $region24
      $region23: #{vove_forward.7} parent=11 // pred_region
        _
      $region24: #{vove_forward.7} parent=11 // pred_fallthru
        _
      // Predicated region
      $region25: #{vove_forward.7} parent=11 // pred_check
        %p435 = pneg %p133
      $region26: #{vove_forward.7} parent=11 // pred_check_branch
        %437 = sbr.rel (%p435) target = $region28
      $region27: #{vove_forward.7} parent=11 // pred_region
        _
      $region28: #{vove_forward.7} parent=11 // pred_fallthru
        _
      // Predicated region
      $region29: #{vove_forward.7} parent=11 // pred_check
        %p438 = pneg %p154
      $region30: #{vove_forward.7} parent=11 // pred_check_branch
        %440 = sbr.rel (%p438) target = $region32
      $region31: #{vove_forward.7} parent=11 // pred_region
        _
      $region32: #{vove_forward.7} parent=11 // pred_fallthru
        _
      // Predicated region
      $region33: #{vove_forward.7} parent=11 // pred_check
        %p441 = pneg %p175
      $region34: #{vove_forward.7} parent=11 // pred_check_branch
        %443 = sbr.rel (%p441) target = $region36
      $region35: #{vove_forward.7} parent=11 // pred_region
        _
      $region36: #{vove_forward.7} parent=11 // pred_fallthru
        _
      // Predicated region
      $region37: #{vove_forward.7} parent=11 // pred_check
        %p444 = pneg %p196
      $region38: #{vove_forward.7} parent=11 // pred_check_branch
        %446 = sbr.rel (%p444) target = $region40
      $region39: #{vove_forward.7} parent=11 // pred_region
        _
      $region40: #{vove_forward.7} parent=11 // pred_fallthru
        _
      // Predicated region
      $region41: #{vove_forward.7} parent=11 // pred_check
        %p447 = pneg %p217
      $region42: #{vove_forward.7} parent=11 // pred_check_branch
        %449 = sbr.rel (%p447) target = $region44
      $region43: #{vove_forward.7} parent=11 // pred_region
        _
      $region44: #{vove_forward.7} parent=11 // pred_fallthru
        _
      // Predicated region
      $region45: #{vove_forward.7} parent=11 // pred_check
        %p450 = pneg %p238
      $region46: #{vove_forward.7} parent=11 // pred_check_branch
        %452 = sbr.rel (%p450) target = $region48
      $region47: #{vove_forward.7} parent=11 // pred_region
        _
      $region48: #{vove_forward.7} parent=11 // pred_fallthru
        _
      // Predicated region
      $region49: #{vove_forward.7} parent=11 // pred_check
        %p453 = pneg %p259
      $region50: #{vove_forward.7} parent=11 // pred_check_branch
        %455 = sbr.rel (%p453) target = $region52
      $region51: #{vove_forward.7} parent=11 // pred_region
        _
      $region52: #{vove_forward.7} parent=11 // pred_fallthru
        _
      // Predicated region
      $region53: #{vove_forward.7} parent=11 // pred_check
        %p456 = pneg %p280
      $region54: #{vove_forward.7} parent=11 // pred_check_branch
        %458 = sbr.rel (%p456) target = $region56
      $region55: #{vove_forward.7} parent=11 // pred_region
        _
      $region56: #{vove_forward.7} parent=11 // pred_fallthru
        _
      // Predicated region
      $region57: #{vove_forward.7} parent=11 // pred_check
        %p459 = pneg %p301
      $region58: #{vove_forward.7} parent=11 // pred_check_branch
        %461 = sbr.rel (%p459) target = $region60
      $region59: #{vove_forward.7} parent=11 // pred_region
        _
      $region60: #{vove_forward.7} parent=11 // pred_fallthru
        _
      // Predicated region
      $region61: #{vove_forward.7} parent=11 // pred_check
        %p462 = pneg %p322
      $region62: #{vove_forward.7} parent=11 // pred_check_branch
        %464 = sbr.rel (%p462) target = $region64
      $region63: #{vove_forward.7} parent=11 // pred_region
        _
      $region64: #{vove_forward.7} parent=11 // pred_fallthru
        _
      // Predicated region
      $region65: #{vove_forward.7} parent=11 // pred_check
        %p465 = pneg %p343
      $region66: #{vove_forward.7} parent=11 // pred_check_branch
        %467 = sbr.rel (%p465) target = $region68
      $region67: #{vove_forward.7} parent=11 // pred_region
        _
      $region68: #{vove_forward.7} parent=11 // pred_fallthru
        _
      // Predicated region
      $region69: #{vove_forward.7} parent=11 // pred_check
        %p468 = pneg %p364
      $region70: #{vove_forward.7} parent=11 // pred_check_branch
        %470 = sbr.rel (%p468) target = $region72
      $region71: #{vove_forward.7} parent=11 // pred_region
        _
      $region72: #{vove_forward.7} parent=11 // pred_fallthru
        _
      // Predicated region
      $region73: #{vove_forward.7} parent=11 // pred_check
        %p471 = pneg %p385
      $region74: #{vove_forward.7} parent=11 // pred_check_branch
        %473 = sbr.rel (%p471) target = $region76
      $region75: #{vove_forward.7} parent=11 // pred_region
        _
      $region76: #{vove_forward.7} parent=11 // pred_fallthru
        _
    $region12: #{vove_forward.7} parent=5 // pred_fallthru
      _
    %p474 = scmp.lt.s32.totalorder %s23, 2
    // Predicated region
    $region77: #{vove_forward.7} parent=5 // pred_check
      %p475 = pneg %p474
    $region78: #{vove_forward.7} parent=5 // pred_check_branch
      %477 = sbr.rel (%p475) target = $region80
    $region79: #{vove_forward.7} parent=5 // pred_region
      // Predicated region
      $region81: #{vove_forward.7} parent=79 // pred_check
        %p478 = pneg %p43
      $region82: #{vove_forward.7} parent=79 // pred_check_branch
        %480 = sbr.rel (%p478) target = $region84
      $region83: #{vove_forward.7} parent=79 // pred_region
        %p481 = scmp.lt.s32.totalorder %s23, 1
        %s482 = scalar_select %p481, %s23, 1
        %s483 = smul.addr %s482, 2
        %s484 = smul.addr %s483, 4
        %s485 = scalar_lea.vmem %s0, %s484
      $region84: #{vove_forward.7} parent=79 // pred_fallthru
        _
    $region80: #{vove_forward.7} parent=5 // pred_fallthru
      _
    %p486 = scmp.le.s32.totalorder 1, %s23
    %p487 = scmp.lt.s32.totalorder %s23, 3
    %p488 = pnand %p486, %p487
    %p489 = pneg %p488
    // Predicated region
    $region85: #{vove_forward.7} parent=5 // pred_check
      _
    $region86: #{vove_forward.7} parent=5 // pred_check_branch
      %491 = sbr.rel (%p488) target = $region88
    $region87: #{vove_forward.7} parent=5 // pred_region
      %s492 = ssub.s32 %s23, 1
      %p493 = scmp.lt.s32.totalorder %s28, 1
      %s494 = scalar_select %p493, %s28, 1
      %s495 = smul.addr %s494, 2
      %s496 = smul.addr %s495, 4
      %s497 = scalar_lea.vmem %s0, %s496
      %p498 = pneg %p49
      %p499 = pneg %p46
      %p500 = pneg %p70
      %p501 = pneg %p67
      %p502 = pneg %p91
      %p503 = pneg %p88
      %p504 = pneg %p112
      %p505 = pneg %p109
      %p506 = pneg %p133
      %p507 = pneg %p130
      %p508 = pneg %p154
      %p509 = pneg %p151
      %p510 = pneg %p175
      %p511 = pneg %p172
      %p512 = pneg %p196
      %p513 = pneg %p193
      %p514 = pneg %p217
      %p515 = pneg %p214
      %p516 = pneg %p238
      %p517 = pneg %p235
      %p518 = pneg %p259
      %p519 = pneg %p256
      %p520 = pneg %p280
      %p521 = pneg %p277
      %p522 = pneg %p301
      %p523 = pneg %p298
      %p524 = pneg %p322
      %p525 = pneg %p319
      %p526 = pneg %p343
      %p527 = pneg %p340
      %p528 = pneg %p364
      %p529 = pneg %p361
      %p530 = pneg %p385
      %p531 = pneg %p382
      %p532 = pneg %p411
      %p533 = pneg %p408
      %p534 = scmp.lt.s32.totalorder %s28, 1
      %s535 = scalar_select %p534, %s28, 1
      %s536 = smul.addr %s535, 2
      %s537 = smul.addr %s536, 4
      %s538 = scalar_lea.vmem %s17, %s537
      %p539 = scmp.lt.s32.totalorder %s28, 1
      %s540 = scalar_select %p539, %s28, 1
      %s541 = smul.addr %s540, 2
      %s542 = smul.addr %s541, 4
      %s543 = scalar_lea.vmem %s0, %s542
      %p544 = scmp.lt.s32.totalorder %s28, 1
      %s545 = scalar_select %p544, %s28, 1
      %s546 = smul.addr %s545, 2
      %s547 = smul.addr %s546, 4
      %s548 = scalar_lea.vmem %s17, %s547
      %v550 = vld [vmem:[%s543] sm:$0xf]
      %v551 = vld [vmem:[%s543 + $0x4] sm:$0xf]
      %v552 = vlaneseq
      %v553 = vand.u32 %v552, 127
      %vm554 = vcmp.lt.s32.totalorder %v553, 16
      %v555 = vld [vmem:[%s1] sm:$0xf]
      %v556 = vld [vmem:[%s1 + $0x4] sm:$0xf]
      %v557 = vld [vmem:[%s2] sm:$0xff]
      %v558 = vld [vmem:[%s2 + $0x8] sm:$0xff]
      %560 = vset.pattern.permute.xlu0 0
      %561 = vperm.xlu0 %560, %v557
      %v562 = vpop.permute.xlu0 %561
      %565 = vset.pattern.permute.xlu0 0
      %566 = vperm.xlu0 %565, %v558
      %v567 = vpop.permute.xlu0 %566
      %v571 = vunpack.c.l.b16 %v555
      %v572 = vunpack.c.l.b16 %v556
      %v573 = vpack.c.b16 %v572, %v571
      %v576 = vunpack.c.l.b16 %v550
      %v577 = vunpack.c.l.b16 %v551
      %v578 = vpack.c.b16 %v577, %v576
      %vm580 = vcmask 130048
      %v582 = vsel %vm580, %v573, 0
      %584 = vmatprep.subr.bf16.mxu0 0
      %585 = vmatpush1.bf16.msra.mxu0 %v578
      %586 = vmatprep.subr.bf16.mxu0 0
      %587 = vmatpush1.bf16.msra.mxu0 0
      %588 = vmatprep.subr.bf16.mxu0 0
      %589 = vmatpush1.bf16.msra.mxu0 0
      %590 = vmatprep.subr.bf16.mxu0 0
      %591 = vmatpush1.bf16.msra.mxu0 0
      %592 = vmatprep.subr.bf16.mxu0 0
      %593 = vmatpush1.bf16.msra.mxu0 0
      %594 = vmatprep.subr.bf16.mxu0 0
      %595 = vmatpush1.bf16.msra.mxu0 0
      %596 = vmatprep.subr.bf16.mxu0 0
      %597 = vmatpush1.bf16.msra.mxu0 0
      %598 = vmatprep.subr.bf16.mxu0 0
      %599 = vmatpush1.bf16.msra.mxu0 0
      %600 = vmatprep.subr.bf16.mxu0 0
      %601 = vmatpush1.bf16.msra.mxu0 0
      %602 = vmatprep.subr.bf16.mxu0 0
      %603 = vmatpush1.bf16.msra.mxu0 0
      %604 = vmatprep.subr.bf16.mxu0 0
      %605 = vmatpush1.bf16.msra.mxu0 0
      %606 = vmatprep.subr.bf16.mxu0 0
      %607 = vmatpush1.bf16.msra.mxu0 0
      %608 = vmatprep.subr.bf16.mxu0 0
      %609 = vmatpush1.bf16.msra.mxu0 0
      %610 = vmatprep.subr.bf16.mxu0 0
      %611 = vmatpush1.bf16.msra.mxu0 0
      %612 = vmatprep.subr.bf16.mxu0 0
      %613 = vmatpush1.bf16.msra.mxu0 0
      %614 = vmatprep.subr.bf16.mxu0 0
      %615 = vmatpush1.bf16.msra.mxu0 0
      %616 = vmatprep.mubr.bf16.mxu0 0
      %617 = vmatmul.mubr.bf16.gmra.mrb[0].mxu0 %v582
      %v618 = vpop.f32.mrb[0].mxu0
      %v619 = vadd.f32 %v562, %v618
      %v620 = vpop.f32.mrb[0].mxu0
      %v621 = vpop.f32.mrb[0].mxu0
      %v622 = vadd.f32 %v567, %v621
      %v623 = vpop.f32.mrb[0].mxu0
      %624 = vdwg.mxu0
      %v625 = vmax.f32 %v619, 0.0
      %v626 = vmax.f32 %v622, 0.0
      %v627 = vld [vmem:[%s3] sm:$0xff]
      %v628 = vld [vmem:[%s3 + $0x8] sm:$0xff]
      %630 = vset.pattern.permute.xlu0 0
      %631 = vperm.xlu0 %630, %v627
      %v632 = vpop.permute.xlu0 %631
      %635 = vset.pattern.permute.xlu0 0
      %636 = vperm.xlu0 %635, %v628
      %v637 = vpop.permute.xlu0 %636
      %v639 = vmul.f32 %v625, %v632
      %v640 = vmul.f32 %v626, %v637
      %v641 = vld [vmem:[%s4] sm:$0xff]
      %v642 = vld [vmem:[%s4 + $0x8] sm:$0xff]
      %644 = vset.pattern.permute.xlu0 0
      %645 = vperm.xlu0 %644, %v641
      %v646 = vpop.permute.xlu0 %645
      %649 = vset.pattern.permute.xlu0 0
      %650 = vperm.xlu0 %649, %v642
      %v651 = vpop.permute.xlu0 %650
      %v653 = vadd.f32 %v639, %v646
      %v654 = vadd.f32 %v640, %v651
      %v655 = vpack.c.bf16 %v653, %v653
      %v656 = vadd.f32 %v653, 0.0
      %v657 = vsel %vm554, 1, 0
      %vm658 = vcmp.eq.s32.totalorder %v657, 1
      %v659 = vsel %vm658, %v656, 0.0
      %v660 = vpack.c.bf16 %v659, %v659
      %v662 = vrot.slane %v660, 2
      %663 = vrot.lane.b32.xlu0 %v662, 2
      %v664 = vpop.permute.xlu0 %663
      %vm665 = vcmask 15360
      %v668 = vsel %vm665, 0, %v664
      %v669 = vsel %vm665, %v664, 0
      %v672 = vrot.slane %v668, 6
      %v673 = vrot.slane %v669, 6
      %674 = vrot.lane.b32.xlu0 %v672, 126
      %v675 = vpop.permute.xlu0 %674
      %676 = vrot.lane.b32.xlu0 %v673, 126
      %v677 = vpop.permute.xlu0 %676
      %vm678 = vcmask 1031168
      %v679 = vsel %vm678, %v675, %v677
      %v680 = vrot.slane %v668, 4
      %v681 = vrot.slane %v669, 4
      %682 = vrot.lane.b32.xlu0 %v680, 124
      %v683 = vpop.permute.xlu0 %682
      %684 = vrot.lane.b32.xlu0 %v681, 124
      %v685 = vpop.permute.xlu0 %684
      %vm686 = vcmask 1014784
      %v687 = vsel %vm686, %v683, %v685
      %vm688 = vcmask 1041408
      %v690 = vsel %vm688, %v668, %v679
      %vm691 = vcmask 1043456
      %v693 = vsel %vm691, %v690, %v687
      %v694 = vld [vmem:[%s5] sm:$0x3]
      %v695 = vld [vmem:[%s6] sm:$0xf]
      %697 = vset.pattern.permute.xlu0 0
      %698 = vperm.xlu0 %697, %v695
      %v699 = vpop.permute.xlu0 %698
      %vm701 = vcmask 97280
      %v703 = vsel %vm701, %v694, 0
      %vm705 = vcmask 1045504
      %v706 = vsel %vm705, %v693, 0
      %708 = vmatprep.subr.bf16.mxu0 0
      %709 = vmatpush1.bf16.msra.mxu0 %v706
      %710 = vmatprep.subr.bf16.mxu0 0
      %711 = vmatpush1.bf16.msra.mxu0 0
      %712 = vmatprep.subr.bf16.mxu0 0
      %713 = vmatpush1.bf16.msra.mxu0 0
      %714 = vmatprep.subr.bf16.mxu0 0
      %715 = vmatpush1.bf16.msra.mxu0 0
      %716 = vmatprep.subr.bf16.mxu0 0
      %717 = vmatpush1.bf16.msra.mxu0 0
      %718 = vmatprep.subr.bf16.mxu0 0
      %719 = vmatpush1.bf16.msra.mxu0 0
      %720 = vmatprep.subr.bf16.mxu0 0
      %721 = vmatpush1.bf16.msra.mxu0 0
      %722 = vmatprep.subr.bf16.mxu0 0
      %723 = vmatpush1.bf16.msra.mxu0 0
      %724 = vmatprep.subr.bf16.mxu0 0
      %725 = vmatpush1.bf16.msra.mxu0 0
      %726 = vmatprep.subr.bf16.mxu0 0
      %727 = vmatpush1.bf16.msra.mxu0 0
      %728 = vmatprep.subr.bf16.mxu0 0
      %729 = vmatpush1.bf16.msra.mxu0 0
      %730 = vmatprep.subr.bf16.mxu0 0
      %731 = vmatpush1.bf16.msra.mxu0 0
      %732 = vmatprep.subr.bf16.mxu0 0
      %733 = vmatpush1.bf16.msra.mxu0 0
      %734 = vmatprep.subr.bf16.mxu0 0
      %735 = vmatpush1.bf16.msra.mxu0 0
      %736 = vmatprep.subr.bf16.mxu0 0
      %737 = vmatpush1.bf16.msra.mxu0 0
      %738 = vmatprep.subr.bf16.mxu0 0
      %739 = vmatpush1.bf16.msra.mxu0 0
      %740 = vmatprep.mubr.bf16.mxu0 0
      %741 = vmatmul.mubr.bf16.gmra.mrb[0].mxu0 %v703
      %v742 = vpop.f32.mrb[0].mxu0
      %v743 = vadd.f32 %v699, %v742
      %v744 = vpop.f32.mrb[0].mxu0
      %v745 = vpop.f32.mrb[0].mxu0
      %v746 = vpop.f32.mrb[0].mxu0
      %747 = vdwg.mxu0
      %v748 = vmax.f32 %v743, 0.0
      %v749 = vld [vmem:[%s7] sm:$0xf]
      %751 = vset.pattern.permute.xlu0 0
      %752 = vperm.xlu0 %751, %v749
      %v753 = vpop.permute.xlu0 %752
      %v755 = vmul.f32 %v748, %v753
      %v756 = vld [vmem:[%s8] sm:$0xf]
      %758 = vset.pattern.permute.xlu0 0
      %759 = vperm.xlu0 %758, %v756
      %v760 = vpop.permute.xlu0 %759
      %v762 = vadd.f32 %v755, %v760
      %v763 = vpack.c.bf16 %v762, %v762
      %v764 = vadd.f32 %v654, %v762
      %v765 = vsel %vm658, %v764, 0.0
      %v766 = vpack.c.bf16 %v765, %v765
      %768 = vrot.lane.b32.xlu0 %v766, 2
      %v769 = vpop.permute.xlu0 %768
      %v771 = vsel %vm665, 0, %v769
      %v772 = vsel %vm665, %v769, 0
      %v775 = vrot.slane %v771, 6
      %v776 = vrot.slane %v772, 6
      %777 = vrot.lane.b32.xlu0 %v775, 126
      %v778 = vpop.permute.xlu0 %777
      %779 = vrot.lane.b32.xlu0 %v776, 126
      %v780 = vpop.permute.xlu0 %779
      %v781 = vsel %vm678, %v778, %v780
      %v782 = vrot.slane %v771, 4
      %v783 = vrot.slane %v772, 4
      %784 = vrot.lane.b32.xlu0 %v782, 124
      %v785 = vpop.permute.xlu0 %784
      %786 = vrot.lane.b32.xlu0 %v783, 124
      %v787 = vpop.permute.xlu0 %786
      %v788 = vsel %vm686, %v785, %v787
      %v790 = vsel %vm688, %v771, %v781
      %v792 = vsel %vm691, %v790, %v788
      %s793 = scalar_lea.vmem %s5, 2
      %v794 = vld [vmem:[%s793] sm:$0x3]
      %s795 = scalar_lea.vmem %s6, 4
      %v796 = vld [vmem:[%s795] sm:$0xf]
      %798 = vset.pattern.permute.xlu0 0
      %799 = vperm.xlu0 %798, %v796
      %v800 = vpop.permute.xlu0 %799
      %v803 = vsel %vm701, %v794, 0
      %v805 = vsel %vm705, %v792, 0
      %807 = vmatprep.subr.bf16.mxu0 0
      %808 = vmatpush1.bf16.msra.mxu0 %v805
      %809 = vmatprep.subr.bf16.mxu0 0
      %810 = vmatpush1.bf16.msra.mxu0 0
      %811 = vmatprep.subr.bf16.mxu0 0
      %812 = vmatpush1.bf16.msra.mxu0 0
      %813 = vmatprep.subr.bf16.mxu0 0
      %814 = vmatpush1.bf16.msra.mxu0 0
      %815 = vmatprep.subr.bf16.mxu0 0
      %816 = vmatpush1.bf16.msra.mxu0 0
      %817 = vmatprep.subr.bf16.mxu0 0
      %818 = vmatpush1.bf16.msra.mxu0 0
      %819 = vmatprep.subr.bf16.mxu0 0
      %820 = vmatpush1.bf16.msra.mxu0 0
      %821 = vmatprep.subr.bf16.mxu0 0
      %822 = vmatpush1.bf16.msra.mxu0 0
      %823 = vmatprep.subr.bf16.mxu0 0
      %824 = vmatpush1.bf16.msra.mxu0 0
      %825 = vmatprep.subr.bf16.mxu0 0
      %826 = vmatpush1.bf16.msra.mxu0 0
      %827 = vmatprep.subr.bf16.mxu0 0
      %828 = vmatpush1.bf16.msra.mxu0 0
      %829 = vmatprep.subr.bf16.mxu0 0
      %830 = vmatpush1.bf16.msra.mxu0 0
      %831 = vmatprep.subr.bf16.mxu0 0
      %832 = vmatpush1.bf16.msra.mxu0 0
      %833 = vmatprep.subr.bf16.mxu0 0
      %834 = vmatpush1.bf16.msra.mxu0 0
      %835 = vmatprep.subr.bf16.mxu0 0
      %836 = vmatpush1.bf16.msra.mxu0 0
      %837 = vmatprep.subr.bf16.mxu0 0
      %838 = vmatpush1.bf16.msra.mxu0 0
      %839 = vmatprep.mubr.bf16.mxu0 0
      %840 = vmatmul.mubr.bf16.gmra.mrb[0].mxu0 %v803
      %v841 = vpop.f32.mrb[0].mxu0
      %v842 = vadd.f32 %v800, %v841
      %v843 = vpop.f32.mrb[0].mxu0
      %v844 = vpop.f32.mrb[0].mxu0
      %v845 = vpop.f32.mrb[0].mxu0
      %846 = vdwg.mxu0
      %v847 = vmax.f32 %v842, 0.0
      %s848 = scalar_lea.vmem %s7, 4
      %v849 = vld [vmem:[%s848] sm:$0xf]
      %851 = vset.pattern.permute.xlu0 0
      %852 = vperm.xlu0 %851, %v849
      %v853 = vpop.permute.xlu0 %852
      %v855 = vmul.f32 %v847, %v853
      %s856 = scalar_lea.vmem %s8, 4
      %v857 = vld [vmem:[%s856] sm:$0xf]
      %859 = vset.pattern.permute.xlu0 0
      %860 = vperm.xlu0 %859, %v857
      %v861 = vpop.permute.xlu0 %860
      %v863 = vadd.f32 %v855, %v861
      %v864 = vpack.c.bf16 %v863, %v863
      %v866 = vrot.slane %v863, 4
      %v868 = vadd.f32 %v654, %v866
      %v869 = vsel %vm658, %v868, 0.0
      %v870 = vpack.c.bf16 %v869, %v869
      %v872 = vrot.slane %v870, 2
      %873 = vrot.lane.b32.xlu0 %v872, 2
      %v874 = vpop.permute.xlu0 %873
      %v876 = vsel %vm665, 0, %v874
      %v877 = vsel %vm665, %v874, 0
      %v880 = vrot.slane %v876, 6
      %v881 = vrot.slane %v877, 6
      %882 = vrot.lane.b32.xlu0 %v880, 126
      %v883 = vpop.permute.xlu0 %882
      %884 = vrot.lane.b32.xlu0 %v881, 126
      %v885 = vpop.permute.xlu0 %884
      %v886 = vsel %vm678, %v883, %v885
      %v887 = vrot.slane %v876, 4
      %v888 = vrot.slane %v877, 4
      %889 = vrot.lane.b32.xlu0 %v887, 124
      %v890 = vpop.permute.xlu0 %889
      %891 = vrot.lane.b32.xlu0 %v888, 124
      %v892 = vpop.permute.xlu0 %891
      %v893 = vsel %vm686, %v890, %v892
      %v895 = vsel %vm688, %v876, %v886
      %v897 = vsel %vm691, %v895, %v893
      %s898 = scalar_lea.vmem %s5, 4
      %v899 = vld [vmem:[%s898] sm:$0x3]
      %s900 = scalar_lea.vmem %s6, 8
      %v901 = vld [vmem:[%s900] sm:$0xf]
      %903 = vset.pattern.permute.xlu0 0
      %904 = vperm.xlu0 %903, %v901
      %v905 = vpop.permute.xlu0 %904
      %v908 = vsel %vm701, %v899, 0
      %v910 = vsel %vm705, %v897, 0
      %912 = vmatprep.subr.bf16.mxu0 0
      %913 = vmatpush1.bf16.msra.mxu0 %v910
      %914 = vmatprep.subr.bf16.mxu0 0
      %915 = vmatpush1.bf16.msra.mxu0 0
      %916 = vmatprep.subr.bf16.mxu0 0
      %917 = vmatpush1.bf16.msra.mxu0 0
      %918 = vmatprep.subr.bf16.mxu0 0
      %919 = vmatpush1.bf16.msra.mxu0 0
      %920 = vmatprep.subr.bf16.mxu0 0
      %921 = vmatpush1.bf16.msra.mxu0 0
      %922 = vmatprep.subr.bf16.mxu0 0
      %923 = vmatpush1.bf16.msra.mxu0 0
      %924 = vmatprep.subr.bf16.mxu0 0
      %925 = vmatpush1.bf16.msra.mxu0 0
      %926 = vmatprep.subr.bf16.mxu0 0
      %927 = vmatpush1.bf16.msra.mxu0 0
      %928 = vmatprep.subr.bf16.mxu0 0
      %929 = vmatpush1.bf16.msra.mxu0 0
      %930 = vmatprep.subr.bf16.mxu0 0
      %931 = vmatpush1.bf16.msra.mxu0 0
      %932 = vmatprep.subr.bf16.mxu0 0
      %933 = vmatpush1.bf16.msra.mxu0 0
      %934 = vmatprep.subr.bf16.mxu0 0
      %935 = vmatpush1.bf16.msra.mxu0 0
      %936 = vmatprep.subr.bf16.mxu0 0
      %937 = vmatpush1.bf16.msra.mxu0 0
      %938 = vmatprep.subr.bf16.mxu0 0
      %939 = vmatpush1.bf16.msra.mxu0 0
      %940 = vmatprep.subr.bf16.mxu0 0
      %941 = vmatpush1.bf16.msra.mxu0 0
      %942 = vmatprep.subr.bf16.mxu0 0
      %943 = vmatpush1.bf16.msra.mxu0 0
      %944 = vmatprep.mubr.bf16.mxu0 0
      %945 = vmatmul.mubr.bf16.gmra.mrb[0].mxu0 %v908
      %v946 = vpop.f32.mrb[0].mxu0
      %v947 = vadd.f32 %v905, %v946
      %v948 = vpop.f32.mrb[0].mxu0
      %v949 = vpop.f32.mrb[0].mxu0
      %v950 = vpop.f32.mrb[0].mxu0
      %951 = vdwg.mxu0
      %v952 = vmax.f32 %v947, 0.0
      %s953 = scalar_lea.vmem %s7, 8
      %v954 = vld [vmem:[%s953] sm:$0xf]
      %956 = vset.pattern.permute.xlu0 0
      %957 = vperm.xlu0 %956, %v954
      %v958 = vpop.permute.xlu0 %957
      %v960 = vmul.f32 %v952, %v958
      %s961 = scalar_lea.vmem %s8, 8
      %v962 = vld [vmem:[%s961] sm:$0xf]
      %964 = vset.pattern.permute.xlu0 0
      %965 = vperm.xlu0 %964, %v962
      %v966 = vpop.permute.xlu0 %965
      %v968 = vadd.f32 %v960, %v966
      %v969 = vpack.c.bf16 %v968, %v968
      %v971 = vrot.slane %v763, 6
      %v973 = vrot.slane %v864, 4
      %v975 = vrot.slane %v969, 2
      %v978 = vsel %vm688, %v655, %v971
      %v980 = vsel %vm691, %v978, %v973
      %v982 = vsel %vm705, %v980, %v975
      %v984 = vld [vmem:[%s9] sm:$0xf]
      %v985 = vld [vmem:[%s9 + $0x4] sm:$0xf]
      %v986 = vld [vmem:[%s10] sm:$0xff]
      %v987 = vld [vmem:[%s10 + $0x8] sm:$0xff]
      %989 = vset.pattern.permute.xlu0 0
      %990 = vperm.xlu0 %989, %v986
      %v991 = vpop.permute.xlu0 %990
      %994 = vset.pattern.permute.xlu0 0
      %995 = vperm.xlu0 %994, %v987
      %v996 = vpop.permute.xlu0 %995
      %v1000 = vunpack.c.l.b16 %v984
      %v1001 = vunpack.c.l.b16 %v985
      %v1002 = vpack.c.b16 %v1001, %v1000
      %v1004 = vsel %vm580, %v1002, 0
      %1006 = vmatprep.subr.bf16.mxu0 0
      %1007 = vmatpush1.bf16.msra.mxu0 %v982
      %1008 = vmatprep.subr.bf16.mxu0 0
      %1009 = vmatpush1.bf16.msra.mxu0 0
      %1010 = vmatprep.subr.bf16.mxu0 0
      %1011 = vmatpush1.bf16.msra.mxu0 0
      %1012 = vmatprep.subr.bf16.mxu0 0
      %1013 = vmatpush1.bf16.msra.mxu0 0
      %1014 = vmatprep.subr.bf16.mxu0 0
      %1015 = vmatpush1.bf16.msra.mxu0 0
      %1016 = vmatprep.subr.bf16.mxu0 0
      %1017 = vmatpush1.bf16.msra.mxu0 0
      %1018 = vmatprep.subr.bf16.mxu0 0
      %1019 = vmatpush1.bf16.msra.mxu0 0
      %1020 = vmatprep.subr.bf16.mxu0 0
      %1021 = vmatpush1.bf16.msra.mxu0 0
      %1022 = vmatprep.subr.bf16.mxu0 0
      %1023 = vmatpush1.bf16.msra.mxu0 0
      %1024 = vmatprep.subr.bf16.mxu0 0
      %1025 = vmatpush1.bf16.msra.mxu0 0
      %1026 = vmatprep.subr.bf16.mxu0 0
      %1027 = vmatpush1.bf16.msra.mxu0 0
      %1028 = vmatprep.subr.bf16.mxu0 0
      %1029 = vmatpush1.bf16.msra.mxu0 0
      %1030 = vmatprep.subr.bf16.mxu0 0
      %1031 = vmatpush1.bf16.msra.mxu0 0
      %1032 = vmatprep.subr.bf16.mxu0 0
      %1033 = vmatpush1.bf16.msra.mxu0 0
      %1034 = vmatprep.subr.bf16.mxu0 0
      %1035 = vmatpush1.bf16.msra.mxu0 0
      %1036 = vmatprep.subr.bf16.mxu0 0
      %1037 = vmatpush1.bf16.msra.mxu0 0
      %1038 = vmatprep.mubr.bf16.mxu0 0
      %1039 = vmatmul.mubr.bf16.gmra.mrb[0].mxu0 %v1004
      %v1040 = vpop.f32.mrb[0].mxu0
      %v1041 = vadd.f32 %v991, %v1040
      %v1042 = vpop.f32.mrb[0].mxu0
      %v1043 = vpop.f32.mrb[0].mxu0
      %v1044 = vadd.f32 %v996, %v1043
      %v1045 = vpop.f32.mrb[0].mxu0
      %1046 = vdwg.mxu0
      %v1047 = vmax.f32 %v1041, 0.0
      %v1048 = vmax.f32 %v1044, 0.0
      %v1049 = vld [vmem:[%s11] sm:$0xff]
      %v1050 = vld [vmem:[%s11 + $0x8] sm:$0xff]
      %1052 = vset.pattern.permute.xlu0 0
      %1053 = vperm.xlu0 %1052, %v1049
      %v1054 = vpop.permute.xlu0 %1053
      %1057 = vset.pattern.permute.xlu0 0
      %1058 = vperm.xlu0 %1057, %v1050
      %v1059 = vpop.permute.xlu0 %1058
      %v1061 = vmul.f32 %v1047, %v1054
      %v1062 = vmul.f32 %v1048, %v1059
      %v1063 = vld [vmem:[%s12] sm:$0xff]
      %v1064 = vld [vmem:[%s12 + $0x8] sm:$0xff]
      %1066 = vset.pattern.permute.xlu0 0
      %1067 = vperm.xlu0 %1066, %v1063
      %v1068 = vpop.permute.xlu0 %1067
      %1071 = vset.pattern.permute.xlu0 0
      %1072 = vperm.xlu0 %1071, %v1064
      %v1073 = vpop.permute.xlu0 %1072
      %v1075 = vadd.f32 %v1061, %v1068
      %v1076 = vadd.f32 %v1062, %v1073
      %v1077 = vsel %vm658, %v1075, 0.0
      %v1078 = vsel %vm658, %v1076, 0.0
      %1079 = vadd.xlane.f32.xlu0 %v1077
      %v1080 = vpop.xlane.xlu0 %1079
      %1081 = vadd.xlane.f32.xlu0 %v1078
      %v1082 = vpop.xlane.xlu0 %1081
      %v1083 = vmul.f32 %v1080, 0.0625
      %v1084 = vmul.f32 %v1082, 0.0625
      %v1085 = vld [vmem:[%s13] sm:$0xff]
      %v1086 = vld [vmem:[%s14] sm:$0xff]
      %v1088 = vsel %vm580, %v1085, 0
      %1090 = vmatprep.subr.mxu0 0.0
      %1091 = vmatpush1.msra.mxu0 %v1083
      %1092 = vmatprep.subr.mxu0 0.0
      %1093 = vmatpush1.msra.mxu0 %v1084
      %1094 = vmatprep.subr.mxu0 0.0
      %1095 = vmatpush1.msra.mxu0 0.0
      %1096 = vmatprep.subr.mxu0 0.0
      %1097 = vmatpush1.msra.mxu0 0.0
      %1098 = vmatprep.subr.mxu0 0.0
      %1099 = vmatpush1.msra.mxu0 0.0
      %1100 = vmatprep.subr.mxu0 0.0
      %1101 = vmatpush1.msra.mxu0 0.0
      %1102 = vmatprep.subr.mxu0 0.0
      %1103 = vmatpush1.msra.mxu0 0.0
      %1104 = vmatprep.subr.mxu0 0.0
      %1105 = vmatpush1.msra.mxu0 0.0
      %1106 = vmatprep.subr.mxu0 0.0
      %1107 = vmatpush1.msra.mxu0 0.0
      %1108 = vmatprep.subr.mxu0 0.0
      %1109 = vmatpush1.msra.mxu0 0.0
      %1110 = vmatprep.subr.mxu0 0.0
      %1111 = vmatpush1.msra.mxu0 0.0
      %1112 = vmatprep.subr.mxu0 0.0
      %1113 = vmatpush1.msra.mxu0 0.0
      %1114 = vmatprep.subr.mxu0 0.0
      %1115 = vmatpush1.msra.mxu0 0.0
      %1116 = vmatprep.subr.mxu0 0.0
      %1117 = vmatpush1.msra.mxu0 0.0
      %1118 = vmatprep.subr.mxu0 0.0
      %1119 = vmatpush1.msra.mxu0 0.0
      %1120 = vmatprep.subr.mxu0 0.0
      %1121 = vmatpush1.msra.mxu0 0.0
      %1122 = vmatprep.subr.mxu0 0.0
      %1123 = vmatpush1.msra.mxu0 0.0
      %1124 = vmatprep.subr.mxu0 0.0
      %1125 = vmatpush1.msra.mxu0 0.0
      %1126 = vmatprep.subr.mxu0 0.0
      %1127 = vmatpush1.msra.mxu0 0.0
      %1128 = vmatprep.subr.mxu0 0.0
      %1129 = vmatpush1.msra.mxu0 0.0
      %1130 = vmatprep.subr.mxu0 0.0
      %1131 = vmatpush1.msra.mxu0 0.0
      %1132 = vmatprep.subr.mxu0 0.0
      %1133 = vmatpush1.msra.mxu0 0.0
      %1134 = vmatprep.subr.mxu0 0.0
      %1135 = vmatpush1.msra.mxu0 0.0
      %1136 = vmatprep.subr.mxu0 0.0
      %1137 = vmatpush1.msra.mxu0 0.0
      %1138 = vmatprep.subr.mxu0 0.0
      %1139 = vmatpush1.msra.mxu0 0.0
      %1140 = vmatprep.subr.mxu0 0.0
      %1141 = vmatpush1.msra.mxu0 0.0
      %1142 = vmatprep.subr.mxu0 0.0
      %1143 = vmatpush1.msra.mxu0 0.0
      %1144 = vmatprep.subr.mxu0 0.0
      %1145 = vmatpush1.msra.mxu0 0.0
      %1146 = vmatprep.subr.mxu0 0.0
      %1147 = vmatpush1.msra.mxu0 0.0
      %1148 = vmatprep.subr.mxu0 0.0
      %1149 = vmatpush1.msra.mxu0 0.0
      %1150 = vmatprep.subr.mxu0 0.0
      %1151 = vmatpush1.msra.mxu0 0.0
      %1152 = vmatprep.subr.mxu0 0.0
      %1153 = vmatpush1.msra.mxu0 0.0
      %1154 = vmatprep.mubr.f32.mxu0 0.0
      %1155 = vmatmul.mubr.f32.gmra.mrb[0].mxu0 %v1088
      %v1156 = vpop.f32.mrb[0].mxu0
      %v1157 = vadd.f32 %v1086, %v1156
      %v1158 = vpop.f32.mrb[0].mxu0
      %1159 = vdwg.mxu0
      %v1160 = vmax.f32 %v1157, 0.0
      %v1161 = vld [vmem:[%s15] sm:$0xff]
      %v1162 = vld [vmem:[%s15 + $0x8] sm:$0xff]
      %v1163 = vld [vmem:[%s16] sm:$0xff]
      %v1164 = vld [vmem:[%s16 + $0x8] sm:$0xff]
      %vm1165 = vcmask 64512
      %v1167 = vsel %vm1165, %v1161, 0
      %v1170 = vsel %vm1165, %v1162, 0
      %1172 = vmatprep.subr.mxu0 0.0
      %1173 = vmatpush1.msra.mxu0 %v1160
      %1174 = vmatprep.subr.mxu0 0.0
      %1175 = vmatpush1.msra.mxu0 0.0
      %1176 = vmatprep.subr.mxu0 0.0
      %1177 = vmatpush1.msra.mxu0 0.0
      %1178 = vmatprep.subr.mxu0 0.0
      %1179 = vmatpush1.msra.mxu0 0.0
      %1180 = vmatprep.subr.mxu0 0.0
      %1181 = vmatpush1.msra.mxu0 0.0
      %1182 = vmatprep.subr.mxu0 0.0
      %1183 = vmatpush1.msra.mxu0 0.0
      %1184 = vmatprep.subr.mxu0 0.0
      %1185 = vmatpush1.msra.mxu0 0.0
      %1186 = vmatprep.subr.mxu0 0.0
      %1187 = vmatpush1.msra.mxu0 0.0
      %1188 = vmatprep.subr.mxu0 0.0
      %1189 = vmatpush1.msra.mxu0 0.0
      %1190 = vmatprep.subr.mxu0 0.0
      %1191 = vmatpush1.msra.mxu0 0.0
      %1192 = vmatprep.subr.mxu0 0.0
      %1193 = vmatpush1.msra.mxu0 0.0
      %1194 = vmatprep.subr.mxu0 0.0
      %1195 = vmatpush1.msra.mxu0 0.0
      %1196 = vmatprep.subr.mxu0 0.0
      %1197 = vmatpush1.msra.mxu0 0.0
      %1198 = vmatprep.subr.mxu0 0.0
      %1199 = vmatpush1.msra.mxu0 0.0
      %1200 = vmatprep.subr.mxu0 0.0
      %1201 = vmatpush1.msra.mxu0 0.0
      %1202 = vmatprep.subr.mxu0 0.0
      %1203 = vmatpush1.msra.mxu0 0.0
      %1204 = vmatprep.subr.mxu0 0.0
      %1205 = vmatpush1.msra.mxu0 0.0
      %1206 = vmatprep.subr.mxu0 0.0
      %1207 = vmatpush1.msra.mxu0 0.0
      %1208 = vmatprep.subr.mxu0 0.0
      %1209 = vmatpush1.msra.mxu0 0.0
      %1210 = vmatprep.subr.mxu0 0.0
      %1211 = vmatpush1.msra.mxu0 0.0
      %1212 = vmatprep.subr.mxu0 0.0
      %1213 = vmatpush1.msra.mxu0 0.0
      %1214 = vmatprep.subr.mxu0 0.0
      %1215 = vmatpush1.msra.mxu0 0.0
      %1216 = vmatprep.subr.mxu0 0.0
      %1217 = vmatpush1.msra.mxu0 0.0
      %1218 = vmatprep.subr.mxu0 0.0
      %1219 = vmatpush1.msra.mxu0 0.0
      %1220 = vmatprep.subr.mxu0 0.0
      %1221 = vmatpush1.msra.mxu0 0.0
      %1222 = vmatprep.subr.mxu0 0.0
      %1223 = vmatpush1.msra.mxu0 0.0
      %1224 = vmatprep.subr.mxu0 0.0
      %1225 = vmatpush1.msra.mxu0 0.0
      %1226 = vmatprep.subr.mxu0 0.0
      %1227 = vmatpush1.msra.mxu0 0.0
      %1228 = vmatprep.subr.mxu0 0.0
      %1229 = vmatpush1.msra.mxu0 0.0
      %1230 = vmatprep.subr.mxu0 0.0
      %1231 = vmatpush1.msra.mxu0 0.0
      %1232 = vmatprep.subr.mxu0 0.0
      %1233 = vmatpush1.msra.mxu0 0.0
      %1234 = vmatprep.subr.mxu0 0.0
      %1235 = vmatpush1.msra.mxu0 0.0
      %1236 = vmatprep.mubr.f32.mxu0 0.0
      %1237 = vmatmul.mubr.f32.gmra.mrb[0].mxu0 %v1167
      %v1238 = vpop.f32.mrb[0].mxu0
      %v1239 = vadd.f32 %v1163, %v1238
      %v1240 = vpop.f32.mrb[0].mxu0
      %1241 = vmatprep.mubr.f32.mxu0 0.0
      %1242 = vmatmul.mubr.f32.gmra.mrb[0].mxu0 %v1170
      %v1243 = vpop.f32.mrb[0].mxu0
      %v1244 = vadd.f32 %v1164, %v1243
      %v1245 = vpop.f32.mrb[0].mxu0
      %1246 = vdwg.mxu0
      %v1247 = vxor.u32 %v1239, 2147483648
      %v1248 = vxor.u32 %v1244, 2147483648
      %v1249 = vmul.f32 %v1247, 1.442695
      %v1250 = vpow.pop %v1249
      %v1251 = vmul.f32 %v1248, 1.442695
      %v1252 = vpow.pop %v1251
      %v1253 = vadd.f32 %v1250, 1.0
      %v1254 = vadd.f32 %v1252, 1.0
      %v1255 = vrcp.pop %v1253
      %v1256 = vmul.f32 1.0, %v1255
      %v1257 = vrcp.pop %v1254
      %v1258 = vmul.f32 1.0, %v1257
      %1260 = vset.pattern.permute.xlu0 0
      %1261 = vperm.xlu0 %1260, %v1256
      %v1262 = vpop.permute.xlu0 %1261
      %1265 = vset.pattern.permute.xlu0 0
      %1266 = vperm.xlu0 %1265, %v1258
      %v1267 = vpop.permute.xlu0 %1266
      %v1269 = vmul.f32 %v1075, %v1262
      %v1270 = vmul.f32 %v1076, %v1267
      %v1271 = vunpack.c.l.bf16 %v550
      %v1272 = vunpack.c.l.bf16 %v551
      %v1273 = vadd.f32 %v1269, %v1271
      %v1274 = vadd.f32 %v1270, %v1272
      %v1275 = vpack.c.bf16 %v1274, %v1273
      %v1277 = vunpack.c.l.b16 %v1275
      %v1278 = vunpack.c.h.b16 %v1275
      %v1279 = vpack.c.b16 %v1277, %v1277
      %v1280 = vpack.c.b16 %v1278, %v1278
      %1283 = vst [vmem:[%s548] sm:$0xf] %v1279
      %1284 = vst [vmem:[%s548 + $0x4] sm:$0xf] %v1280
      %p1285 = scmp.lt.s32.totalorder %s28, 1
      %s1286 = scalar_select %p1285, %s28, 1
      %s1287 = smul.addr %s1286, 2
      %s1288 = smul.addr %s1287, 4
      %s1289 = scalar_lea.vmem %s17, %s1288
      // Predicated region
      $region89: #{vove_forward.7} parent=87 // pred_check
        %p1290 = pneg %p408
      $region90: #{vove_forward.7} parent=87 // pred_check_branch
        %1292 = sbr.rel (%p1290) target = $region92
      $region91: #{vove_forward.7} parent=87 // pred_region
        _
      $region92: #{vove_forward.7} parent=87 // pred_fallthru
        _
    $region88: #{vove_forward.7} parent=5 // pred_fallthru
      _
    %p1293 = scmp.le.s32.totalorder 2, %s23
    // Predicated region
    $region93: #{vove_forward.7} parent=5 // pred_check
      %p1294 = pneg %p1293
    $region94: #{vove_forward.7} parent=5 // pred_check_branch
      %1296 = sbr.rel (%p1294) target = $region96
    $region95: #{vove_forward.7} parent=5 // pred_region
      %s1297 = ssub.s32 %s23, 2
      // Predicated region
      $region97: #{vove_forward.7} parent=95 // pred_check
        %p1298 = pneg %p414
      $region98: #{vove_forward.7} parent=95 // pred_check_branch
        %1300 = sbr.rel (%p1298) target = $region100
      $region99: #{vove_forward.7} parent=95 // pred_region
        %p1301 = scmp.lt.s32.totalorder %s29, 1
        %s1302 = scalar_select %p1301, %s29, 1
        %s1303 = smul.addr %s1302, 2
        %s1304 = smul.addr %s1303, 4
        %s1305 = scalar_lea.vmem %s17, %s1304
      $region100: #{vove_forward.7} parent=95 // pred_fallthru
        _
    $region96: #{vove_forward.7} parent=5 // pred_fallthru
      _
  $region6: #{vove_forward.7} parent=0 // loop_footer
    %s27 = sadd.s32 1, %s23
  $region7: #{vove_forward.7} parent=0 // loop_footer_branch
    %22 = sbr.rel target = $region3
  $region8: #{vove_forward.7} parent=0 // loop_exit
    _

// kernel: vove_forward.8
$region0: #{vove_forward.8}
  #allocation0 [shape = 'u32[]', space=smem, size = 0x4, offset = 0x4, fixed_abs, tag = 'smem constant byte address 0x4 - core index']
  #allocation1 [shape = 'u32[144,128]{1,0:T(1,128)}', space=vmem, size = 0x12000, scoped, tag = 'internal scratch']
  %s0 = inlined_call_operand.vmem [shape: bf16[2,16,128], index: 0, kind: input, shape index: {}]
  %s1 = inlined_call_operand.vmem [shape: bf16[16,16], index: 1, kind: input, shape index: {}]
  %s2 = inlined_call_operand.vmem [shape: f32[16,1], index: 2, kind: input, shape index: {}]
  %s3 = inlined_call_operand.vmem [shape: f32[16,1], index: 3, kind: input, shape index: {}]
  %s4 = inlined_call_operand.vmem [shape: f32[16,1], index: 4, kind: input, shape index: {}]
  %s5 = inlined_call_operand.vmem [shape: bf16[3,4,12], index: 5, kind: input, shape index: {}]
  %s6 = inlined_call_operand.vmem [shape: f32[3,4,1], index: 6, kind: input, shape index: {}]
  %s7 = inlined_call_operand.vmem [shape: f32[3,4,1], index: 7, kind: input, shape index: {}]
  %s8 = inlined_call_operand.vmem [shape: f32[3,4,1], index: 8, kind: input, shape index: {}]
  %s9 = inlined_call_operand.vmem [shape: bf16[16,16], index: 9, kind: input, shape index: {}]
  %s10 = inlined_call_operand.vmem [shape: f32[16,1], index: 10, kind: input, shape index: {}]
  %s11 = inlined_call_operand.vmem [shape: f32[16,1], index: 11, kind: input, shape index: {}]
  %s12 = inlined_call_operand.vmem [shape: f32[16,1], index: 12, kind: input, shape index: {}]
  %s13 = inlined_call_operand.vmem [shape: f32[8,16], index: 13, kind: input, shape index: {}]
  %s14 = inlined_call_operand.vmem [shape: f32[8,1], index: 14, kind: input, shape index: {}]
  %s15 = inlined_call_operand.vmem [shape: f32[16,8], index: 15, kind: input, shape index: {}]
  %s16 = inlined_call_operand.vmem [shape: f32[16,1], index: 16, kind: input, shape index: {}]
  %s17 = inlined_call_operand.vmem [shape: bf16[2,16,128], index: 17, kind: output, shape index: {}]
  %s18 = sld [smem:[#allocation0]]
  $region101: #{vove_forward.8} parent=0
    _
  %s20 = ssub.s32 1, %s18
  %s21 = scalar_select 0, %s20, %s18
  loop: start=0, step=1, limit=4
  $region2: #{vove_forward.8} parent=0 // loop_pre_header
    _
  $region3: #{vove_forward.8} parent=0 // loop_header
    %s23 = sphi 0, %s27
    %p24 = scmp.ge.s32.totalorder %s23, 4
    %s33 = sphi 0, %s35
    %s36 = sphi 0, %s33
    %s37 = sphi 0, %s36
    %s53 = sphi 0, %s37
    %s57 = sphi 0, %s57
    %s59 = sphi 0, %s57
    %s60 = sphi 0, %s59
    %s74 = sphi 0, %s60
    %s78 = sphi 0, %s78
    %s80 = sphi 0, %s78
    %s81 = sphi 0, %s80
    %s95 = sphi 0, %s81
    %s99 = sphi 0, %s99
    %s101 = sphi 0, %s99
    %s102 = sphi 0, %s101
    %s116 = sphi 0, %s102
    %s120 = sphi 0, %s120
    %s122 = sphi 0, %s120
    %s123 = sphi 0, %s122
    %s137 = sphi 0, %s123
    %s141 = sphi 0, %s141
    %s143 = sphi 0, %s141
    %s144 = sphi 0, %s143
    %s158 = sphi 0, %s144
    %s162 = sphi 0, %s162
    %s164 = sphi 0, %s162
    %s165 = sphi 0, %s164
    %s179 = sphi 0, %s165
    %s183 = sphi 0, %s183
    %s185 = sphi 0, %s183
    %s186 = sphi 0, %s185
    %s200 = sphi 0, %s186
    %s204 = sphi 0, %s204
    %s206 = sphi 0, %s204
    %s207 = sphi 0, %s206
    %s221 = sphi 0, %s207
    %s225 = sphi 0, %s225
    %s227 = sphi 0, %s225
    %s228 = sphi 0, %s227
    %s242 = sphi 0, %s228
    %s246 = sphi 0, %s246
    %s248 = sphi 0, %s246
    %s249 = sphi 0, %s248
    %s263 = sphi 0, %s249
    %s267 = sphi 0, %s267
    %s269 = sphi 0, %s267
    %s270 = sphi 0, %s269
    %s284 = sphi 0, %s270
    %s288 = sphi 0, %s288
    %s290 = sphi 0, %s288
    %s291 = sphi 0, %s290
    %s305 = sphi 0, %s291
    %s309 = sphi 0, %s309
    %s311 = sphi 0, %s309
    %s312 = sphi 0, %s311
    %s326 = sphi 0, %s312
    %s330 = sphi 0, %s330
    %s332 = sphi 0, %s330
    %s333 = sphi 0, %s332
    %s347 = sphi 0, %s333
    %s351 = sphi 0, %s351
    %s353 = sphi 0, %s351
    %s354 = sphi 0, %s353
    %s368 = sphi 0, %s354
    %s372 = sphi 0, %s372
    %s374 = sphi 0, %s372
    %s375 = sphi 0, %s374
    %s389 = sphi 0, %s375
    %s395 = sphi 0, %s397
    %s398 = sphi 0, %s395
    %s399 = sphi 0, %s398
    %s415 = sphi 0, %s399
  $region4: #{vove_forward.8} parent=0 // loop_header_branch
    %26 = sbr.rel (%p24) target = $region8
  $region5: #{vove_forward.8} parent=0 // loop_body
    %s28 = ssub.s32 %s23, 1
    %s29 = ssub.s32 %s23, 2
    %s30 = sadd.s32 %s23, 1
    %s31 = ssub.s32 %s23, %s30
    %p32 = scmp.eq.s32.totalorder %s31, 0
    %s34 = sadd.s32 %s33, 1
    %s35 = scalar_select %p32, %s33, %s34
    %p38 = pneg %p32
    %p39 = scmp.eq.s32.totalorder %s23, 1
    %p40 = por %p38, %p39
    %p41 = scmp.ne.s32.totalorder %s33, %s36
    %p42 = scmp.eq.s32.totalorder %s23, 0
    %p43 = por %p41, %p42
    %p44 = scmp.ne.s32.totalorder %s33, %s36
    %p45 = scmp.eq.s32.totalorder %s28, 1
    %p46 = por %p44, %p45
    %p47 = scmp.ne.s32.totalorder %s36, %s37
    %p48 = scmp.eq.s32.totalorder %s28, 0
    %p49 = por %p47, %p48
    %p50 = scmp.ne.s32.totalorder %s36, %s37
    %p51 = scmp.eq.s32.totalorder %s29, 1
    %p52 = por %p50, %p51
    %p54 = scmp.ne.s32.totalorder %s37, %s53
    %p55 = scmp.eq.s32.totalorder %s29, 0
    %p56 = por %p54, %p55
    %s58 = sadd.s32 %s57, 1
    %p61 = scmp.eq.s32.totalorder %s23, 1
    %p62 = scmp.ne.s32.totalorder %s57, %s59
    %p63 = scmp.eq.s32.totalorder %s23, 0
    %p64 = por %p62, %p63
    %p65 = scmp.ne.s32.totalorder %s57, %s59
    %p66 = scmp.eq.s32.totalorder %s28, 1
    %p67 = por %p65, %p66
    %p68 = scmp.ne.s32.totalorder %s59, %s60
    %p69 = scmp.eq.s32.totalorder %s28, 0
    %p70 = por %p68, %p69
    %p71 = scmp.ne.s32.totalorder %s59, %s60
    %p72 = scmp.eq.s32.totalorder %s29, 1
    %p73 = por %p71, %p72
    %p75 = scmp.ne.s32.totalorder %s60, %s74
    %p76 = scmp.eq.s32.totalorder %s29, 0
    %p77 = por %p75, %p76
    %s79 = sadd.s32 %s78, 1
    %p82 = scmp.eq.s32.totalorder %s23, 1
    %p83 = scmp.ne.s32.totalorder %s78, %s80
    %p84 = scmp.eq.s32.totalorder %s23, 0
    %p85 = por %p83, %p84
    %p86 = scmp.ne.s32.totalorder %s78, %s80
    %p87 = scmp.eq.s32.totalorder %s28, 1
    %p88 = por %p86, %p87
    %p89 = scmp.ne.s32.totalorder %s80, %s81
    %p90 = scmp.eq.s32.totalorder %s28, 0
    %p91 = por %p89, %p90
    %p92 = scmp.ne.s32.totalorder %s80, %s81
    %p93 = scmp.eq.s32.totalorder %s29, 1
    %p94 = por %p92, %p93
    %p96 = scmp.ne.s32.totalorder %s81, %s95
    %p97 = scmp.eq.s32.totalorder %s29, 0
    %p98 = por %p96, %p97
    %s100 = sadd.s32 %s99, 1
    %p103 = scmp.eq.s32.totalorder %s23, 1
    %p104 = scmp.ne.s32.totalorder %s99, %s101
    %p105 = scmp.eq.s32.totalorder %s23, 0
    %p106 = por %p104, %p105
    %p107 = scmp.ne.s32.totalorder %s99, %s101
    %p108 = scmp.eq.s32.totalorder %s28, 1
    %p109 = por %p107, %p108
    %p110 = scmp.ne.s32.totalorder %s101, %s102
    %p111 = scmp.eq.s32.totalorder %s28, 0
    %p112 = por %p110, %p111
    %p113 = scmp.ne.s32.totalorder %s101, %s102
    %p114 = scmp.eq.s32.totalorder %s29, 1
    %p115 = por %p113, %p114
    %p117 = scmp.ne.s32.totalorder %s102, %s116
    %p118 = scmp.eq.s32.totalorder %s29, 0
    %p119 = por %p117, %p118
    %s121 = sadd.s32 %s120, 1
    %p124 = scmp.eq.s32.totalorder %s23, 1
    %p125 = scmp.ne.s32.totalorder %s120, %s122
    %p126 = scmp.eq.s32.totalorder %s23, 0
    %p127 = por %p125, %p126
    %p128 = scmp.ne.s32.totalorder %s120, %s122
    %p129 = scmp.eq.s32.totalorder %s28, 1
    %p130 = por %p128, %p129
    %p131 = scmp.ne.s32.totalorder %s122, %s123
    %p132 = scmp.eq.s32.totalorder %s28, 0
    %p133 = por %p131, %p132
    %p134 = scmp.ne.s32.totalorder %s122, %s123
    %p135 = scmp.eq.s32.totalorder %s29, 1
    %p136 = por %p134, %p135
    %p138 = scmp.ne.s32.totalorder %s123, %s137
    %p139 = scmp.eq.s32.totalorder %s29, 0
    %p140 = por %p138, %p139
    %s142 = sadd.s32 %s141, 1
    %p145 = scmp.eq.s32.totalorder %s23, 1
    %p146 = scmp.ne.s32.totalorder %s141, %s143
    %p147 = scmp.eq.s32.totalorder %s23, 0
    %p148 = por %p146, %p147
    %p149 = scmp.ne.s32.totalorder %s141, %s143
    %p150 = scmp.eq.s32.totalorder %s28, 1
    %p151 = por %p149, %p150
    %p152 = scmp.ne.s32.totalorder %s143, %s144
    %p153 = scmp.eq.s32.totalorder %s28, 0
    %p154 = por %p152, %p153
    %p155 = scmp.ne.s32.totalorder %s143, %s144
    %p156 = scmp.eq.s32.totalorder %s29, 1
    %p157 = por %p155, %p156
    %p159 = scmp.ne.s32.totalorder %s144, %s158
    %p160 = scmp.eq.s32.totalorder %s29, 0
    %p161 = por %p159, %p160
    %s163 = sadd.s32 %s162, 1
    %p166 = scmp.eq.s32.totalorder %s23, 1
    %p167 = scmp.ne.s32.totalorder %s162, %s164
    %p168 = scmp.eq.s32.totalorder %s23, 0
    %p169 = por %p167, %p168
    %p170 = scmp.ne.s32.totalorder %s162, %s164
    %p171 = scmp.eq.s32.totalorder %s28, 1
    %p172 = por %p170, %p171
    %p173 = scmp.ne.s32.totalorder %s164, %s165
    %p174 = scmp.eq.s32.totalorder %s28, 0
    %p175 = por %p173, %p174
    %p176 = scmp.ne.s32.totalorder %s164, %s165
    %p177 = scmp.eq.s32.totalorder %s29, 1
    %p178 = por %p176, %p177
    %p180 = scmp.ne.s32.totalorder %s165, %s179
    %p181 = scmp.eq.s32.totalorder %s29, 0
    %p182 = por %p180, %p181
    %s184 = sadd.s32 %s183, 1
    %p187 = scmp.eq.s32.totalorder %s23, 1
    %p188 = scmp.ne.s32.totalorder %s183, %s185
    %p189 = scmp.eq.s32.totalorder %s23, 0
    %p190 = por %p188, %p189
    %p191 = scmp.ne.s32.totalorder %s183, %s185
    %p192 = scmp.eq.s32.totalorder %s28, 1
    %p193 = por %p191, %p192
    %p194 = scmp.ne.s32.totalorder %s185, %s186
    %p195 = scmp.eq.s32.totalorder %s28, 0
    %p196 = por %p194, %p195
    %p197 = scmp.ne.s32.totalorder %s185, %s186
    %p198 = scmp.eq.s32.totalorder %s29, 1
    %p199 = por %p197, %p198
    %p201 = scmp.ne.s32.totalorder %s186, %s200
    %p202 = scmp.eq.s32.totalorder %s29, 0
    %p203 = por %p201, %p202
    %s205 = sadd.s32 %s204, 1
    %p208 = scmp.eq.s32.totalorder %s23, 1
    %p209 = scmp.ne.s32.totalorder %s204, %s206
    %p210 = scmp.eq.s32.totalorder %s23, 0
    %p211 = por %p209, %p210
    %p212 = scmp.ne.s32.totalorder %s204, %s206
    %p213 = scmp.eq.s32.totalorder %s28, 1
    %p214 = por %p212, %p213
    %p215 = scmp.ne.s32.totalorder %s206, %s207
    %p216 = scmp.eq.s32.totalorder %s28, 0
    %p217 = por %p215, %p216
    %p218 = scmp.ne.s32.totalorder %s206, %s207
    %p219 = scmp.eq.s32.totalorder %s29, 1
    %p220 = por %p218, %p219
    %p222 = scmp.ne.s32.totalorder %s207, %s221
    %p223 = scmp.eq.s32.totalorder %s29, 0
    %p224 = por %p222, %p223
    %s226 = sadd.s32 %s225, 1
    %p229 = scmp.eq.s32.totalorder %s23, 1
    %p230 = scmp.ne.s32.totalorder %s225, %s227
    %p231 = scmp.eq.s32.totalorder %s23, 0
    %p232 = por %p230, %p231
    %p233 = scmp.ne.s32.totalorder %s225, %s227
    %p234 = scmp.eq.s32.totalorder %s28, 1
    %p235 = por %p233, %p234
    %p236 = scmp.ne.s32.totalorder %s227, %s228
    %p237 = scmp.eq.s32.totalorder %s28, 0
    %p238 = por %p236, %p237
    %p239 = scmp.ne.s32.totalorder %s227, %s228
    %p240 = scmp.eq.s32.totalorder %s29, 1
    %p241 = por %p239, %p240
    %p243 = scmp.ne.s32.totalorder %s228, %s242
    %p244 = scmp.eq.s32.totalorder %s29, 0
    %p245 = por %p243, %p244
    %s247 = sadd.s32 %s246, 1
    %p250 = scmp.eq.s32.totalorder %s23, 1
    %p251 = scmp.ne.s32.totalorder %s246, %s248
    %p252 = scmp.eq.s32.totalorder %s23, 0
    %p253 = por %p251, %p252
    %p254 = scmp.ne.s32.totalorder %s246, %s248
    %p255 = scmp.eq.s32.totalorder %s28, 1
    %p256 = por %p254, %p255
    %p257 = scmp.ne.s32.totalorder %s248, %s249
    %p258 = scmp.eq.s32.totalorder %s28, 0
    %p259 = por %p257, %p258
    %p260 = scmp.ne.s32.totalorder %s248, %s249
    %p261 = scmp.eq.s32.totalorder %s29, 1
    %p262 = por %p260, %p261
    %p264 = scmp.ne.s32.totalorder %s249, %s263
    %p265 = scmp.eq.s32.totalorder %s29, 0
    %p266 = por %p264, %p265
    %s268 = sadd.s32 %s267, 1
    %p271 = scmp.eq.s32.totalorder %s23, 1
    %p272 = scmp.ne.s32.totalorder %s267, %s269
    %p273 = scmp.eq.s32.totalorder %s23, 0
    %p274 = por %p272, %p273
    %p275 = scmp.ne.s32.totalorder %s267, %s269
    %p276 = scmp.eq.s32.totalorder %s28, 1
    %p277 = por %p275, %p276
    %p278 = scmp.ne.s32.totalorder %s269, %s270
    %p279 = scmp.eq.s32.totalorder %s28, 0
    %p280 = por %p278, %p279
    %p281 = scmp.ne.s32.totalorder %s269, %s270
    %p282 = scmp.eq.s32.totalorder %s29, 1
    %p283 = por %p281, %p282
    %p285 = scmp.ne.s32.totalorder %s270, %s284
    %p286 = scmp.eq.s32.totalorder %s29, 0
    %p287 = por %p285, %p286
    %s289 = sadd.s32 %s288, 1
    %p292 = scmp.eq.s32.totalorder %s23, 1
    %p293 = scmp.ne.s32.totalorder %s288, %s290
    %p294 = scmp.eq.s32.totalorder %s23, 0
    %p295 = por %p293, %p294
    %p296 = scmp.ne.s32.totalorder %s288, %s290
    %p297 = scmp.eq.s32.totalorder %s28, 1
    %p298 = por %p296, %p297
    %p299 = scmp.ne.s32.totalorder %s290, %s291
    %p300 = scmp.eq.s32.totalorder %s28, 0
    %p301 = por %p299, %p300
    %p302 = scmp.ne.s32.totalorder %s290, %s291
    %p303 = scmp.eq.s32.totalorder %s29, 1
    %p304 = por %p302, %p303
    %p306 = scmp.ne.s32.totalorder %s291, %s305
    %p307 = scmp.eq.s32.totalorder %s29, 0
    %p308 = por %p306, %p307
    %s310 = sadd.s32 %s309, 1
    %p313 = scmp.eq.s32.totalorder %s23, 1
    %p314 = scmp.ne.s32.totalorder %s309, %s311
    %p315 = scmp.eq.s32.totalorder %s23, 0
    %p316 = por %p314, %p315
    %p317 = scmp.ne.s32.totalorder %s309, %s311
    %p318 = scmp.eq.s32.totalorder %s28, 1
    %p319 = por %p317, %p318
    %p320 = scmp.ne.s32.totalorder %s311, %s312
    %p321 = scmp.eq.s32.totalorder %s28, 0
    %p322 = por %p320, %p321
    %p323 = scmp.ne.s32.totalorder %s311, %s312
    %p324 = scmp.eq.s32.totalorder %s29, 1
    %p325 = por %p323, %p324
    %p327 = scmp.ne.s32.totalorder %s312, %s326
    %p328 = scmp.eq.s32.totalorder %s29, 0
    %p329 = por %p327, %p328
    %s331 = sadd.s32 %s330, 1
    %p334 = scmp.eq.s32.totalorder %s23, 1
    %p335 = scmp.ne.s32.totalorder %s330, %s332
    %p336 = scmp.eq.s32.totalorder %s23, 0
    %p337 = por %p335, %p336
    %p338 = scmp.ne.s32.totalorder %s330, %s332
    %p339 = scmp.eq.s32.totalorder %s28, 1
    %p340 = por %p338, %p339
    %p341 = scmp.ne.s32.totalorder %s332, %s333
    %p342 = scmp.eq.s32.totalorder %s28, 0
    %p343 = por %p341, %p342
    %p344 = scmp.ne.s32.totalorder %s332, %s333
    %p345 = scmp.eq.s32.totalorder %s29, 1
    %p346 = por %p344, %p345
    %p348 = scmp.ne.s32.totalorder %s333, %s347
    %p349 = scmp.eq.s32.totalorder %s29, 0
    %p350 = por %p348, %p349
    %s352 = sadd.s32 %s351, 1
    %p355 = scmp.eq.s32.totalorder %s23, 1
    %p356 = scmp.ne.s32.totalorder %s351, %s353
    %p357 = scmp.eq.s32.totalorder %s23, 0
    %p358 = por %p356, %p357
    %p359 = scmp.ne.s32.totalorder %s351, %s353
    %p360 = scmp.eq.s32.totalorder %s28, 1
    %p361 = por %p359, %p360
    %p362 = scmp.ne.s32.totalorder %s353, %s354
    %p363 = scmp.eq.s32.totalorder %s28, 0
    %p364 = por %p362, %p363
    %p365 = scmp.ne.s32.totalorder %s353, %s354
    %p366 = scmp.eq.s32.totalorder %s29, 1
    %p367 = por %p365, %p366
    %p369 = scmp.ne.s32.totalorder %s354, %s368
    %p370 = scmp.eq.s32.totalorder %s29, 0
    %p371 = por %p369, %p370
    %s373 = sadd.s32 %s372, 1
    %p376 = scmp.eq.s32.totalorder %s23, 1
    %p377 = scmp.ne.s32.totalorder %s372, %s374
    %p378 = scmp.eq.s32.totalorder %s23, 0
    %p379 = por %p377, %p378
    %p380 = scmp.ne.s32.totalorder %s372, %s374
    %p381 = scmp.eq.s32.totalorder %s28, 1
    %p382 = por %p380, %p381
    %p383 = scmp.ne.s32.totalorder %s374, %s375
    %p384 = scmp.eq.s32.totalorder %s28, 0
    %p385 = por %p383, %p384
    %p386 = scmp.ne.s32.totalorder %s374, %s375
    %p387 = scmp.eq.s32.totalorder %s29, 1
    %p388 = por %p386, %p387
    %p390 = scmp.ne.s32.totalorder %s375, %s389
    %p391 = scmp.eq.s32.totalorder %s29, 0
    %p392 = por %p390, %p391
    %s393 = ssub.s32 %s23, %s30
    %p394 = scmp.eq.s32.totalorder %s393, 0
    %s396 = sadd.s32 %s395, 1
    %s397 = scalar_select %p394, %s395, %s396
    %p400 = pneg %p394
    %p401 = scmp.eq.s32.totalorder %s23, 1
    %p402 = por %p400, %p401
    %p403 = scmp.ne.s32.totalorder %s395, %s398
    %p404 = scmp.eq.s32.totalorder %s23, 0
    %p405 = por %p403, %p404
    %p406 = scmp.ne.s32.totalorder %s395, %s398
    %p407 = scmp.eq.s32.totalorder %s28, 1
    %p408 = por %p406, %p407
    %p409 = scmp.ne.s32.totalorder %s398, %s399
    %p410 = scmp.eq.s32.totalorder %s28, 0
    %p411 = por %p409, %p410
    %p412 = scmp.ne.s32.totalorder %s398, %s399
    %p413 = scmp.eq.s32.totalorder %s29, 1
    %p414 = por %p412, %p413
    %p416 = scmp.ne.s32.totalorder %s399, %s415
    %p417 = scmp.eq.s32.totalorder %s29, 0
    %p418 = por %p416, %p417
    %p419 = scmp.le.s32.totalorder 1, %s23
    %p420 = scmp.lt.s32.totalorder %s23, 3
    %p421 = pnand %p419, %p420
    %p422 = pneg %p421
    // Predicated region
    $region9: #{vove_forward.8} parent=5 // pred_check
      _
    $region10: #{vove_forward.8} parent=5 // pred_check_branch
      %424 = sbr.rel (%p421) target = $region12
    $region11: #{vove_forward.8} parent=5 // pred_region
      %s425 = ssub.s32 %s23, 1
      // Predicated region
      $region13: #{vove_forward.8} parent=11 // pred_check
        %p426 = pneg %p70
      $region14: #{vove_forward.8} parent=11 // pred_check_branch
        %428 = sbr.rel (%p426) target = $region16
      $region15: #{vove_forward.8} parent=11 // pred_region
        _
      $region16: #{vove_forward.8} parent=11 // pred_fallthru
        _
      // Predicated region
      $region17: #{vove_forward.8} parent=11 // pred_check
        %p429 = pneg %p91
      $region18: #{vove_forward.8} parent=11 // pred_check_branch
        %431 = sbr.rel (%p429) target = $region20
      $region19: #{vove_forward.8} parent=11 // pred_region
        _
      $region20: #{vove_forward.8} parent=11 // pred_fallthru
        _
      // Predicated region
      $region21: #{vove_forward.8} parent=11 // pred_check
        %p432 = pneg %p112
      $region22: #{vove_forward.8} parent=11 // pred_check_branch
        %434 = sbr.rel (%p432) target = $region24
      $region23: #{vove_forward.8} parent=11 // pred_region
        _
      $region24: #{vove_forward.8} parent=11 // pred_fallthru
        _
      // Predicated region
      $region25: #{vove_forward.8} parent=11 // pred_check
        %p435 = pneg %p133
      $region26: #{vove_forward.8} parent=11 // pred_check_branch
        %437 = sbr.rel (%p435) target = $region28
      $region27: #{vove_forward.8} parent=11 // pred_region
        _
      $region28: #{vove_forward.8} parent=11 // pred_fallthru
        _
      // Predicated region
      $region29: #{vove_forward.8} parent=11 // pred_check
        %p438 = pneg %p154
      $region30: #{vove_forward.8} parent=11 // pred_check_branch
        %440 = sbr.rel (%p438) target = $region32
      $region31: #{vove_forward.8} parent=11 // pred_region
        _
      $region32: #{vove_forward.8} parent=11 // pred_fallthru
        _
      // Predicated region
      $region33: #{vove_forward.8} parent=11 // pred_check
        %p441 = pneg %p175
      $region34: #{vove_forward.8} parent=11 // pred_check_branch
        %443 = sbr.rel (%p441) target = $region36
      $region35: #{vove_forward.8} parent=11 // pred_region
        _
      $region36: #{vove_forward.8} parent=11 // pred_fallthru
        _
      // Predicated region
      $region37: #{vove_forward.8} parent=11 // pred_check
        %p444 = pneg %p196
      $region38: #{vove_forward.8} parent=11 // pred_check_branch
        %446 = sbr.rel (%p444) target = $region40
      $region39: #{vove_forward.8} parent=11 // pred_region
        _
      $region40: #{vove_forward.8} parent=11 // pred_fallthru
        _
      // Predicated region
      $region41: #{vove_forward.8} parent=11 // pred_check
        %p447 = pneg %p217
      $region42: #{vove_forward.8} parent=11 // pred_check_branch
        %449 = sbr.rel (%p447) target = $region44
      $region43: #{vove_forward.8} parent=11 // pred_region
        _
      $region44: #{vove_forward.8} parent=11 // pred_fallthru
        _
      // Predicated region
      $region45: #{vove_forward.8} parent=11 // pred_check
        %p450 = pneg %p238
      $region46: #{vove_forward.8} parent=11 // pred_check_branch
        %452 = sbr.rel (%p450) target = $region48
      $region47: #{vove_forward.8} parent=11 // pred_region
        _
      $region48: #{vove_forward.8} parent=11 // pred_fallthru
        _
      // Predicated region
      $region49: #{vove_forward.8} parent=11 // pred_check
        %p453 = pneg %p259
      $region50: #{vove_forward.8} parent=11 // pred_check_branch
        %455 = sbr.rel (%p453) target = $region52
      $region51: #{vove_forward.8} parent=11 // pred_region
        _
      $region52: #{vove_forward.8} parent=11 // pred_fallthru
        _
      // Predicated region
      $region53: #{vove_forward.8} parent=11 // pred_check
        %p456 = pneg %p280
      $region54: #{vove_forward.8} parent=11 // pred_check_branch
        %458 = sbr.rel (%p456) target = $region56
      $region55: #{vove_forward.8} parent=11 // pred_region
        _
      $region56: #{vove_forward.8} parent=11 // pred_fallthru
        _
      // Predicated region
      $region57: #{vove_forward.8} parent=11 // pred_check
        %p459 = pneg %p301
      $region58: #{vove_forward.8} parent=11 // pred_check_branch
        %461 = sbr.rel (%p459) target = $region60
      $region59: #{vove_forward.8} parent=11 // pred_region
        _
      $region60: #{vove_forward.8} parent=11 // pred_fallthru
        _
      // Predicated region
      $region61: #{vove_forward.8} parent=11 // pred_check
        %p462 = pneg %p322
      $region62: #{vove_forward.8} parent=11 // pred_check_branch
        %464 = sbr.rel (%p462) target = $region64
      $region63: #{vove_forward.8} parent=11 // pred_region
        _
      $region64: #{vove_forward.8} parent=11 // pred_fallthru
        _
      // Predicated region
      $region65: #{vove_forward.8} parent=11 // pred_check
        %p465 = pneg %p343
      $region66: #{vove_forward.8} parent=11 // pred_check_branch
        %467 = sbr.rel (%p465) target = $region68
      $region67: #{vove_forward.8} parent=11 // pred_region
        _
      $region68: #{vove_forward.8} parent=11 // pred_fallthru
        _
      // Predicated region
      $region69: #{vove_forward.8} parent=11 // pred_check
        %p468 = pneg %p364
      $region70: #{vove_forward.8} parent=11 // pred_check_branch
        %470 = sbr.rel (%p468) target = $region72
      $region71: #{vove_forward.8} parent=11 // pred_region
        _
      $region72: #{vove_forward.8} parent=11 // pred_fallthru
        _
      // Predicated region
      $region73: #{vove_forward.8} parent=11 // pred_check
        %p471 = pneg %p385
      $region74: #{vove_forward.8} parent=11 // pred_check_branch
        %473 = sbr.rel (%p471) target = $region76
      $region75: #{vove_forward.8} parent=11 // pred_region
        _
      $region76: #{vove_forward.8} parent=11 // pred_fallthru
        _
    $region12: #{vove_forward.8} parent=5 // pred_fallthru
      _
    %p474 = scmp.lt.s32.totalorder %s23, 2
    // Predicated region
    $region77: #{vove_forward.8} parent=5 // pred_check
      %p475 = pneg %p474
    $region78: #{vove_forward.8} parent=5 // pred_check_branch
      %477 = sbr.rel (%p475) target = $region80
    $region79: #{vove_forward.8} parent=5 // pred_region
      // Predicated region
      $region81: #{vove_forward.8} parent=79 // pred_check
        %p478 = pneg %p43
      $region82: #{vove_forward.8} parent=79 // pred_check_branch
        %480 = sbr.rel (%p478) target = $region84
      $region83: #{vove_forward.8} parent=79 // pred_region
        %p481 = scmp.lt.s32.totalorder %s23, 1
        %s482 = scalar_select %p481, %s23, 1
        %s483 = smul.addr %s482, 2
        %s484 = smul.addr %s483, 4
        %s485 = scalar_lea.vmem %s0, %s484
      $region84: #{vove_forward.8} parent=79 // pred_fallthru
        _
    $region80: #{vove_forward.8} parent=5 // pred_fallthru
      _
    %p486 = scmp.le.s32.totalorder 1, %s23
    %p487 = scmp.lt.s32.totalorder %s23, 3
    %p488 = pnand %p486, %p487
    %p489 = pneg %p488
    // Predicated region
    $region85: #{vove_forward.8} parent=5 // pred_check
      _
    $region86: #{vove_forward.8} parent=5 // pred_check_branch
      %491 = sbr.rel (%p488) target = $region88
    $region87: #{vove_forward.8} parent=5 // pred_region
      %s492 = ssub.s32 %s23, 1
      %p493 = scmp.lt.s32.totalorder %s28, 1
      %s494 = scalar_select %p493, %s28, 1
      %s495 = smul.addr %s494, 2
      %s496 = smul.addr %s495, 4
      %s497 = scalar_lea.vmem %s0, %s496
      %p498 = pneg %p49
      %p499 = pneg %p46
      %p500 = pneg %p70
      %p501 = pneg %p67
      %p502 = pneg %p91
      %p503 = pneg %p88
      %p504 = pneg %p112
      %p505 = pneg %p109
      %p506 = pneg %p133
      %p507 = pneg %p130
      %p508 = pneg %p154
      %p509 = pneg %p151
      %p510 = pneg %p175
      %p511 = pneg %p172
      %p512 = pneg %p196
      %p513 = pneg %p193
      %p514 = pneg %p217
      %p515 = pneg %p214
      %p516 = pneg %p238
      %p517 = pneg %p235
      %p518 = pneg %p259
      %p519 = pneg %p256
      %p520 = pneg %p280
      %p521 = pneg %p277
      %p522 = pneg %p301
      %p523 = pneg %p298
      %p524 = pneg %p322
      %p525 = pneg %p319
      %p526 = pneg %p343
      %p527 = pneg %p340
      %p528 = pneg %p364
      %p529 = pneg %p361
      %p530 = pneg %p385
      %p531 = pneg %p382
      %p532 = pneg %p411
      %p533 = pneg %p408
      %p534 = scmp.lt.s32.totalorder %s28, 1
      %s535 = scalar_select %p534, %s28, 1
      %s536 = smul.addr %s535, 2
      %s537 = smul.addr %s536, 4
      %s538 = scalar_lea.vmem %s17, %s537
      %p539 = scmp.lt.s32.totalorder %s28, 1
      %s540 = scalar_select %p539, %s28, 1
      %s541 = smul.addr %s540, 2
      %s542 = smul.addr %s541, 4
      %s543 = scalar_lea.vmem %s0, %s542
      %p544 = scmp.lt.s32.totalorder %s28, 1
      %s545 = scalar_select %p544, %s28, 1
      %s546 = smul.addr %s545, 2
      %s547 = smul.addr %s546, 4
      %s548 = scalar_lea.vmem %s17, %s547
      %v550 = vld [vmem:[%s543] sm:$0xf]
      %v551 = vld [vmem:[%s543 + $0x4] sm:$0xf]
      %v552 = vlaneseq
      %v553 = vand.u32 %v552, 127
      %vm554 = vcmp.lt.s32.totalorder %v553, 16
      %v555 = vld [vmem:[%s1] sm:$0xf]
      %v556 = vld [vmem:[%s1 + $0x4] sm:$0xf]
      %v557 = vld [vmem:[%s2] sm:$0xff]
      %v558 = vld [vmem:[%s2 + $0x8] sm:$0xff]
      %560 = vset.pattern.permute.xlu0 0
      %561 = vperm.xlu0 %560, %v557
      %v562 = vpop.permute.xlu0 %561
      %565 = vset.pattern.permute.xlu0 0
      %566 = vperm.xlu0 %565, %v558
      %v567 = vpop.permute.xlu0 %566
      %v571 = vunpack.c.l.b16 %v555
      %v572 = vunpack.c.l.b16 %v556
      %v573 = vpack.c.b16 %v572, %v571
      %v576 = vunpack.c.l.b16 %v550
      %v577 = vunpack.c.l.b16 %v551
      %v578 = vpack.c.b16 %v577, %v576
      %vm580 = vcmask 130048
      %v582 = vsel %vm580, %v573, 0
      %584 = vmatprep.subr.bf16.mxu0 0
      %585 = vmatpush1.bf16.msra.mxu0 %v578
      %586 = vmatprep.subr.bf16.mxu0 0
      %587 = vmatpush1.bf16.msra.mxu0 0
      %588 = vmatprep.subr.bf16.mxu0 0
      %589 = vmatpush1.bf16.msra.mxu0 0
      %590 = vmatprep.subr.bf16.mxu0 0
      %591 = vmatpush1.bf16.msra.mxu0 0
      %592 = vmatprep.subr.bf16.mxu0 0
      %593 = vmatpush1.bf16.msra.mxu0 0
      %594 = vmatprep.subr.bf16.mxu0 0
      %595 = vmatpush1.bf16.msra.mxu0 0
      %596 = vmatprep.subr.bf16.mxu0 0
      %597 = vmatpush1.bf16.msra.mxu0 0
      %598 = vmatprep.subr.bf16.mxu0 0
      %599 = vmatpush1.bf16.msra.mxu0 0
      %600 = vmatprep.subr.bf16.mxu0 0
      %601 = vmatpush1.bf16.msra.mxu0 0
      %602 = vmatprep.subr.bf16.mxu0 0
      %603 = vmatpush1.bf16.msra.mxu0 0
      %604 = vmatprep.subr.bf16.mxu0 0
      %605 = vmatpush1.bf16.msra.mxu0 0
      %606 = vmatprep.subr.bf16.mxu0 0
      %607 = vmatpush1.bf16.msra.mxu0 0
      %608 = vmatprep.subr.bf16.mxu0 0
      %609 = vmatpush1.bf16.msra.mxu0 0
      %610 = vmatprep.subr.bf16.mxu0 0
      %611 = vmatpush1.bf16.msra.mxu0 0
      %612 = vmatprep.subr.bf16.mxu0 0
      %613 = vmatpush1.bf16.msra.mxu0 0
      %614 = vmatprep.subr.bf16.mxu0 0
      %615 = vmatpush1.bf16.msra.mxu0 0
      %616 = vmatprep.mubr.bf16.mxu0 0
      %617 = vmatmul.mubr.bf16.gmra.mrb[0].mxu0 %v582
      %v618 = vpop.f32.mrb[0].mxu0
      %v619 = vadd.f32 %v562, %v618
      %v620 = vpop.f32.mrb[0].mxu0
      %v621 = vpop.f32.mrb[0].mxu0
      %v622 = vadd.f32 %v567, %v621
      %v623 = vpop.f32.mrb[0].mxu0
      %624 = vdwg.mxu0
      %v625 = vmax.f32 %v619, 0.0
      %v626 = vmax.f32 %v622, 0.0
      %v627 = vld [vmem:[%s3] sm:$0xff]
      %v628 = vld [vmem:[%s3 + $0x8] sm:$0xff]
      %630 = vset.pattern.permute.xlu0 0
      %631 = vperm.xlu0 %630, %v627
      %v632 = vpop.permute.xlu0 %631
      %635 = vset.pattern.permute.xlu0 0
      %636 = vperm.xlu0 %635, %v628
      %v637 = vpop.permute.xlu0 %636
      %v639 = vmul.f32 %v625, %v632
      %v640 = vmul.f32 %v626, %v637
      %v641 = vld [vmem:[%s4] sm:$0xff]
      %v642 = vld [vmem:[%s4 + $0x8] sm:$0xff]
      %644 = vset.pattern.permute.xlu0 0
      %645 = vperm.xlu0 %644, %v641
      %v646 = vpop.permute.xlu0 %645
      %649 = vset.pattern.permute.xlu0 0
      %650 = vperm.xlu0 %649, %v642
      %v651 = vpop.permute.xlu0 %650
      %v653 = vadd.f32 %v639, %v646
      %v654 = vadd.f32 %v640, %v651
      %v655 = vpack.c.bf16 %v653, %v653
      %v656 = vadd.f32 %v653, 0.0
      %v657 = vsel %vm554, 1, 0
      %vm658 = vcmp.eq.s32.totalorder %v657, 1
      %v659 = vsel %vm658, %v656, 0.0
      %v660 = vpack.c.bf16 %v659, %v659
      %v662 = vrot.slane %v660, 2
      %663 = vrot.lane.b32.xlu0 %v662, 3
      %v664 = vpop.permute.xlu0 %663
      %vm665 = vcmask 23552
      %v668 = vsel %vm665, 0, %v664
      %v669 = vsel %vm665, %v664, 0
      %v672 = vrot.slane %v668, 6
      %v673 = vrot.slane %v669, 6
      %674 = vrot.lane.b32.xlu0 %v672, 125
      %v675 = vpop.permute.xlu0 %674
      %676 = vrot.lane.b32.xlu0 %v673, 125
      %v677 = vpop.permute.xlu0 %676
      %vm678 = vcmask 1022976
      %v679 = vsel %vm678, %v675, %v677
      %v680 = vrot.slane %v668, 4
      %v681 = vrot.slane %v669, 4
      %682 = vrot.lane.b32.xlu0 %v680, 122
      %v683 = vpop.permute.xlu0 %682
      %684 = vrot.lane.b32.xlu0 %v681, 122
      %v685 = vpop.permute.xlu0 %684
      %vm686 = vcmask 998400
      %v687 = vsel %vm686, %v683, %v685
      %vm688 = vcmask 1041408
      %v690 = vsel %vm688, %v668, %v679
      %vm691 = vcmask 1043456
      %v693 = vsel %vm691, %v690, %v687
      %v694 = vld [vmem:[%s5] sm:$0x3]
      %v695 = vld [vmem:[%s6] sm:$0xf]
      %697 = vset.pattern.permute.xlu0 0
      %698 = vperm.xlu0 %697, %v695
      %v699 = vpop.permute.xlu0 %698
      %vm701 = vcmask 97280
      %v703 = vsel %vm701, %v694, 0
      %vm705 = vcmask 1045504
      %v706 = vsel %vm705, %v693, 0
      %708 = vmatprep.subr.bf16.mxu0 0
      %709 = vmatpush1.bf16.msra.mxu0 %v706
      %710 = vmatprep.subr.bf16.mxu0 0
      %711 = vmatpush1.bf16.msra.mxu0 0
      %712 = vmatprep.subr.bf16.mxu0 0
      %713 = vmatpush1.bf16.msra.mxu0 0
      %714 = vmatprep.subr.bf16.mxu0 0
      %715 = vmatpush1.bf16.msra.mxu0 0
      %716 = vmatprep.subr.bf16.mxu0 0
      %717 = vmatpush1.bf16.msra.mxu0 0
      %718 = vmatprep.subr.bf16.mxu0 0
      %719 = vmatpush1.bf16.msra.mxu0 0
      %720 = vmatprep.subr.bf16.mxu0 0
      %721 = vmatpush1.bf16.msra.mxu0 0
      %722 = vmatprep.subr.bf16.mxu0 0
      %723 = vmatpush1.bf16.msra.mxu0 0
      %724 = vmatprep.subr.bf16.mxu0 0
      %725 = vmatpush1.bf16.msra.mxu0 0
      %726 = vmatprep.subr.bf16.mxu0 0
      %727 = vmatpush1.bf16.msra.mxu0 0
      %728 = vmatprep.subr.bf16.mxu0 0
      %729 = vmatpush1.bf16.msra.mxu0 0
      %730 = vmatprep.subr.bf16.mxu0 0
      %731 = vmatpush1.bf16.msra.mxu0 0
      %732 = vmatprep.subr.bf16.mxu0 0
      %733 = vmatpush1.bf16.msra.mxu0 0
      %734 = vmatprep.subr.bf16.mxu0 0
      %735 = vmatpush1.bf16.msra.mxu0 0
      %736 = vmatprep.subr.bf16.mxu0 0
      %737 = vmatpush1.bf16.msra.mxu0 0
      %738 = vmatprep.subr.bf16.mxu0 0
      %739 = vmatpush1.bf16.msra.mxu0 0
      %740 = vmatprep.mubr.bf16.mxu0 0
      %741 = vmatmul.mubr.bf16.gmra.mrb[0].mxu0 %v703
      %v742 = vpop.f32.mrb[0].mxu0
      %v743 = vadd.f32 %v699, %v742
      %v744 = vpop.f32.mrb[0].mxu0
      %v745 = vpop.f32.mrb[0].mxu0
      %v746 = vpop.f32.mrb[0].mxu0
      %747 = vdwg.mxu0
      %v748 = vmax.f32 %v743, 0.0
      %v749 = vld [vmem:[%s7] sm:$0xf]
      %751 = vset.pattern.permute.xlu0 0
      %752 = vperm.xlu0 %751, %v749
      %v753 = vpop.permute.xlu0 %752
      %v755 = vmul.f32 %v748, %v753
      %v756 = vld [vmem:[%s8] sm:$0xf]
      %758 = vset.pattern.permute.xlu0 0
      %759 = vperm.xlu0 %758, %v756
      %v760 = vpop.permute.xlu0 %759
      %v762 = vadd.f32 %v755, %v760
      %v763 = vpack.c.bf16 %v762, %v762
      %v764 = vadd.f32 %v654, %v762
      %v765 = vsel %vm658, %v764, 0.0
      %v766 = vpack.c.bf16 %v765, %v765
      %768 = vrot.lane.b32.xlu0 %v766, 3
      %v769 = vpop.permute.xlu0 %768
      %v771 = vsel %vm665, 0, %v769
      %v772 = vsel %vm665, %v769, 0
      %v775 = vrot.slane %v771, 6
      %v776 = vrot.slane %v772, 6
      %777 = vrot.lane.b32.xlu0 %v775, 125
      %v778 = vpop.permute.xlu0 %777
      %779 = vrot.lane.b32.xlu0 %v776, 125
      %v780 = vpop.permute.xlu0 %779
      %v781 = vsel %vm678, %v778, %v780
      %v782 = vrot.slane %v771, 4
      %v783 = vrot.slane %v772, 4
      %784 = vrot.lane.b32.xlu0 %v782, 122
      %v785 = vpop.permute.xlu0 %784
      %786 = vrot.lane.b32.xlu0 %v783, 122
      %v787 = vpop.permute.xlu0 %786
      %v788 = vsel %vm686, %v785, %v787
      %v790 = vsel %vm688, %v771, %v781
      %v792 = vsel %vm691, %v790, %v788
      %s793 = scalar_lea.vmem %s5, 2
      %v794 = vld [vmem:[%s793] sm:$0x3]
      %s795 = scalar_lea.vmem %s6, 4
      %v796 = vld [vmem:[%s795] sm:$0xf]
      %798 = vset.pattern.permute.xlu0 0
      %799 = vperm.xlu0 %798, %v796
      %v800 = vpop.permute.xlu0 %799
      %v803 = vsel %vm701, %v794, 0
      %v805 = vsel %vm705, %v792, 0
      %807 = vmatprep.subr.bf16.mxu0 0
      %808 = vmatpush1.bf16.msra.mxu0 %v805
      %809 = vmatprep.subr.bf16.mxu0 0
      %810 = vmatpush1.bf16.msra.mxu0 0
      %811 = vmatprep.subr.bf16.mxu0 0
      %812 = vmatpush1.bf16.msra.mxu0 0
      %813 = vmatprep.subr.bf16.mxu0 0
      %814 = vmatpush1.bf16.msra.mxu0 0
      %815 = vmatprep.subr.bf16.mxu0 0
      %816 = vmatpush1.bf16.msra.mxu0 0
      %817 = vmatprep.subr.bf16.mxu0 0
      %818 = vmatpush1.bf16.msra.mxu0 0
      %819 = vmatprep.subr.bf16.mxu0 0
      %820 = vmatpush1.bf16.msra.mxu0 0
      %821 = vmatprep.subr.bf16.mxu0 0
      %822 = vmatpush1.bf16.msra.mxu0 0
      %823 = vmatprep.subr.bf16.mxu0 0
      %824 = vmatpush1.bf16.msra.mxu0 0
      %825 = vmatprep.subr.bf16.mxu0 0
      %826 = vmatpush1.bf16.msra.mxu0 0
      %827 = vmatprep.subr.bf16.mxu0 0
      %828 = vmatpush1.bf16.msra.mxu0 0
      %829 = vmatprep.subr.bf16.mxu0 0
      %830 = vmatpush1.bf16.msra.mxu0 0
      %831 = vmatprep.subr.bf16.mxu0 0
      %832 = vmatpush1.bf16.msra.mxu0 0
      %833 = vmatprep.subr.bf16.mxu0 0
      %834 = vmatpush1.bf16.msra.mxu0 0
      %835 = vmatprep.subr.bf16.mxu0 0
      %836 = vmatpush1.bf16.msra.mxu0 0
      %837 = vmatprep.subr.bf16.mxu0 0
      %838 = vmatpush1.bf16.msra.mxu0 0
      %839 = vmatprep.mubr.bf16.mxu0 0
      %840 = vmatmul.mubr.bf16.gmra.mrb[0].mxu0 %v803
      %v841 = vpop.f32.mrb[0].mxu0
      %v842 = vadd.f32 %v800, %v841
      %v843 = vpop.f32.mrb[0].mxu0
      %v844 = vpop.f32.mrb[0].mxu0
      %v845 = vpop.f32.mrb[0].mxu0
      %846 = vdwg.mxu0
      %v847 = vmax.f32 %v842, 0.0
      %s848 = scalar_lea.vmem %s7, 4
      %v849 = vld [vmem:[%s848] sm:$0xf]
      %851 = vset.pattern.permute.xlu0 0
      %852 = vperm.xlu0 %851, %v849
      %v853 = vpop.permute.xlu0 %852
      %v855 = vmul.f32 %v847, %v853
      %s856 = scalar_lea.vmem %s8, 4
      %v857 = vld [vmem:[%s856] sm:$0xf]
      %859 = vset.pattern.permute.xlu0 0
      %860 = vperm.xlu0 %859, %v857
      %v861 = vpop.permute.xlu0 %860
      %v863 = vadd.f32 %v855, %v861
      %v864 = vpack.c.bf16 %v863, %v863
      %v866 = vrot.slane %v863, 4
      %v868 = vadd.f32 %v654, %v866
      %v869 = vsel %vm658, %v868, 0.0
      %v870 = vpack.c.bf16 %v869, %v869
      %v872 = vrot.slane %v870, 2
      %873 = vrot.lane.b32.xlu0 %v872, 3
      %v874 = vpop.permute.xlu0 %873
      %v876 = vsel %vm665, 0, %v874
      %v877 = vsel %vm665, %v874, 0
      %v880 = vrot.slane %v876, 6
      %v881 = vrot.slane %v877, 6
      %882 = vrot.lane.b32.xlu0 %v880, 125
      %v883 = vpop.permute.xlu0 %882
      %884 = vrot.lane.b32.xlu0 %v881, 125
      %v885 = vpop.permute.xlu0 %884
      %v886 = vsel %vm678, %v883, %v885
      %v887 = vrot.slane %v876, 4
      %v888 = vrot.slane %v877, 4
      %889 = vrot.lane.b32.xlu0 %v887, 122
      %v890 = vpop.permute.xlu0 %889
      %891 = vrot.lane.b32.xlu0 %v888, 122
      %v892 = vpop.permute.xlu0 %891
      %v893 = vsel %vm686, %v890, %v892
      %v895 = vsel %vm688, %v876, %v886
      %v897 = vsel %vm691, %v895, %v893
      %s898 = scalar_lea.vmem %s5, 4
      %v899 = vld [vmem:[%s898] sm:$0x3]
      %s900 = scalar_lea.vmem %s6, 8
      %v901 = vld [vmem:[%s900] sm:$0xf]
      %903 = vset.pattern.permute.xlu0 0
      %904 = vperm.xlu0 %903, %v901
      %v905 = vpop.permute.xlu0 %904
      %v908 = vsel %vm701, %v899, 0
      %v910 = vsel %vm705, %v897, 0
      %912 = vmatprep.subr.bf16.mxu0 0
      %913 = vmatpush1.bf16.msra.mxu0 %v910
      %914 = vmatprep.subr.bf16.mxu0 0
      %915 = vmatpush1.bf16.msra.mxu0 0
      %916 = vmatprep.subr.bf16.mxu0 0
      %917 = vmatpush1.bf16.msra.mxu0 0
      %918 = vmatprep.subr.bf16.mxu0 0
      %919 = vmatpush1.bf16.msra.mxu0 0
      %920 = vmatprep.subr.bf16.mxu0 0
      %921 = vmatpush1.bf16.msra.mxu0 0
      %922 = vmatprep.subr.bf16.mxu0 0
      %923 = vmatpush1.bf16.msra.mxu0 0
      %924 = vmatprep.subr.bf16.mxu0 0
      %925 = vmatpush1.bf16.msra.mxu0 0
      %926 = vmatprep.subr.bf16.mxu0 0
      %927 = vmatpush1.bf16.msra.mxu0 0
      %928 = vmatprep.subr.bf16.mxu0 0
      %929 = vmatpush1.bf16.msra.mxu0 0
      %930 = vmatprep.subr.bf16.mxu0 0
      %931 = vmatpush1.bf16.msra.mxu0 0
      %932 = vmatprep.subr.bf16.mxu0 0
      %933 = vmatpush1.bf16.msra.mxu0 0
      %934 = vmatprep.subr.bf16.mxu0 0
      %935 = vmatpush1.bf16.msra.mxu0 0
      %936 = vmatprep.subr.bf16.mxu0 0
      %937 = vmatpush1.bf16.msra.mxu0 0
      %938 = vmatprep.subr.bf16.mxu0 0
      %939 = vmatpush1.bf16.msra.mxu0 0
      %940 = vmatprep.subr.bf16.mxu0 0
      %941 = vmatpush1.bf16.msra.mxu0 0
      %942 = vmatprep.subr.bf16.mxu0 0
      %943 = vmatpush1.bf16.msra.mxu0 0
      %944 = vmatprep.mubr.bf16.mxu0 0
      %945 = vmatmul.mubr.bf16.gmra.mrb[0].mxu0 %v908
      %v946 = vpop.f32.mrb[0].mxu0
      %v947 = vadd.f32 %v905, %v946
      %v948 = vpop.f32.mrb[0].mxu0
      %v949 = vpop.f32.mrb[0].mxu0
      %v950 = vpop.f32.mrb[0].mxu0
      %951 = vdwg.mxu0
      %v952 = vmax.f32 %v947, 0.0
      %s953 = scalar_lea.vmem %s7, 8
      %v954 = vld [vmem:[%s953] sm:$0xf]
      %956 = vset.pattern.permute.xlu0 0
      %957 = vperm.xlu0 %956, %v954
      %v958 = vpop.permute.xlu0 %957
      %v960 = vmul.f32 %v952, %v958
      %s961 = scalar_lea.vmem %s8, 8
      %v962 = vld [vmem:[%s961] sm:$0xf]
      %964 = vset.pattern.permute.xlu0 0
      %965 = vperm.xlu0 %964, %v962
      %v966 = vpop.permute.xlu0 %965
      %v968 = vadd.f32 %v960, %v966
      %v969 = vpack.c.bf16 %v968, %v968
      %v971 = vrot.slane %v763, 6
      %v973 = vrot.slane %v864, 4
      %v975 = vrot.slane %v969, 2
      %v978 = vsel %vm688, %v655, %v971
      %v980 = vsel %vm691, %v978, %v973
      %v982 = vsel %vm705, %v980, %v975
      %v984 = vld [vmem:[%s9] sm:$0xf]
      %v985 = vld [vmem:[%s9 + $0x4] sm:$0xf]
      %v986 = vld [vmem:[%s10] sm:$0xff]
      %v987 = vld [vmem:[%s10 + $0x8] sm:$0xff]
      %989 = vset.pattern.permute.xlu0 0
      %990 = vperm.xlu0 %989, %v986
      %v991 = vpop.permute.xlu0 %990
      %994 = vset.pattern.permute.xlu0 0
      %995 = vperm.xlu0 %994, %v987
      %v996 = vpop.permute.xlu0 %995
      %v1000 = vunpack.c.l.b16 %v984
      %v1001 = vunpack.c.l.b16 %v985
      %v1002 = vpack.c.b16 %v1001, %v1000
      %v1004 = vsel %vm580, %v1002, 0
      %1006 = vmatprep.subr.bf16.mxu0 0
      %1007 = vmatpush1.bf16.msra.mxu0 %v982
      %1008 = vmatprep.subr.bf16.mxu0 0
      %1009 = vmatpush1.bf16.msra.mxu0 0
      %1010 = vmatprep.subr.bf16.mxu0 0
      %1011 = vmatpush1.bf16.msra.mxu0 0
      %1012 = vmatprep.subr.bf16.mxu0 0
      %1013 = vmatpush1.bf16.msra.mxu0 0
      %1014 = vmatprep.subr.bf16.mxu0 0
      %1015 = vmatpush1.bf16.msra.mxu0 0
      %1016 = vmatprep.subr.bf16.mxu0 0
      %1017 = vmatpush1.bf16.msra.mxu0 0
      %1018 = vmatprep.subr.bf16.mxu0 0
      %1019 = vmatpush1.bf16.msra.mxu0 0
      %1020 = vmatprep.subr.bf16.mxu0 0
      %1021 = vmatpush1.bf16.msra.mxu0 0
      %1022 = vmatprep.subr.bf16.mxu0 0
      %1023 = vmatpush1.bf16.msra.mxu0 0
      %1024 = vmatprep.subr.bf16.mxu0 0
      %1025 = vmatpush1.bf16.msra.mxu0 0
      %1026 = vmatprep.subr.bf16.mxu0 0
      %1027 = vmatpush1.bf16.msra.mxu0 0
      %1028 = vmatprep.subr.bf16.mxu0 0
      %1029 = vmatpush1.bf16.msra.mxu0 0
      %1030 = vmatprep.subr.bf16.mxu0 0
      %1031 = vmatpush1.bf16.msra.mxu0 0
      %1032 = vmatprep.subr.bf16.mxu0 0
      %1033 = vmatpush1.bf16.msra.mxu0 0
      %1034 = vmatprep.subr.bf16.mxu0 0
      %1035 = vmatpush1.bf16.msra.mxu0 0
      %1036 = vmatprep.subr.bf16.mxu0 0
      %1037 = vmatpush1.bf16.msra.mxu0 0
      %1038 = vmatprep.mubr.bf16.mxu0 0
      %1039 = vmatmul.mubr.bf16.gmra.mrb[0].mxu0 %v1004
      %v1040 = vpop.f32.mrb[0].mxu0
      %v1041 = vadd.f32 %v991, %v1040
      %v1042 = vpop.f32.mrb[0].mxu0
      %v1043 = vpop.f32.mrb[0].mxu0
      %v1044 = vadd.f32 %v996, %v1043
      %v1045 = vpop.f32.mrb[0].mxu0
      %1046 = vdwg.mxu0
      %v1047 = vmax.f32 %v1041, 0.0
      %v1048 = vmax.f32 %v1044, 0.0
      %v1049 = vld [vmem:[%s11] sm:$0xff]
      %v1050 = vld [vmem:[%s11 + $0x8] sm:$0xff]
      %1052 = vset.pattern.permute.xlu0 0
      %1053 = vperm.xlu0 %1052, %v1049
      %v1054 = vpop.permute.xlu0 %1053
      %1057 = vset.pattern.permute.xlu0 0
      %1058 = vperm.xlu0 %1057, %v1050
      %v1059 = vpop.permute.xlu0 %1058
      %v1061 = vmul.f32 %v1047, %v1054
      %v1062 = vmul.f32 %v1048, %v1059
      %v1063 = vld [vmem:[%s12] sm:$0xff]
      %v1064 = vld [vmem:[%s12 + $0x8] sm:$0xff]
      %1066 = vset.pattern.permute.xlu0 0
      %1067 = vperm.xlu0 %1066, %v1063
      %v1068 = vpop.permute.xlu0 %1067
      %1071 = vset.pattern.permute.xlu0 0
      %1072 = vperm.xlu0 %1071, %v1064
      %v1073 = vpop.permute.xlu0 %1072
      %v1075 = vadd.f32 %v1061, %v1068
      %v1076 = vadd.f32 %v1062, %v1073
      %v1077 = vsel %vm658, %v1075, 0.0
      %v1078 = vsel %vm658, %v1076, 0.0
      %1079 = vadd.xlane.f32.xlu0 %v1077
      %v1080 = vpop.xlane.xlu0 %1079
      %1081 = vadd.xlane.f32.xlu0 %v1078
      %v1082 = vpop.xlane.xlu0 %1081
      %v1083 = vmul.f32 %v1080, 0.0625
      %v1084 = vmul.f32 %v1082, 0.0625
      %v1085 = vld [vmem:[%s13] sm:$0xff]
      %v1086 = vld [vmem:[%s14] sm:$0xff]
      %v1088 = vsel %vm580, %v1085, 0
      %1090 = vmatprep.subr.mxu0 0.0
      %1091 = vmatpush1.msra.mxu0 %v1083
      %1092 = vmatprep.subr.mxu0 0.0
      %1093 = vmatpush1.msra.mxu0 %v1084
      %1094 = vmatprep.subr.mxu0 0.0
      %1095 = vmatpush1.msra.mxu0 0.0
      %1096 = vmatprep.subr.mxu0 0.0
      %1097 = vmatpush1.msra.mxu0 0.0
      %1098 = vmatprep.subr.mxu0 0.0
      %1099 = vmatpush1.msra.mxu0 0.0
      %1100 = vmatprep.subr.mxu0 0.0
      %1101 = vmatpush1.msra.mxu0 0.0
      %1102 = vmatprep.subr.mxu0 0.0
      %1103 = vmatpush1.msra.mxu0 0.0
      %1104 = vmatprep.subr.mxu0 0.0
      %1105 = vmatpush1.msra.mxu0 0.0
      %1106 = vmatprep.subr.mxu0 0.0
      %1107 = vmatpush1.msra.mxu0 0.0
      %1108 = vmatprep.subr.mxu0 0.0
      %1109 = vmatpush1.msra.mxu0 0.0
      %1110 = vmatprep.subr.mxu0 0.0
      %1111 = vmatpush1.msra.mxu0 0.0
      %1112 = vmatprep.subr.mxu0 0.0
      %1113 = vmatpush1.msra.mxu0 0.0
      %1114 = vmatprep.subr.mxu0 0.0
      %1115 = vmatpush1.msra.mxu0 0.0
      %1116 = vmatprep.subr.mxu0 0.0
      %1117 = vmatpush1.msra.mxu0 0.0
      %1118 = vmatprep.subr.mxu0 0.0
      %1119 = vmatpush1.msra.mxu0 0.0
      %1120 = vmatprep.subr.mxu0 0.0
      %1121 = vmatpush1.msra.mxu0 0.0
      %1122 = vmatprep.subr.mxu0 0.0
      %1123 = vmatpush1.msra.mxu0 0.0
      %1124 = vmatprep.subr.mxu0 0.0
      %1125 = vmatpush1.msra.mxu0 0.0
      %1126 = vmatprep.subr.mxu0 0.0
      %1127 = vmatpush1.msra.mxu0 0.0
      %1128 = vmatprep.subr.mxu0 0.0
      %1129 = vmatpush1.msra.mxu0 0.0
      %1130 = vmatprep.subr.mxu0 0.0
      %1131 = vmatpush1.msra.mxu0 0.0
      %1132 = vmatprep.subr.mxu0 0.0
      %1133 = vmatpush1.msra.mxu0 0.0
      %1134 = vmatprep.subr.mxu0 0.0
      %1135 = vmatpush1.msra.mxu0 0.0
      %1136 = vmatprep.subr.mxu0 0.0
      %1137 = vmatpush1.msra.mxu0 0.0
      %1138 = vmatprep.subr.mxu0 0.0
      %1139 = vmatpush1.msra.mxu0 0.0
      %1140 = vmatprep.subr.mxu0 0.0
      %1141 = vmatpush1.msra.mxu0 0.0
      %1142 = vmatprep.subr.mxu0 0.0
      %1143 = vmatpush1.msra.mxu0 0.0
      %1144 = vmatprep.subr.mxu0 0.0
      %1145 = vmatpush1.msra.mxu0 0.0
      %1146 = vmatprep.subr.mxu0 0.0
      %1147 = vmatpush1.msra.mxu0 0.0
      %1148 = vmatprep.subr.mxu0 0.0
      %1149 = vmatpush1.msra.mxu0 0.0
      %1150 = vmatprep.subr.mxu0 0.0
      %1151 = vmatpush1.msra.mxu0 0.0
      %1152 = vmatprep.subr.mxu0 0.0
      %1153 = vmatpush1.msra.mxu0 0.0
      %1154 = vmatprep.mubr.f32.mxu0 0.0
      %1155 = vmatmul.mubr.f32.gmra.mrb[0].mxu0 %v1088
      %v1156 = vpop.f32.mrb[0].mxu0
      %v1157 = vadd.f32 %v1086, %v1156
      %v1158 = vpop.f32.mrb[0].mxu0
      %1159 = vdwg.mxu0
      %v1160 = vmax.f32 %v1157, 0.0
      %v1161 = vld [vmem:[%s15] sm:$0xff]
      %v1162 = vld [vmem:[%s15 + $0x8] sm:$0xff]
      %v1163 = vld [vmem:[%s16] sm:$0xff]
      %v1164 = vld [vmem:[%s16 + $0x8] sm:$0xff]
      %vm1165 = vcmask 64512
      %v1167 = vsel %vm1165, %v1161, 0
      %v1170 = vsel %vm1165, %v1162, 0
      %1172 = vmatprep.subr.mxu0 0.0
      %1173 = vmatpush1.msra.mxu0 %v1160
      %1174 = vmatprep.subr.mxu0 0.0
      %1175 = vmatpush1.msra.mxu0 0.0
      %1176 = vmatprep.subr.mxu0 0.0
      %1177 = vmatpush1.msra.mxu0 0.0
      %1178 = vmatprep.subr.mxu0 0.0
      %1179 = vmatpush1.msra.mxu0 0.0
      %1180 = vmatprep.subr.mxu0 0.0
      %1181 = vmatpush1.msra.mxu0 0.0
      %1182 = vmatprep.subr.mxu0 0.0
      %1183 = vmatpush1.msra.mxu0 0.0
      %1184 = vmatprep.subr.mxu0 0.0
      %1185 = vmatpush1.msra.mxu0 0.0
      %1186 = vmatprep.subr.mxu0 0.0
      %1187 = vmatpush1.msra.mxu0 0.0
      %1188 = vmatprep.subr.mxu0 0.0
      %1189 = vmatpush1.msra.mxu0 0.0
      %1190 = vmatprep.subr.mxu0 0.0
      %1191 = vmatpush1.msra.mxu0 0.0
      %1192 = vmatprep.subr.mxu0 0.0
      %1193 = vmatpush1.msra.mxu0 0.0
      %1194 = vmatprep.subr.mxu0 0.0
      %1195 = vmatpush1.msra.mxu0 0.0
      %1196 = vmatprep.subr.mxu0 0.0
      %1197 = vmatpush1.msra.mxu0 0.0
      %1198 = vmatprep.subr.mxu0 0.0
      %1199 = vmatpush1.msra.mxu0 0.0
      %1200 = vmatprep.subr.mxu0 0.0
      %1201 = vmatpush1.msra.mxu0 0.0
      %1202 = vmatprep.subr.mxu0 0.0
      %1203 = vmatpush1.msra.mxu0 0.0
      %1204 = vmatprep.subr.mxu0 0.0
      %1205 = vmatpush1.msra.mxu0 0.0
      %1206 = vmatprep.subr.mxu0 0.0
      %1207 = vmatpush1.msra.mxu0 0.0
      %1208 = vmatprep.subr.mxu0 0.0
      %1209 = vmatpush1.msra.mxu0 0.0
      %1210 = vmatprep.subr.mxu0 0.0
      %1211 = vmatpush1.msra.mxu0 0.0
      %1212 = vmatprep.subr.mxu0 0.0
      %1213 = vmatpush1.msra.mxu0 0.0
      %1214 = vmatprep.subr.mxu0 0.0
      %1215 = vmatpush1.msra.mxu0 0.0
      %1216 = vmatprep.subr.mxu0 0.0
      %1217 = vmatpush1.msra.mxu0 0.0
      %1218 = vmatprep.subr.mxu0 0.0
      %1219 = vmatpush1.msra.mxu0 0.0
      %1220 = vmatprep.subr.mxu0 0.0
      %1221 = vmatpush1.msra.mxu0 0.0
      %1222 = vmatprep.subr.mxu0 0.0
      %1223 = vmatpush1.msra.mxu0 0.0
      %1224 = vmatprep.subr.mxu0 0.0
      %1225 = vmatpush1.msra.mxu0 0.0
      %1226 = vmatprep.subr.mxu0 0.0
      %1227 = vmatpush1.msra.mxu0 0.0
      %1228 = vmatprep.subr.mxu0 0.0
      %1229 = vmatpush1.msra.mxu0 0.0
      %1230 = vmatprep.subr.mxu0 0.0
      %1231 = vmatpush1.msra.mxu0 0.0
      %1232 = vmatprep.subr.mxu0 0.0
      %1233 = vmatpush1.msra.mxu0 0.0
      %1234 = vmatprep.subr.mxu0 0.0
      %1235 = vmatpush1.msra.mxu0 0.0
      %1236 = vmatprep.mubr.f32.mxu0 0.0
      %1237 = vmatmul.mubr.f32.gmra.mrb[0].mxu0 %v1167
      %v1238 = vpop.f32.mrb[0].mxu0
      %v1239 = vadd.f32 %v1163, %v1238
      %v1240 = vpop.f32.mrb[0].mxu0
      %1241 = vmatprep.mubr.f32.mxu0 0.0
      %1242 = vmatmul.mubr.f32.gmra.mrb[0].mxu0 %v1170
      %v1243 = vpop.f32.mrb[0].mxu0
      %v1244 = vadd.f32 %v1164, %v1243
      %v1245 = vpop.f32.mrb[0].mxu0
      %1246 = vdwg.mxu0
      %v1247 = vxor.u32 %v1239, 2147483648
      %v1248 = vxor.u32 %v1244, 2147483648
      %v1249 = vmul.f32 %v1247, 1.442695
      %v1250 = vpow.pop %v1249
      %v1251 = vmul.f32 %v1248, 1.442695
      %v1252 = vpow.pop %v1251
      %v1253 = vadd.f32 %v1250, 1.0
      %v1254 = vadd.f32 %v1252, 1.0
      %v1255 = vrcp.pop %v1253
      %v1256 = vmul.f32 1.0, %v1255
      %v1257 = vrcp.pop %v1254
      %v1258 = vmul.f32 1.0, %v1257
      %1260 = vset.pattern.permute.xlu0 0
      %1261 = vperm.xlu0 %1260, %v1256
      %v1262 = vpop.permute.xlu0 %1261
      %1265 = vset.pattern.permute.xlu0 0
      %1266 = vperm.xlu0 %1265, %v1258
      %v1267 = vpop.permute.xlu0 %1266
      %v1269 = vmul.f32 %v1075, %v1262
      %v1270 = vmul.f32 %v1076, %v1267
      %v1271 = vunpack.c.l.bf16 %v550
      %v1272 = vunpack.c.l.bf16 %v551
      %v1273 = vadd.f32 %v1269, %v1271
      %v1274 = vadd.f32 %v1270, %v1272
      %v1275 = vpack.c.bf16 %v1274, %v1273
      %v1277 = vunpack.c.l.b16 %v1275
      %v1278 = vunpack.c.h.b16 %v1275
      %v1279 = vpack.c.b16 %v1277, %v1277
      %v1280 = vpack.c.b16 %v1278, %v1278
      %1283 = vst [vmem:[%s548] sm:$0xf] %v1279
      %1284 = vst [vmem:[%s548 + $0x4] sm:$0xf] %v1280
      %p1285 = scmp.lt.s32.totalorder %s28, 1
      %s1286 = scalar_select %p1285, %s28, 1
      %s1287 = smul.addr %s1286, 2
      %s1288 = smul.addr %s1287, 4
      %s1289 = scalar_lea.vmem %s17, %s1288
      // Predicated region
      $region89: #{vove_forward.8} parent=87 // pred_check
        %p1290 = pneg %p408
      $region90: #{vove_forward.8} parent=87 // pred_check_branch
        %1292 = sbr.rel (%p1290) target = $region92
      $region91: #{vove_forward.8} parent=87 // pred_region
        _
      $region92: #{vove_forward.8} parent=87 // pred_fallthru
        _
    $region88: #{vove_forward.8} parent=5 // pred_fallthru
      _
    %p1293 = scmp.le.s32.totalorder 2, %s23
    // Predicated region
    $region93: #{vove_forward.8} parent=5 // pred_check
      %p1294 = pneg %p1293
    $region94: #{vove_forward.8} parent=5 // pred_check_branch
      %1296 = sbr.rel (%p1294) target = $region96
    $region95: #{vove_forward.8} parent=5 // pred_region
      %s1297 = ssub.s32 %s23, 2
      // Predicated region
      $region97: #{vove_forward.8} parent=95 // pred_check
        %p1298 = pneg %p414
      $region98: #{vove_forward.8} parent=95 // pred_check_branch
        %1300 = sbr.rel (%p1298) target = $region100
      $region99: #{vove_forward.8} parent=95 // pred_region
        %p1301 = scmp.lt.s32.totalorder %s29, 1
        %s1302 = scalar_select %p1301, %s29, 1
        %s1303 = smul.addr %s1302, 2
        %s1304 = smul.addr %s1303, 4
        %s1305 = scalar_lea.vmem %s17, %s1304
      $region100: #{vove_forward.8} parent=95 // pred_fallthru
        _
    $region96: #{vove_forward.8} parent=5 // pred_fallthru
      _
  $region6: #{vove_forward.8} parent=0 // loop_footer
    %s27 = sadd.s32 1, %s23
  $region7: #{vove_forward.8} parent=0 // loop_footer_branch
    %22 = sbr.rel target = $region3
  $region8: #{vove_forward.8} parent=0 // loop_exit
    _

// kernel: vove_forward.9
$region0: #{vove_forward.9}
  #allocation0 [shape = 'u32[]', space=smem, size = 0x4, offset = 0x4, fixed_abs, tag = 'smem constant byte address 0x4 - core index']
  #allocation1 [shape = 'u32[144,128]{1,0:T(1,128)}', space=vmem, size = 0x12000, scoped, tag = 'internal scratch']
  %s0 = inlined_call_operand.vmem [shape: bf16[2,16,128], index: 0, kind: input, shape index: {}]
  %s1 = inlined_call_operand.vmem [shape: bf16[16,16], index: 1, kind: input, shape index: {}]
  %s2 = inlined_call_operand.vmem [shape: f32[16,1], index: 2, kind: input, shape index: {}]
  %s3 = inlined_call_operand.vmem [shape: f32[16,1], index: 3, kind: input, shape index: {}]
  %s4 = inlined_call_operand.vmem [shape: f32[16,1], index: 4, kind: input, shape index: {}]
  %s5 = inlined_call_operand.vmem [shape: bf16[3,4,12], index: 5, kind: input, shape index: {}]
  %s6 = inlined_call_operand.vmem [shape: f32[3,4,1], index: 6, kind: input, shape index: {}]
  %s7 = inlined_call_operand.vmem [shape: f32[3,4,1], index: 7, kind: input, shape index: {}]
  %s8 = inlined_call_operand.vmem [shape: f32[3,4,1], index: 8, kind: input, shape index: {}]
  %s9 = inlined_call_operand.vmem [shape: bf16[16,16], index: 9, kind: input, shape index: {}]
  %s10 = inlined_call_operand.vmem [shape: f32[16,1], index: 10, kind: input, shape index: {}]
  %s11 = inlined_call_operand.vmem [shape: f32[16,1], index: 11, kind: input, shape index: {}]
  %s12 = inlined_call_operand.vmem [shape: f32[16,1], index: 12, kind: input, shape index: {}]
  %s13 = inlined_call_operand.vmem [shape: f32[8,16], index: 13, kind: input, shape index: {}]
  %s14 = inlined_call_operand.vmem [shape: f32[8,1], index: 14, kind: input, shape index: {}]
  %s15 = inlined_call_operand.vmem [shape: f32[16,8], index: 15, kind: input, shape index: {}]
  %s16 = inlined_call_operand.vmem [shape: f32[16,1], index: 16, kind: input, shape index: {}]
  %s17 = inlined_call_operand.vmem [shape: bf16[2,16,128], index: 17, kind: output, shape index: {}]
  %s18 = sld [smem:[#allocation0]]
  $region101: #{vove_forward.9} parent=0
    _
  %s20 = ssub.s32 1, %s18
  %s21 = scalar_select 0, %s20, %s18
  loop: start=0, step=1, limit=4
  $region2: #{vove_forward.9} parent=0 // loop_pre_header
    _
  $region3: #{vove_forward.9} parent=0 // loop_header
    %s23 = sphi 0, %s27
    %p24 = scmp.ge.s32.totalorder %s23, 4
    %s33 = sphi 0, %s35
    %s36 = sphi 0, %s33
    %s37 = sphi 0, %s36
    %s53 = sphi 0, %s37
    %s57 = sphi 0, %s57
    %s59 = sphi 0, %s57
    %s60 = sphi 0, %s59
    %s74 = sphi 0, %s60
    %s78 = sphi 0, %s78
    %s80 = sphi 0, %s78
    %s81 = sphi 0, %s80
    %s95 = sphi 0, %s81
    %s99 = sphi 0, %s99
    %s101 = sphi 0, %s99
    %s102 = sphi 0, %s101
    %s116 = sphi 0, %s102
    %s120 = sphi 0, %s120
    %s122 = sphi 0, %s120
    %s123 = sphi 0, %s122
    %s137 = sphi 0, %s123
    %s141 = sphi 0, %s141
    %s143 = sphi 0, %s141
    %s144 = sphi 0, %s143
    %s158 = sphi 0, %s144
    %s162 = sphi 0, %s162
    %s164 = sphi 0, %s162
    %s165 = sphi 0, %s164
    %s179 = sphi 0, %s165
    %s183 = sphi 0, %s183
    %s185 = sphi 0, %s183
    %s186 = sphi 0, %s185
    %s200 = sphi 0, %s186
    %s204 = sphi 0, %s204
    %s206 = sphi 0, %s204
    %s207 = sphi 0, %s206
    %s221 = sphi 0, %s207
    %s225 = sphi 0, %s225
    %s227 = sphi 0, %s225
    %s228 = sphi 0, %s227
    %s242 = sphi 0, %s228
    %s246 = sphi 0, %s246
    %s248 = sphi 0, %s246
    %s249 = sphi 0, %s248
    %s263 = sphi 0, %s249
    %s267 = sphi 0, %s267
    %s269 = sphi 0, %s267
    %s270 = sphi 0, %s269
    %s284 = sphi 0, %s270
    %s288 = sphi 0, %s288
    %s290 = sphi 0, %s288
    %s291 = sphi 0, %s290
    %s305 = sphi 0, %s291
    %s309 = sphi 0, %s309
    %s311 = sphi 0, %s309
    %s312 = sphi 0, %s311
    %s326 = sphi 0, %s312
    %s330 = sphi 0, %s330
    %s332 = sphi 0, %s330
    %s333 = sphi 0, %s332
    %s347 = sphi 0, %s333
    %s351 = sphi 0, %s351
    %s353 = sphi 0, %s351
    %s354 = sphi 0, %s353
    %s368 = sphi 0, %s354
    %s372 = sphi 0, %s372
    %s374 = sphi 0, %s372
    %s375 = sphi 0, %s374
    %s389 = sphi 0, %s375
    %s395 = sphi 0, %s397
    %s398 = sphi 0, %s395
    %s399 = sphi 0, %s398
    %s415 = sphi 0, %s399
  $region4: #{vove_forward.9} parent=0 // loop_header_branch
    %26 = sbr.rel (%p24) target = $region8
  $region5: #{vove_forward.9} parent=0 // loop_body
    %s28 = ssub.s32 %s23, 1
    %s29 = ssub.s32 %s23, 2
    %s30 = sadd.s32 %s23, 1
    %s31 = ssub.s32 %s23, %s30
    %p32 = scmp.eq.s32.totalorder %s31, 0
    %s34 = sadd.s32 %s33, 1
    %s35 = scalar_select %p32, %s33, %s34
    %p38 = pneg %p32
    %p39 = scmp.eq.s32.totalorder %s23, 1
    %p40 = por %p38, %p39
    %p41 = scmp.ne.s32.totalorder %s33, %s36
    %p42 = scmp.eq.s32.totalorder %s23, 0
    %p43 = por %p41, %p42
    %p44 = scmp.ne.s32.totalorder %s33, %s36
    %p45 = scmp.eq.s32.totalorder %s28, 1
    %p46 = por %p44, %p45
    %p47 = scmp.ne.s32.totalorder %s36, %s37
    %p48 = scmp.eq.s32.totalorder %s28, 0
    %p49 = por %p47, %p48
    %p50 = scmp.ne.s32.totalorder %s36, %s37
    %p51 = scmp.eq.s32.totalorder %s29, 1
    %p52 = por %p50, %p51
    %p54 = scmp.ne.s32.totalorder %s37, %s53
    %p55 = scmp.eq.s32.totalorder %s29, 0
    %p56 = por %p54, %p55
    %s58 = sadd.s32 %s57, 1
    %p61 = scmp.eq.s32.totalorder %s23, 1
    %p62 = scmp.ne.s32.totalorder %s57, %s59
    %p63 = scmp.eq.s32.totalorder %s23, 0
    %p64 = por %p62, %p63
    %p65 = scmp.ne.s32.totalorder %s57, %s59
    %p66 = scmp.eq.s32.totalorder %s28, 1
    %p67 = por %p65, %p66
    %p68 = scmp.ne.s32.totalorder %s59, %s60
    %p69 = scmp.eq.s32.totalorder %s28, 0
    %p70 = por %p68, %p69
    %p71 = scmp.ne.s32.totalorder %s59, %s60
    %p72 = scmp.eq.s32.totalorder %s29, 1
    %p73 = por %p71, %p72
    %p75 = scmp.ne.s32.totalorder %s60, %s74
    %p76 = scmp.eq.s32.totalorder %s29, 0
    %p77 = por %p75, %p76
    %s79 = sadd.s32 %s78, 1
    %p82 = scmp.eq.s32.totalorder %s23, 1
    %p83 = scmp.ne.s32.totalorder %s78, %s80
    %p84 = scmp.eq.s32.totalorder %s23, 0
    %p85 = por %p83, %p84
    %p86 = scmp.ne.s32.totalorder %s78, %s80
    %p87 = scmp.eq.s32.totalorder %s28, 1
    %p88 = por %p86, %p87
    %p89 = scmp.ne.s32.totalorder %s80, %s81
    %p90 = scmp.eq.s32.totalorder %s28, 0
    %p91 = por %p89, %p90
    %p92 = scmp.ne.s32.totalorder %s80, %s81
    %p93 = scmp.eq.s32.totalorder %s29, 1
    %p94 = por %p92, %p93
    %p96 = scmp.ne.s32.totalorder %s81, %s95
    %p97 = scmp.eq.s32.totalorder %s29, 0
    %p98 = por %p96, %p97
    %s100 = sadd.s32 %s99, 1
    %p103 = scmp.eq.s32.totalorder %s23, 1
    %p104 = scmp.ne.s32.totalorder %s99, %s101
    %p105 = scmp.eq.s32.totalorder %s23, 0
    %p106 = por %p104, %p105
    %p107 = scmp.ne.s32.totalorder %s99, %s101
    %p108 = scmp.eq.s32.totalorder %s28, 1
    %p109 = por %p107, %p108
    %p110 = scmp.ne.s32.totalorder %s101, %s102
    %p111 = scmp.eq.s32.totalorder %s28, 0
    %p112 = por %p110, %p111
    %p113 = scmp.ne.s32.totalorder %s101, %s102
    %p114 = scmp.eq.s32.totalorder %s29, 1
    %p115 = por %p113, %p114
    %p117 = scmp.ne.s32.totalorder %s102, %s116
    %p118 = scmp.eq.s32.totalorder %s29, 0
    %p119 = por %p117, %p118
    %s121 = sadd.s32 %s120, 1
    %p124 = scmp.eq.s32.totalorder %s23, 1
    %p125 = scmp.ne.s32.totalorder %s120, %s122
    %p126 = scmp.eq.s32.totalorder %s23, 0
    %p127 = por %p125, %p126
    %p128 = scmp.ne.s32.totalorder %s120, %s122
    %p129 = scmp.eq.s32.totalorder %s28, 1
    %p130 = por %p128, %p129
    %p131 = scmp.ne.s32.totalorder %s122, %s123
    %p132 = scmp.eq.s32.totalorder %s28, 0
    %p133 = por %p131, %p132
    %p134 = scmp.ne.s32.totalorder %s122, %s123
    %p135 = scmp.eq.s32.totalorder %s29, 1
    %p136 = por %p134, %p135
    %p138 = scmp.ne.s32.totalorder %s123, %s137
    %p139 = scmp.eq.s32.totalorder %s29, 0
    %p140 = por %p138, %p139
    %s142 = sadd.s32 %s141, 1
    %p145 = scmp.eq.s32.totalorder %s23, 1
    %p146 = scmp.ne.s32.totalorder %s141, %s143
    %p147 = scmp.eq.s32.totalorder %s23, 0
    %p148 = por %p146, %p147
    %p149 = scmp.ne.s32.totalorder %s141, %s143
    %p150 = scmp.eq.s32.totalorder %s28, 1
    %p151 = por %p149, %p150
    %p152 = scmp.ne.s32.totalorder %s143, %s144
    %p153 = scmp.eq.s32.totalorder %s28, 0
    %p154 = por %p152, %p153
    %p155 = scmp.ne.s32.totalorder %s143, %s144
    %p156 = scmp.eq.s32.totalorder %s29, 1
    %p157 = por %p155, %p156
    %p159 = scmp.ne.s32.totalorder %s144, %s158
    %p160 = scmp.eq.s32.totalorder %s29, 0
    %p161 = por %p159, %p160
    %s163 = sadd.s32 %s162, 1
    %p166 = scmp.eq.s32.totalorder %s23, 1
    %p167 = scmp.ne.s32.totalorder %s162, %s164
    %p168 = scmp.eq.s32.totalorder %s23, 0
    %p169 = por %p167, %p168
    %p170 = scmp.ne.s32.totalorder %s162, %s164
    %p171 = scmp.eq.s32.totalorder %s28, 1
    %p172 = por %p170, %p171
    %p173 = scmp.ne.s32.totalorder %s164, %s165
    %p174 = scmp.eq.s32.totalorder %s28, 0
    %p175 = por %p173, %p174
    %p176 = scmp.ne.s32.totalorder %s164, %s165
    %p177 = scmp.eq.s32.totalorder %s29, 1
    %p178 = por %p176, %p177
    %p180 = scmp.ne.s32.totalorder %s165, %s179
    %p181 = scmp.eq.s32.totalorder %s29, 0
    %p182 = por %p180, %p181
    %s184 = sadd.s32 %s183, 1
    %p187 = scmp.eq.s32.totalorder %s23, 1
    %p188 = scmp.ne.s32.totalorder %s183, %s185
    %p189 = scmp.eq.s32.totalorder %s23, 0
    %p190 = por %p188, %p189
    %p191 = scmp.ne.s32.totalorder %s183, %s185
    %p192 = scmp.eq.s32.totalorder %s28, 1
    %p193 = por %p191, %p192
    %p194 = scmp.ne.s32.totalorder %s185, %s186
    %p195 = scmp.eq.s32.totalorder %s28, 0
    %p196 = por %p194, %p195
    %p197 = scmp.ne.s32.totalorder %s185, %s186
    %p198 = scmp.eq.s32.totalorder %s29, 1
    %p199 = por %p197, %p198
    %p201 = scmp.ne.s32.totalorder %s186, %s200
    %p202 = scmp.eq.s32.totalorder %s29, 0
    %p203 = por %p201, %p202
    %s205 = sadd.s32 %s204, 1
    %p208 = scmp.eq.s32.totalorder %s23, 1
    %p209 = scmp.ne.s32.totalorder %s204, %s206
    %p210 = scmp.eq.s32.totalorder %s23, 0
    %p211 = por %p209, %p210
    %p212 = scmp.ne.s32.totalorder %s204, %s206
    %p213 = scmp.eq.s32.totalorder %s28, 1
    %p214 = por %p212, %p213
    %p215 = scmp.ne.s32.totalorder %s206, %s207
    %p216 = scmp.eq.s32.totalorder %s28, 0
    %p217 = por %p215, %p216
    %p218 = scmp.ne.s32.totalorder %s206, %s207
    %p219 = scmp.eq.s32.totalorder %s29, 1
    %p220 = por %p218, %p219
    %p222 = scmp.ne.s32.totalorder %s207, %s221
    %p223 = scmp.eq.s32.totalorder %s29, 0
    %p224 = por %p222, %p223
    %s226 = sadd.s32 %s225, 1
    %p229 = scmp.eq.s32.totalorder %s23, 1
    %p230 = scmp.ne.s32.totalorder %s225, %s227
    %p231 = scmp.eq.s32.totalorder %s23, 0
    %p232 = por %p230, %p231
    %p233 = scmp.ne.s32.totalorder %s225, %s227
    %p234 = scmp.eq.s32.totalorder %s28, 1
    %p235 = por %p233, %p234
    %p236 = scmp.ne.s32.totalorder %s227, %s228
    %p237 = scmp.eq.s32.totalorder %s28, 0
    %p238 = por %p236, %p237
    %p239 = scmp.ne.s32.totalorder %s227, %s228
    %p240 = scmp.eq.s32.totalorder %s29, 1
    %p241 = por %p239, %p240
    %p243 = scmp.ne.s32.totalorder %s228, %s242
    %p244 = scmp.eq.s32.totalorder %s29, 0
    %p245 = por %p243, %p244
    %s247 = sadd.s32 %s246, 1
    %p250 = scmp.eq.s32.totalorder %s23, 1
    %p251 = scmp.ne.s32.totalorder %s246, %s248
    %p252 = scmp.eq.s32.totalorder %s23, 0
    %p253 = por %p251, %p252
    %p254 = scmp.ne.s32.totalorder %s246, %s248
    %p255 = scmp.eq.s32.totalorder %s28, 1
    %p256 = por %p254, %p255
    %p257 = scmp.ne.s32.totalorder %s248, %s249
    %p258 = scmp.eq.s32.totalorder %s28, 0
    %p259 = por %p257, %p258
    %p260 = scmp.ne.s32.totalorder %s248, %s249
    %p261 = scmp.eq.s32.totalorder %s29, 1
    %p262 = por %p260, %p261
    %p264 = scmp.ne.s32.totalorder %s249, %s263
    %p265 = scmp.eq.s32.totalorder %s29, 0
    %p266 = por %p264, %p265
    %s268 = sadd.s32 %s267, 1
    %p271 = scmp.eq.s32.totalorder %s23, 1
    %p272 = scmp.ne.s32.totalorder %s267, %s269
    %p273 = scmp.eq.s32.totalorder %s23, 0
    %p274 = por %p272, %p273
    %p275 = scmp.ne.s32.totalorder %s267, %s269
    %p276 = scmp.eq.s32.totalorder %s28, 1
    %p277 = por %p275, %p276
    %p278 = scmp.ne.s32.totalorder %s269, %s270
    %p279 = scmp.eq.s32.totalorder %s28, 0
    %p280 = por %p278, %p279
    %p281 = scmp.ne.s32.totalorder %s269, %s270
    %p282 = scmp.eq.s32.totalorder %s29, 1
    %p283 = por %p281, %p282
    %p285 = scmp.ne.s32.totalorder %s270, %s284
    %p286 = scmp.eq.s32.totalorder %s29, 0
    %p287 = por %p285, %p286
    %s289 = sadd.s32 %s288, 1
    %p292 = scmp.eq.s32.totalorder %s23, 1
    %p293 = scmp.ne.s32.totalorder %s288, %s290
    %p294 = scmp.eq.s32.totalorder %s23, 0
    %p295 = por %p293, %p294
    %p296 = scmp.ne.s32.totalorder %s288, %s290
    %p297 = scmp.eq.s32.totalorder %s28, 1
    %p298 = por %p296, %p297
    %p299 = scmp.ne.s32.totalorder %s290, %s291
    %p300 = scmp.eq.s32.totalorder %s28, 0
    %p301 = por %p299, %p300
    %p302 = scmp.ne.s32.totalorder %s290, %s291
    %p303 = scmp.eq.s32.totalorder %s29, 1
    %p304 = por %p302, %p303
    %p306 = scmp.ne.s32.totalorder %s291, %s305
    %p307 = scmp.eq.s32.totalorder %s29, 0
    %p308 = por %p306, %p307
    %s310 = sadd.s32 %s309, 1
    %p313 = scmp.eq.s32.totalorder %s23, 1
    %p314 = scmp.ne.s32.totalorder %s309, %s311
    %p315 = scmp.eq.s32.totalorder %s23, 0
    %p316 = por %p314, %p315
    %p317 = scmp.ne.s32.totalorder %s309, %s311
    %p318 = scmp.eq.s32.totalorder %s28, 1
    %p319 = por %p317, %p318
    %p320 = scmp.ne.s32.totalorder %s311, %s312
    %p321 = scmp.eq.s32.totalorder %s28, 0
    %p322 = por %p320, %p321
    %p323 = scmp.ne.s32.totalorder %s311, %s312
    %p324 = scmp.eq.s32.totalorder %s29, 1
    %p325 = por %p323, %p324
    %p327 = scmp.ne.s32.totalorder %s312, %s326
    %p328 = scmp.eq.s32.totalorder %s29, 0
    %p329 = por %p327, %p328
    %s331 = sadd.s32 %s330, 1
    %p334 = scmp.eq.s32.totalorder %s23, 1
    %p335 = scmp.ne.s32.totalorder %s330, %s332
    %p336 = scmp.eq.s32.totalorder %s23, 0
    %p337 = por %p335, %p336
    %p338 = scmp.ne.s32.totalorder %s330, %s332
    %p339 = scmp.eq.s32.totalorder %s28, 1
    %p340 = por %p338, %p339
    %p341 = scmp.ne.s32.totalorder %s332, %s333
    %p342 = scmp.eq.s32.totalorder %s28, 0
    %p343 = por %p341, %p342
    %p344 = scmp.ne.s32.totalorder %s332, %s333
    %p345 = scmp.eq.s32.totalorder %s29, 1
    %p346 = por %p344, %p345
    %p348 = scmp.ne.s32.totalorder %s333, %s347
    %p349 = scmp.eq.s32.totalorder %s29, 0
    %p350 = por %p348, %p349
    %s352 = sadd.s32 %s351, 1
    %p355 = scmp.eq.s32.totalorder %s23, 1
    %p356 = scmp.ne.s32.totalorder %s351, %s353
    %p357 = scmp.eq.s32.totalorder %s23, 0
    %p358 = por %p356, %p357
    %p359 = scmp.ne.s32.totalorder %s351, %s353
    %p360 = scmp.eq.s32.totalorder %s28, 1
    %p361 = por %p359, %p360
    %p362 = scmp.ne.s32.totalorder %s353, %s354
    %p363 = scmp.eq.s32.totalorder %s28, 0
    %p364 = por %p362, %p363
    %p365 = scmp.ne.s32.totalorder %s353, %s354
    %p366 = scmp.eq.s32.totalorder %s29, 1
    %p367 = por %p365, %p366
    %p369 = scmp.ne.s32.totalorder %s354, %s368
    %p370 = scmp.eq.s32.totalorder %s29, 0
    %p371 = por %p369, %p370
    %s373 = sadd.s32 %s372, 1
    %p376 = scmp.eq.s32.totalorder %s23, 1
    %p377 = scmp.ne.s32.totalorder %s372, %s374
    %p378 = scmp.eq.s32.totalorder %s23, 0
    %p379 = por %p377, %p378
    %p380 = scmp.ne.s32.totalorder %s372, %s374
    %p381 = scmp.eq.s32.totalorder %s28, 1
    %p382 = por %p380, %p381
    %p383 = scmp.ne.s32.totalorder %s374, %s375
    %p384 = scmp.eq.s32.totalorder %s28, 0
    %p385 = por %p383, %p384
    %p386 = scmp.ne.s32.totalorder %s374, %s375
    %p387 = scmp.eq.s32.totalorder %s29, 1
    %p388 = por %p386, %p387
    %p390 = scmp.ne.s32.totalorder %s375, %s389
    %p391 = scmp.eq.s32.totalorder %s29, 0
    %p392 = por %p390, %p391
    %s393 = ssub.s32 %s23, %s30
    %p394 = scmp.eq.s32.totalorder %s393, 0
    %s396 = sadd.s32 %s395, 1
    %s397 = scalar_select %p394, %s395, %s396
    %p400 = pneg %p394
    %p401 = scmp.eq.s32.totalorder %s23, 1
    %p402 = por %p400, %p401
    %p403 = scmp.ne.s32.totalorder %s395, %s398
    %p404 = scmp.eq.s32.totalorder %s23, 0
    %p405 = por %p403, %p404
    %p406 = scmp.ne.s32.totalorder %s395, %s398
    %p407 = scmp.eq.s32.totalorder %s28, 1
    %p408 = por %p406, %p407
    %p409 = scmp.ne.s32.totalorder %s398, %s399
    %p410 = scmp.eq.s32.totalorder %s28, 0
    %p411 = por %p409, %p410
    %p412 = scmp.ne.s32.totalorder %s398, %s399
    %p413 = scmp.eq.s32.totalorder %s29, 1
    %p414 = por %p412, %p413
    %p416 = scmp.ne.s32.totalorder %s399, %s415
    %p417 = scmp.eq.s32.totalorder %s29, 0
    %p418 = por %p416, %p417
    %p419 = scmp.le.s32.totalorder 1, %s23
    %p420 = scmp.lt.s32.totalorder %s23, 3
    %p421 = pnand %p419, %p420
    %p422 = pneg %p421
    // Predicated region
    $region9: #{vove_forward.9} parent=5 // pred_check
      _
    $region10: #{vove_forward.9} parent=5 // pred_check_branch
      %424 = sbr.rel (%p421) target = $region12
    $region11: #{vove_forward.9} parent=5 // pred_region
      %s425 = ssub.s32 %s23, 1
      // Predicated region
      $region13: #{vove_forward.9} parent=11 // pred_check
        %p426 = pneg %p70
      $region14: #{vove_forward.9} parent=11 // pred_check_branch
        %428 = sbr.rel (%p426) target = $region16
      $region15: #{vove_forward.9} parent=11 // pred_region
        _
      $region16: #{vove_forward.9} parent=11 // pred_fallthru
        _
      // Predicated region
      $region17: #{vove_forward.9} parent=11 // pred_check
        %p429 = pneg %p91
      $region18: #{vove_forward.9} parent=11 // pred_check_branch
        %431 = sbr.rel (%p429) target = $region20
      $region19: #{vove_forward.9} parent=11 // pred_region
        _
      $region20: #{vove_forward.9} parent=11 // pred_fallthru
        _
      // Predicated region
      $region21: #{vove_forward.9} parent=11 // pred_check
        %p432 = pneg %p112
      $region22: #{vove_forward.9} parent=11 // pred_check_branch
        %434 = sbr.rel (%p432) target = $region24
      $region23: #{vove_forward.9} parent=11 // pred_region
        _
      $region24: #{vove_forward.9} parent=11 // pred_fallthru
        _
      // Predicated region
      $region25: #{vove_forward.9} parent=11 // pred_check
        %p435 = pneg %p133
      $region26: #{vove_forward.9} parent=11 // pred_check_branch
        %437 = sbr.rel (%p435) target = $region28
      $region27: #{vove_forward.9} parent=11 // pred_region
        _
      $region28: #{vove_forward.9} parent=11 // pred_fallthru
        _
      // Predicated region
      $region29: #{vove_forward.9} parent=11 // pred_check
        %p438 = pneg %p154
      $region30: #{vove_forward.9} parent=11 // pred_check_branch
        %440 = sbr.rel (%p438) target = $region32
      $region31: #{vove_forward.9} parent=11 // pred_region
        _
      $region32: #{vove_forward.9} parent=11 // pred_fallthru
        _
      // Predicated region
      $region33: #{vove_forward.9} parent=11 // pred_check
        %p441 = pneg %p175
      $region34: #{vove_forward.9} parent=11 // pred_check_branch
        %443 = sbr.rel (%p441) target = $region36
      $region35: #{vove_forward.9} parent=11 // pred_region
        _
      $region36: #{vove_forward.9} parent=11 // pred_fallthru
        _
      // Predicated region
      $region37: #{vove_forward.9} parent=11 // pred_check
        %p444 = pneg %p196
      $region38: #{vove_forward.9} parent=11 // pred_check_branch
        %446 = sbr.rel (%p444) target = $region40
      $region39: #{vove_forward.9} parent=11 // pred_region
        _
      $region40: #{vove_forward.9} parent=11 // pred_fallthru
        _
      // Predicated region
      $region41: #{vove_forward.9} parent=11 // pred_check
        %p447 = pneg %p217
      $region42: #{vove_forward.9} parent=11 // pred_check_branch
        %449 = sbr.rel (%p447) target = $region44
      $region43: #{vove_forward.9} parent=11 // pred_region
        _
      $region44: #{vove_forward.9} parent=11 // pred_fallthru
        _
      // Predicated region
      $region45: #{vove_forward.9} parent=11 // pred_check
        %p450 = pneg %p238
      $region46: #{vove_forward.9} parent=11 // pred_check_branch
        %452 = sbr.rel (%p450) target = $region48
      $region47: #{vove_forward.9} parent=11 // pred_region
        _
      $region48: #{vove_forward.9} parent=11 // pred_fallthru
        _
      // Predicated region
      $region49: #{vove_forward.9} parent=11 // pred_check
        %p453 = pneg %p259
      $region50: #{vove_forward.9} parent=11 // pred_check_branch
        %455 = sbr.rel (%p453) target = $region52
      $region51: #{vove_forward.9} parent=11 // pred_region
        _
      $region52: #{vove_forward.9} parent=11 // pred_fallthru
        _
      // Predicated region
      $region53: #{vove_forward.9} parent=11 // pred_check
        %p456 = pneg %p280
      $region54: #{vove_forward.9} parent=11 // pred_check_branch
        %458 = sbr.rel (%p456) target = $region56
      $region55: #{vove_forward.9} parent=11 // pred_region
        _
      $region56: #{vove_forward.9} parent=11 // pred_fallthru
        _
      // Predicated region
      $region57: #{vove_forward.9} parent=11 // pred_check
        %p459 = pneg %p301
      $region58: #{vove_forward.9} parent=11 // pred_check_branch
        %461 = sbr.rel (%p459) target = $region60
      $region59: #{vove_forward.9} parent=11 // pred_region
        _
      $region60: #{vove_forward.9} parent=11 // pred_fallthru
        _
      // Predicated region
      $region61: #{vove_forward.9} parent=11 // pred_check
        %p462 = pneg %p322
      $region62: #{vove_forward.9} parent=11 // pred_check_branch
        %464 = sbr.rel (%p462) target = $region64
      $region63: #{vove_forward.9} parent=11 // pred_region
        _
      $region64: #{vove_forward.9} parent=11 // pred_fallthru
        _
      // Predicated region
      $region65: #{vove_forward.9} parent=11 // pred_check
        %p465 = pneg %p343
      $region66: #{vove_forward.9} parent=11 // pred_check_branch
        %467 = sbr.rel (%p465) target = $region68
      $region67: #{vove_forward.9} parent=11 // pred_region
        _
      $region68: #{vove_forward.9} parent=11 // pred_fallthru
        _
      // Predicated region
      $region69: #{vove_forward.9} parent=11 // pred_check
        %p468 = pneg %p364
      $region70: #{vove_forward.9} parent=11 // pred_check_branch
        %470 = sbr.rel (%p468) target = $region72
      $region71: #{vove_forward.9} parent=11 // pred_region
        _
      $region72: #{vove_forward.9} parent=11 // pred_fallthru
        _
      // Predicated region
      $region73: #{vove_forward.9} parent=11 // pred_check
        %p471 = pneg %p385
      $region74: #{vove_forward.9} parent=11 // pred_check_branch
        %473 = sbr.rel (%p471) target = $region76
      $region75: #{vove_forward.9} parent=11 // pred_region
        _
      $region76: #{vove_forward.9} parent=11 // pred_fallthru
        _
    $region12: #{vove_forward.9} parent=5 // pred_fallthru
      _
    %p474 = scmp.lt.s32.totalorder %s23, 2
    // Predicated region
    $region77: #{vove_forward.9} parent=5 // pred_check
      %p475 = pneg %p474
    $region78: #{vove_forward.9} parent=5 // pred_check_branch
      %477 = sbr.rel (%p475) target = $region80
    $region79: #{vove_forward.9} parent=5 // pred_region
      // Predicated region
      $region81: #{vove_forward.9} parent=79 // pred_check
        %p478 = pneg %p43
      $region82: #{vove_forward.9} parent=79 // pred_check_branch
        %480 = sbr.rel (%p478) target = $region84
      $region83: #{vove_forward.9} parent=79 // pred_region
        %p481 = scmp.lt.s32.totalorder %s23, 1
        %s482 = scalar_select %p481, %s23, 1
        %s483 = smul.addr %s482, 2
        %s484 = smul.addr %s483, 4
        %s485 = scalar_lea.vmem %s0, %s484
      $region84: #{vove_forward.9} parent=79 // pred_fallthru
        _
    $region80: #{vove_forward.9} parent=5 // pred_fallthru
      _
    %p486 = scmp.le.s32.totalorder 1, %s23
    %p487 = scmp.lt.s32.totalorder %s23, 3
    %p488 = pnand %p486, %p487
    %p489 = pneg %p488
    // Predicated region
    $region85: #{vove_forward.9} parent=5 // pred_check
      _
    $region86: #{vove_forward.9} parent=5 // pred_check_branch
      %491 = sbr.rel (%p488) target = $region88
    $region87: #{vove_forward.9} parent=5 // pred_region
      %s492 = ssub.s32 %s23, 1
      %p493 = scmp.lt.s32.totalorder %s28, 1
      %s494 = scalar_select %p493, %s28, 1
      %s495 = smul.addr %s494, 2
      %s496 = smul.addr %s495, 4
      %s497 = scalar_lea.vmem %s0, %s496
      %p498 = pneg %p49
      %p499 = pneg %p46
      %p500 = pneg %p70
      %p501 = pneg %p67
      %p502 = pneg %p91
      %p503 = pneg %p88
      %p504 = pneg %p112
      %p505 = pneg %p109
      %p506 = pneg %p133
      %p507 = pneg %p130
      %p508 = pneg %p154
      %p509 = pneg %p151
      %p510 = pneg %p175
      %p511 = pneg %p172
      %p512 = pneg %p196
      %p513 = pneg %p193
      %p514 = pneg %p217
      %p515 = pneg %p214
      %p516 = pneg %p238
      %p517 = pneg %p235
      %p518 = pneg %p259
      %p519 = pneg %p256
      %p520 = pneg %p280
      %p521 = pneg %p277
      %p522 = pneg %p301
      %p523 = pneg %p298
      %p524 = pneg %p322
      %p525 = pneg %p319
      %p526 = pneg %p343
      %p527 = pneg %p340
      %p528 = pneg %p364
      %p529 = pneg %p361
      %p530 = pneg %p385
      %p531 = pneg %p382
      %p532 = pneg %p411
      %p533 = pneg %p408
      %p534 = scmp.lt.s32.totalorder %s28, 1
      %s535 = scalar_select %p534, %s28, 1
      %s536 = smul.addr %s535, 2
      %s537 = smul.addr %s536, 4
      %s538 = scalar_lea.vmem %s17, %s537
      %p539 = scmp.lt.s32.totalorder %s28, 1
      %s540 = scalar_select %p539, %s28, 1
      %s541 = smul.addr %s540, 2
      %s542 = smul.addr %s541, 4
      %s543 = scalar_lea.vmem %s0, %s542
      %p544 = scmp.lt.s32.totalorder %s28, 1
      %s545 = scalar_select %p544, %s28, 1
      %s546 = smul.addr %s545, 2
      %s547 = smul.addr %s546, 4
      %s548 = scalar_lea.vmem %s17, %s547
      %v550 = vld [vmem:[%s543] sm:$0xf]
      %v551 = vld [vmem:[%s543 + $0x4] sm:$0xf]
      %v552 = vlaneseq
      %v553 = vand.u32 %v552, 127
      %vm554 = vcmp.lt.s32.totalorder %v553, 16
      %v555 = vld [vmem:[%s1] sm:$0xf]
      %v556 = vld [vmem:[%s1 + $0x4] sm:$0xf]
      %v557 = vld [vmem:[%s2] sm:$0xff]
      %v558 = vld [vmem:[%s2 + $0x8] sm:$0xff]
      %560 = vset.pattern.permute.xlu0 0
      %561 = vperm.xlu0 %560, %v557
      %v562 = vpop.permute.xlu0 %561
      %565 = vset.pattern.permute.xlu0 0
      %566 = vperm.xlu0 %565, %v558
      %v567 = vpop.permute.xlu0 %566
      %v571 = vunpack.c.l.b16 %v555
      %v572 = vunpack.c.l.b16 %v556
      %v573 = vpack.c.b16 %v572, %v571
      %v576 = vunpack.c.l.b16 %v550
      %v577 = vunpack.c.l.b16 %v551
      %v578 = vpack.c.b16 %v577, %v576
      %vm580 = vcmask 130048
      %v582 = vsel %vm580, %v573, 0
      %584 = vmatprep.subr.bf16.mxu0 0
      %585 = vmatpush1.bf16.msra.mxu0 %v578
      %586 = vmatprep.subr.bf16.mxu0 0
      %587 = vmatpush1.bf16.msra.mxu0 0
      %588 = vmatprep.subr.bf16.mxu0 0
      %589 = vmatpush1.bf16.msra.mxu0 0
      %590 = vmatprep.subr.bf16.mxu0 0
      %591 = vmatpush1.bf16.msra.mxu0 0
      %592 = vmatprep.subr.bf16.mxu0 0
      %593 = vmatpush1.bf16.msra.mxu0 0
      %594 = vmatprep.subr.bf16.mxu0 0
      %595 = vmatpush1.bf16.msra.mxu0 0
      %596 = vmatprep.subr.bf16.mxu0 0
      %597 = vmatpush1.bf16.msra.mxu0 0
      %598 = vmatprep.subr.bf16.mxu0 0
      %599 = vmatpush1.bf16.msra.mxu0 0
      %600 = vmatprep.subr.bf16.mxu0 0
      %601 = vmatpush1.bf16.msra.mxu0 0
      %602 = vmatprep.subr.bf16.mxu0 0
      %603 = vmatpush1.bf16.msra.mxu0 0
      %604 = vmatprep.subr.bf16.mxu0 0
      %605 = vmatpush1.bf16.msra.mxu0 0
      %606 = vmatprep.subr.bf16.mxu0 0
      %607 = vmatpush1.bf16.msra.mxu0 0
      %608 = vmatprep.subr.bf16.mxu0 0
      %609 = vmatpush1.bf16.msra.mxu0 0
      %610 = vmatprep.subr.bf16.mxu0 0
      %611 = vmatpush1.bf16.msra.mxu0 0
      %612 = vmatprep.subr.bf16.mxu0 0
      %613 = vmatpush1.bf16.msra.mxu0 0
      %614 = vmatprep.subr.bf16.mxu0 0
      %615 = vmatpush1.bf16.msra.mxu0 0
      %616 = vmatprep.mubr.bf16.mxu0 0
      %617 = vmatmul.mubr.bf16.gmra.mrb[0].mxu0 %v582
      %v618 = vpop.f32.mrb[0].mxu0
      %v619 = vadd.f32 %v562, %v618
      %v620 = vpop.f32.mrb[0].mxu0
      %v621 = vpop.f32.mrb[0].mxu0
      %v622 = vadd.f32 %v567, %v621
      %v623 = vpop.f32.mrb[0].mxu0
      %624 = vdwg.mxu0
      %v625 = vmax.f32 %v619, 0.0
      %v626 = vmax.f32 %v622, 0.0
      %v627 = vld [vmem:[%s3] sm:$0xff]
      %v628 = vld [vmem:[%s3 + $0x8] sm:$0xff]
      %630 = vset.pattern.permute.xlu0 0
      %631 = vperm.xlu0 %630, %v627
      %v632 = vpop.permute.xlu0 %631
      %635 = vset.pattern.permute.xlu0 0
      %636 = vperm.xlu0 %635, %v628
      %v637 = vpop.permute.xlu0 %636
      %v639 = vmul.f32 %v625, %v632
      %v640 = vmul.f32 %v626, %v637
      %v641 = vld [vmem:[%s4] sm:$0xff]
      %v642 = vld [vmem:[%s4 + $0x8] sm:$0xff]
      %644 = vset.pattern.permute.xlu0 0
      %645 = vperm.xlu0 %644, %v641
      %v646 = vpop.permute.xlu0 %645
      %649 = vset.pattern.permute.xlu0 0
      %650 = vperm.xlu0 %649, %v642
      %v651 = vpop.permute.xlu0 %650
      %v653 = vadd.f32 %v639, %v646
      %v654 = vadd.f32 %v640, %v651
      %v655 = vpack.c.bf16 %v653, %v653
      %v656 = vadd.f32 %v653, 0.0
      %v657 = vsel %vm554, 1, 0
      %vm658 = vcmp.eq.s32.totalorder %v657, 1
      %v659 = vsel %vm658, %v656, 0.0
      %v660 = vpack.c.bf16 %v659, %v659
      %v662 = vrot.slane %v660, 2
      %663 = vrot.lane.b32.xlu0 %v662, 4
      %v664 = vpop.permute.xlu0 %663
      %vm665 = vcmask 31744
      %v668 = vsel %vm665, 0, %v664
      %v669 = vsel %vm665, %v664, 0
      %v672 = vrot.slane %v668, 6
      %v673 = vrot.slane %v669, 6
      %674 = vrot.lane.b32.xlu0 %v672, 124
      %v675 = vpop.permute.xlu0 %674
      %676 = vrot.lane.b32.xlu0 %v673, 124
      %v677 = vpop.permute.xlu0 %676
      %vm678 = vcmask 1014784
      %v679 = vsel %vm678, %v675, %v677
      %v680 = vrot.slane %v668, 4
      %v681 = vrot.slane %v669, 4
      %682 = vrot.lane.b32.xlu0 %v680, 120
      %v683 = vpop.permute.xlu0 %682
      %684 = vrot.lane.b32.xlu0 %v681, 120
      %v685 = vpop.permute.xlu0 %684
      %vm686 = vcmask 982016
      %v687 = vsel %vm686, %v683, %v685
      %vm688 = vcmask 1041408
      %v690 = vsel %vm688, %v668, %v679
      %vm691 = vcmask 1043456
      %v693 = vsel %vm691, %v690, %v687
      %v694 = vld [vmem:[%s5] sm:$0x3]
      %v695 = vld [vmem:[%s6] sm:$0xf]
      %697 = vset.pattern.permute.xlu0 0
      %698 = vperm.xlu0 %697, %v695
      %v699 = vpop.permute.xlu0 %698
      %vm701 = vcmask 97280
      %v703 = vsel %vm701, %v694, 0
      %vm705 = vcmask 1045504
      %v706 = vsel %vm705, %v693, 0
      %708 = vmatprep.subr.bf16.mxu0 0
      %709 = vmatpush1.bf16.msra.mxu0 %v706
      %710 = vmatprep.subr.bf16.mxu0 0
      %711 = vmatpush1.bf16.msra.mxu0 0
      %712 = vmatprep.subr.bf16.mxu0 0
      %713 = vmatpush1.bf16.msra.mxu0 0
      %714 = vmatprep.subr.bf16.mxu0 0
      %715 = vmatpush1.bf16.msra.mxu0 0
      %716 = vmatprep.subr.bf16.mxu0 0
      %717 = vmatpush1.bf16.msra.mxu0 0
      %718 = vmatprep.subr.bf16.mxu0 0
      %719 = vmatpush1.bf16.msra.mxu0 0
      %720 = vmatprep.subr.bf16.mxu0 0
      %721 = vmatpush1.bf16.msra.mxu0 0
      %722 = vmatprep.subr.bf16.mxu0 0
      %723 = vmatpush1.bf16.msra.mxu0 0
      %724 = vmatprep.subr.bf16.mxu0 0
      %725 = vmatpush1.bf16.msra.mxu0 0
      %726 = vmatprep.subr.bf16.mxu0 0
      %727 = vmatpush1.bf16.msra.mxu0 0
      %728 = vmatprep.subr.bf16.mxu0 0
      %729 = vmatpush1.bf16.msra.mxu0 0
      %730 = vmatprep.subr.bf16.mxu0 0
      %731 = vmatpush1.bf16.msra.mxu0 0
      %732 = vmatprep.subr.bf16.mxu0 0
      %733 = vmatpush1.bf16.msra.mxu0 0
      %734 = vmatprep.subr.bf16.mxu0 0
      %735 = vmatpush1.bf16.msra.mxu0 0
      %736 = vmatprep.subr.bf16.mxu0 0
      %737 = vmatpush1.bf16.msra.mxu0 0
      %738 = vmatprep.subr.bf16.mxu0 0
      %739 = vmatpush1.bf16.msra.mxu0 0
      %740 = vmatprep.mubr.bf16.mxu0 0
      %741 = vmatmul.mubr.bf16.gmra.mrb[0].mxu0 %v703
      %v742 = vpop.f32.mrb[0].mxu0
      %v743 = vadd.f32 %v699, %v742
      %v744 = vpop.f32.mrb[0].mxu0
      %v745 = vpop.f32.mrb[0].mxu0
      %v746 = vpop.f32.mrb[0].mxu0
      %747 = vdwg.mxu0
      %v748 = vmax.f32 %v743, 0.0
      %v749 = vld [vmem:[%s7] sm:$0xf]
      %751 = vset.pattern.permute.xlu0 0
      %752 = vperm.xlu0 %751, %v749
      %v753 = vpop.permute.xlu0 %752
      %v755 = vmul.f32 %v748, %v753
      %v756 = vld [vmem:[%s8] sm:$0xf]
      %758 = vset.pattern.permute.xlu0 0
      %759 = vperm.xlu0 %758, %v756
      %v760 = vpop.permute.xlu0 %759
      %v762 = vadd.f32 %v755, %v760
      %v763 = vpack.c.bf16 %v762, %v762
      %v764 = vadd.f32 %v654, %v762
      %v765 = vsel %vm658, %v764, 0.0
      %v766 = vpack.c.bf16 %v765, %v765
      %768 = vrot.lane.b32.xlu0 %v766, 4
      %v769 = vpop.permute.xlu0 %768
      %v771 = vsel %vm665, 0, %v769
      %v772 = vsel %vm665, %v769, 0
      %v775 = vrot.slane %v771, 6
      %v776 = vrot.slane %v772, 6
      %777 = vrot.lane.b32.xlu0 %v775, 124
      %v778 = vpop.permute.xlu0 %777
      %779 = vrot.lane.b32.xlu0 %v776, 124
      %v780 = vpop.permute.xlu0 %779
      %v781 = vsel %vm678, %v778, %v780
      %v782 = vrot.slane %v771, 4
      %v783 = vrot.slane %v772, 4
      %784 = vrot.lane.b32.xlu0 %v782, 120
      %v785 = vpop.permute.xlu0 %784
      %786 = vrot.lane.b32.xlu0 %v783, 120
      %v787 = vpop.permute.xlu0 %786
      %v788 = vsel %vm686, %v785, %v787
      %v790 = vsel %vm688, %v771, %v781
      %v792 = vsel %vm691, %v790, %v788
      %s793 = scalar_lea.vmem %s5, 2
      %v794 = vld [vmem:[%s793] sm:$0x3]
      %s795 = scalar_lea.vmem %s6, 4
      %v796 = vld [vmem:[%s795] sm:$0xf]
      %798 = vset.pattern.permute.xlu0 0
      %799 = vperm.xlu0 %798, %v796
      %v800 = vpop.permute.xlu0 %799
      %v803 = vsel %vm701, %v794, 0
      %v805 = vsel %vm705, %v792, 0
      %807 = vmatprep.subr.bf16.mxu0 0
      %808 = vmatpush1.bf16.msra.mxu0 %v805
      %809 = vmatprep.subr.bf16.mxu0 0
      %810 = vmatpush1.bf16.msra.mxu0 0
      %811 = vmatprep.subr.bf16.mxu0 0
      %812 = vmatpush1.bf16.msra.mxu0 0
      %813 = vmatprep.subr.bf16.mxu0 0
      %814 = vmatpush1.bf16.msra.mxu0 0
      %815 = vmatprep.subr.bf16.mxu0 0
      %816 = vmatpush1.bf16.msra.mxu0 0
      %817 = vmatprep.subr.bf16.mxu0 0
      %818 = vmatpush1.bf16.msra.mxu0 0
      %819 = vmatprep.subr.bf16.mxu0 0
      %820 = vmatpush1.bf16.msra.mxu0 0
      %821 = vmatprep.subr.bf16.mxu0 0
      %822 = vmatpush1.bf16.msra.mxu0 0
      %823 = vmatprep.subr.bf16.mxu0 0
      %824 = vmatpush1.bf16.msra.mxu0 0
      %825 = vmatprep.subr.bf16.mxu0 0
      %826 = vmatpush1.bf16.msra.mxu0 0
      %827 = vmatprep.subr.bf16.mxu0 0
      %828 = vmatpush1.bf16.msra.mxu0 0
      %829 = vmatprep.subr.bf16.mxu0 0
      %830 = vmatpush1.bf16.msra.mxu0 0
      %831 = vmatprep.subr.bf16.mxu0 0
      %832 = vmatpush1.bf16.msra.mxu0 0
      %833 = vmatprep.subr.bf16.mxu0 0
      %834 = vmatpush1.bf16.msra.mxu0 0
      %835 = vmatprep.subr.bf16.mxu0 0
      %836 = vmatpush1.bf16.msra.mxu0 0
      %837 = vmatprep.subr.bf16.mxu0 0
      %838 = vmatpush1.bf16.msra.mxu0 0
      %839 = vmatprep.mubr.bf16.mxu0 0
      %840 = vmatmul.mubr.bf16.gmra.mrb[0].mxu0 %v803
      %v841 = vpop.f32.mrb[0].mxu0
      %v842 = vadd.f32 %v800, %v841
      %v843 = vpop.f32.mrb[0].mxu0
      %v844 = vpop.f32.mrb[0].mxu0
      %v845 = vpop.f32.mrb[0].mxu0
      %846 = vdwg.mxu0
      %v847 = vmax.f32 %v842, 0.0
      %s848 = scalar_lea.vmem %s7, 4
      %v849 = vld [vmem:[%s848] sm:$0xf]
      %851 = vset.pattern.permute.xlu0 0
      %852 = vperm.xlu0 %851, %v849
      %v853 = vpop.permute.xlu0 %852
      %v855 = vmul.f32 %v847, %v853
      %s856 = scalar_lea.vmem %s8, 4
      %v857 = vld [vmem:[%s856] sm:$0xf]
      %859 = vset.pattern.permute.xlu0 0
      %860 = vperm.xlu0 %859, %v857
      %v861 = vpop.permute.xlu0 %860
      %v863 = vadd.f32 %v855, %v861
      %v864 = vpack.c.bf16 %v863, %v863
      %v866 = vrot.slane %v863, 4
      %v868 = vadd.f32 %v654, %v866
      %v869 = vsel %vm658, %v868, 0.0
      %v870 = vpack.c.bf16 %v869, %v869
      %v872 = vrot.slane %v870, 2
      %873 = vrot.lane.b32.xlu0 %v872, 4
      %v874 = vpop.permute.xlu0 %873
      %v876 = vsel %vm665, 0, %v874
      %v877 = vsel %vm665, %v874, 0
      %v880 = vrot.slane %v876, 6
      %v881 = vrot.slane %v877, 6
      %882 = vrot.lane.b32.xlu0 %v880, 124
      %v883 = vpop.permute.xlu0 %882
      %884 = vrot.lane.b32.xlu0 %v881, 124
      %v885 = vpop.permute.xlu0 %884
      %v886 = vsel %vm678, %v883, %v885
      %v887 = vrot.slane %v876, 4
      %v888 = vrot.slane %v877, 4
      %889 = vrot.lane.b32.xlu0 %v887, 120
      %v890 = vpop.permute.xlu0 %889
      %891 = vrot.lane.b32.xlu0 %v888, 120
      %v892 = vpop.permute.xlu0 %891
      %v893 = vsel %vm686, %v890, %v892
      %v895 = vsel %vm688, %v876, %v886
      %v897 = vsel %vm691, %v895, %v893
      %s898 = scalar_lea.vmem %s5, 4
      %v899 = vld [vmem:[%s898] sm:$0x3]
      %s900 = scalar_lea.vmem %s6, 8
      %v901 = vld [vmem:[%s900] sm:$0xf]
      %903 = vset.pattern.permute.xlu0 0
      %904 = vperm.xlu0 %903, %v901
      %v905 = vpop.permute.xlu0 %904
      %v908 = vsel %vm701, %v899, 0
      %v910 = vsel %vm705, %v897, 0
      %912 = vmatprep.subr.bf16.mxu0 0
      %913 = vmatpush1.bf16.msra.mxu0 %v910
      %914 = vmatprep.subr.bf16.mxu0 0
      %915 = vmatpush1.bf16.msra.mxu0 0
      %916 = vmatprep.subr.bf16.mxu0 0
      %917 = vmatpush1.bf16.msra.mxu0 0
      %918 = vmatprep.subr.bf16.mxu0 0
      %919 = vmatpush1.bf16.msra.mxu0 0
      %920 = vmatprep.subr.bf16.mxu0 0
      %921 = vmatpush1.bf16.msra.mxu0 0
      %922 = vmatprep.subr.bf16.mxu0 0
      %923 = vmatpush1.bf16.msra.mxu0 0
      %924 = vmatprep.subr.bf16.mxu0 0
      %925 = vmatpush1.bf16.msra.mxu0 0
      %926 = vmatprep.subr.bf16.mxu0 0
      %927 = vmatpush1.bf16.msra.mxu0 0
      %928 = vmatprep.subr.bf16.mxu0 0
      %929 = vmatpush1.bf16.msra.mxu0 0
      %930 = vmatprep.subr.bf16.mxu0 0
      %931 = vmatpush1.bf16.msra.mxu0 0
      %932 = vmatprep.subr.bf16.mxu0 0
      %933 = vmatpush1.bf16.msra.mxu0 0
      %934 = vmatprep.subr.bf16.mxu0 0
      %935 = vmatpush1.bf16.msra.mxu0 0
      %936 = vmatprep.subr.bf16.mxu0 0
      %937 = vmatpush1.bf16.msra.mxu0 0
      %938 = vmatprep.subr.bf16.mxu0 0
      %939 = vmatpush1.bf16.msra.mxu0 0
      %940 = vmatprep.subr.bf16.mxu0 0
      %941 = vmatpush1.bf16.msra.mxu0 0
      %942 = vmatprep.subr.bf16.mxu0 0
      %943 = vmatpush1.bf16.msra.mxu0 0
      %944 = vmatprep.mubr.bf16.mxu0 0
      %945 = vmatmul.mubr.bf16.gmra.mrb[0].mxu0 %v908
      %v946 = vpop.f32.mrb[0].mxu0
      %v947 = vadd.f32 %v905, %v946
      %v948 = vpop.f32.mrb[0].mxu0
      %v949 = vpop.f32.mrb[0].mxu0
      %v950 = vpop.f32.mrb[0].mxu0
      %951 = vdwg.mxu0
      %v952 = vmax.f32 %v947, 0.0
      %s953 = scalar_lea.vmem %s7, 8
      %v954 = vld [vmem:[%s953] sm:$0xf]
      %956 = vset.pattern.permute.xlu0 0
      %957 = vperm.xlu0 %956, %v954
      %v958 = vpop.permute.xlu0 %957
      %v960 = vmul.f32 %v952, %v958
      %s961 = scalar_lea.vmem %s8, 8
      %v962 = vld [vmem:[%s961] sm:$0xf]
      %964 = vset.pattern.permute.xlu0 0
      %965 = vperm.xlu0 %964, %v962
      %v966 = vpop.permute.xlu0 %965
      %v968 = vadd.f32 %v960, %v966
      %v969 = vpack.c.bf16 %v968, %v968
      %v971 = vrot.slane %v763, 6
      %v973 = vrot.slane %v864, 4
      %v975 = vrot.slane %v969, 2
      %v978 = vsel %vm688, %v655, %v971
      %v980 = vsel %vm691, %v978, %v973
      %v982 = vsel %vm705, %v980, %v975
      %v984 = vld [vmem:[%s9] sm:$0xf]
      %v985 = vld [vmem:[%s9 + $0x4] sm:$0xf]
      %v986 = vld [vmem:[%s10] sm:$0xff]
      %v987 = vld [vmem:[%s10 + $0x8] sm:$0xff]
      %989 = vset.pattern.permute.xlu0 0
      %990 = vperm.xlu0 %989, %v986
      %v991 = vpop.permute.xlu0 %990
      %994 = vset.pattern.permute.xlu0 0
      %995 = vperm.xlu0 %994, %v987
      %v996 = vpop.permute.xlu0 %995
      %v1000 = vunpack.c.l.b16 %v984
      %v1001 = vunpack.c.l.b16 %v985
      %v1002 = vpack.c.b16 %v1001, %v1000
      %v1004 = vsel %vm580, %v1002, 0
      %1006 = vmatprep.subr.bf16.mxu0 0
      %1007 = vmatpush1.bf16.msra.mxu0 %v982
      %1008 = vmatprep.subr.bf16.mxu0 0
      %1009 = vmatpush1.bf16.msra.mxu0 0
      %1010 = vmatprep.subr.bf16.mxu0 0
      %1011 = vmatpush1.bf16.msra.mxu0 0
      %1012 = vmatprep.subr.bf16.mxu0 0
      %1013 = vmatpush1.bf16.msra.mxu0 0
      %1014 = vmatprep.subr.bf16.mxu0 0
      %1015 = vmatpush1.bf16.msra.mxu0 0
      %1016 = vmatprep.subr.bf16.mxu0 0
      %1017 = vmatpush1.bf16.msra.mxu0 0
      %1018 = vmatprep.subr.bf16.mxu0 0
      %1019 = vmatpush1.bf16.msra.mxu0 0
      %1020 = vmatprep.subr.bf16.mxu0 0
      %1021 = vmatpush1.bf16.msra.mxu0 0
      %1022 = vmatprep.subr.bf16.mxu0 0
      %1023 = vmatpush1.bf16.msra.mxu0 0
      %1024 = vmatprep.subr.bf16.mxu0 0
      %1025 = vmatpush1.bf16.msra.mxu0 0
      %1026 = vmatprep.subr.bf16.mxu0 0
      %1027 = vmatpush1.bf16.msra.mxu0 0
      %1028 = vmatprep.subr.bf16.mxu0 0
      %1029 = vmatpush1.bf16.msra.mxu0 0
      %1030 = vmatprep.subr.bf16.mxu0 0
      %1031 = vmatpush1.bf16.msra.mxu0 0
      %1032 = vmatprep.subr.bf16.mxu0 0
      %1033 = vmatpush1.bf16.msra.mxu0 0
      %1034 = vmatprep.subr.bf16.mxu0 0
      %1035 = vmatpush1.bf16.msra.mxu0 0
      %1036 = vmatprep.subr.bf16.mxu0 0
      %1037 = vmatpush1.bf16.msra.mxu0 0
      %1038 = vmatprep.mubr.bf16.mxu0 0
      %1039 = vmatmul.mubr.bf16.gmra.mrb[0].mxu0 %v1004
      %v1040 = vpop.f32.mrb[0].mxu0
      %v1041 = vadd.f32 %v991, %v1040
      %v1042 = vpop.f32.mrb[0].mxu0
      %v1043 = vpop.f32.mrb[0].mxu0
      %v1044 = vadd.f32 %v996, %v1043
      %v1045 = vpop.f32.mrb[0].mxu0
      %1046 = vdwg.mxu0
      %v1047 = vmax.f32 %v1041, 0.0
      %v1048 = vmax.f32 %v1044, 0.0
      %v1049 = vld [vmem:[%s11] sm:$0xff]
      %v1050 = vld [vmem:[%s11 + $0x8] sm:$0xff]
      %1052 = vset.pattern.permute.xlu0 0
      %1053 = vperm.xlu0 %1052, %v1049
      %v1054 = vpop.permute.xlu0 %1053
      %1057 = vset.pattern.permute.xlu0 0
      %1058 = vperm.xlu0 %1057, %v1050
      %v1059 = vpop.permute.xlu0 %1058
      %v1061 = vmul.f32 %v1047, %v1054
      %v1062 = vmul.f32 %v1048, %v1059
      %v1063 = vld [vmem:[%s12] sm:$0xff]
      %v1064 = vld [vmem:[%s12 + $0x8] sm:$0xff]
      %1066 = vset.pattern.permute.xlu0 0
      %1067 = vperm.xlu0 %1066, %v1063
      %v1068 = vpop.permute.xlu0 %1067
      %1071 = vset.pattern.permute.xlu0 0
      %1072 = vperm.xlu0 %1071, %v1064
      %v1073 = vpop.permute.xlu0 %1072
      %v1075 = vadd.f32 %v1061, %v1068
      %v1076 = vadd.f32 %v1062, %v1073
      %v1077 = vsel %vm658, %v1075, 0.0
      %v1078 = vsel %vm658, %v1076, 0.0
      %1079 = vadd.xlane.f32.xlu0 %v1077
      %v1080 = vpop.xlane.xlu0 %1079
      %1081 = vadd.xlane.f32.xlu0 %v1078
      %v1082 = vpop.xlane.xlu0 %1081
      %v1083 = vmul.f32 %v1080, 0.0625
      %v1084 = vmul.f32 %v1082, 0.0625
      %v1085 = vld [vmem:[%s13] sm:$0xff]
      %v1086 = vld [vmem:[%s14] sm:$0xff]
      %v1088 = vsel %vm580, %v1085, 0
      %1090 = vmatprep.subr.mxu0 0.0
      %1091 = vmatpush1.msra.mxu0 %v1083
      %1092 = vmatprep.subr.mxu0 0.0
      %1093 = vmatpush1.msra.mxu0 %v1084
      %1094 = vmatprep.subr.mxu0 0.0
      %1095 = vmatpush1.msra.mxu0 0.0
      %1096 = vmatprep.subr.mxu0 0.0
      %1097 = vmatpush1.msra.mxu0 0.0
      %1098 = vmatprep.subr.mxu0 0.0
      %1099 = vmatpush1.msra.mxu0 0.0
      %1100 = vmatprep.subr.mxu0 0.0
      %1101 = vmatpush1.msra.mxu0 0.0
      %1102 = vmatprep.subr.mxu0 0.0
      %1103 = vmatpush1.msra.mxu0 0.0
      %1104 = vmatprep.subr.mxu0 0.0
      %1105 = vmatpush1.msra.mxu0 0.0
      %1106 = vmatprep.subr.mxu0 0.0
      %1107 = vmatpush1.msra.mxu0 0.0
      %1108 = vmatprep.subr.mxu0 0.0
      %1109 = vmatpush1.msra.mxu0 0.0
      %1110 = vmatprep.subr.mxu0 0.0
      %1111 = vmatpush1.msra.mxu0 0.0
      %1112 = vmatprep.subr.mxu0 0.0
      %1113 = vmatpush1.msra.mxu0 0.0
      %1114 = vmatprep.subr.mxu0 0.0
      %1115 = vmatpush1.msra.mxu0 0.0
      %1116 = vmatprep.subr.mxu0 0.0
      %1117 = vmatpush1.msra.mxu0 0.0
      %1118 = vmatprep.subr.mxu0 0.0
      %1119 = vmatpush1.msra.mxu0 0.0
      %1120 = vmatprep.subr.mxu0 0.0
      %1121 = vmatpush1.msra.mxu0 0.0
      %1122 = vmatprep.subr.mxu0 0.0
      %1123 = vmatpush1.msra.mxu0 0.0
      %1124 = vmatprep.subr.mxu0 0.0
      %1125 = vmatpush1.msra.mxu0 0.0
      %1126 = vmatprep.subr.mxu0 0.0
      %1127 = vmatpush1.msra.mxu0 0.0
      %1128 = vmatprep.subr.mxu0 0.0
      %1129 = vmatpush1.msra.mxu0 0.0
      %1130 = vmatprep.subr.mxu0 0.0
      %1131 = vmatpush1.msra.mxu0 0.0
      %1132 = vmatprep.subr.mxu0 0.0
      %1133 = vmatpush1.msra.mxu0 0.0
      %1134 = vmatprep.subr.mxu0 0.0
      %1135 = vmatpush1.msra.mxu0 0.0
      %1136 = vmatprep.subr.mxu0 0.0
      %1137 = vmatpush1.msra.mxu0 0.0
      %1138 = vmatprep.subr.mxu0 0.0
      %1139 = vmatpush1.msra.mxu0 0.0
      %1140 = vmatprep.subr.mxu0 0.0
      %1141 = vmatpush1.msra.mxu0 0.0
      %1142 = vmatprep.subr.mxu0 0.0
      %1143 = vmatpush1.msra.mxu0 0.0
      %1144 = vmatprep.subr.mxu0 0.0
      %1145 = vmatpush1.msra.mxu0 0.0
      %1146 = vmatprep.subr.mxu0 0.0
      %1147 = vmatpush1.msra.mxu0 0.0
      %1148 = vmatprep.subr.mxu0 0.0
      %1149 = vmatpush1.msra.mxu0 0.0
      %1150 = vmatprep.subr.mxu0 0.0
      %1151 = vmatpush1.msra.mxu0 0.0
      %1152 = vmatprep.subr.mxu0 0.0
      %1153 = vmatpush1.msra.mxu0 0.0
      %1154 = vmatprep.mubr.f32.mxu0 0.0
      %1155 = vmatmul.mubr.f32.gmra.mrb[0].mxu0 %v1088
      %v1156 = vpop.f32.mrb[0].mxu0
      %v1157 = vadd.f32 %v1086, %v1156
      %v1158 = vpop.f32.mrb[0].mxu0
      %1159 = vdwg.mxu0
      %v1160 = vmax.f32 %v1157, 0.0
      %v1161 = vld [vmem:[%s15] sm:$0xff]
      %v1162 = vld [vmem:[%s15 + $0x8] sm:$0xff]
      %v1163 = vld [vmem:[%s16] sm:$0xff]
      %v1164 = vld [vmem:[%s16 + $0x8] sm:$0xff]
      %vm1165 = vcmask 64512
      %v1167 = vsel %vm1165, %v1161, 0
      %v1170 = vsel %vm1165, %v1162, 0
      %1172 = vmatprep.subr.mxu0 0.0
      %1173 = vmatpush1.msra.mxu0 %v1160
      %1174 = vmatprep.subr.mxu0 0.0
      %1175 = vmatpush1.msra.mxu0 0.0
      %1176 = vmatprep.subr.mxu0 0.0
      %1177 = vmatpush1.msra.mxu0 0.0
      %1178 = vmatprep.subr.mxu0 0.0
      %1179 = vmatpush1.msra.mxu0 0.0
      %1180 = vmatprep.subr.mxu0 0.0
      %1181 = vmatpush1.msra.mxu0 0.0
      %1182 = vmatprep.subr.mxu0 0.0
      %1183 = vmatpush1.msra.mxu0 0.0
      %1184 = vmatprep.subr.mxu0 0.0
      %1185 = vmatpush1.msra.mxu0 0.0
      %1186 = vmatprep.subr.mxu0 0.0
      %1187 = vmatpush1.msra.mxu0 0.0
      %1188 = vmatprep.subr.mxu0 0.0
      %1189 = vmatpush1.msra.mxu0 0.0
      %1190 = vmatprep.subr.mxu0 0.0
      %1191 = vmatpush1.msra.mxu0 0.0
      %1192 = vmatprep.subr.mxu0 0.0
      %1193 = vmatpush1.msra.mxu0 0.0
      %1194 = vmatprep.subr.mxu0 0.0
      %1195 = vmatpush1.msra.mxu0 0.0
      %1196 = vmatprep.subr.mxu0 0.0
      %1197 = vmatpush1.msra.mxu0 0.0
      %1198 = vmatprep.subr.mxu0 0.0
      %1199 = vmatpush1.msra.mxu0 0.0
      %1200 = vmatprep.subr.mxu0 0.0
      %1201 = vmatpush1.msra.mxu0 0.0
      %1202 = vmatprep.subr.mxu0 0.0
      %1203 = vmatpush1.msra.mxu0 0.0
      %1204 = vmatprep.subr.mxu0 0.0
      %1205 = vmatpush1.msra.mxu0 0.0
      %1206 = vmatprep.subr.mxu0 0.0
      %1207 = vmatpush1.msra.mxu0 0.0
      %1208 = vmatprep.subr.mxu0 0.0
      %1209 = vmatpush1.msra.mxu0 0.0
      %1210 = vmatprep.subr.mxu0 0.0
      %1211 = vmatpush1.msra.mxu0 0.0
      %1212 = vmatprep.subr.mxu0 0.0
      %1213 = vmatpush1.msra.mxu0 0.0
      %1214 = vmatprep.subr.mxu0 0.0
      %1215 = vmatpush1.msra.mxu0 0.0
      %1216 = vmatprep.subr.mxu0 0.0
      %1217 = vmatpush1.msra.mxu0 0.0
      %1218 = vmatprep.subr.mxu0 0.0
      %1219 = vmatpush1.msra.mxu0 0.0
      %1220 = vmatprep.subr.mxu0 0.0
      %1221 = vmatpush1.msra.mxu0 0.0
      %1222 = vmatprep.subr.mxu0 0.0
      %1223 = vmatpush1.msra.mxu0 0.0
      %1224 = vmatprep.subr.mxu0 0.0
      %1225 = vmatpush1.msra.mxu0 0.0
      %1226 = vmatprep.subr.mxu0 0.0
      %1227 = vmatpush1.msra.mxu0 0.0
      %1228 = vmatprep.subr.mxu0 0.0
      %1229 = vmatpush1.msra.mxu0 0.0
      %1230 = vmatprep.subr.mxu0 0.0
      %1231 = vmatpush1.msra.mxu0 0.0
      %1232 = vmatprep.subr.mxu0 0.0
      %1233 = vmatpush1.msra.mxu0 0.0
      %1234 = vmatprep.subr.mxu0 0.0
      %1235 = vmatpush1.msra.mxu0 0.0
      %1236 = vmatprep.mubr.f32.mxu0 0.0
      %1237 = vmatmul.mubr.f32.gmra.mrb[0].mxu0 %v1167
      %v1238 = vpop.f32.mrb[0].mxu0
      %v1239 = vadd.f32 %v1163, %v1238
      %v1240 = vpop.f32.mrb[0].mxu0
      %1241 = vmatprep.mubr.f32.mxu0 0.0
      %1242 = vmatmul.mubr.f32.gmra.mrb[0].mxu0 %v1170
      %v1243 = vpop.f32.mrb[0].mxu0
      %v1244 = vadd.f32 %v1164, %v1243
      %v1245 = vpop.f32.mrb[0].mxu0
      %1246 = vdwg.mxu0
      %v1247 = vxor.u32 %v1239, 2147483648
      %v1248 = vxor.u32 %v1244, 2147483648
      %v1249 = vmul.f32 %v1247, 1.442695
      %v1250 = vpow.pop %v1249
      %v1251 = vmul.f32 %v1248, 1.442695
      %v1252 = vpow.pop %v1251
      %v1253 = vadd.f32 %v1250, 1.0
      %v1254 = vadd.f32 %v1252, 1.0
      %v1255 = vrcp.pop %v1253
      %v1256 = vmul.f32 1.0, %v1255
      %v1257 = vrcp.pop %v1254
      %v1258 = vmul.f32 1.0, %v1257
      %1260 = vset.pattern.permute.xlu0 0
      %1261 = vperm.xlu0 %1260, %v1256
      %v1262 = vpop.permute.xlu0 %1261
      %1265 = vset.pattern.permute.xlu0 0
      %1266 = vperm.xlu0 %1265, %v1258
      %v1267 = vpop.permute.xlu0 %1266
      %v1269 = vmul.f32 %v1075, %v1262
      %v1270 = vmul.f32 %v1076, %v1267
      %v1271 = vunpack.c.l.bf16 %v550
      %v1272 = vunpack.c.l.bf16 %v551
      %v1273 = vadd.f32 %v1269, %v1271
      %v1274 = vadd.f32 %v1270, %v1272
      %v1275 = vpack.c.bf16 %v1274, %v1273
      %v1277 = vunpack.c.l.b16 %v1275
      %v1278 = vunpack.c.h.b16 %v1275
      %v1279 = vpack.c.b16 %v1277, %v1277
      %v1280 = vpack.c.b16 %v1278, %v1278
      %1283 = vst [vmem:[%s548] sm:$0xf] %v1279
      %1284 = vst [vmem:[%s548 + $0x4] sm:$0xf] %v1280
      %p1285 = scmp.lt.s32.totalorder %s28, 1
      %s1286 = scalar_select %p1285, %s28, 1
      %s1287 = smul.addr %s1286, 2
      %s1288 = smul.addr %s1287, 4
      %s1289 = scalar_lea.vmem %s17, %s1288
      // Predicated region
      $region89: #{vove_forward.9} parent=87 // pred_check
        %p1290 = pneg %p408
      $region90: #{vove_forward.9} parent=87 // pred_check_branch
        %1292 = sbr.rel (%p1290) target = $region92
      $region91: #{vove_forward.9} parent=87 // pred_region
        _
      $region92: #{vove_forward.9} parent=87 // pred_fallthru
        _
    $region88: #{vove_forward.9} parent=5 // pred_fallthru
      _
    %p1293 = scmp.le.s32.totalorder 2, %s23
    // Predicated region
    $region93: #{vove_forward.9} parent=5 // pred_check
      %p1294 = pneg %p1293
    $region94: #{vove_forward.9} parent=5 // pred_check_branch
      %1296 = sbr.rel (%p1294) target = $region96
    $region95: #{vove_forward.9} parent=5 // pred_region
      %s1297 = ssub.s32 %s23, 2
      // Predicated region
      $region97: #{vove_forward.9} parent=95 // pred_check
        %p1298 = pneg %p414
      $region98: #{vove_forward.9} parent=95 // pred_check_branch
        %1300 = sbr.rel (%p1298) target = $region100
      $region99: #{vove_forward.9} parent=95 // pred_region
        %p1301 = scmp.lt.s32.totalorder %s29, 1
        %s1302 = scalar_select %p1301, %s29, 1
        %s1303 = smul.addr %s1302, 2
        %s1304 = smul.addr %s1303, 4
        %s1305 = scalar_lea.vmem %s17, %s1304
      $region100: #{vove_forward.9} parent=95 // pred_fallthru
        _
    $region96: #{vove_forward.9} parent=5 // pred_fallthru
      _
  $region6: #{vove_forward.9} parent=0 // loop_footer
    %s27 = sadd.s32 1, %s23
  $region7: #{vove_forward.9} parent=0 // loop_footer_branch
    %22 = sbr.rel target = $region3
  $region8: #{vove_forward.9} parent=0 // loop_exit
    _

// kernel: vove_forward.10
$region0: #{vove_forward.10}
  #allocation0 [shape = 'u32[]', space=smem, size = 0x4, offset = 0x4, fixed_abs, tag = 'smem constant byte address 0x4 - core index']
  #allocation1 [shape = 'u32[144,128]{1,0:T(1,128)}', space=vmem, size = 0x12000, scoped, tag = 'internal scratch']
  %s0 = inlined_call_operand.vmem [shape: bf16[2,16,128], index: 0, kind: input, shape index: {}]
  %s1 = inlined_call_operand.vmem [shape: bf16[2,16,128], index: 1, kind: input, shape index: {}]
  %s2 = inlined_call_operand.vmem [shape: bf16[2,16,128], index: 2, kind: input, shape index: {}]
  %s3 = inlined_call_operand.vmem [shape: bf16[3,32,16], index: 3, kind: input, shape index: {}]
  %s4 = inlined_call_operand.vmem [shape: f32[32,1], index: 4, kind: input, shape index: {}]
  %s5 = inlined_call_operand.vmem [shape: bf16[8,32], index: 5, kind: input, shape index: {}]
  %s6 = inlined_call_operand.vmem [shape: f32[8,1], index: 6, kind: input, shape index: {}]
  %s7 = inlined_call_operand.vmem [shape: bf16[32,8], index: 7, kind: input, shape index: {}]
  %s8 = inlined_call_operand.vmem [shape: f32[32,1], index: 8, kind: input, shape index: {}]
  %s9 = inlined_call_operand.vmem [shape: f32[2,64,1], index: 9, kind: output, shape index: {}]
  %s10 = sld [smem:[#allocation0]]
  $region69: #{vove_forward.10} parent=0
    _
  %s12 = ssub.s32 1, %s10
  %s13 = scalar_select 0, %s12, %s10
  loop: start=0, step=1, limit=4
  $region2: #{vove_forward.10} parent=0 // loop_pre_header
    _
  $region3: #{vove_forward.10} parent=0 // loop_header
    %s15 = sphi 0, %s19
    %p16 = scmp.ge.s32.totalorder %s15, 4
    %s25 = sphi 0, %s27
    %s28 = sphi 0, %s25
    %s29 = sphi 0, %s28
    %s45 = sphi 0, %s29
    %s51 = sphi 0, %s53
    %s54 = sphi 0, %s51
    %s55 = sphi 0, %s54
    %s71 = sphi 0, %s55
    %s77 = sphi 0, %s79
    %s80 = sphi 0, %s77
    %s81 = sphi 0, %s80
    %s97 = sphi 0, %s81
    %s101 = sphi 0, %s101
    %s103 = sphi 0, %s101
    %s104 = sphi 0, %s103
    %s118 = sphi 0, %s104
    %s122 = sphi 0, %s122
    %s124 = sphi 0, %s122
    %s125 = sphi 0, %s124
    %s139 = sphi 0, %s125
    %s143 = sphi 0, %s143
    %s145 = sphi 0, %s143
    %s146 = sphi 0, %s145
    %s160 = sphi 0, %s146
    %s164 = sphi 0, %s164
    %s166 = sphi 0, %s164
    %s167 = sphi 0, %s166
    %s181 = sphi 0, %s167
    %s185 = sphi 0, %s185
    %s187 = sphi 0, %s185
    %s188 = sphi 0, %s187
    %s202 = sphi 0, %s188
    %s206 = sphi 0, %s206
    %s208 = sphi 0, %s206
    %s209 = sphi 0, %s208
    %s223 = sphi 0, %s209
    %s229 = sphi 0, %s231
    %s232 = sphi 0, %s229
    %s233 = sphi 0, %s232
    %s249 = sphi 0, %s233
  $region4: #{vove_forward.10} parent=0 // loop_header_branch
    %18 = sbr.rel (%p16) target = $region8
  $region5: #{vove_forward.10} parent=0 // loop_body
    %s20 = ssub.s32 %s15, 1
    %s21 = ssub.s32 %s15, 2
    %s22 = sadd.s32 %s15, 1
    %s23 = ssub.s32 %s15, %s22
    %p24 = scmp.eq.s32.totalorder %s23, 0
    %s26 = sadd.s32 %s25, 1
    %s27 = scalar_select %p24, %s25, %s26
    %p30 = pneg %p24
    %p31 = scmp.eq.s32.totalorder %s15, 1
    %p32 = por %p30, %p31
    %p33 = scmp.ne.s32.totalorder %s25, %s28
    %p34 = scmp.eq.s32.totalorder %s15, 0
    %p35 = por %p33, %p34
    %p36 = scmp.ne.s32.totalorder %s25, %s28
    %p37 = scmp.eq.s32.totalorder %s20, 1
    %p38 = por %p36, %p37
    %p39 = scmp.ne.s32.totalorder %s28, %s29
    %p40 = scmp.eq.s32.totalorder %s20, 0
    %p41 = por %p39, %p40
    %p42 = scmp.ne.s32.totalorder %s28, %s29
    %p43 = scmp.eq.s32.totalorder %s21, 1
    %p44 = por %p42, %p43
    %p46 = scmp.ne.s32.totalorder %s29, %s45
    %p47 = scmp.eq.s32.totalorder %s21, 0
    %p48 = por %p46, %p47
    %s49 = ssub.s32 %s15, %s22
    %p50 = scmp.eq.s32.totalorder %s49, 0
    %s52 = sadd.s32 %s51, 1
    %s53 = scalar_select %p50, %s51, %s52
    %p56 = pneg %p50
    %p57 = scmp.eq.s32.totalorder %s15, 1
    %p58 = por %p56, %p57
    %p59 = scmp.ne.s32.totalorder %s51, %s54
    %p60 = scmp.eq.s32.totalorder %s15, 0
    %p61 = por %p59, %p60
    %p62 = scmp.ne.s32.totalorder %s51, %s54
    %p63 = scmp.eq.s32.totalorder %s20, 1
    %p64 = por %p62, %p63
    %p65 = scmp.ne.s32.totalorder %s54, %s55
    %p66 = scmp.eq.s32.totalorder %s20, 0
    %p67 = por %p65, %p66
    %p68 = scmp.ne.s32.totalorder %s54, %s55
    %p69 = scmp.eq.s32.totalorder %s21, 1
    %p70 = por %p68, %p69
    %p72 = scmp.ne.s32.totalorder %s55, %s71
    %p73 = scmp.eq.s32.totalorder %s21, 0
    %p74 = por %p72, %p73
    %s75 = ssub.s32 %s15, %s22
    %p76 = scmp.eq.s32.totalorder %s75, 0
    %s78 = sadd.s32 %s77, 1
    %s79 = scalar_select %p76, %s77, %s78
    %p82 = pneg %p76
    %p83 = scmp.eq.s32.totalorder %s15, 1
    %p84 = por %p82, %p83
    %p85 = scmp.ne.s32.totalorder %s77, %s80
    %p86 = scmp.eq.s32.totalorder %s15, 0
    %p87 = por %p85, %p86
    %p88 = scmp.ne.s32.totalorder %s77, %s80
    %p89 = scmp.eq.s32.totalorder %s20, 1
    %p90 = por %p88, %p89
    %p91 = scmp.ne.s32.totalorder %s80, %s81
    %p92 = scmp.eq.s32.totalorder %s20, 0
    %p93 = por %p91, %p92
    %p94 = scmp.ne.s32.totalorder %s80, %s81
    %p95 = scmp.eq.s32.totalorder %s21, 1
    %p96 = por %p94, %p95
    %p98 = scmp.ne.s32.totalorder %s81, %s97
    %p99 = scmp.eq.s32.totalorder %s21, 0
    %p100 = por %p98, %p99
    %s102 = sadd.s32 %s101, 1
    %p105 = scmp.eq.s32.totalorder %s15, 1
    %p106 = scmp.ne.s32.totalorder %s101, %s103
    %p107 = scmp.eq.s32.totalorder %s15, 0
    %p108 = por %p106, %p107
    %p109 = scmp.ne.s32.totalorder %s101, %s103
    %p110 = scmp.eq.s32.totalorder %s20, 1
    %p111 = por %p109, %p110
    %p112 = scmp.ne.s32.totalorder %s103, %s104
    %p113 = scmp.eq.s32.totalorder %s20, 0
    %p114 = por %p112, %p113
    %p115 = scmp.ne.s32.totalorder %s103, %s104
    %p116 = scmp.eq.s32.totalorder %s21, 1
    %p117 = por %p115, %p116
    %p119 = scmp.ne.s32.totalorder %s104, %s118
    %p120 = scmp.eq.s32.totalorder %s21, 0
    %p121 = por %p119, %p120
    %s123 = sadd.s32 %s122, 1
    %p126 = scmp.eq.s32.totalorder %s15, 1
    %p127 = scmp.ne.s32.totalorder %s122, %s124
    %p128 = scmp.eq.s32.totalorder %s15, 0
    %p129 = por %p127, %p128
    %p130 = scmp.ne.s32.totalorder %s122, %s124
    %p131 = scmp.eq.s32.totalorder %s20, 1
    %p132 = por %p130, %p131
    %p133 = scmp.ne.s32.totalorder %s124, %s125
    %p134 = scmp.eq.s32.totalorder %s20, 0
    %p135 = por %p133, %p134
    %p136 = scmp.ne.s32.totalorder %s124, %s125
    %p137 = scmp.eq.s32.totalorder %s21, 1
    %p138 = por %p136, %p137
    %p140 = scmp.ne.s32.totalorder %s125, %s139
    %p141 = scmp.eq.s32.totalorder %s21, 0
    %p142 = por %p140, %p141
    %s144 = sadd.s32 %s143, 1
    %p147 = scmp.eq.s32.totalorder %s15, 1
    %p148 = scmp.ne.s32.totalorder %s143, %s145
    %p149 = scmp.eq.s32.totalorder %s15, 0
    %p150 = por %p148, %p149
    %p151 = scmp.ne.s32.totalorder %s143, %s145
    %p152 = scmp.eq.s32.totalorder %s20, 1
    %p153 = por %p151, %p152
    %p154 = scmp.ne.s32.totalorder %s145, %s146
    %p155 = scmp.eq.s32.totalorder %s20, 0
    %p156 = por %p154, %p155
    %p157 = scmp.ne.s32.totalorder %s145, %s146
    %p158 = scmp.eq.s32.totalorder %s21, 1
    %p159 = por %p157, %p158
    %p161 = scmp.ne.s32.totalorder %s146, %s160
    %p162 = scmp.eq.s32.totalorder %s21, 0
    %p163 = por %p161, %p162
    %s165 = sadd.s32 %s164, 1
    %p168 = scmp.eq.s32.totalorder %s15, 1
    %p169 = scmp.ne.s32.totalorder %s164, %s166
    %p170 = scmp.eq.s32.totalorder %s15, 0
    %p171 = por %p169, %p170
    %p172 = scmp.ne.s32.totalorder %s164, %s166
    %p173 = scmp.eq.s32.totalorder %s20, 1
    %p174 = por %p172, %p173
    %p175 = scmp.ne.s32.totalorder %s166, %s167
    %p176 = scmp.eq.s32.totalorder %s20, 0
    %p177 = por %p175, %p176
    %p178 = scmp.ne.s32.totalorder %s166, %s167
    %p179 = scmp.eq.s32.totalorder %s21, 1
    %p180 = por %p178, %p179
    %p182 = scmp.ne.s32.totalorder %s167, %s181
    %p183 = scmp.eq.s32.totalorder %s21, 0
    %p184 = por %p182, %p183
    %s186 = sadd.s32 %s185, 1
    %p189 = scmp.eq.s32.totalorder %s15, 1
    %p190 = scmp.ne.s32.totalorder %s185, %s187
    %p191 = scmp.eq.s32.totalorder %s15, 0
    %p192 = por %p190, %p191
    %p193 = scmp.ne.s32.totalorder %s185, %s187
    %p194 = scmp.eq.s32.totalorder %s20, 1
    %p195 = por %p193, %p194
    %p196 = scmp.ne.s32.totalorder %s187, %s188
    %p197 = scmp.eq.s32.totalorder %s20, 0
    %p198 = por %p196, %p197
    %p199 = scmp.ne.s32.totalorder %s187, %s188
    %p200 = scmp.eq.s32.totalorder %s21, 1
    %p201 = por %p199, %p200
    %p203 = scmp.ne.s32.totalorder %s188, %s202
    %p204 = scmp.eq.s32.totalorder %s21, 0
    %p205 = por %p203, %p204
    %s207 = sadd.s32 %s206, 1
    %p210 = scmp.eq.s32.totalorder %s15, 1
    %p211 = scmp.ne.s32.totalorder %s206, %s208
    %p212 = scmp.eq.s32.totalorder %s15, 0
    %p213 = por %p211, %p212
    %p214 = scmp.ne.s32.totalorder %s206, %s208
    %p215 = scmp.eq.s32.totalorder %s20, 1
    %p216 = por %p214, %p215
    %p217 = scmp.ne.s32.totalorder %s208, %s209
    %p218 = scmp.eq.s32.totalorder %s20, 0
    %p219 = por %p217, %p218
    %p220 = scmp.ne.s32.totalorder %s208, %s209
    %p221 = scmp.eq.s32.totalorder %s21, 1
    %p222 = por %p220, %p221
    %p224 = scmp.ne.s32.totalorder %s209, %s223
    %p225 = scmp.eq.s32.totalorder %s21, 0
    %p226 = por %p224, %p225
    %s227 = ssub.s32 %s15, %s22
    %p228 = scmp.eq.s32.totalorder %s227, 0
    %s230 = sadd.s32 %s229, 1
    %s231 = scalar_select %p228, %s229, %s230
    %p234 = pneg %p228
    %p235 = scmp.eq.s32.totalorder %s15, 1
    %p236 = por %p234, %p235
    %p237 = scmp.ne.s32.totalorder %s229, %s232
    %p238 = scmp.eq.s32.totalorder %s15, 0
    %p239 = por %p237, %p238
    %p240 = scmp.ne.s32.totalorder %s229, %s232
    %p241 = scmp.eq.s32.totalorder %s20, 1
    %p242 = por %p240, %p241
    %p243 = scmp.ne.s32.totalorder %s232, %s233
    %p244 = scmp.eq.s32.totalorder %s20, 0
    %p245 = por %p243, %p244
    %p246 = scmp.ne.s32.totalorder %s232, %s233
    %p247 = scmp.eq.s32.totalorder %s21, 1
    %p248 = por %p246, %p247
    %p250 = scmp.ne.s32.totalorder %s233, %s249
    %p251 = scmp.eq.s32.totalorder %s21, 0
    %p252 = por %p250, %p251
    %p253 = scmp.le.s32.totalorder 1, %s15
    %p254 = scmp.lt.s32.totalorder %s15, 3
    %p255 = pnand %p253, %p254
    %p256 = pneg %p255
    // Predicated region
    $region9: #{vove_forward.10} parent=5 // pred_check
      _
    $region10: #{vove_forward.10} parent=5 // pred_check_branch
      %258 = sbr.rel (%p255) target = $region12
    $region11: #{vove_forward.10} parent=5 // pred_region
      %s259 = ssub.s32 %s15, 1
      // Predicated region
      $region13: #{vove_forward.10} parent=11 // pred_check
        %p260 = pneg %p114
      $region14: #{vove_forward.10} parent=11 // pred_check_branch
        %262 = sbr.rel (%p260) target = $region16
      $region15: #{vove_forward.10} parent=11 // pred_region
        _
      $region16: #{vove_forward.10} parent=11 // pred_fallthru
        _
      // Predicated region
      $region17: #{vove_forward.10} parent=11 // pred_check
        %p263 = pneg %p135
      $region18: #{vove_forward.10} parent=11 // pred_check_branch
        %265 = sbr.rel (%p263) target = $region20
      $region19: #{vove_forward.10} parent=11 // pred_region
        _
      $region20: #{vove_forward.10} parent=11 // pred_fallthru
        _
      // Predicated region
      $region21: #{vove_forward.10} parent=11 // pred_check
        %p266 = pneg %p156
      $region22: #{vove_forward.10} parent=11 // pred_check_branch
        %268 = sbr.rel (%p266) target = $region24
      $region23: #{vove_forward.10} parent=11 // pred_region
        _
      $region24: #{vove_forward.10} parent=11 // pred_fallthru
        _
      // Predicated region
      $region25: #{vove_forward.10} parent=11 // pred_check
        %p269 = pneg %p177
      $region26: #{vove_forward.10} parent=11 // pred_check_branch
        %271 = sbr.rel (%p269) target = $region28
      $region27: #{vove_forward.10} parent=11 // pred_region
        _
      $region28: #{vove_forward.10} parent=11 // pred_fallthru
        _
      // Predicated region
      $region29: #{vove_forward.10} parent=11 // pred_check
        %p272 = pneg %p198
      $region30: #{vove_forward.10} parent=11 // pred_check_branch
        %274 = sbr.rel (%p272) target = $region32
      $region31: #{vove_forward.10} parent=11 // pred_region
        _
      $region32: #{vove_forward.10} parent=11 // pred_fallthru
        _
      // Predicated region
      $region33: #{vove_forward.10} parent=11 // pred_check
        %p275 = pneg %p219
      $region34: #{vove_forward.10} parent=11 // pred_check_branch
        %277 = sbr.rel (%p275) target = $region36
      $region35: #{vove_forward.10} parent=11 // pred_region
        _
      $region36: #{vove_forward.10} parent=11 // pred_fallthru
        _
    $region12: #{vove_forward.10} parent=5 // pred_fallthru
      _
    %p278 = scmp.lt.s32.totalorder %s15, 2
    // Predicated region
    $region37: #{vove_forward.10} parent=5 // pred_check
      %p279 = pneg %p278
    $region38: #{vove_forward.10} parent=5 // pred_check_branch
      %281 = sbr.rel (%p279) target = $region40
    $region39: #{vove_forward.10} parent=5 // pred_region
      // Predicated region
      $region41: #{vove_forward.10} parent=39 // pred_check
        %p282 = pneg %p35
      $region42: #{vove_forward.10} parent=39 // pred_check_branch
        %284 = sbr.rel (%p282) target = $region44
      $region43: #{vove_forward.10} parent=39 // pred_region
        %p285 = scmp.lt.s32.totalorder %s15, 1
        %s286 = scalar_select %p285, %s15, 1
        %s287 = smul.addr %s286, 2
        %s288 = smul.addr %s287, 4
        %s289 = scalar_lea.vmem %s0, %s288
      $region44: #{vove_forward.10} parent=39 // pred_fallthru
        _
      // Predicated region
      $region45: #{vove_forward.10} parent=39 // pred_check
        %p290 = pneg %p61
      $region46: #{vove_forward.10} parent=39 // pred_check_branch
        %292 = sbr.rel (%p290) target = $region48
      $region47: #{vove_forward.10} parent=39 // pred_region
        %p293 = scmp.lt.s32.totalorder %s15, 1
        %s294 = scalar_select %p293, %s15, 1
        %s295 = smul.addr %s294, 2
        %s296 = smul.addr %s295, 4
        %s297 = scalar_lea.vmem %s1, %s296
      $region48: #{vove_forward.10} parent=39 // pred_fallthru
        _
      // Predicated region
      $region49: #{vove_forward.10} parent=39 // pred_check
        %p298 = pneg %p87
      $region50: #{vove_forward.10} parent=39 // pred_check_branch
        %300 = sbr.rel (%p298) target = $region52
      $region51: #{vove_forward.10} parent=39 // pred_region
        %p301 = scmp.lt.s32.totalorder %s15, 1
        %s302 = scalar_select %p301, %s15, 1
        %s303 = smul.addr %s302, 2
        %s304 = smul.addr %s303, 4
        %s305 = scalar_lea.vmem %s2, %s304
      $region52: #{vove_forward.10} parent=39 // pred_fallthru
        _
    $region40: #{vove_forward.10} parent=5 // pred_fallthru
      _
    %p306 = scmp.le.s32.totalorder 1, %s15
    %p307 = scmp.lt.s32.totalorder %s15, 3
    %p308 = pnand %p306, %p307
    %p309 = pneg %p308
    // Predicated region
    $region53: #{vove_forward.10} parent=5 // pred_check
      _
    $region54: #{vove_forward.10} parent=5 // pred_check_branch
      %311 = sbr.rel (%p308) target = $region56
    $region55: #{vove_forward.10} parent=5 // pred_region
      %s312 = ssub.s32 %s15, 1
      %p313 = scmp.lt.s32.totalorder %s20, 1
      %s314 = scalar_select %p313, %s20, 1
      %s315 = smul.addr %s314, 2
      %s316 = smul.addr %s315, 4
      %s317 = scalar_lea.vmem %s0, %s316
      %p318 = pneg %p41
      %p319 = pneg %p38
      %p320 = scmp.lt.s32.totalorder %s20, 1
      %s321 = scalar_select %p320, %s20, 1
      %s322 = smul.addr %s321, 2
      %s323 = smul.addr %s322, 4
      %s324 = scalar_lea.vmem %s1, %s323
      %p325 = pneg %p67
      %p326 = pneg %p64
      %p327 = scmp.lt.s32.totalorder %s20, 1
      %s328 = scalar_select %p327, %s20, 1
      %s329 = smul.addr %s328, 2
      %s330 = smul.addr %s329, 4
      %s331 = scalar_lea.vmem %s2, %s330
      %p332 = pneg %p93
      %p333 = pneg %p90
      %p334 = pneg %p114
      %p335 = pneg %p111
      %p336 = pneg %p135
      %p337 = pneg %p132
      %p338 = pneg %p156
      %p339 = pneg %p153
      %p340 = pneg %p177
      %p341 = pneg %p174
      %p342 = pneg %p198
      %p343 = pneg %p195
      %p344 = pneg %p219
      %p345 = pneg %p216
      %p346 = pneg %p245
      %p347 = pneg %p242
      %p348 = scmp.lt.s32.totalorder %s20, 1
      %s349 = scalar_select %p348, %s20, 1
      %s350 = smul.addr %s349, 8
      %s351 = smul.addr %s350, 8
      %s352 = scalar_lea.vmem %s9, %s351
      %p353 = scmp.lt.s32.totalorder %s20, 1
      %s354 = scalar_select %p353, %s20, 1
      %s355 = smul.addr %s354, 2
      %s356 = smul.addr %s355, 4
      %s357 = scalar_lea.vmem %s0, %s356
      %p358 = scmp.lt.s32.totalorder %s20, 1
      %s359 = scalar_select %p358, %s20, 1
      %s360 = smul.addr %s359, 2
      %s361 = smul.addr %s360, 4
      %s362 = scalar_lea.vmem %s1, %s361
      %p363 = scmp.lt.s32.totalorder %s20, 1
      %s364 = scalar_select %p363, %s20, 1
      %s365 = smul.addr %s364, 2
      %s366 = smul.addr %s365, 4
      %s367 = scalar_lea.vmem %s2, %s366
      %p368 = scmp.lt.s32.totalorder %s20, 1
      %s369 = scalar_select %p368, %s20, 1
      %s370 = smul.addr %s369, 8
      %s371 = smul.addr %s370, 8
      %s372 = scalar_lea.vmem %s9, %s371
      %v374 = vld [vmem:[%s3] sm:$0xf]
      %v375 = vld [vmem:[%s3 + $0x4] sm:$0xf]
      %v376 = vld [vmem:[%s3 + $0x8] sm:$0xf]
      %v377 = vld [vmem:[%s3 + $0xc] sm:$0xf]
      %v378 = vld [vmem:[%s357] sm:$0xf]
      %v379 = vld [vmem:[%s357 + $0x4] sm:$0xf]
      %s380 = scalar_lea.vmem %s3, 16
      %v381 = vld [vmem:[%s380] sm:$0xf]
      %v382 = vld [vmem:[%s380 + $0x4] sm:$0xf]
      %v383 = vld [vmem:[%s380 + $0x8] sm:$0xf]
      %v384 = vld [vmem:[%s380 + $0xc] sm:$0xf]
      %v385 = vld [vmem:[%s362] sm:$0xf]
      %v386 = vld [vmem:[%s362 + $0x4] sm:$0xf]
      %v391 = vunpack.c.l.b16 %v381
      %v392 = vunpack.c.l.b16 %v382
      %v393 = vunpack.c.l.b16 %v383
      %v394 = vunpack.c.l.b16 %v384
      %v395 = vpack.c.b16 %v392, %v391
      %v396 = vpack.c.b16 %v394, %v393
      %v399 = vunpack.c.l.b16 %v385
      %v400 = vunpack.c.l.b16 %v386
      %v401 = vpack.c.b16 %v400, %v399
      %vm403 = vcmask 130048
      %v405 = vsel %vm403, %v395, 0
      %v408 = vsel %vm403, %v396, 0
      %410 = vmatprep.subr.bf16.mxu0 0
      %411 = vmatpush1.bf16.msra.mxu0 %v401
      %412 = vmatprep.subr.bf16.mxu0 0
      %413 = vmatpush1.bf16.msra.mxu0 0
      %414 = vmatprep.subr.bf16.mxu0 0
      %415 = vmatpush1.bf16.msra.mxu0 0
      %416 = vmatprep.subr.bf16.mxu0 0
      %417 = vmatpush1.bf16.msra.mxu0 0
      %418 = vmatprep.subr.bf16.mxu0 0
      %419 = vmatpush1.bf16.msra.mxu0 0
      %420 = vmatprep.subr.bf16.mxu0 0
      %421 = vmatpush1.bf16.msra.mxu0 0
      %422 = vmatprep.subr.bf16.mxu0 0
      %423 = vmatpush1.bf16.msra.mxu0 0
      %424 = vmatprep.subr.bf16.mxu0 0
      %425 = vmatpush1.bf16.msra.mxu0 0
      %426 = vmatprep.subr.bf16.mxu0 0
      %427 = vmatpush1.bf16.msra.mxu0 0
      %428 = vmatprep.subr.bf16.mxu0 0
      %429 = vmatpush1.bf16.msra.mxu0 0
      %430 = vmatprep.subr.bf16.mxu0 0
      %431 = vmatpush1.bf16.msra.mxu0 0
      %432 = vmatprep.subr.bf16.mxu0 0
      %433 = vmatpush1.bf16.msra.mxu0 0
      %434 = vmatprep.subr.bf16.mxu0 0
      %435 = vmatpush1.bf16.msra.mxu0 0
      %436 = vmatprep.subr.bf16.mxu0 0
      %437 = vmatpush1.bf16.msra.mxu0 0
      %438 = vmatprep.subr.bf16.mxu0 0
      %439 = vmatpush1.bf16.msra.mxu0 0
      %440 = vmatprep.subr.bf16.mxu0 0
      %441 = vmatpush1.bf16.msra.mxu0 0
      %442 = vmatprep.mubr.bf16.mxu0 0
      %443 = vmatmul.mubr.bf16.gmra.mrb[0].mxu0 %v405
      %v444 = vpop.f32.mrb[0].mxu0
      %v445 = vadd.f32 0.0, %v444
      %v446 = vpop.f32.mrb[0].mxu0
      %v447 = vpop.f32.mrb[0].mxu0
      %v448 = vadd.f32 0.0, %v447
      %v449 = vpop.f32.mrb[0].mxu0
      %450 = vmatprep.mubr.bf16.mxu0 0
      %451 = vmatmul.mubr.bf16.gmra.mrb[0].mxu0 %v408
      %v452 = vpop.f32.mrb[0].mxu0
      %v453 = vadd.f32 0.0, %v452
      %v454 = vpop.f32.mrb[0].mxu0
      %v455 = vpop.f32.mrb[0].mxu0
      %v456 = vadd.f32 0.0, %v455
      %v457 = vpop.f32.mrb[0].mxu0
      %458 = vdwg.mxu0
      %v463 = vunpack.c.l.b16 %v374
      %v464 = vunpack.c.l.b16 %v375
      %v465 = vunpack.c.l.b16 %v376
      %v466 = vunpack.c.l.b16 %v377
      %v467 = vpack.c.b16 %v464, %v463
      %v468 = vpack.c.b16 %v466, %v465
      %v471 = vunpack.c.l.b16 %v378
      %v472 = vunpack.c.l.b16 %v379
      %v473 = vpack.c.b16 %v472, %v471
      %v476 = vsel %vm403, %v467, 0
      %v479 = vsel %vm403, %v468, 0
      %481 = vmatprep.subr.bf16.mxu0 0
      %482 = vmatpush1.bf16.msra.mxu0 %v473
      %483 = vmatprep.subr.bf16.mxu0 0
      %484 = vmatpush1.bf16.msra.mxu0 0
      %485 = vmatprep.subr.bf16.mxu0 0
      %486 = vmatpush1.bf16.msra.mxu0 0
      %487 = vmatprep.subr.bf16.mxu0 0
      %488 = vmatpush1.bf16.msra.mxu0 0
      %489 = vmatprep.subr.bf16.mxu0 0
      %490 = vmatpush1.bf16.msra.mxu0 0
      %491 = vmatprep.subr.bf16.mxu0 0
      %492 = vmatpush1.bf16.msra.mxu0 0
      %493 = vmatprep.subr.bf16.mxu0 0
      %494 = vmatpush1.bf16.msra.mxu0 0
      %495 = vmatprep.subr.bf16.mxu0 0
      %496 = vmatpush1.bf16.msra.mxu0 0
      %497 = vmatprep.subr.bf16.mxu0 0
      %498 = vmatpush1.bf16.msra.mxu0 0
      %499 = vmatprep.subr.bf16.mxu0 0
      %500 = vmatpush1.bf16.msra.mxu0 0
      %501 = vmatprep.subr.bf16.mxu0 0
      %502 = vmatpush1.bf16.msra.mxu0 0
      %503 = vmatprep.subr.bf16.mxu0 0
      %504 = vmatpush1.bf16.msra.mxu0 0
      %505 = vmatprep.subr.bf16.mxu0 0
      %506 = vmatpush1.bf16.msra.mxu0 0
      %507 = vmatprep.subr.bf16.mxu0 0
      %508 = vmatpush1.bf16.msra.mxu0 0
      %509 = vmatprep.subr.bf16.mxu0 0
      %510 = vmatpush1.bf16.msra.mxu0 0
      %511 = vmatprep.subr.bf16.mxu0 0
      %512 = vmatpush1.bf16.msra.mxu0 0
      %513 = vmatprep.mubr.bf16.mxu0 0
      %514 = vmatmul.mubr.bf16.gmra.mrb[0].mxu0 %v476
      %v515 = vpop.f32.mrb[0].mxu0
      %v516 = vadd.f32 %v445, %v515
      %v517 = vpop.f32.mrb[0].mxu0
      %v518 = vpop.f32.mrb[0].mxu0
      %v519 = vadd.f32 %v448, %v518
      %v520 = vpop.f32.mrb[0].mxu0
      %521 = vmatprep.mubr.bf16.mxu0 0
      %522 = vmatmul.mubr.bf16.gmra.mrb[0].mxu0 %v479
      %v523 = vpop.f32.mrb[0].mxu0
      %v524 = vadd.f32 %v453, %v523
      %v525 = vpop.f32.mrb[0].mxu0
      %v526 = vpop.f32.mrb[0].mxu0
      %v527 = vadd.f32 %v456, %v526
      %v528 = vpop.f32.mrb[0].mxu0
      %529 = vdwg.mxu0
      %s530 = scalar_lea.vmem %s3, 32
      %v531 = vld [vmem:[%s530] sm:$0xf]
      %v532 = vld [vmem:[%s530 + $0x4] sm:$0xf]
      %v533 = vld [vmem:[%s530 + $0x8] sm:$0xf]
      %v534 = vld [vmem:[%s530 + $0xc] sm:$0xf]
      %v535 = vld [vmem:[%s367] sm:$0xf]
      %v536 = vld [vmem:[%s367 + $0x4] sm:$0xf]
      %v541 = vunpack.c.l.b16 %v531
      %v542 = vunpack.c.l.b16 %v532
      %v543 = vunpack.c.l.b16 %v533
      %v544 = vunpack.c.l.b16 %v534
      %v545 = vpack.c.b16 %v542, %v541
      %v546 = vpack.c.b16 %v544, %v543
      %v549 = vunpack.c.l.b16 %v535
      %v550 = vunpack.c.l.b16 %v536
      %v551 = vpack.c.b16 %v550, %v549
      %v554 = vsel %vm403, %v545, 0
      %v557 = vsel %vm403, %v546, 0
      %559 = vmatprep.subr.bf16.mxu0 0
      %560 = vmatpush1.bf16.msra.mxu0 %v551
      %561 = vmatprep.subr.bf16.mxu0 0
      %562 = vmatpush1.bf16.msra.mxu0 0
      %563 = vmatprep.subr.bf16.mxu0 0
      %564 = vmatpush1.bf16.msra.mxu0 0
      %565 = vmatprep.subr.bf16.mxu0 0
      %566 = vmatpush1.bf16.msra.mxu0 0
      %567 = vmatprep.subr.bf16.mxu0 0
      %568 = vmatpush1.bf16.msra.mxu0 0
      %569 = vmatprep.subr.bf16.mxu0 0
      %570 = vmatpush1.bf16.msra.mxu0 0
      %571 = vmatprep.subr.bf16.mxu0 0
      %572 = vmatpush1.bf16.msra.mxu0 0
      %573 = vmatprep.subr.bf16.mxu0 0
      %574 = vmatpush1.bf16.msra.mxu0 0
      %575 = vmatprep.subr.bf16.mxu0 0
      %576 = vmatpush1.bf16.msra.mxu0 0
      %577 = vmatprep.subr.bf16.mxu0 0
      %578 = vmatpush1.bf16.msra.mxu0 0
      %579 = vmatprep.subr.bf16.mxu0 0
      %580 = vmatpush1.bf16.msra.mxu0 0
      %581 = vmatprep.subr.bf16.mxu0 0
      %582 = vmatpush1.bf16.msra.mxu0 0
      %583 = vmatprep.subr.bf16.mxu0 0
      %584 = vmatpush1.bf16.msra.mxu0 0
      %585 = vmatprep.subr.bf16.mxu0 0
      %586 = vmatpush1.bf16.msra.mxu0 0
      %587 = vmatprep.subr.bf16.mxu0 0
      %588 = vmatpush1.bf16.msra.mxu0 0
      %589 = vmatprep.subr.bf16.mxu0 0
      %590 = vmatpush1.bf16.msra.mxu0 0
      %591 = vmatprep.mubr.bf16.mxu0 0
      %592 = vmatmul.mubr.bf16.gmra.mrb[0].mxu0 %v554
      %v593 = vpop.f32.mrb[0].mxu0
      %v594 = vadd.f32 0.0, %v593
      %v595 = vpop.f32.mrb[0].mxu0
      %v596 = vpop.f32.mrb[0].mxu0
      %v597 = vadd.f32 0.0, %v596
      %v598 = vpop.f32.mrb[0].mxu0
      %599 = vmatprep.mubr.bf16.mxu0 0
      %600 = vmatmul.mubr.bf16.gmra.mrb[0].mxu0 %v557
      %v601 = vpop.f32.mrb[0].mxu0
      %v602 = vadd.f32 0.0, %v601
      %v603 = vpop.f32.mrb[0].mxu0
      %v604 = vpop.f32.mrb[0].mxu0
      %v605 = vadd.f32 0.0, %v604
      %v606 = vpop.f32.mrb[0].mxu0
      %607 = vdwg.mxu0
      %v608 = vadd.f32 %v516, %v594
      %v609 = vadd.f32 %v519, %v597
      %v610 = vadd.f32 %v524, %v602
      %v611 = vadd.f32 %v527, %v605
      %v612 = vld [vmem:[%s4] sm:$0xff]
      %v613 = vld [vmem:[%s4 + $0x8] sm:$0xff]
      %v614 = vld [vmem:[%s4 + $0x10] sm:$0xff]
      %v615 = vld [vmem:[%s4 + $0x18] sm:$0xff]
      %617 = vset.pattern.permute.xlu0 0
      %618 = vperm.xlu0 %617, %v612
      %v619 = vpop.permute.xlu0 %618
      %622 = vset.pattern.permute.xlu0 0
      %623 = vperm.xlu0 %622, %v613
      %v624 = vpop.permute.xlu0 %623
      %627 = vset.pattern.permute.xlu0 0
      %628 = vperm.xlu0 %627, %v614
      %v629 = vpop.permute.xlu0 %628
      %632 = vset.pattern.permute.xlu0 0
      %633 = vperm.xlu0 %632, %v615
      %v634 = vpop.permute.xlu0 %633
      %v636 = vadd.f32 %v608, %v619
      %v637 = vadd.f32 %v609, %v624
      %v638 = vadd.f32 %v610, %v629
      %v639 = vadd.f32 %v611, %v634
      %v640 = vmax.f32 %v636, 0.0
      %v641 = vmax.f32 %v637, 0.0
      %v642 = vmax.f32 %v638, 0.0
      %v643 = vmax.f32 %v639, 0.0
      %v644 = vpack.c.bf16 %v641, %v640
      %v645 = vpack.c.bf16 %v643, %v642
      %v646 = vld [vmem:[%s5] sm:$0xf]
      %v647 = vld [vmem:[%s6] sm:$0xff]
      %649 = vset.pattern.permute.xlu0 0
      %650 = vperm.xlu0 %649, %v647
      %v651 = vpop.permute.xlu0 %650
      %vm653 = vcmask 261120
      %v655 = vsel %vm653, %v646, 0
      %657 = vmatprep.subr.bf16.mxu0 0
      %658 = vmatpush1.bf16.msra.mxu0 %v644
      %659 = vmatprep.subr.bf16.mxu0 0
      %660 = vmatpush1.bf16.msra.mxu0 %v645
      %661 = vmatprep.subr.bf16.mxu0 0
      %662 = vmatpush1.bf16.msra.mxu0 0
      %663 = vmatprep.subr.bf16.mxu0 0
      %664 = vmatpush1.bf16.msra.mxu0 0
      %665 = vmatprep.subr.bf16.mxu0 0
      %666 = vmatpush1.bf16.msra.mxu0 0
      %667 = vmatprep.subr.bf16.mxu0 0
      %668 = vmatpush1.bf16.msra.mxu0 0
      %669 = vmatprep.subr.bf16.mxu0 0
      %670 = vmatpush1.bf16.msra.mxu0 0
      %671 = vmatprep.subr.bf16.mxu0 0
      %672 = vmatpush1.bf16.msra.mxu0 0
      %673 = vmatprep.subr.bf16.mxu0 0
      %674 = vmatpush1.bf16.msra.mxu0 0
      %675 = vmatprep.subr.bf16.mxu0 0
      %676 = vmatpush1.bf16.msra.mxu0 0
      %677 = vmatprep.subr.bf16.mxu0 0
      %678 = vmatpush1.bf16.msra.mxu0 0
      %679 = vmatprep.subr.bf16.mxu0 0
      %680 = vmatpush1.bf16.msra.mxu0 0
      %681 = vmatprep.subr.bf16.mxu0 0
      %682 = vmatpush1.bf16.msra.mxu0 0
      %683 = vmatprep.subr.bf16.mxu0 0
      %684 = vmatpush1.bf16.msra.mxu0 0
      %685 = vmatprep.subr.bf16.mxu0 0
      %686 = vmatpush1.bf16.msra.mxu0 0
      %687 = vmatprep.subr.bf16.mxu0 0
      %688 = vmatpush1.bf16.msra.mxu0 0
      %689 = vmatprep.mubr.bf16.mxu0 0
      %690 = vmatmul.mubr.bf16.gmra.mrb[0].mxu0 %v655
      %v691 = vpop.f32.mrb[0].mxu0
      %v692 = vadd.f32 %v651, %v691
      %v693 = vpop.f32.mrb[0].mxu0
      %v694 = vpop.f32.mrb[0].mxu0
      %v695 = vpop.f32.mrb[0].mxu0
      %696 = vdwg.mxu0
      %v697 = vtanh.pop %v692
      %v698 = vld [vmem:[%s7] sm:$0xf]
      %v699 = vld [vmem:[%s7 + $0x4] sm:$0xf]
      %v700 = vld [vmem:[%s7 + $0x8] sm:$0xf]
      %v701 = vld [vmem:[%s7 + $0xc] sm:$0xf]
      %v702 = vpack.c.bf16 %v697, %v697
      %v703 = vld [vmem:[%s8] sm:$0xff]
      %v704 = vld [vmem:[%s8 + $0x8] sm:$0xff]
      %v705 = vld [vmem:[%s8 + $0x10] sm:$0xff]
      %v706 = vld [vmem:[%s8 + $0x18] sm:$0xff]
      %708 = vset.pattern.permute.xlu0 0
      %709 = vperm.xlu0 %708, %v703
      %v710 = vpop.permute.xlu0 %709
      %713 = vset.pattern.permute.xlu0 0
      %714 = vperm.xlu0 %713, %v704
      %v715 = vpop.permute.xlu0 %714
      %718 = vset.pattern.permute.xlu0 0
      %719 = vperm.xlu0 %718, %v705
      %v720 = vpop.permute.xlu0 %719
      %723 = vset.pattern.permute.xlu0 0
      %724 = vperm.xlu0 %723, %v706
      %v725 = vpop.permute.xlu0 %724
      %v731 = vunpack.c.l.b16 %v698
      %v732 = vunpack.c.l.b16 %v699
      %v733 = vunpack.c.l.b16 %v700
      %v734 = vunpack.c.l.b16 %v701
      %v735 = vpack.c.b16 %v732, %v731
      %v736 = vpack.c.b16 %v734, %v733
      %vm737 = vcmask 64512
      %v739 = vsel %vm737, %v735, 0
      %v742 = vsel %vm737, %v736, 0
      %vm744 = vcmask 1043456
      %v746 = vsel %vm744, %v702, 0
      %748 = vmatprep.subr.bf16.mxu0 0
      %749 = vmatpush1.bf16.msra.mxu0 %v746
      %750 = vmatprep.subr.bf16.mxu0 0
      %751 = vmatpush1.bf16.msra.mxu0 0
      %752 = vmatprep.subr.bf16.mxu0 0
      %753 = vmatpush1.bf16.msra.mxu0 0
      %754 = vmatprep.subr.bf16.mxu0 0
      %755 = vmatpush1.bf16.msra.mxu0 0
      %756 = vmatprep.subr.bf16.mxu0 0
      %757 = vmatpush1.bf16.msra.mxu0 0
      %758 = vmatprep.subr.bf16.mxu0 0
      %759 = vmatpush1.bf16.msra.mxu0 0
      %760 = vmatprep.subr.bf16.mxu0 0
      %761 = vmatpush1.bf16.msra.mxu0 0
      %762 = vmatprep.subr.bf16.mxu0 0
      %763 = vmatpush1.bf16.msra.mxu0 0
      %764 = vmatprep.subr.bf16.mxu0 0
      %765 = vmatpush1.bf16.msra.mxu0 0
      %766 = vmatprep.subr.bf16.mxu0 0
      %767 = vmatpush1.bf16.msra.mxu0 0
      %768 = vmatprep.subr.bf16.mxu0 0
      %769 = vmatpush1.bf16.msra.mxu0 0
      %770 = vmatprep.subr.bf16.mxu0 0
      %771 = vmatpush1.bf16.msra.mxu0 0
      %772 = vmatprep.subr.bf16.mxu0 0
      %773 = vmatpush1.bf16.msra.mxu0 0
      %774 = vmatprep.subr.bf16.mxu0 0
      %775 = vmatpush1.bf16.msra.mxu0 0
      %776 = vmatprep.subr.bf16.mxu0 0
      %777 = vmatpush1.bf16.msra.mxu0 0
      %778 = vmatprep.subr.bf16.mxu0 0
      %779 = vmatpush1.bf16.msra.mxu0 0
      %780 = vmatprep.mubr.bf16.mxu0 0
      %781 = vmatmul.mubr.bf16.gmra.mrb[0].mxu0 %v739
      %v782 = vpop.f32.mrb[0].mxu0
      %v783 = vadd.f32 %v710, %v782
      %v784 = vpop.f32.mrb[0].mxu0
      %v785 = vpop.f32.mrb[0].mxu0
      %v786 = vadd.f32 %v715, %v785
      %v787 = vpop.f32.mrb[0].mxu0
      %788 = vmatprep.mubr.bf16.mxu0 0
      %789 = vmatmul.mubr.bf16.gmra.mrb[0].mxu0 %v742
      %v790 = vpop.f32.mrb[0].mxu0
      %v791 = vadd.f32 %v720, %v790
      %v792 = vpop.f32.mrb[0].mxu0
      %v793 = vpop.f32.mrb[0].mxu0
      %v794 = vadd.f32 %v725, %v793
      %v795 = vpop.f32.mrb[0].mxu0
      %796 = vdwg.mxu0
      %v797 = vlaneseq
      %v798 = vand.u32 %v797, 127
      %vm799 = vcmp.lt.s32.totalorder %v798, 16
      %v800 = vsel %vm799, 1, 0
      %vm801 = vcmp.eq.s32.totalorder %v800, 1
      %v802 = vsel %vm801, %v783, -1e+30
      %v803 = vsel %vm801, %v786, -1e+30
      %v804 = vsel %vm801, %v791, -1e+30
      %v805 = vsel %vm801, %v794, -1e+30
      %806 = vmax.xlane.f32.xlu0 %v802
      %v807 = vpop.xlane.xlu0 %806
      %808 = vmax.xlane.f32.xlu0 %v803
      %v809 = vpop.xlane.xlu0 %808
      %810 = vmax.xlane.f32.xlu0 %v804
      %v811 = vpop.xlane.xlu0 %810
      %812 = vmax.xlane.f32.xlu0 %v805
      %v813 = vpop.xlane.xlu0 %812
      %v814 = vsub.f32 %v802, %v807
      %v815 = vsub.f32 %v803, %v809
      %v816 = vsub.f32 %v804, %v811
      %v817 = vsub.f32 %v805, %v813
      %v818 = vmul.f32 %v814, 1.442695
      %v819 = vpow.pop %v818
      %v820 = vmul.f32 %v815, 1.442695
      %v821 = vpow.pop %v820
      %v822 = vmul.f32 %v816, 1.442695
      %v823 = vpow.pop %v822
      %v824 = vmul.f32 %v817, 1.442695
      %v825 = vpow.pop %v824
      %826 = vadd.xlane.f32.xlu0 %v819
      %v827 = vpop.xlane.xlu0 %826
      %828 = vadd.xlane.f32.xlu0 %v821
      %v829 = vpop.xlane.xlu0 %828
      %830 = vadd.xlane.f32.xlu0 %v823
      %v831 = vpop.xlane.xlu0 %830
      %832 = vadd.xlane.f32.xlu0 %v825
      %v833 = vpop.xlane.xlu0 %832
      %v834 = vrcp.pop %v827
      %v835 = vmul.f32 %v819, %v834
      %v836 = vrcp.pop %v829
      %v837 = vmul.f32 %v821, %v836
      %v838 = vrcp.pop %v831
      %v839 = vmul.f32 %v823, %v838
      %v840 = vrcp.pop %v833
      %v841 = vmul.f32 %v825, %v840
      %v842 = vmul.f32 %v835, %v640
      %v843 = vmul.f32 %v837, %v641
      %v844 = vmul.f32 %v839, %v642
      %v845 = vmul.f32 %v841, %v643
      %846 = vadd.xlane.f32.xlu0 %v842
      %v847 = vpop.xlane.xlu0 %846
      %848 = vadd.xlane.f32.xlu0 %v843
      %v849 = vpop.xlane.xlu0 %848
      %850 = vadd.xlane.f32.xlu0 %v844
      %v851 = vpop.xlane.xlu0 %850
      %852 = vadd.xlane.f32.xlu0 %v845
      %v853 = vpop.xlane.xlu0 %852
      %v854 = vmul.f32 %v842, %v640
      %v855 = vmul.f32 %v843, %v641
      %v856 = vmul.f32 %v844, %v642
      %v857 = vmul.f32 %v845, %v643
      %858 = vadd.xlane.f32.xlu0 %v854
      %v859 = vpop.xlane.xlu0 %858
      %860 = vadd.xlane.f32.xlu0 %v855
      %v861 = vpop.xlane.xlu0 %860
      %862 = vadd.xlane.f32.xlu0 %v856
      %v863 = vpop.xlane.xlu0 %862
      %864 = vadd.xlane.f32.xlu0 %v857
      %v865 = vpop.xlane.xlu0 %864
      %v866 = vmul.f32 %v847, %v847
      %v867 = vmul.f32 %v849, %v849
      %v868 = vmul.f32 %v851, %v851
      %v869 = vmul.f32 %v853, %v853
      %v870 = vsub.f32 %v859, %v866
      %v871 = vsub.f32 %v861, %v867
      %v872 = vsub.f32 %v863, %v868
      %v873 = vsub.f32 %v865, %v869
      %v874 = vmax.f32 %v870, 0.0
      %v875 = vmax.f32 %v871, 0.0
      %v876 = vmax.f32 %v872, 0.0
      %v877 = vmax.f32 %v873, 0.0
      %v878 = vadd.f32 %v874, 1e-07
      %v879 = vadd.f32 %v875, 1e-07
      %v880 = vadd.f32 %v876, 1e-07
      %v881 = vadd.f32 %v877, 1e-07
      %v882 = vrsqrt.pop %v878
      %v883 = vmul.f32 %v878, %v882
      %vm884 = vcmp.eq.f32.partialorder %v878, inf
      %v885 = vsel %vm884, %v878, %v883
      %vm886 = vcmp.eq.f32.partialorder %v878, 0.0
      %v887 = vand.u32 %v878, 2147483648
      %v888 = vsel %vm886, %v887, %v885
      %v889 = vrsqrt.pop %v879
      %v890 = vmul.f32 %v879, %v889
      %vm891 = vcmp.eq.f32.partialorder %v879, inf
      %v892 = vsel %vm891, %v879, %v890
      %vm893 = vcmp.eq.f32.partialorder %v879, 0.0
      %v894 = vand.u32 %v879, 2147483648
      %v895 = vsel %vm893, %v894, %v892
      %v896 = vrsqrt.pop %v880
      %v897 = vmul.f32 %v880, %v896
      %vm898 = vcmp.eq.f32.partialorder %v880, inf
      %v899 = vsel %vm898, %v880, %v897
      %vm900 = vcmp.eq.f32.partialorder %v880, 0.0
      %v901 = vand.u32 %v880, 2147483648
      %v902 = vsel %vm900, %v901, %v899
      %v903 = vrsqrt.pop %v881
      %v904 = vmul.f32 %v881, %v903
      %vm905 = vcmp.eq.f32.partialorder %v881, inf
      %v906 = vsel %vm905, %v881, %v904
      %vm907 = vcmp.eq.f32.partialorder %v881, 0.0
      %v908 = vand.u32 %v881, 2147483648
      %v909 = vsel %vm907, %v908, %v906
      %vm910 = vcmask 7168
      %911 = vst.msk [vmem:[%s372] sm:$0xff] %vm910, %v847
      %912 = vst.msk [vmem:[%s372 + $0x8] sm:$0xff] %vm910, %v849
      %913 = vst.msk [vmem:[%s372 + $0x10] sm:$0xff] %vm910, %v851
      %914 = vst.msk [vmem:[%s372 + $0x18] sm:$0xff] %vm910, %v853
      %915 = vst.msk [vmem:[%s372 + $0x20] sm:$0xff] %vm910, %v888
      %916 = vst.msk [vmem:[%s372 + $0x28] sm:$0xff] %vm910, %v895
      %917 = vst.msk [vmem:[%s372 + $0x30] sm:$0xff] %vm910, %v902
      %918 = vst.msk [vmem:[%s372 + $0x38] sm:$0xff] %vm910, %v909
      %p919 = scmp.lt.s32.totalorder %s20, 1
      %s920 = scalar_select %p919, %s20, 1
      %s921 = smul.addr %s920, 8
      %s922 = smul.addr %s921, 8
      %s923 = scalar_lea.vmem %s9, %s922
      // Predicated region
      $region57: #{vove_forward.10} parent=55 // pred_check
        %p924 = pneg %p242
      $region58: #{vove_forward.10} parent=55 // pred_check_branch
        %926 = sbr.rel (%p924) target = $region60
      $region59: #{vove_forward.10} parent=55 // pred_region
        _
      $region60: #{vove_forward.10} parent=55 // pred_fallthru
        _
    $region56: #{vove_forward.10} parent=5 // pred_fallthru
      _
    %p927 = scmp.le.s32.totalorder 2, %s15
    // Predicated region
    $region61: #{vove_forward.10} parent=5 // pred_check
      %p928 = pneg %p927
    $region62: #{vove_forward.10} parent=5 // pred_check_branch
      %930 = sbr.rel (%p928) target = $region64
    $region63: #{vove_forward.10} parent=5 // pred_region
      %s931 = ssub.s32 %s15, 2
      // Predicated region
      $region65: #{vove_forward.10} parent=63 // pred_check
        %p932 = pneg %p248
      $region66: #{vove_forward.10} parent=63 // pred_check_branch
        %934 = sbr.rel (%p932) target = $region68
      $region67: #{vove_forward.10} parent=63 // pred_region
        %p935 = scmp.lt.s32.totalorder %s21, 1
        %s936 = scalar_select %p935, %s21, 1
        %s937 = smul.addr %s936, 8
        %s938 = smul.addr %s937, 8
        %s939 = scalar_lea.vmem %s9, %s938
      $region68: #{vove_forward.10} parent=63 // pred_fallthru
        _
    $region64: #{vove_forward.10} parent=5 // pred_fallthru
      _
  $region6: #{vove_forward.10} parent=0 // loop_footer
    %s19 = sadd.s32 1, %s15
  $region7: #{vove_forward.10} parent=0 // loop_footer_branch
    %14 = sbr.rel target = $region3
  $region8: #{vove_forward.10} parent=0 // loop_exit
    _

// kernel: vove_forward.11
$region0: #{vove_forward.11}
  #allocation0 [shape = 'u32[]', space=smem, size = 0x4, offset = 0x4, fixed_abs, tag = 'smem constant byte address 0x4 - core index']
  #allocation1 [shape = 'u32[144,128]{1,0:T(1,128)}', space=vmem, size = 0x12000, scoped, tag = 'internal scratch']
  %s0 = inlined_call_operand.vmem [shape: f32[2,64], index: 0, kind: input, shape index: {}]
  %s1 = inlined_call_operand.vmem [shape: f32[1,64], index: 1, kind: input, shape index: {}]
  %s2 = inlined_call_operand.vmem [shape: f32[1,64], index: 2, kind: input, shape index: {}]
  %s3 = inlined_call_operand.vmem [shape: f32[64,16], index: 3, kind: input, shape index: {}]
  %s4 = inlined_call_operand.vmem [shape: f32[1,16], index: 4, kind: input, shape index: {}]
  %s5 = inlined_call_operand.vmem [shape: f32[1,16], index: 5, kind: input, shape index: {}]
  %s6 = inlined_call_operand.vmem [shape: f32[1,16], index: 6, kind: input, shape index: {}]
  %s7 = inlined_call_operand.vmem [shape: f32[16,128], index: 7, kind: input, shape index: {}]
  %s8 = inlined_call_operand.vmem [shape: f32[1,128], index: 8, kind: input, shape index: {}]
  %s9 = inlined_call_operand.vmem [shape: f32[1,128], index: 9, kind: input, shape index: {}]
  %s10 = inlined_call_operand.vmem [shape: f32[1,128], index: 10, kind: input, shape index: {}]
  %s11 = inlined_call_operand.vmem [shape: bf16[128,2560], index: 11, kind: input, shape index: {}]
  %s12 = inlined_call_operand.vmem [shape: f32[1,2560], index: 12, kind: input, shape index: {}]
  %s13 = inlined_call_operand.vmem [shape: f32[1,2560], index: 13, kind: input, shape index: {}]
  %s14 = inlined_call_operand.vmem [shape: f32[1,2560], index: 14, kind: input, shape index: {}]
  %s15 = inlined_call_operand.hbm [shape: f32[2,128], index: 15, kind: output, shape index: {0}]
  %s16 = inlined_call_operand.hbm [shape: f32[2,2560], index: 16, kind: output, shape index: {1}]
  %17 = xla_tuple %s15, %s16
  %s18 = sld [smem:[#allocation0]]
  $region78: #{vove_forward.11} parent=0
    _
  %s20 = ssub.s32 1, %s18
  %s21 = scalar_select 0, %s20, %s18
  $region1: #{vove_forward.11} parent=0
    #allocation2 [shape = 'u8[1024]{0}', space=vmem, size = 0x400, scoped, tag = 'output window, operand 0, single buffered']
    #allocation3 [shape = 's32[1]{0}', space=sflag, size = 0x4, scoped, tag = 'scoped memory for vove_forward.11']
    #allocation4 [shape = 'u8[20480]{0}', space=vmem, size = 0x5000, scoped, tag = 'output window, operand 1, single buffered']
    #allocation5 [shape = 's32[1]{0}', space=sflag, size = 0x4, scoped, tag = 'scoped memory for vove_forward.11']
    %22 = vsyncpa [#allocation3], 0
    %23 = vsyncpa [#allocation5], 0
    // Predicated region
    $region2: #{vove_forward.11} parent=1 // pred_check
      _
    $region3: #{vove_forward.11} parent=1 // pred_check_branch
      %25 = sbr.rel (0) target = $region5
    $region4: #{vove_forward.11} parent=1 // pred_region
      _
    $region5: #{vove_forward.11} parent=1 // pred_fallthru
      _
    // Predicated region
    $region6: #{vove_forward.11} parent=1 // pred_check
      _
    $region7: #{vove_forward.11} parent=1 // pred_check_branch
      %27 = sbr.rel (0) target = $region9
    $region8: #{vove_forward.11} parent=1 // pred_region
      _
    $region9: #{vove_forward.11} parent=1 // pred_fallthru
      _
    // Predicated region
    $region10: #{vove_forward.11} parent=1 // pred_check
      _
    $region11: #{vove_forward.11} parent=1 // pred_check_branch
      %29 = sbr.rel (0) target = $region13
    $region12: #{vove_forward.11} parent=1 // pred_region
      _
    $region13: #{vove_forward.11} parent=1 // pred_fallthru
      _
    // Predicated region
    $region14: #{vove_forward.11} parent=1 // pred_check
      _
    $region15: #{vove_forward.11} parent=1 // pred_check_branch
      %31 = sbr.rel (0) target = $region17
    $region16: #{vove_forward.11} parent=1 // pred_region
      _
    $region17: #{vove_forward.11} parent=1 // pred_fallthru
      _
    // Predicated region
    $region18: #{vove_forward.11} parent=1 // pred_check
      _
    $region19: #{vove_forward.11} parent=1 // pred_check_branch
      %33 = sbr.rel (0) target = $region21
    $region20: #{vove_forward.11} parent=1 // pred_region
      _
    $region21: #{vove_forward.11} parent=1 // pred_fallthru
      _
    // Predicated region
    $region22: #{vove_forward.11} parent=1 // pred_check
      _
    $region23: #{vove_forward.11} parent=1 // pred_check_branch
      %35 = sbr.rel (0) target = $region25
    $region24: #{vove_forward.11} parent=1 // pred_region
      _
    $region25: #{vove_forward.11} parent=1 // pred_fallthru
      _
    // Predicated region
    $region26: #{vove_forward.11} parent=1 // pred_check
      _
    $region27: #{vove_forward.11} parent=1 // pred_check_branch
      %37 = sbr.rel (0) target = $region29
    $region28: #{vove_forward.11} parent=1 // pred_region
      _
    $region29: #{vove_forward.11} parent=1 // pred_fallthru
      _
    // Predicated region
    $region30: #{vove_forward.11} parent=1 // pred_check
      _
    $region31: #{vove_forward.11} parent=1 // pred_check_branch
      %39 = sbr.rel (0) target = $region33
    $region32: #{vove_forward.11} parent=1 // pred_region
      _
    $region33: #{vove_forward.11} parent=1 // pred_fallthru
      _
    // Predicated region
    $region34: #{vove_forward.11} parent=1 // pred_check
      _
    $region35: #{vove_forward.11} parent=1 // pred_check_branch
      %41 = sbr.rel (0) target = $region37
    $region36: #{vove_forward.11} parent=1 // pred_region
      _
    $region37: #{vove_forward.11} parent=1 // pred_fallthru
      _
    // Predicated region
    $region38: #{vove_forward.11} parent=1 // pred_check
      _
    $region39: #{vove_forward.11} parent=1 // pred_check_branch
      %43 = sbr.rel (0) target = $region41
    $region40: #{vove_forward.11} parent=1 // pred_region
      _
    $region41: #{vove_forward.11} parent=1 // pred_fallthru
      _
    // Predicated region
    $region42: #{vove_forward.11} parent=1 // pred_check
      _
    $region43: #{vove_forward.11} parent=1 // pred_check_branch
      %45 = sbr.rel (0) target = $region45
    $region44: #{vove_forward.11} parent=1 // pred_region
      _
    $region45: #{vove_forward.11} parent=1 // pred_fallthru
      _
    // Predicated region
    $region46: #{vove_forward.11} parent=1 // pred_check
      _
    $region47: #{vove_forward.11} parent=1 // pred_check_branch
      %47 = sbr.rel (0) target = $region49
    $region48: #{vove_forward.11} parent=1 // pred_region
      _
    $region49: #{vove_forward.11} parent=1 // pred_fallthru
      _
    // Predicated region
    $region50: #{vove_forward.11} parent=1 // pred_check
      _
    $region51: #{vove_forward.11} parent=1 // pred_check_branch
      %49 = sbr.rel (0) target = $region53
    $region52: #{vove_forward.11} parent=1 // pred_region
      _
    $region53: #{vove_forward.11} parent=1 // pred_fallthru
      _
    // Predicated region
    $region54: #{vove_forward.11} parent=1 // pred_check
      _
    $region55: #{vove_forward.11} parent=1 // pred_check_branch
      %51 = sbr.rel (0) target = $region57
    $region56: #{vove_forward.11} parent=1 // pred_region
      _
    $region57: #{vove_forward.11} parent=1 // pred_fallthru
      _
    // Predicated region
    $region58: #{vove_forward.11} parent=1 // pred_check
      _
    $region59: #{vove_forward.11} parent=1 // pred_check_branch
      %53 = sbr.rel (0) target = $region61
    $region60: #{vove_forward.11} parent=1 // pred_region
      _
    $region61: #{vove_forward.11} parent=1 // pred_fallthru
      _
    %v55 = vld [vmem:[%s0] sm:$0x3]
    %v56 = vld [vmem:[%s1] sm:$0x1]
    %v58 = vlaneseq
    %v59 = vshrl.u32 %v58, 7
    %v60 = vsub.s32 0, %v59
    %v61 = vrot.slane %v56, %v60
    %v63 = vmul.f32 %v55, %v61
    %v64 = vld [vmem:[%s2] sm:$0x1]
    %v66 = vlaneseq
    %v67 = vshrl.u32 %v66, 7
    %v68 = vsub.s32 0, %v67
    %v69 = vrot.slane %v64, %v68
    %v71 = vadd.f32 %v63, %v69
    %v72 = vld [vmem:[%s3] sm:$0xff]
    %v73 = vld [vmem:[%s3 + $0x8] sm:$0xff]
    %v74 = vld [vmem:[%s3 + $0x10] sm:$0xff]
    %v75 = vld [vmem:[%s3 + $0x18] sm:$0xff]
    %v76 = vld [vmem:[%s3 + $0x20] sm:$0xff]
    %v77 = vld [vmem:[%s3 + $0x28] sm:$0xff]
    %v78 = vld [vmem:[%s3 + $0x30] sm:$0xff]
    %v79 = vld [vmem:[%s3 + $0x38] sm:$0xff]
    %v80 = vld [vmem:[%s4] sm:$0x1]
    %v82 = vlaneseq
    %v83 = vshrl.u32 %v82, 7
    %v84 = vsub.s32 0, %v83
    %v85 = vrot.slane %v80, %v84
    %vm87 = vcmask 523264
    %v89 = vsel %vm87, %v71, 0
    %91 = vmatprep.subr.mxu0 0.0
    %92 = vmatpush1.msra.mxu0 %v72
    %93 = vmatprep.subr.mxu0 0.0
    %94 = vmatpush1.msra.mxu0 %v73
    %95 = vmatprep.subr.mxu0 0.0
    %96 = vmatpush1.msra.mxu0 %v74
    %97 = vmatprep.subr.mxu0 0.0
    %98 = vmatpush1.msra.mxu0 %v75
    %99 = vmatprep.subr.mxu0 0.0
    %100 = vmatpush1.msra.mxu0 %v76
    %101 = vmatprep.subr.mxu0 0.0
    %102 = vmatpush1.msra.mxu0 %v77
    %103 = vmatprep.subr.mxu0 0.0
    %104 = vmatpush1.msra.mxu0 %v78
    %105 = vmatprep.subr.mxu0 0.0
    %106 = vmatpush1.msra.mxu0 %v79
    %107 = vmatprep.subr.mxu0 0.0
    %108 = vmatpush1.msra.mxu0 0.0
    %109 = vmatprep.subr.mxu0 0.0
    %110 = vmatpush1.msra.mxu0 0.0
    %111 = vmatprep.subr.mxu0 0.0
    %112 = vmatpush1.msra.mxu0 0.0
    %113 = vmatprep.subr.mxu0 0.0
    %114 = vmatpush1.msra.mxu0 0.0
    %115 = vmatprep.subr.mxu0 0.0
    %116 = vmatpush1.msra.mxu0 0.0
    %117 = vmatprep.subr.mxu0 0.0
    %118 = vmatpush1.msra.mxu0 0.0
    %119 = vmatprep.subr.mxu0 0.0
    %120 = vmatpush1.msra.mxu0 0.0
    %121 = vmatprep.subr.mxu0 0.0
    %122 = vmatpush1.msra.mxu0 0.0
    %123 = vmatprep.subr.mxu0 0.0
    %124 = vmatpush1.msra.mxu0 0.0
    %125 = vmatprep.subr.mxu0 0.0
    %126 = vmatpush1.msra.mxu0 0.0
    %127 = vmatprep.subr.mxu0 0.0
    %128 = vmatpush1.msra.mxu0 0.0
    %129 = vmatprep.subr.mxu0 0.0
    %130 = vmatpush1.msra.mxu0 0.0
    %131 = vmatprep.subr.mxu0 0.0
    %132 = vmatpush1.msra.mxu0 0.0
    %133 = vmatprep.subr.mxu0 0.0
    %134 = vmatpush1.msra.mxu0 0.0
    %135 = vmatprep.subr.mxu0 0.0
    %136 = vmatpush1.msra.mxu0 0.0
    %137 = vmatprep.subr.mxu0 0.0
    %138 = vmatpush1.msra.mxu0 0.0
    %139 = vmatprep.subr.mxu0 0.0
    %140 = vmatpush1.msra.mxu0 0.0
    %141 = vmatprep.subr.mxu0 0.0
    %142 = vmatpush1.msra.mxu0 0.0
    %143 = vmatprep.subr.mxu0 0.0
    %144 = vmatpush1.msra.mxu0 0.0
    %145 = vmatprep.subr.mxu0 0.0
    %146 = vmatpush1.msra.mxu0 0.0
    %147 = vmatprep.subr.mxu0 0.0
    %148 = vmatpush1.msra.mxu0 0.0
    %149 = vmatprep.subr.mxu0 0.0
    %150 = vmatpush1.msra.mxu0 0.0
    %151 = vmatprep.subr.mxu0 0.0
    %152 = vmatpush1.msra.mxu0 0.0
    %153 = vmatprep.subr.mxu0 0.0
    %154 = vmatpush1.msra.mxu0 0.0
    %155 = vmatprep.mubr.f32.mxu0 0.0
    %156 = vmatmul.mubr.f32.gmra.mrb[0].mxu0 %v89
    %v157 = vpop.f32.mrb[0].mxu0
    %v158 = vadd.f32 %v85, %v157
    %v159 = vpop.f32.mrb[0].mxu0
    %160 = vdwg.mxu0
    %v161 = vld [vmem:[%s5] sm:$0x1]
    %v163 = vlaneseq
    %v164 = vshrl.u32 %v163, 7
    %v165 = vsub.s32 0, %v164
    %v166 = vrot.slane %v161, %v165
    %v168 = vmul.f32 %v158, %v166
    %v169 = vld [vmem:[%s6] sm:$0x1]
    %v171 = vlaneseq
    %v172 = vshrl.u32 %v171, 7
    %v173 = vsub.s32 0, %v172
    %v174 = vrot.slane %v169, %v173
    %v176 = vadd.f32 %v168, %v174
    %v177 = vmul.f32 %v176, %v176
    %vm178 = vcmask 123904
    %v179 = vsel %vm178, %v177, 0.0
    %180 = vadd.xlane.f32.xlu0 %v179
    %v181 = vpop.xlane.xlu0 %180
    %v182 = vrsqrt.pop %v181
    %v183 = vmul.f32 %v181, %v182
    %vm184 = vcmp.eq.f32.partialorder %v181, inf
    %v185 = vsel %vm184, %v181, %v183
    %vm186 = vcmp.eq.f32.partialorder %v181, 0.0
    %v187 = vand.u32 %v181, 2147483648
    %v188 = vsel %vm186, %v187, %v185
    %v189 = vmax.f32 %v188, 1e-12
    %v190 = vrcp.pop %v189
    %v191 = vmul.f32 %v176, %v190
    %v192 = vld [vmem:[%s7] sm:$0xff]
    %v193 = vld [vmem:[%s7 + $0x8] sm:$0xff]
    %v194 = vld [vmem:[%s8] sm:$0x1]
    %v196 = vlaneseq
    %v197 = vshrl.u32 %v196, 7
    %v198 = vsub.s32 0, %v197
    %v199 = vrot.slane %v194, %v198
    %vm201 = vcmask 130048
    %v203 = vsel %vm201, %v191, 0
    %205 = vmatprep.subr.mxu0 0.0
    %206 = vmatpush1.msra.mxu0 %v192
    %207 = vmatprep.subr.mxu0 0.0
    %208 = vmatpush1.msra.mxu0 %v193
    %209 = vmatprep.subr.mxu0 0.0
    %210 = vmatpush1.msra.mxu0 0.0
    %211 = vmatprep.subr.mxu0 0.0
    %212 = vmatpush1.msra.mxu0 0.0
    %213 = vmatprep.subr.mxu0 0.0
    %214 = vmatpush1.msra.mxu0 0.0
    %215 = vmatprep.subr.mxu0 0.0
    %216 = vmatpush1.msra.mxu0 0.0
    %217 = vmatprep.subr.mxu0 0.0
    %218 = vmatpush1.msra.mxu0 0.0
    %219 = vmatprep.subr.mxu0 0.0
    %220 = vmatpush1.msra.mxu0 0.0
    %221 = vmatprep.subr.mxu0 0.0
    %222 = vmatpush1.msra.mxu0 0.0
    %223 = vmatprep.subr.mxu0 0.0
    %224 = vmatpush1.msra.mxu0 0.0
    %225 = vmatprep.subr.mxu0 0.0
    %226 = vmatpush1.msra.mxu0 0.0
    %227 = vmatprep.subr.mxu0 0.0
    %228 = vmatpush1.msra.mxu0 0.0
    %229 = vmatprep.subr.mxu0 0.0
    %230 = vmatpush1.msra.mxu0 0.0
    %231 = vmatprep.subr.mxu0 0.0
    %232 = vmatpush1.msra.mxu0 0.0
    %233 = vmatprep.subr.mxu0 0.0
    %234 = vmatpush1.msra.mxu0 0.0
    %235 = vmatprep.subr.mxu0 0.0
    %236 = vmatpush1.msra.mxu0 0.0
    %237 = vmatprep.subr.mxu0 0.0
    %238 = vmatpush1.msra.mxu0 0.0
    %239 = vmatprep.subr.mxu0 0.0
    %240 = vmatpush1.msra.mxu0 0.0
    %241 = vmatprep.subr.mxu0 0.0
    %242 = vmatpush1.msra.mxu0 0.0
    %243 = vmatprep.subr.mxu0 0.0
    %244 = vmatpush1.msra.mxu0 0.0
    %245 = vmatprep.subr.mxu0 0.0
    %246 = vmatpush1.msra.mxu0 0.0
    %247 = vmatprep.subr.mxu0 0.0
    %248 = vmatpush1.msra.mxu0 0.0
    %249 = vmatprep.subr.mxu0 0.0
    %250 = vmatpush1.msra.mxu0 0.0
    %251 = vmatprep.subr.mxu0 0.0
    %252 = vmatpush1.msra.mxu0 0.0
    %253 = vmatprep.subr.mxu0 0.0
    %254 = vmatpush1.msra.mxu0 0.0
    %255 = vmatprep.subr.mxu0 0.0
    %256 = vmatpush1.msra.mxu0 0.0
    %257 = vmatprep.subr.mxu0 0.0
    %258 = vmatpush1.msra.mxu0 0.0
    %259 = vmatprep.subr.mxu0 0.0
    %260 = vmatpush1.msra.mxu0 0.0
    %261 = vmatprep.subr.mxu0 0.0
    %262 = vmatpush1.msra.mxu0 0.0
    %263 = vmatprep.subr.mxu0 0.0
    %264 = vmatpush1.msra.mxu0 0.0
    %265 = vmatprep.subr.mxu0 0.0
    %266 = vmatpush1.msra.mxu0 0.0
    %267 = vmatprep.subr.mxu0 0.0
    %268 = vmatpush1.msra.mxu0 0.0
    %269 = vmatprep.mubr.f32.mxu0 0.0
    %270 = vmatmul.mubr.f32.gmra.mrb[0].mxu0 %v203
    %v271 = vpop.f32.mrb[0].mxu0
    %v272 = vadd.f32 %v199, %v271
    %v273 = vpop.f32.mrb[0].mxu0
    %274 = vdwg.mxu0
    %v275 = vld [vmem:[%s9] sm:$0x1]
    %v277 = vlaneseq
    %v278 = vshrl.u32 %v277, 7
    %v279 = vsub.s32 0, %v278
    %v280 = vrot.slane %v275, %v279
    %v282 = vmul.f32 %v272, %v280
    %v283 = vld [vmem:[%s10] sm:$0x1]
    %v285 = vlaneseq
    %v286 = vshrl.u32 %v285, 7
    %v287 = vsub.s32 0, %v286
    %v288 = vrot.slane %v283, %v287
    %v290 = vadd.f32 %v282, %v288
    %291 = vst [vmem:[#allocation2] sm:$0x3] %v290
    %v292 = vmax.f32 %v290, 0.0
    %v293 = vpack.c.bf16 %v292, %v292
    %v294 = vld [vmem:[%s11] sm:$0xff]
    %v295 = vld [vmem:[%s11 + $0x8] sm:$0xff]
    %v296 = vld [vmem:[%s11 + $0x10] sm:$0xff]
    %v297 = vld [vmem:[%s11 + $0x18] sm:$0xff]
    %v298 = vld [vmem:[%s11 + $0x20] sm:$0xff]
    %v299 = vld [vmem:[%s11 + $0x28] sm:$0xff]
    %v300 = vld [vmem:[%s11 + $0x30] sm:$0xff]
    %v301 = vld [vmem:[%s11 + $0x38] sm:$0xff]
    %v302 = vld [vmem:[%s11 + $0x40] sm:$0xff]
    %v303 = vld [vmem:[%s11 + $0x48] sm:$0xff]
    %v304 = vld [vmem:[%s11 + $0x50] sm:$0xff]
    %v305 = vld [vmem:[%s11 + $0x58] sm:$0xff]
    %v306 = vld [vmem:[%s11 + $0x60] sm:$0xff]
    %v307 = vld [vmem:[%s11 + $0x68] sm:$0xff]
    %v308 = vld [vmem:[%s11 + $0x70] sm:$0xff]
    %v309 = vld [vmem:[%s11 + $0x78] sm:$0xff]
    %v310 = vld [vmem:[%s11 + $0x80] sm:$0xff]
    %v311 = vld [vmem:[%s11 + $0x88] sm:$0xff]
    %v312 = vld [vmem:[%s11 + $0x90] sm:$0xff]
    %v313 = vld [vmem:[%s11 + $0x98] sm:$0xff]
    %v314 = vld [vmem:[%s11 + $0xa0] sm:$0xff]
    %v315 = vld [vmem:[%s11 + $0xa8] sm:$0xff]
    %v316 = vld [vmem:[%s11 + $0xb0] sm:$0xff]
    %v317 = vld [vmem:[%s11 + $0xb8] sm:$0xff]
    %v318 = vld [vmem:[%s11 + $0xc0] sm:$0xff]
    %v319 = vld [vmem:[%s11 + $0xc8] sm:$0xff]
    %v320 = vld [vmem:[%s11 + $0xd0] sm:$0xff]
    %v321 = vld [vmem:[%s11 + $0xd8] sm:$0xff]
    %v322 = vld [vmem:[%s11 + $0xe0] sm:$0xff]
    %v323 = vld [vmem:[%s11 + $0xe8] sm:$0xff]
    %v324 = vld [vmem:[%s11 + $0xf0] sm:$0xff]
    %v325 = vld [vmem:[%s11 + $0xf8] sm:$0xff]
    %v326 = vld [vmem:[%s11 + $0x100] sm:$0xff]
    %v327 = vld [vmem:[%s11 + $0x108] sm:$0xff]
    %v328 = vld [vmem:[%s11 + $0x110] sm:$0xff]
    %v329 = vld [vmem:[%s11 + $0x118] sm:$0xff]
    %v330 = vld [vmem:[%s11 + $0x120] sm:$0xff]
    %v331 = vld [vmem:[%s11 + $0x128] sm:$0xff]
    %v332 = vld [vmem:[%s11 + $0x130] sm:$0xff]
    %v333 = vld [vmem:[%s11 + $0x138] sm:$0xff]
    %v334 = vld [vmem:[%s11 + $0x140] sm:$0xff]
    %v335 = vld [vmem:[%s11 + $0x148] sm:$0xff]
    %v336 = vld [vmem:[%s11 + $0x150] sm:$0xff]
    %v337 = vld [vmem:[%s11 + $0x158] sm:$0xff]
    %v338 = vld [vmem:[%s11 + $0x160] sm:$0xff]
    %v339 = vld [vmem:[%s11 + $0x168] sm:$0xff]
    %v340 = vld [vmem:[%s11 + $0x170] sm:$0xff]
    %v341 = vld [vmem:[%s11 + $0x178] sm:$0xff]
    %v342 = vld [vmem:[%s11 + $0x180] sm:$0xff]
    %v343 = vld [vmem:[%s11 + $0x188] sm:$0xff]
    %v344 = vld [vmem:[%s11 + $0x190] sm:$0xff]
    %v345 = vld [vmem:[%s11 + $0x198] sm:$0xff]
    %v346 = vld [vmem:[%s11 + $0x1a0] sm:$0xff]
    %v347 = vld [vmem:[%s11 + $0x1a8] sm:$0xff]
    %v348 = vld [vmem:[%s11 + $0x1b0] sm:$0xff]
    %v349 = vld [vmem:[%s11 + $0x1b8] sm:$0xff]
    %v350 = vld [vmem:[%s11 + $0x1c0] sm:$0xff]
    %v351 = vld [vmem:[%s11 + $0x1c8] sm:$0xff]
    %v352 = vld [vmem:[%s11 + $0x1d0] sm:$0xff]
    %v353 = vld [vmem:[%s11 + $0x1d8] sm:$0xff]
    %v354 = vld [vmem:[%s11 + $0x1e0] sm:$0xff]
    %v355 = vld [vmem:[%s11 + $0x1e8] sm:$0xff]
    %v356 = vld [vmem:[%s11 + $0x1f0] sm:$0xff]
    %v357 = vld [vmem:[%s11 + $0x1f8] sm:$0xff]
    %v358 = vld [vmem:[%s11 + $0x200] sm:$0xff]
    %v359 = vld [vmem:[%s11 + $0x208] sm:$0xff]
    %v360 = vld [vmem:[%s11 + $0x210] sm:$0xff]
    %v361 = vld [vmem:[%s11 + $0x218] sm:$0xff]
    %v362 = vld [vmem:[%s11 + $0x220] sm:$0xff]
    %v363 = vld [vmem:[%s11 + $0x228] sm:$0xff]
    %v364 = vld [vmem:[%s11 + $0x230] sm:$0xff]
    %v365 = vld [vmem:[%s11 + $0x238] sm:$0xff]
    %v366 = vld [vmem:[%s11 + $0x240] sm:$0xff]
    %v367 = vld [vmem:[%s11 + $0x248] sm:$0xff]
    %v368 = vld [vmem:[%s11 + $0x250] sm:$0xff]
    %v369 = vld [vmem:[%s11 + $0x258] sm:$0xff]
    %v370 = vld [vmem:[%s11 + $0x260] sm:$0xff]
    %v371 = vld [vmem:[%s11 + $0x268] sm:$0xff]
    %v372 = vld [vmem:[%s11 + $0x270] sm:$0xff]
    %v373 = vld [vmem:[%s11 + $0x278] sm:$0xff]
    %v374 = vld [vmem:[%s11 + $0x280] sm:$0xff]
    %v375 = vld [vmem:[%s11 + $0x288] sm:$0xff]
    %v376 = vld [vmem:[%s11 + $0x290] sm:$0xff]
    %v377 = vld [vmem:[%s11 + $0x298] sm:$0xff]
    %v378 = vld [vmem:[%s11 + $0x2a0] sm:$0xff]
    %v379 = vld [vmem:[%s11 + $0x2a8] sm:$0xff]
    %v380 = vld [vmem:[%s11 + $0x2b0] sm:$0xff]
    %v381 = vld [vmem:[%s11 + $0x2b8] sm:$0xff]
    %v382 = vld [vmem:[%s11 + $0x2c0] sm:$0xff]
    %v383 = vld [vmem:[%s11 + $0x2c8] sm:$0xff]
    %v384 = vld [vmem:[%s11 + $0x2d0] sm:$0xff]
    %v385 = vld [vmem:[%s11 + $0x2d8] sm:$0xff]
    %v386 = vld [vmem:[%s11 + $0x2e0] sm:$0xff]
    %v387 = vld [vmem:[%s11 + $0x2e8] sm:$0xff]
    %v388 = vld [vmem:[%s11 + $0x2f0] sm:$0xff]
    %v389 = vld [vmem:[%s11 + $0x2f8] sm:$0xff]
    %v390 = vld [vmem:[%s11 + $0x300] sm:$0xff]
    %v391 = vld [vmem:[%s11 + $0x308] sm:$0xff]
    %v392 = vld [vmem:[%s11 + $0x310] sm:$0xff]
    %v393 = vld [vmem:[%s11 + $0x318] sm:$0xff]
    %v394 = vld [vmem:[%s11 + $0x320] sm:$0xff]
    %v395 = vld [vmem:[%s11 + $0x328] sm:$0xff]
    %v396 = vld [vmem:[%s11 + $0x330] sm:$0xff]
    %v397 = vld [vmem:[%s11 + $0x338] sm:$0xff]
    %v398 = vld [vmem:[%s11 + $0x340] sm:$0xff]
    %v399 = vld [vmem:[%s11 + $0x348] sm:$0xff]
    %v400 = vld [vmem:[%s11 + $0x350] sm:$0xff]
    %v401 = vld [vmem:[%s11 + $0x358] sm:$0xff]
    %v402 = vld [vmem:[%s11 + $0x360] sm:$0xff]
    %v403 = vld [vmem:[%s11 + $0x368] sm:$0xff]
    %v404 = vld [vmem:[%s11 + $0x370] sm:$0xff]
    %v405 = vld [vmem:[%s11 + $0x378] sm:$0xff]
    %v406 = vld [vmem:[%s11 + $0x380] sm:$0xff]
    %v407 = vld [vmem:[%s11 + $0x388] sm:$0xff]
    %v408 = vld [vmem:[%s11 + $0x390] sm:$0xff]
    %v409 = vld [vmem:[%s11 + $0x398] sm:$0xff]
    %v410 = vld [vmem:[%s11 + $0x3a0] sm:$0xff]
    %v411 = vld [vmem:[%s11 + $0x3a8] sm:$0xff]
    %v412 = vld [vmem:[%s11 + $0x3b0] sm:$0xff]
    %v413 = vld [vmem:[%s11 + $0x3b8] sm:$0xff]
    %v414 = vld [vmem:[%s11 + $0x3c0] sm:$0xff]
    %v415 = vld [vmem:[%s11 + $0x3c8] sm:$0xff]
    %v416 = vld [vmem:[%s11 + $0x3d0] sm:$0xff]
    %v417 = vld [vmem:[%s11 + $0x3d8] sm:$0xff]
    %v418 = vld [vmem:[%s11 + $0x3e0] sm:$0xff]
    %v419 = vld [vmem:[%s11 + $0x3e8] sm:$0xff]
    %v420 = vld [vmem:[%s11 + $0x3f0] sm:$0xff]
    %v421 = vld [vmem:[%s11 + $0x3f8] sm:$0xff]
    %v422 = vld [vmem:[%s11 + $0x400] sm:$0xff]
    %v423 = vld [vmem:[%s11 + $0x408] sm:$0xff]
    %v424 = vld [vmem:[%s11 + $0x410] sm:$0xff]
    %v425 = vld [vmem:[%s11 + $0x418] sm:$0xff]
    %v426 = vld [vmem:[%s11 + $0x420] sm:$0xff]
    %v427 = vld [vmem:[%s11 + $0x428] sm:$0xff]
    %v428 = vld [vmem:[%s11 + $0x430] sm:$0xff]
    %v429 = vld [vmem:[%s11 + $0x438] sm:$0xff]
    %v430 = vld [vmem:[%s11 + $0x440] sm:$0xff]
    %v431 = vld [vmem:[%s11 + $0x448] sm:$0xff]
    %v432 = vld [vmem:[%s11 + $0x450] sm:$0xff]
    %v433 = vld [vmem:[%s11 + $0x458] sm:$0xff]
    %v434 = vld [vmem:[%s11 + $0x460] sm:$0xff]
    %v435 = vld [vmem:[%s11 + $0x468] sm:$0xff]
    %v436 = vld [vmem:[%s11 + $0x470] sm:$0xff]
    %v437 = vld [vmem:[%s11 + $0x478] sm:$0xff]
    %v438 = vld [vmem:[%s11 + $0x480] sm:$0xff]
    %v439 = vld [vmem:[%s11 + $0x488] sm:$0xff]
    %v440 = vld [vmem:[%s11 + $0x490] sm:$0xff]
    %v441 = vld [vmem:[%s11 + $0x498] sm:$0xff]
    %v442 = vld [vmem:[%s11 + $0x4a0] sm:$0xff]
    %v443 = vld [vmem:[%s11 + $0x4a8] sm:$0xff]
    %v444 = vld [vmem:[%s11 + $0x4b0] sm:$0xff]
    %v445 = vld [vmem:[%s11 + $0x4b8] sm:$0xff]
    %v446 = vld [vmem:[%s11 + $0x4c0] sm:$0xff]
    %v447 = vld [vmem:[%s11 + $0x4c8] sm:$0xff]
    %v448 = vld [vmem:[%s11 + $0x4d0] sm:$0xff]
    %v449 = vld [vmem:[%s11 + $0x4d8] sm:$0xff]
    %v450 = vld [vmem:[%s11 + $0x4e0] sm:$0xff]
    %v451 = vld [vmem:[%s11 + $0x4e8] sm:$0xff]
    %v452 = vld [vmem:[%s11 + $0x4f0] sm:$0xff]
    %v453 = vld [vmem:[%s11 + $0x4f8] sm:$0xff]
    %v454 = vld [vmem:[%s12] sm:$0xff]
    %v455 = vld [vmem:[%s12 + $0x8] sm:$0xff]
    %v456 = vld [vmem:[%s12 + $0x10] sm:$0xf]
    %v460 = vlaneseq
    %v461 = vshrl.u32 %v460, 7
    %v462 = vsub.s32 0, %v461
    %v463 = vrot.slane %v454, %v462
    %v464 = vlaneseq
    %v465 = vshrl.u32 %v464, 7
    %v466 = vsub.s32 1, %v465
    %v467 = vrot.slane %v454, %v466
    %v468 = vlaneseq
    %v469 = vshrl.u32 %v468, 7
    %v470 = vsub.s32 2, %v469
    %v471 = vrot.slane %v454, %v470
    %v472 = vlaneseq
    %v473 = vshrl.u32 %v472, 7
    %v474 = vsub.s32 3, %v473
    %v475 = vrot.slane %v454, %v474
    %v476 = vlaneseq
    %v477 = vshrl.u32 %v476, 7
    %v478 = vsub.s32 4, %v477
    %v479 = vrot.slane %v454, %v478
    %v480 = vlaneseq
    %v481 = vshrl.u32 %v480, 7
    %v482 = vsub.s32 5, %v481
    %v483 = vrot.slane %v454, %v482
    %v484 = vlaneseq
    %v485 = vshrl.u32 %v484, 7
    %v486 = vsub.s32 6, %v485
    %v487 = vrot.slane %v454, %v486
    %v488 = vlaneseq
    %v489 = vshrl.u32 %v488, 7
    %v490 = vsub.s32 7, %v489
    %v491 = vrot.slane %v454, %v490
    %v492 = vlaneseq
    %v493 = vshrl.u32 %v492, 7
    %v494 = vsub.s32 0, %v493
    %v495 = vrot.slane %v455, %v494
    %v496 = vlaneseq
    %v497 = vshrl.u32 %v496, 7
    %v498 = vsub.s32 1, %v497
    %v499 = vrot.slane %v455, %v498
    %v500 = vlaneseq
    %v501 = vshrl.u32 %v500, 7
    %v502 = vsub.s32 2, %v501
    %v503 = vrot.slane %v455, %v502
    %v504 = vlaneseq
    %v505 = vshrl.u32 %v504, 7
    %v506 = vsub.s32 3, %v505
    %v507 = vrot.slane %v455, %v506
    %v508 = vlaneseq
    %v509 = vshrl.u32 %v508, 7
    %v510 = vsub.s32 4, %v509
    %v511 = vrot.slane %v455, %v510
    %v512 = vlaneseq
    %v513 = vshrl.u32 %v512, 7
    %v514 = vsub.s32 5, %v513
    %v515 = vrot.slane %v455, %v514
    %v516 = vlaneseq
    %v517 = vshrl.u32 %v516, 7
    %v518 = vsub.s32 6, %v517
    %v519 = vrot.slane %v455, %v518
    %v520 = vlaneseq
    %v521 = vshrl.u32 %v520, 7
    %v522 = vsub.s32 7, %v521
    %v523 = vrot.slane %v455, %v522
    %v524 = vlaneseq
    %v525 = vshrl.u32 %v524, 7
    %v526 = vsub.s32 0, %v525
    %v527 = vrot.slane %v456, %v526
    %v528 = vlaneseq
    %v529 = vshrl.u32 %v528, 7
    %v530 = vsub.s32 1, %v529
    %v531 = vrot.slane %v456, %v530
    %v532 = vlaneseq
    %v533 = vshrl.u32 %v532, 7
    %v534 = vsub.s32 2, %v533
    %v535 = vrot.slane %v456, %v534
    %v536 = vlaneseq
    %v537 = vshrl.u32 %v536, 7
    %v538 = vsub.s32 3, %v537
    %v539 = vrot.slane %v456, %v538
    %v720 = vunpack.c.l.b16 %v294
    %v721 = vunpack.c.h.b16 %v294
    %v722 = vunpack.c.l.b16 %v295
    %v723 = vunpack.c.h.b16 %v295
    %v724 = vunpack.c.l.b16 %v296
    %v725 = vunpack.c.h.b16 %v296
    %v726 = vunpack.c.l.b16 %v297
    %v727 = vunpack.c.h.b16 %v297
    %v728 = vunpack.c.l.b16 %v298
    %v729 = vunpack.c.h.b16 %v298
    %v730 = vunpack.c.l.b16 %v299
    %v731 = vunpack.c.h.b16 %v299
    %v732 = vunpack.c.l.b16 %v300
    %v733 = vunpack.c.h.b16 %v300
    %v734 = vunpack.c.l.b16 %v301
    %v735 = vunpack.c.h.b16 %v301
    %v736 = vunpack.c.l.b16 %v302
    %v737 = vunpack.c.h.b16 %v302
    %v738 = vunpack.c.l.b16 %v303
    %v739 = vunpack.c.h.b16 %v303
    %v740 = vunpack.c.l.b16 %v304
    %v741 = vunpack.c.h.b16 %v304
    %v742 = vunpack.c.l.b16 %v305
    %v743 = vunpack.c.h.b16 %v305
    %v744 = vunpack.c.l.b16 %v306
    %v745 = vunpack.c.h.b16 %v306
    %v746 = vunpack.c.l.b16 %v307
    %v747 = vunpack.c.h.b16 %v307
    %v748 = vunpack.c.l.b16 %v308
    %v749 = vunpack.c.h.b16 %v308
    %v750 = vunpack.c.l.b16 %v309
    %v751 = vunpack.c.h.b16 %v309
    %v752 = vunpack.c.l.b16 %v310
    %v753 = vunpack.c.h.b16 %v310
    %v754 = vunpack.c.l.b16 %v311
    %v755 = vunpack.c.h.b16 %v311
    %v756 = vunpack.c.l.b16 %v312
    %v757 = vunpack.c.h.b16 %v312
    %v758 = vunpack.c.l.b16 %v313
    %v759 = vunpack.c.h.b16 %v313
    %v760 = vunpack.c.l.b16 %v314
    %v761 = vunpack.c.h.b16 %v314
    %v762 = vunpack.c.l.b16 %v315
    %v763 = vunpack.c.h.b16 %v315
    %v764 = vunpack.c.l.b16 %v316
    %v765 = vunpack.c.h.b16 %v316
    %v766 = vunpack.c.l.b16 %v317
    %v767 = vunpack.c.h.b16 %v317
    %v768 = vunpack.c.l.b16 %v318
    %v769 = vunpack.c.h.b16 %v318
    %v770 = vunpack.c.l.b16 %v319
    %v771 = vunpack.c.h.b16 %v319
    %v772 = vunpack.c.l.b16 %v320
    %v773 = vunpack.c.h.b16 %v320
    %v774 = vunpack.c.l.b16 %v321
    %v775 = vunpack.c.h.b16 %v321
    %v776 = vunpack.c.l.b16 %v322
    %v777 = vunpack.c.h.b16 %v322
    %v778 = vunpack.c.l.b16 %v323
    %v779 = vunpack.c.h.b16 %v323
    %v780 = vunpack.c.l.b16 %v324
    %v781 = vunpack.c.h.b16 %v324
    %v782 = vunpack.c.l.b16 %v325
    %v783 = vunpack.c.h.b16 %v325
    %v784 = vunpack.c.l.b16 %v326
    %v785 = vunpack.c.h.b16 %v326
    %v786 = vunpack.c.l.b16 %v327
    %v787 = vunpack.c.h.b16 %v327
    %v788 = vunpack.c.l.b16 %v328
    %v789 = vunpack.c.h.b16 %v328
    %v790 = vunpack.c.l.b16 %v329
    %v791 = vunpack.c.h.b16 %v329
    %v792 = vunpack.c.l.b16 %v330
    %v793 = vunpack.c.h.b16 %v330
    %v794 = vunpack.c.l.b16 %v331
    %v795 = vunpack.c.h.b16 %v331
    %v796 = vunpack.c.l.b16 %v332
    %v797 = vunpack.c.h.b16 %v332
    %v798 = vunpack.c.l.b16 %v333
    %v799 = vunpack.c.h.b16 %v333
    %v800 = vunpack.c.l.b16 %v334
    %v801 = vunpack.c.h.b16 %v334
    %v802 = vunpack.c.l.b16 %v335
    %v803 = vunpack.c.h.b16 %v335
    %v804 = vunpack.c.l.b16 %v336
    %v805 = vunpack.c.h.b16 %v336
    %v806 = vunpack.c.l.b16 %v337
    %v807 = vunpack.c.h.b16 %v337
    %v808 = vunpack.c.l.b16 %v338
    %v809 = vunpack.c.h.b16 %v338
    %v810 = vunpack.c.l.b16 %v339
    %v811 = vunpack.c.h.b16 %v339
    %v812 = vunpack.c.l.b16 %v340
    %v813 = vunpack.c.h.b16 %v340
    %v814 = vunpack.c.l.b16 %v341
    %v815 = vunpack.c.h.b16 %v341
    %v816 = vunpack.c.l.b16 %v342
    %v817 = vunpack.c.h.b16 %v342
    %v818 = vunpack.c.l.b16 %v343
    %v819 = vunpack.c.h.b16 %v343
    %v820 = vunpack.c.l.b16 %v344
    %v821 = vunpack.c.h.b16 %v344
    %v822 = vunpack.c.l.b16 %v345
    %v823 = vunpack.c.h.b16 %v345
    %v824 = vunpack.c.l.b16 %v346
    %v825 = vunpack.c.h.b16 %v346
    %v826 = vunpack.c.l.b16 %v347
    %v827 = vunpack.c.h.b16 %v347
    %v828 = vunpack.c.l.b16 %v348
    %v829 = vunpack.c.h.b16 %v348
    %v830 = vunpack.c.l.b16 %v349
    %v831 = vunpack.c.h.b16 %v349
    %v832 = vunpack.c.l.b16 %v350
    %v833 = vunpack.c.h.b16 %v350
    %v834 = vunpack.c.l.b16 %v351
    %v835 = vunpack.c.h.b16 %v351
    %v836 = vunpack.c.l.b16 %v352
    %v837 = vunpack.c.h.b16 %v352
    %v838 = vunpack.c.l.b16 %v353
    %v839 = vunpack.c.h.b16 %v353
    %v840 = vunpack.c.l.b16 %v354
    %v841 = vunpack.c.h.b16 %v354
    %v842 = vunpack.c.l.b16 %v355
    %v843 = vunpack.c.h.b16 %v355
    %v844 = vunpack.c.l.b16 %v356
    %v845 = vunpack.c.h.b16 %v356
    %v846 = vunpack.c.l.b16 %v357
    %v847 = vunpack.c.h.b16 %v357
    %v848 = vunpack.c.l.b16 %v358
    %v849 = vunpack.c.h.b16 %v358
    %v850 = vunpack.c.l.b16 %v359
    %v851 = vunpack.c.h.b16 %v359
    %v852 = vunpack.c.l.b16 %v360
    %v853 = vunpack.c.h.b16 %v360
    %v854 = vunpack.c.l.b16 %v361
    %v855 = vunpack.c.h.b16 %v361
    %v856 = vunpack.c.l.b16 %v362
    %v857 = vunpack.c.h.b16 %v362
    %v858 = vunpack.c.l.b16 %v363
    %v859 = vunpack.c.h.b16 %v363
    %v860 = vunpack.c.l.b16 %v364
    %v861 = vunpack.c.h.b16 %v364
    %v862 = vunpack.c.l.b16 %v365
    %v863 = vunpack.c.h.b16 %v365
    %v864 = vunpack.c.l.b16 %v366
    %v865 = vunpack.c.h.b16 %v366
    %v866 = vunpack.c.l.b16 %v367
    %v867 = vunpack.c.h.b16 %v367
    %v868 = vunpack.c.l.b16 %v368
    %v869 = vunpack.c.h.b16 %v368
    %v870 = vunpack.c.l.b16 %v369
    %v871 = vunpack.c.h.b16 %v369
    %v872 = vunpack.c.l.b16 %v370
    %v873 = vunpack.c.h.b16 %v370
    %v874 = vunpack.c.l.b16 %v371
    %v875 = vunpack.c.h.b16 %v371
    %v876 = vunpack.c.l.b16 %v372
    %v877 = vunpack.c.h.b16 %v372
    %v878 = vunpack.c.l.b16 %v373
    %v879 = vunpack.c.h.b16 %v373
    %v880 = vunpack.c.l.b16 %v374
    %v881 = vunpack.c.h.b16 %v374
    %v882 = vunpack.c.l.b16 %v375
    %v883 = vunpack.c.h.b16 %v375
    %v884 = vunpack.c.l.b16 %v376
    %v885 = vunpack.c.h.b16 %v376
    %v886 = vunpack.c.l.b16 %v377
    %v887 = vunpack.c.h.b16 %v377
    %v888 = vunpack.c.l.b16 %v378
    %v889 = vunpack.c.h.b16 %v378
    %v890 = vunpack.c.l.b16 %v379
    %v891 = vunpack.c.h.b16 %v379
    %v892 = vunpack.c.l.b16 %v380
    %v893 = vunpack.c.h.b16 %v380
    %v894 = vunpack.c.l.b16 %v381
    %v895 = vunpack.c.h.b16 %v381
    %v896 = vunpack.c.l.b16 %v382
    %v897 = vunpack.c.h.b16 %v382
    %v898 = vunpack.c.l.b16 %v383
    %v899 = vunpack.c.h.b16 %v383
    %v900 = vunpack.c.l.b16 %v384
    %v901 = vunpack.c.h.b16 %v384
    %v902 = vunpack.c.l.b16 %v385
    %v903 = vunpack.c.h.b16 %v385
    %v904 = vunpack.c.l.b16 %v386
    %v905 = vunpack.c.h.b16 %v386
    %v906 = vunpack.c.l.b16 %v387
    %v907 = vunpack.c.h.b16 %v387
    %v908 = vunpack.c.l.b16 %v388
    %v909 = vunpack.c.h.b16 %v388
    %v910 = vunpack.c.l.b16 %v389
    %v911 = vunpack.c.h.b16 %v389
    %v912 = vunpack.c.l.b16 %v390
    %v913 = vunpack.c.h.b16 %v390
    %v914 = vunpack.c.l.b16 %v391
    %v915 = vunpack.c.h.b16 %v391
    %v916 = vunpack.c.l.b16 %v392
    %v917 = vunpack.c.h.b16 %v392
    %v918 = vunpack.c.l.b16 %v393
    %v919 = vunpack.c.h.b16 %v393
    %v920 = vunpack.c.l.b16 %v394
    %v921 = vunpack.c.h.b16 %v394
    %v922 = vunpack.c.l.b16 %v395
    %v923 = vunpack.c.h.b16 %v395
    %v924 = vunpack.c.l.b16 %v396
    %v925 = vunpack.c.h.b16 %v396
    %v926 = vunpack.c.l.b16 %v397
    %v927 = vunpack.c.h.b16 %v397
    %v928 = vunpack.c.l.b16 %v398
    %v929 = vunpack.c.h.b16 %v398
    %v930 = vunpack.c.l.b16 %v399
    %v931 = vunpack.c.h.b16 %v399
    %v932 = vunpack.c.l.b16 %v400
    %v933 = vunpack.c.h.b16 %v400
    %v934 = vunpack.c.l.b16 %v401
    %v935 = vunpack.c.h.b16 %v401
    %v936 = vunpack.c.l.b16 %v402
    %v937 = vunpack.c.h.b16 %v402
    %v938 = vunpack.c.l.b16 %v403
    %v939 = vunpack.c.h.b16 %v403
    %v940 = vunpack.c.l.b16 %v404
    %v941 = vunpack.c.h.b16 %v404
    %v942 = vunpack.c.l.b16 %v405
    %v943 = vunpack.c.h.b16 %v405
    %v944 = vunpack.c.l.b16 %v406
    %v945 = vunpack.c.h.b16 %v406
    %v946 = vunpack.c.l.b16 %v407
    %v947 = vunpack.c.h.b16 %v407
    %v948 = vunpack.c.l.b16 %v408
    %v949 = vunpack.c.h.b16 %v408
    %v950 = vunpack.c.l.b16 %v409
    %v951 = vunpack.c.h.b16 %v409
    %v952 = vunpack.c.l.b16 %v410
    %v953 = vunpack.c.h.b16 %v410
    %v954 = vunpack.c.l.b16 %v411
    %v955 = vunpack.c.h.b16 %v411
    %v956 = vunpack.c.l.b16 %v412
    %v957 = vunpack.c.h.b16 %v412
    %v958 = vunpack.c.l.b16 %v413
    %v959 = vunpack.c.h.b16 %v413
    %v960 = vunpack.c.l.b16 %v414
    %v961 = vunpack.c.h.b16 %v414
    %v962 = vunpack.c.l.b16 %v415
    %v963 = vunpack.c.h.b16 %v415
    %v964 = vunpack.c.l.b16 %v416
    %v965 = vunpack.c.h.b16 %v416
    %v966 = vunpack.c.l.b16 %v417
    %v967 = vunpack.c.h.b16 %v417
    %v968 = vunpack.c.l.b16 %v418
    %v969 = vunpack.c.h.b16 %v418
    %v970 = vunpack.c.l.b16 %v419
    %v971 = vunpack.c.h.b16 %v419
    %v972 = vunpack.c.l.b16 %v420
    %v973 = vunpack.c.h.b16 %v420
    %v974 = vunpack.c.l.b16 %v421
    %v975 = vunpack.c.h.b16 %v421
    %v976 = vunpack.c.l.b16 %v422
    %v977 = vunpack.c.h.b16 %v422
    %v978 = vunpack.c.l.b16 %v423
    %v979 = vunpack.c.h.b16 %v423
    %v980 = vunpack.c.l.b16 %v424
    %v981 = vunpack.c.h.b16 %v424
    %v982 = vunpack.c.l.b16 %v425
    %v983 = vunpack.c.h.b16 %v425
    %v984 = vunpack.c.l.b16 %v426
    %v985 = vunpack.c.h.b16 %v426
    %v986 = vunpack.c.l.b16 %v427
    %v987 = vunpack.c.h.b16 %v427
    %v988 = vunpack.c.l.b16 %v428
    %v989 = vunpack.c.h.b16 %v428
    %v990 = vunpack.c.l.b16 %v429
    %v991 = vunpack.c.h.b16 %v429
    %v992 = vunpack.c.l.b16 %v430
    %v993 = vunpack.c.h.b16 %v430
    %v994 = vunpack.c.l.b16 %v431
    %v995 = vunpack.c.h.b16 %v431
    %v996 = vunpack.c.l.b16 %v432
    %v997 = vunpack.c.h.b16 %v432
    %v998 = vunpack.c.l.b16 %v433
    %v999 = vunpack.c.h.b16 %v433
    %v1000 = vunpack.c.l.b16 %v434
    %v1001 = vunpack.c.h.b16 %v434
    %v1002 = vunpack.c.l.b16 %v435
    %v1003 = vunpack.c.h.b16 %v435
    %v1004 = vunpack.c.l.b16 %v436
    %v1005 = vunpack.c.h.b16 %v436
    %v1006 = vunpack.c.l.b16 %v437
    %v1007 = vunpack.c.h.b16 %v437
    %v1008 = vunpack.c.l.b16 %v438
    %v1009 = vunpack.c.h.b16 %v438
    %v1010 = vunpack.c.l.b16 %v439
    %v1011 = vunpack.c.h.b16 %v439
    %v1012 = vunpack.c.l.b16 %v440
    %v1013 = vunpack.c.h.b16 %v440
    %v1014 = vunpack.c.l.b16 %v441
    %v1015 = vunpack.c.h.b16 %v441
    %v1016 = vunpack.c.l.b16 %v442
    %v1017 = vunpack.c.h.b16 %v442
    %v1018 = vunpack.c.l.b16 %v443
    %v1019 = vunpack.c.h.b16 %v443
    %v1020 = vunpack.c.l.b16 %v444
    %v1021 = vunpack.c.h.b16 %v444
    %v1022 = vunpack.c.l.b16 %v445
    %v1023 = vunpack.c.h.b16 %v445
    %v1024 = vunpack.c.l.b16 %v446
    %v1025 = vunpack.c.h.b16 %v446
    %v1026 = vunpack.c.l.b16 %v447
    %v1027 = vunpack.c.h.b16 %v447
    %v1028 = vunpack.c.l.b16 %v448
    %v1029 = vunpack.c.h.b16 %v448
    %v1030 = vunpack.c.l.b16 %v449
    %v1031 = vunpack.c.h.b16 %v449
    %v1032 = vunpack.c.l.b16 %v450
    %v1033 = vunpack.c.h.b16 %v450
    %v1034 = vunpack.c.l.b16 %v451
    %v1035 = vunpack.c.h.b16 %v451
    %v1036 = vunpack.c.l.b16 %v452
    %v1037 = vunpack.c.h.b16 %v452
    %v1038 = vunpack.c.l.b16 %v453
    %v1039 = vunpack.c.h.b16 %v453
    %v1040 = vpack.c.b16 %v740, %v720
    %v1041 = vpack.c.b16 %v741, %v721
    %v1042 = vpack.c.b16 %v742, %v722
    %v1043 = vpack.c.b16 %v743, %v723
    %v1044 = vpack.c.b16 %v744, %v724
    %v1045 = vpack.c.b16 %v745, %v725
    %v1046 = vpack.c.b16 %v746, %v726
    %v1047 = vpack.c.b16 %v747, %v727
    %v1048 = vpack.c.b16 %v748, %v728
    %v1049 = vpack.c.b16 %v749, %v729
    %v1050 = vpack.c.b16 %v750, %v730
    %v1051 = vpack.c.b16 %v751, %v731
    %v1052 = vpack.c.b16 %v752, %v732
    %v1053 = vpack.c.b16 %v753, %v733
    %v1054 = vpack.c.b16 %v754, %v734
    %v1055 = vpack.c.b16 %v755, %v735
    %v1056 = vpack.c.b16 %v756, %v736
    %v1057 = vpack.c.b16 %v757, %v737
    %v1058 = vpack.c.b16 %v758, %v738
    %v1059 = vpack.c.b16 %v759, %v739
    %v1060 = vpack.c.b16 %v780, %v760
    %v1061 = vpack.c.b16 %v781, %v761
    %v1062 = vpack.c.b16 %v782, %v762
    %v1063 = vpack.c.b16 %v783, %v763
    %v1064 = vpack.c.b16 %v784, %v764
    %v1065 = vpack.c.b16 %v785, %v765
    %v1066 = vpack.c.b16 %v786, %v766
    %v1067 = vpack.c.b16 %v787, %v767
    %v1068 = vpack.c.b16 %v788, %v768
    %v1069 = vpack.c.b16 %v789, %v769
    %v1070 = vpack.c.b16 %v790, %v770
    %v1071 = vpack.c.b16 %v791, %v771
    %v1072 = vpack.c.b16 %v792, %v772
    %v1073 = vpack.c.b16 %v793, %v773
    %v1074 = vpack.c.b16 %v794, %v774
    %v1075 = vpack.c.b16 %v795, %v775
    %v1076 = vpack.c.b16 %v796, %v776
    %v1077 = vpack.c.b16 %v797, %v777
    %v1078 = vpack.c.b16 %v798, %v778
    %v1079 = vpack.c.b16 %v799, %v779
    %v1080 = vpack.c.b16 %v820, %v800
    %v1081 = vpack.c.b16 %v821, %v801
    %v1082 = vpack.c.b16 %v822, %v802
    %v1083 = vpack.c.b16 %v823, %v803
    %v1084 = vpack.c.b16 %v824, %v804
    %v1085 = vpack.c.b16 %v825, %v805
    %v1086 = vpack.c.b16 %v826, %v806
    %v1087 = vpack.c.b16 %v827, %v807
    %v1088 = vpack.c.b16 %v828, %v808
    %v1089 = vpack.c.b16 %v829, %v809
    %v1090 = vpack.c.b16 %v830, %v810
    %v1091 = vpack.c.b16 %v831, %v811
    %v1092 = vpack.c.b16 %v832, %v812
    %v1093 = vpack.c.b16 %v833, %v813
    %v1094 = vpack.c.b16 %v834, %v814
    %v1095 = vpack.c.b16 %v835, %v815
    %v1096 = vpack.c.b16 %v836, %v816
    %v1097 = vpack.c.b16 %v837, %v817
    %v1098 = vpack.c.b16 %v838, %v818
    %v1099 = vpack.c.b16 %v839, %v819
    %v1100 = vpack.c.b16 %v860, %v840
    %v1101 = vpack.c.b16 %v861, %v841
    %v1102 = vpack.c.b16 %v862, %v842
    %v1103 = vpack.c.b16 %v863, %v843
    %v1104 = vpack.c.b16 %v864, %v844
    %v1105 = vpack.c.b16 %v865, %v845
    %v1106 = vpack.c.b16 %v866, %v846
    %v1107 = vpack.c.b16 %v867, %v847
    %v1108 = vpack.c.b16 %v868, %v848
    %v1109 = vpack.c.b16 %v869, %v849
    %v1110 = vpack.c.b16 %v870, %v850
    %v1111 = vpack.c.b16 %v871, %v851
    %v1112 = vpack.c.b16 %v872, %v852
    %v1113 = vpack.c.b16 %v873, %v853
    %v1114 = vpack.c.b16 %v874, %v854
    %v1115 = vpack.c.b16 %v875, %v855
    %v1116 = vpack.c.b16 %v876, %v856
    %v1117 = vpack.c.b16 %v877, %v857
    %v1118 = vpack.c.b16 %v878, %v858
    %v1119 = vpack.c.b16 %v879, %v859
    %v1120 = vpack.c.b16 %v900, %v880
    %v1121 = vpack.c.b16 %v901, %v881
    %v1122 = vpack.c.b16 %v902, %v882
    %v1123 = vpack.c.b16 %v903, %v883
    %v1124 = vpack.c.b16 %v904, %v884
    %v1125 = vpack.c.b16 %v905, %v885
    %v1126 = vpack.c.b16 %v906, %v886
    %v1127 = vpack.c.b16 %v907, %v887
    %v1128 = vpack.c.b16 %v908, %v888
    %v1129 = vpack.c.b16 %v909, %v889
    %v1130 = vpack.c.b16 %v910, %v890
    %v1131 = vpack.c.b16 %v911, %v891
    %v1132 = vpack.c.b16 %v912, %v892
    %v1133 = vpack.c.b16 %v913, %v893
    %v1134 = vpack.c.b16 %v914, %v894
    %v1135 = vpack.c.b16 %v915, %v895
    %v1136 = vpack.c.b16 %v916, %v896
    %v1137 = vpack.c.b16 %v917, %v897
    %v1138 = vpack.c.b16 %v918, %v898
    %v1139 = vpack.c.b16 %v919, %v899
    %v1140 = vpack.c.b16 %v940, %v920
    %v1141 = vpack.c.b16 %v941, %v921
    %v1142 = vpack.c.b16 %v942, %v922
    %v1143 = vpack.c.b16 %v943, %v923
    %v1144 = vpack.c.b16 %v944, %v924
    %v1145 = vpack.c.b16 %v945, %v925
    %v1146 = vpack.c.b16 %v946, %v926
    %v1147 = vpack.c.b16 %v947, %v927
    %v1148 = vpack.c.b16 %v948, %v928
    %v1149 = vpack.c.b16 %v949, %v929
    %v1150 = vpack.c.b16 %v950, %v930
    %v1151 = vpack.c.b16 %v951, %v931
    %v1152 = vpack.c.b16 %v952, %v932
    %v1153 = vpack.c.b16 %v953, %v933
    %v1154 = vpack.c.b16 %v954, %v934
    %v1155 = vpack.c.b16 %v955, %v935
    %v1156 = vpack.c.b16 %v956, %v936
    %v1157 = vpack.c.b16 %v957, %v937
    %v1158 = vpack.c.b16 %v958, %v938
    %v1159 = vpack.c.b16 %v959, %v939
    %v1160 = vpack.c.b16 %v980, %v960
    %v1161 = vpack.c.b16 %v981, %v961
    %v1162 = vpack.c.b16 %v982, %v962
    %v1163 = vpack.c.b16 %v983, %v963
    %v1164 = vpack.c.b16 %v984, %v964
    %v1165 = vpack.c.b16 %v985, %v965
    %v1166 = vpack.c.b16 %v986, %v966
    %v1167 = vpack.c.b16 %v987, %v967
    %v1168 = vpack.c.b16 %v988, %v968
    %v1169 = vpack.c.b16 %v989, %v969
    %v1170 = vpack.c.b16 %v990, %v970
    %v1171 = vpack.c.b16 %v991, %v971
    %v1172 = vpack.c.b16 %v992, %v972
    %v1173 = vpack.c.b16 %v993, %v973
    %v1174 = vpack.c.b16 %v994, %v974
    %v1175 = vpack.c.b16 %v995, %v975
    %v1176 = vpack.c.b16 %v996, %v976
    %v1177 = vpack.c.b16 %v997, %v977
    %v1178 = vpack.c.b16 %v998, %v978
    %v1179 = vpack.c.b16 %v999, %v979
    %v1180 = vpack.c.b16 %v1020, %v1000
    %v1181 = vpack.c.b16 %v1021, %v1001
    %v1182 = vpack.c.b16 %v1022, %v1002
    %v1183 = vpack.c.b16 %v1023, %v1003
    %v1184 = vpack.c.b16 %v1024, %v1004
    %v1185 = vpack.c.b16 %v1025, %v1005
    %v1186 = vpack.c.b16 %v1026, %v1006
    %v1187 = vpack.c.b16 %v1027, %v1007
    %v1188 = vpack.c.b16 %v1028, %v1008
    %v1189 = vpack.c.b16 %v1029, %v1009
    %v1190 = vpack.c.b16 %v1030, %v1010
    %v1191 = vpack.c.b16 %v1031, %v1011
    %v1192 = vpack.c.b16 %v1032, %v1012
    %v1193 = vpack.c.b16 %v1033, %v1013
    %v1194 = vpack.c.b16 %v1034, %v1014
    %v1195 = vpack.c.b16 %v1035, %v1015
    %v1196 = vpack.c.b16 %v1036, %v1016
    %v1197 = vpack.c.b16 %v1037, %v1017
    %v1198 = vpack.c.b16 %v1038, %v1018
    %v1199 = vpack.c.b16 %v1039, %v1019
    %1360 = vmatprep.subr.bf16.mxu0 %v1041
    %1361 = vmatpush1.bf16.msra.mxu0 %v1040
    %1362 = vmatprep.subr.bf16.mxu0 %v1061
    %1363 = vmatpush1.bf16.msra.mxu0 %v1060
    %1364 = vmatprep.subr.bf16.mxu0 %v1081
    %1365 = vmatpush1.bf16.msra.mxu0 %v1080
    %1366 = vmatprep.subr.bf16.mxu0 %v1101
    %1367 = vmatpush1.bf16.msra.mxu0 %v1100
    %1368 = vmatprep.subr.bf16.mxu0 %v1121
    %1369 = vmatpush1.bf16.msra.mxu0 %v1120
    %1370 = vmatprep.subr.bf16.mxu0 %v1141
    %1371 = vmatpush1.bf16.msra.mxu0 %v1140
    %1372 = vmatprep.subr.bf16.mxu0 %v1161
    %1373 = vmatpush1.bf16.msra.mxu0 %v1160
    %1374 = vmatprep.subr.bf16.mxu0 %v1181
    %1375 = vmatpush1.bf16.msra.mxu0 %v1180
    %1376 = vmatprep.subr.bf16.mxu0 0
    %1377 = vmatpush1.bf16.msra.mxu0 0
    %1378 = vmatprep.subr.bf16.mxu0 0
    %1379 = vmatpush1.bf16.msra.mxu0 0
    %1380 = vmatprep.subr.bf16.mxu0 0
    %1381 = vmatpush1.bf16.msra.mxu0 0
    %1382 = vmatprep.subr.bf16.mxu0 0
    %1383 = vmatpush1.bf16.msra.mxu0 0
    %1384 = vmatprep.subr.bf16.mxu0 0
    %1385 = vmatpush1.bf16.msra.mxu0 0
    %1386 = vmatprep.subr.bf16.mxu0 0
    %1387 = vmatpush1.bf16.msra.mxu0 0
    %1388 = vmatprep.subr.bf16.mxu0 0
    %1389 = vmatpush1.bf16.msra.mxu0 0
    %1390 = vmatprep.subr.bf16.mxu0 0
    %1391 = vmatpush1.bf16.msra.mxu0 0
    %1392 = vmatprep.mubr.bf16.mxu0 0
    %1393 = vmatmul.mubr.bf16.gmra.mrb[0].mxu0 %v293
    %v1394 = vpop.f32.mrb[0].mxu0
    %v1395 = vadd.f32 %v463, %v1394
    %v1396 = vpop.f32.mrb[0].mxu0
    %v1397 = vadd.f32 %v467, %v1396
    %v1398 = vpop.f32.mrb[0].mxu0
    %v1399 = vpop.f32.mrb[0].mxu0
    %1400 = vdwg.mxu0
    %1401 = vmatprep.subr.bf16.mxu0 %v1043
    %1402 = vmatpush1.bf16.msra.mxu0 %v1042
    %1403 = vmatprep.subr.bf16.mxu0 %v1063
    %1404 = vmatpush1.bf16.msra.mxu0 %v1062
    %1405 = vmatprep.subr.bf16.mxu0 %v1083
    %1406 = vmatpush1.bf16.msra.mxu0 %v1082
    %1407 = vmatprep.subr.bf16.mxu0 %v1103
    %1408 = vmatpush1.bf16.msra.mxu0 %v1102
    %1409 = vmatprep.subr.bf16.mxu0 %v1123
    %1410 = vmatpush1.bf16.msra.mxu0 %v1122
    %1411 = vmatprep.subr.bf16.mxu0 %v1143
    %1412 = vmatpush1.bf16.msra.mxu0 %v1142
    %1413 = vmatprep.subr.bf16.mxu0 %v1163
    %1414 = vmatpush1.bf16.msra.mxu0 %v1162
    %1415 = vmatprep.subr.bf16.mxu0 %v1183
    %1416 = vmatpush1.bf16.msra.mxu0 %v1182
    %1417 = vmatprep.subr.bf16.mxu0 0
    %1418 = vmatpush1.bf16.msra.mxu0 0
    %1419 = vmatprep.subr.bf16.mxu0 0
    %1420 = vmatpush1.bf16.msra.mxu0 0
    %1421 = vmatprep.subr.bf16.mxu0 0
    %1422 = vmatpush1.bf16.msra.mxu0 0
    %1423 = vmatprep.subr.bf16.mxu0 0
    %1424 = vmatpush1.bf16.msra.mxu0 0
    %1425 = vmatprep.subr.bf16.mxu0 0
    %1426 = vmatpush1.bf16.msra.mxu0 0
    %1427 = vmatprep.subr.bf16.mxu0 0
    %1428 = vmatpush1.bf16.msra.mxu0 0
    %1429 = vmatprep.subr.bf16.mxu0 0
    %1430 = vmatpush1.bf16.msra.mxu0 0
    %1431 = vmatprep.subr.bf16.mxu0 0
    %1432 = vmatpush1.bf16.msra.mxu0 0
    %1433 = vmatprep.mubr.bf16.mxu0 0
    %1434 = vmatmul.mubr.bf16.gmra.mrb[0].mxu0 %v293
    %v1435 = vpop.f32.mrb[0].mxu0
    %v1436 = vadd.f32 %v471, %v1435
    %v1437 = vpop.f32.mrb[0].mxu0
    %v1438 = vadd.f32 %v475, %v1437
    %v1439 = vpop.f32.mrb[0].mxu0
    %v1440 = vpop.f32.mrb[0].mxu0
    %1441 = vdwg.mxu0
    %1442 = vmatprep.subr.bf16.mxu0 %v1045
    %1443 = vmatpush1.bf16.msra.mxu0 %v1044
    %1444 = vmatprep.subr.bf16.mxu0 %v1065
    %1445 = vmatpush1.bf16.msra.mxu0 %v1064
    %1446 = vmatprep.subr.bf16.mxu0 %v1085
    %1447 = vmatpush1.bf16.msra.mxu0 %v1084
    %1448 = vmatprep.subr.bf16.mxu0 %v1105
    %1449 = vmatpush1.bf16.msra.mxu0 %v1104
    %1450 = vmatprep.subr.bf16.mxu0 %v1125
    %1451 = vmatpush1.bf16.msra.mxu0 %v1124
    %1452 = vmatprep.subr.bf16.mxu0 %v1145
    %1453 = vmatpush1.bf16.msra.mxu0 %v1144
    %1454 = vmatprep.subr.bf16.mxu0 %v1165
    %1455 = vmatpush1.bf16.msra.mxu0 %v1164
    %1456 = vmatprep.subr.bf16.mxu0 %v1185
    %1457 = vmatpush1.bf16.msra.mxu0 %v1184
    %1458 = vmatprep.subr.bf16.mxu0 0
    %1459 = vmatpush1.bf16.msra.mxu0 0
    %1460 = vmatprep.subr.bf16.mxu0 0
    %1461 = vmatpush1.bf16.msra.mxu0 0
    %1462 = vmatprep.subr.bf16.mxu0 0
    %1463 = vmatpush1.bf16.msra.mxu0 0
    %1464 = vmatprep.subr.bf16.mxu0 0
    %1465 = vmatpush1.bf16.msra.mxu0 0
    %1466 = vmatprep.subr.bf16.mxu0 0
    %1467 = vmatpush1.bf16.msra.mxu0 0
    %1468 = vmatprep.subr.bf16.mxu0 0
    %1469 = vmatpush1.bf16.msra.mxu0 0
    %1470 = vmatprep.subr.bf16.mxu0 0
    %1471 = vmatpush1.bf16.msra.mxu0 0
    %1472 = vmatprep.subr.bf16.mxu0 0
    %1473 = vmatpush1.bf16.msra.mxu0 0
    %1474 = vmatprep.mubr.bf16.mxu0 0
    %1475 = vmatmul.mubr.bf16.gmra.mrb[0].mxu0 %v293
    %v1476 = vpop.f32.mrb[0].mxu0
    %v1477 = vadd.f32 %v479, %v1476
    %v1478 = vpop.f32.mrb[0].mxu0
    %v1479 = vadd.f32 %v483, %v1478
    %v1480 = vpop.f32.mrb[0].mxu0
    %v1481 = vpop.f32.mrb[0].mxu0
    %1482 = vdwg.mxu0
    %1483 = vmatprep.subr.bf16.mxu0 %v1047
    %1484 = vmatpush1.bf16.msra.mxu0 %v1046
    %1485 = vmatprep.subr.bf16.mxu0 %v1067
    %1486 = vmatpush1.bf16.msra.mxu0 %v1066
    %1487 = vmatprep.subr.bf16.mxu0 %v1087
    %1488 = vmatpush1.bf16.msra.mxu0 %v1086
    %1489 = vmatprep.subr.bf16.mxu0 %v1107
    %1490 = vmatpush1.bf16.msra.mxu0 %v1106
    %1491 = vmatprep.subr.bf16.mxu0 %v1127
    %1492 = vmatpush1.bf16.msra.mxu0 %v1126
    %1493 = vmatprep.subr.bf16.mxu0 %v1147
    %1494 = vmatpush1.bf16.msra.mxu0 %v1146
    %1495 = vmatprep.subr.bf16.mxu0 %v1167
    %1496 = vmatpush1.bf16.msra.mxu0 %v1166
    %1497 = vmatprep.subr.bf16.mxu0 %v1187
    %1498 = vmatpush1.bf16.msra.mxu0 %v1186
    %1499 = vmatprep.subr.bf16.mxu0 0
    %1500 = vmatpush1.bf16.msra.mxu0 0
    %1501 = vmatprep.subr.bf16.mxu0 0
    %1502 = vmatpush1.bf16.msra.mxu0 0
    %1503 = vmatprep.subr.bf16.mxu0 0
    %1504 = vmatpush1.bf16.msra.mxu0 0
    %1505 = vmatprep.subr.bf16.mxu0 0
    %1506 = vmatpush1.bf16.msra.mxu0 0
    %1507 = vmatprep.subr.bf16.mxu0 0
    %1508 = vmatpush1.bf16.msra.mxu0 0
    %1509 = vmatprep.subr.bf16.mxu0 0
    %1510 = vmatpush1.bf16.msra.mxu0 0
    %1511 = vmatprep.subr.bf16.mxu0 0
    %1512 = vmatpush1.bf16.msra.mxu0 0
    %1513 = vmatprep.subr.bf16.mxu0 0
    %1514 = vmatpush1.bf16.msra.mxu0 0
    %1515 = vmatprep.mubr.bf16.mxu0 0
    %1516 = vmatmul.mubr.bf16.gmra.mrb[0].mxu0 %v293
    %v1517 = vpop.f32.mrb[0].mxu0
    %v1518 = vadd.f32 %v487, %v1517
    %v1519 = vpop.f32.mrb[0].mxu0
    %v1520 = vadd.f32 %v491, %v1519
    %v1521 = vpop.f32.mrb[0].mxu0
    %v1522 = vpop.f32.mrb[0].mxu0
    %1523 = vdwg.mxu0
    %1524 = vmatprep.subr.bf16.mxu0 %v1049
    %1525 = vmatpush1.bf16.msra.mxu0 %v1048
    %1526 = vmatprep.subr.bf16.mxu0 %v1069
    %1527 = vmatpush1.bf16.msra.mxu0 %v1068
    %1528 = vmatprep.subr.bf16.mxu0 %v1089
    %1529 = vmatpush1.bf16.msra.mxu0 %v1088
    %1530 = vmatprep.subr.bf16.mxu0 %v1109
    %1531 = vmatpush1.bf16.msra.mxu0 %v1108
    %1532 = vmatprep.subr.bf16.mxu0 %v1129
    %1533 = vmatpush1.bf16.msra.mxu0 %v1128
    %1534 = vmatprep.subr.bf16.mxu0 %v1149
    %1535 = vmatpush1.bf16.msra.mxu0 %v1148
    %1536 = vmatprep.subr.bf16.mxu0 %v1169
    %1537 = vmatpush1.bf16.msra.mxu0 %v1168
    %1538 = vmatprep.subr.bf16.mxu0 %v1189
    %1539 = vmatpush1.bf16.msra.mxu0 %v1188
    %1540 = vmatprep.subr.bf16.mxu0 0
    %1541 = vmatpush1.bf16.msra.mxu0 0
    %1542 = vmatprep.subr.bf16.mxu0 0
    %1543 = vmatpush1.bf16.msra.mxu0 0
    %1544 = vmatprep.subr.bf16.mxu0 0
    %1545 = vmatpush1.bf16.msra.mxu0 0
    %1546 = vmatprep.subr.bf16.mxu0 0
    %1547 = vmatpush1.bf16.msra.mxu0 0
    %1548 = vmatprep.subr.bf16.mxu0 0
    %1549 = vmatpush1.bf16.msra.mxu0 0
    %1550 = vmatprep.subr.bf16.mxu0 0
    %1551 = vmatpush1.bf16.msra.mxu0 0
    %1552 = vmatprep.subr.bf16.mxu0 0
    %1553 = vmatpush1.bf16.msra.mxu0 0
    %1554 = vmatprep.subr.bf16.mxu0 0
    %1555 = vmatpush1.bf16.msra.mxu0 0
    %1556 = vmatprep.mubr.bf16.mxu0 0
    %1557 = vmatmul.mubr.bf16.gmra.mrb[0].mxu0 %v293
    %v1558 = vpop.f32.mrb[0].mxu0
    %v1559 = vadd.f32 %v495, %v1558
    %v1560 = vpop.f32.mrb[0].mxu0
    %v1561 = vadd.f32 %v499, %v1560
    %v1562 = vpop.f32.mrb[0].mxu0
    %v1563 = vpop.f32.mrb[0].mxu0
    %1564 = vdwg.mxu0
    %1565 = vmatprep.subr.bf16.mxu0 %v1051
    %1566 = vmatpush1.bf16.msra.mxu0 %v1050
    %1567 = vmatprep.subr.bf16.mxu0 %v1071
    %1568 = vmatpush1.bf16.msra.mxu0 %v1070
    %1569 = vmatprep.subr.bf16.mxu0 %v1091
    %1570 = vmatpush1.bf16.msra.mxu0 %v1090
    %1571 = vmatprep.subr.bf16.mxu0 %v1111
    %1572 = vmatpush1.bf16.msra.mxu0 %v1110
    %1573 = vmatprep.subr.bf16.mxu0 %v1131
    %1574 = vmatpush1.bf16.msra.mxu0 %v1130
    %1575 = vmatprep.subr.bf16.mxu0 %v1151
    %1576 = vmatpush1.bf16.msra.mxu0 %v1150
    %1577 = vmatprep.subr.bf16.mxu0 %v1171
    %1578 = vmatpush1.bf16.msra.mxu0 %v1170
    %1579 = vmatprep.subr.bf16.mxu0 %v1191
    %1580 = vmatpush1.bf16.msra.mxu0 %v1190
    %1581 = vmatprep.subr.bf16.mxu0 0
    %1582 = vmatpush1.bf16.msra.mxu0 0
    %1583 = vmatprep.subr.bf16.mxu0 0
    %1584 = vmatpush1.bf16.msra.mxu0 0
    %1585 = vmatprep.subr.bf16.mxu0 0
    %1586 = vmatpush1.bf16.msra.mxu0 0
    %1587 = vmatprep.subr.bf16.mxu0 0
    %1588 = vmatpush1.bf16.msra.mxu0 0
    %1589 = vmatprep.subr.bf16.mxu0 0
    %1590 = vmatpush1.bf16.msra.mxu0 0
    %1591 = vmatprep.subr.bf16.mxu0 0
    %1592 = vmatpush1.bf16.msra.mxu0 0
    %1593 = vmatprep.subr.bf16.mxu0 0
    %1594 = vmatpush1.bf16.msra.mxu0 0
    %1595 = vmatprep.subr.bf16.mxu0 0
    %1596 = vmatpush1.bf16.msra.mxu0 0
    %1597 = vmatprep.mubr.bf16.mxu0 0
    %1598 = vmatmul.mubr.bf16.gmra.mrb[0].mxu0 %v293
    %v1599 = vpop.f32.mrb[0].mxu0
    %v1600 = vadd.f32 %v503, %v1599
    %v1601 = vpop.f32.mrb[0].mxu0
    %v1602 = vadd.f32 %v507, %v1601
    %v1603 = vpop.f32.mrb[0].mxu0
    %v1604 = vpop.f32.mrb[0].mxu0
    %1605 = vdwg.mxu0
    %1606 = vmatprep.subr.bf16.mxu0 %v1053
    %1607 = vmatpush1.bf16.msra.mxu0 %v1052
    %1608 = vmatprep.subr.bf16.mxu0 %v1073
    %1609 = vmatpush1.bf16.msra.mxu0 %v1072
    %1610 = vmatprep.subr.bf16.mxu0 %v1093
    %1611 = vmatpush1.bf16.msra.mxu0 %v1092
    %1612 = vmatprep.subr.bf16.mxu0 %v1113
    %1613 = vmatpush1.bf16.msra.mxu0 %v1112
    %1614 = vmatprep.subr.bf16.mxu0 %v1133
    %1615 = vmatpush1.bf16.msra.mxu0 %v1132
    %1616 = vmatprep.subr.bf16.mxu0 %v1153
    %1617 = vmatpush1.bf16.msra.mxu0 %v1152
    %1618 = vmatprep.subr.bf16.mxu0 %v1173
    %1619 = vmatpush1.bf16.msra.mxu0 %v1172
    %1620 = vmatprep.subr.bf16.mxu0 %v1193
    %1621 = vmatpush1.bf16.msra.mxu0 %v1192
    %1622 = vmatprep.subr.bf16.mxu0 0
    %1623 = vmatpush1.bf16.msra.mxu0 0
    %1624 = vmatprep.subr.bf16.mxu0 0
    %1625 = vmatpush1.bf16.msra.mxu0 0
    %1626 = vmatprep.subr.bf16.mxu0 0
    %1627 = vmatpush1.bf16.msra.mxu0 0
    %1628 = vmatprep.subr.bf16.mxu0 0
    %1629 = vmatpush1.bf16.msra.mxu0 0
    %1630 = vmatprep.subr.bf16.mxu0 0
    %1631 = vmatpush1.bf16.msra.mxu0 0
    %1632 = vmatprep.subr.bf16.mxu0 0
    %1633 = vmatpush1.bf16.msra.mxu0 0
    %1634 = vmatprep.subr.bf16.mxu0 0
    %1635 = vmatpush1.bf16.msra.mxu0 0
    %1636 = vmatprep.subr.bf16.mxu0 0
    %1637 = vmatpush1.bf16.msra.mxu0 0
    %1638 = vmatprep.mubr.bf16.mxu0 0
    %1639 = vmatmul.mubr.bf16.gmra.mrb[0].mxu0 %v293
    %v1640 = vpop.f32.mrb[0].mxu0
    %v1641 = vadd.f32 %v511, %v1640
    %v1642 = vpop.f32.mrb[0].mxu0
    %v1643 = vadd.f32 %v515, %v1642
    %v1644 = vpop.f32.mrb[0].mxu0
    %v1645 = vpop.f32.mrb[0].mxu0
    %1646 = vdwg.mxu0
    %1647 = vmatprep.subr.bf16.mxu0 %v1055
    %1648 = vmatpush1.bf16.msra.mxu0 %v1054
    %1649 = vmatprep.subr.bf16.mxu0 %v1075
    %1650 = vmatpush1.bf16.msra.mxu0 %v1074
    %1651 = vmatprep.subr.bf16.mxu0 %v1095
    %1652 = vmatpush1.bf16.msra.mxu0 %v1094
    %1653 = vmatprep.subr.bf16.mxu0 %v1115
    %1654 = vmatpush1.bf16.msra.mxu0 %v1114
    %1655 = vmatprep.subr.bf16.mxu0 %v1135
    %1656 = vmatpush1.bf16.msra.mxu0 %v1134
    %1657 = vmatprep.subr.bf16.mxu0 %v1155
    %1658 = vmatpush1.bf16.msra.mxu0 %v1154
    %1659 = vmatprep.subr.bf16.mxu0 %v1175
    %1660 = vmatpush1.bf16.msra.mxu0 %v1174
    %1661 = vmatprep.subr.bf16.mxu0 %v1195
    %1662 = vmatpush1.bf16.msra.mxu0 %v1194
    %1663 = vmatprep.subr.bf16.mxu0 0
    %1664 = vmatpush1.bf16.msra.mxu0 0
    %1665 = vmatprep.subr.bf16.mxu0 0
    %1666 = vmatpush1.bf16.msra.mxu0 0
    %1667 = vmatprep.subr.bf16.mxu0 0
    %1668 = vmatpush1.bf16.msra.mxu0 0
    %1669 = vmatprep.subr.bf16.mxu0 0
    %1670 = vmatpush1.bf16.msra.mxu0 0
    %1671 = vmatprep.subr.bf16.mxu0 0
    %1672 = vmatpush1.bf16.msra.mxu0 0
    %1673 = vmatprep.subr.bf16.mxu0 0
    %1674 = vmatpush1.bf16.msra.mxu0 0
    %1675 = vmatprep.subr.bf16.mxu0 0
    %1676 = vmatpush1.bf16.msra.mxu0 0
    %1677 = vmatprep.subr.bf16.mxu0 0
    %1678 = vmatpush1.bf16.msra.mxu0 0
    %1679 = vmatprep.mubr.bf16.mxu0 0
    %1680 = vmatmul.mubr.bf16.gmra.mrb[0].mxu0 %v293
    %v1681 = vpop.f32.mrb[0].mxu0
    %v1682 = vadd.f32 %v519, %v1681
    %v1683 = vpop.f32.mrb[0].mxu0
    %v1684 = vadd.f32 %v523, %v1683
    %v1685 = vpop.f32.mrb[0].mxu0
    %v1686 = vpop.f32.mrb[0].mxu0
    %1687 = vdwg.mxu0
    %1688 = vmatprep.subr.bf16.mxu0 %v1057
    %1689 = vmatpush1.bf16.msra.mxu0 %v1056
    %1690 = vmatprep.subr.bf16.mxu0 %v1077
    %1691 = vmatpush1.bf16.msra.mxu0 %v1076
    %1692 = vmatprep.subr.bf16.mxu0 %v1097
    %1693 = vmatpush1.bf16.msra.mxu0 %v1096
    %1694 = vmatprep.subr.bf16.mxu0 %v1117
    %1695 = vmatpush1.bf16.msra.mxu0 %v1116
    %1696 = vmatprep.subr.bf16.mxu0 %v1137
    %1697 = vmatpush1.bf16.msra.mxu0 %v1136
    %1698 = vmatprep.subr.bf16.mxu0 %v1157
    %1699 = vmatpush1.bf16.msra.mxu0 %v1156
    %1700 = vmatprep.subr.bf16.mxu0 %v1177
    %1701 = vmatpush1.bf16.msra.mxu0 %v1176
    %1702 = vmatprep.subr.bf16.mxu0 %v1197
    %1703 = vmatpush1.bf16.msra.mxu0 %v1196
    %1704 = vmatprep.subr.bf16.mxu0 0
    %1705 = vmatpush1.bf16.msra.mxu0 0
    %1706 = vmatprep.subr.bf16.mxu0 0
    %1707 = vmatpush1.bf16.msra.mxu0 0
    %1708 = vmatprep.subr.bf16.mxu0 0
    %1709 = vmatpush1.bf16.msra.mxu0 0
    %1710 = vmatprep.subr.bf16.mxu0 0
    %1711 = vmatpush1.bf16.msra.mxu0 0
    %1712 = vmatprep.subr.bf16.mxu0 0
    %1713 = vmatpush1.bf16.msra.mxu0 0
    %1714 = vmatprep.subr.bf16.mxu0 0
    %1715 = vmatpush1.bf16.msra.mxu0 0
    %1716 = vmatprep.subr.bf16.mxu0 0
    %1717 = vmatpush1.bf16.msra.mxu0 0
    %1718 = vmatprep.subr.bf16.mxu0 0
    %1719 = vmatpush1.bf16.msra.mxu0 0
    %1720 = vmatprep.mubr.bf16.mxu0 0
    %1721 = vmatmul.mubr.bf16.gmra.mrb[0].mxu0 %v293
    %v1722 = vpop.f32.mrb[0].mxu0
    %v1723 = vadd.f32 %v527, %v1722
    %v1724 = vpop.f32.mrb[0].mxu0
    %v1725 = vadd.f32 %v531, %v1724
    %v1726 = vpop.f32.mrb[0].mxu0
    %v1727 = vpop.f32.mrb[0].mxu0
    %1728 = vdwg.mxu0
    %1729 = vmatprep.subr.bf16.mxu0 %v1059
    %1730 = vmatpush1.bf16.msra.mxu0 %v1058
    %1731 = vmatprep.subr.bf16.mxu0 %v1079
    %1732 = vmatpush1.bf16.msra.mxu0 %v1078
    %1733 = vmatprep.subr.bf16.mxu0 %v1099
    %1734 = vmatpush1.bf16.msra.mxu0 %v1098
    %1735 = vmatprep.subr.bf16.mxu0 %v1119
    %1736 = vmatpush1.bf16.msra.mxu0 %v1118
    %1737 = vmatprep.subr.bf16.mxu0 %v1139
    %1738 = vmatpush1.bf16.msra.mxu0 %v1138
    %1739 = vmatprep.subr.bf16.mxu0 %v1159
    %1740 = vmatpush1.bf16.msra.mxu0 %v1158
    %1741 = vmatprep.subr.bf16.mxu0 %v1179
    %1742 = vmatpush1.bf16.msra.mxu0 %v1178
    %1743 = vmatprep.subr.bf16.mxu0 %v1199
    %1744 = vmatpush1.bf16.msra.mxu0 %v1198
    %1745 = vmatprep.subr.bf16.mxu0 0
    %1746 = vmatpush1.bf16.msra.mxu0 0
    %1747 = vmatprep.subr.bf16.mxu0 0
    %1748 = vmatpush1.bf16.msra.mxu0 0
    %1749 = vmatprep.subr.bf16.mxu0 0
    %1750 = vmatpush1.bf16.msra.mxu0 0
    %1751 = vmatprep.subr.bf16.mxu0 0
    %1752 = vmatpush1.bf16.msra.mxu0 0
    %1753 = vmatprep.subr.bf16.mxu0 0
    %1754 = vmatpush1.bf16.msra.mxu0 0
    %1755 = vmatprep.subr.bf16.mxu0 0
    %1756 = vmatpush1.bf16.msra.mxu0 0
    %1757 = vmatprep.subr.bf16.mxu0 0
    %1758 = vmatpush1.bf16.msra.mxu0 0
    %1759 = vmatprep.subr.bf16.mxu0 0
    %1760 = vmatpush1.bf16.msra.mxu0 0
    %1761 = vmatprep.mubr.bf16.mxu0 0
    %1762 = vmatmul.mubr.bf16.gmra.mrb[0].mxu0 %v293
    %v1763 = vpop.f32.mrb[0].mxu0
    %v1764 = vadd.f32 %v535, %v1763
    %v1765 = vpop.f32.mrb[0].mxu0
    %v1766 = vadd.f32 %v539, %v1765
    %v1767 = vpop.f32.mrb[0].mxu0
    %v1768 = vpop.f32.mrb[0].mxu0
    %1769 = vdwg.mxu0
    %v1770 = vld [vmem:[%s13] sm:$0xff]
    %v1771 = vld [vmem:[%s13 + $0x8] sm:$0xff]
    %v1772 = vld [vmem:[%s13 + $0x10] sm:$0xf]
    %v1776 = vlaneseq
    %v1777 = vshrl.u32 %v1776, 7
    %v1778 = vsub.s32 0, %v1777
    %v1779 = vrot.slane %v1770, %v1778
    %v1780 = vlaneseq
    %v1781 = vshrl.u32 %v1780, 7
    %v1782 = vsub.s32 1, %v1781
    %v1783 = vrot.slane %v1770, %v1782
    %v1784 = vlaneseq
    %v1785 = vshrl.u32 %v1784, 7
    %v1786 = vsub.s32 2, %v1785
    %v1787 = vrot.slane %v1770, %v1786
    %v1788 = vlaneseq
    %v1789 = vshrl.u32 %v1788, 7
    %v1790 = vsub.s32 3, %v1789
    %v1791 = vrot.slane %v1770, %v1790
    %v1792 = vlaneseq
    %v1793 = vshrl.u32 %v1792, 7
    %v1794 = vsub.s32 4, %v1793
    %v1795 = vrot.slane %v1770, %v1794
    %v1796 = vlaneseq
    %v1797 = vshrl.u32 %v1796, 7
    %v1798 = vsub.s32 5, %v1797
    %v1799 = vrot.slane %v1770, %v1798
    %v1800 = vlaneseq
    %v1801 = vshrl.u32 %v1800, 7
    %v1802 = vsub.s32 6, %v1801
    %v1803 = vrot.slane %v1770, %v1802
    %v1804 = vlaneseq
    %v1805 = vshrl.u32 %v1804, 7
    %v1806 = vsub.s32 7, %v1805
    %v1807 = vrot.slane %v1770, %v1806
    %v1808 = vlaneseq
    %v1809 = vshrl.u32 %v1808, 7
    %v1810 = vsub.s32 0, %v1809
    %v1811 = vrot.slane %v1771, %v1810
    %v1812 = vlaneseq
    %v1813 = vshrl.u32 %v1812, 7
    %v1814 = vsub.s32 1, %v1813
    %v1815 = vrot.slane %v1771, %v1814
    %v1816 = vlaneseq
    %v1817 = vshrl.u32 %v1816, 7
    %v1818 = vsub.s32 2, %v1817
    %v1819 = vrot.slane %v1771, %v1818
    %v1820 = vlaneseq
    %v1821 = vshrl.u32 %v1820, 7
    %v1822 = vsub.s32 3, %v1821
    %v1823 = vrot.slane %v1771, %v1822
    %v1824 = vlaneseq
    %v1825 = vshrl.u32 %v1824, 7
    %v1826 = vsub.s32 4, %v1825
    %v1827 = vrot.slane %v1771, %v1826
    %v1828 = vlaneseq
    %v1829 = vshrl.u32 %v1828, 7
    %v1830 = vsub.s32 5, %v1829
    %v1831 = vrot.slane %v1771, %v1830
    %v1832 = vlaneseq
    %v1833 = vshrl.u32 %v1832, 7
    %v1834 = vsub.s32 6, %v1833
    %v1835 = vrot.slane %v1771, %v1834
    %v1836 = vlaneseq
    %v1837 = vshrl.u32 %v1836, 7
    %v1838 = vsub.s32 7, %v1837
    %v1839 = vrot.slane %v1771, %v1838
    %v1840 = vlaneseq
    %v1841 = vshrl.u32 %v1840, 7
    %v1842 = vsub.s32 0, %v1841
    %v1843 = vrot.slane %v1772, %v1842
    %v1844 = vlaneseq
    %v1845 = vshrl.u32 %v1844, 7
    %v1846 = vsub.s32 1, %v1845
    %v1847 = vrot.slane %v1772, %v1846
    %v1848 = vlaneseq
    %v1849 = vshrl.u32 %v1848, 7
    %v1850 = vsub.s32 2, %v1849
    %v1851 = vrot.slane %v1772, %v1850
    %v1852 = vlaneseq
    %v1853 = vshrl.u32 %v1852, 7
    %v1854 = vsub.s32 3, %v1853
    %v1855 = vrot.slane %v1772, %v1854
    %v1876 = vmul.f32 %v1395, %v1779
    %v1877 = vmul.f32 %v1397, %v1783
    %v1878 = vmul.f32 %v1436, %v1787
    %v1879 = vmul.f32 %v1438, %v1791
    %v1880 = vmul.f32 %v1477, %v1795
    %v1881 = vmul.f32 %v1479, %v1799
    %v1882 = vmul.f32 %v1518, %v1803
    %v1883 = vmul.f32 %v1520, %v1807
    %v1884 = vmul.f32 %v1559, %v1811
    %v1885 = vmul.f32 %v1561, %v1815
    %v1886 = vmul.f32 %v1600, %v1819
    %v1887 = vmul.f32 %v1602, %v1823
    %v1888 = vmul.f32 %v1641, %v1827
    %v1889 = vmul.f32 %v1643, %v1831
    %v1890 = vmul.f32 %v1682, %v1835
    %v1891 = vmul.f32 %v1684, %v1839
    %v1892 = vmul.f32 %v1723, %v1843
    %v1893 = vmul.f32 %v1725, %v1847
    %v1894 = vmul.f32 %v1764, %v1851
    %v1895 = vmul.f32 %v1766, %v1855
    %v1896 = vld [vmem:[%s14] sm:$0xff]
    %v1897 = vld [vmem:[%s14 + $0x8] sm:$0xff]
    %v1898 = vld [vmem:[%s14 + $0x10] sm:$0xf]
    %v1902 = vlaneseq
    %v1903 = vshrl.u32 %v1902, 7
    %v1904 = vsub.s32 0, %v1903
    %v1905 = vrot.slane %v1896, %v1904
    %v1906 = vlaneseq
    %v1907 = vshrl.u32 %v1906, 7
    %v1908 = vsub.s32 1, %v1907
    %v1909 = vrot.slane %v1896, %v1908
    %v1910 = vlaneseq
    %v1911 = vshrl.u32 %v1910, 7
    %v1912 = vsub.s32 2, %v1911
    %v1913 = vrot.slane %v1896, %v1912
    %v1914 = vlaneseq
    %v1915 = vshrl.u32 %v1914, 7
    %v1916 = vsub.s32 3, %v1915
    %v1917 = vrot.slane %v1896, %v1916
    %v1918 = vlaneseq
    %v1919 = vshrl.u32 %v1918, 7
    %v1920 = vsub.s32 4, %v1919
    %v1921 = vrot.slane %v1896, %v1920
    %v1922 = vlaneseq
    %v1923 = vshrl.u32 %v1922, 7
    %v1924 = vsub.s32 5, %v1923
    %v1925 = vrot.slane %v1896, %v1924
    %v1926 = vlaneseq
    %v1927 = vshrl.u32 %v1926, 7
    %v1928 = vsub.s32 6, %v1927
    %v1929 = vrot.slane %v1896, %v1928
    %v1930 = vlaneseq
    %v1931 = vshrl.u32 %v1930, 7
    %v1932 = vsub.s32 7, %v1931
    %v1933 = vrot.slane %v1896, %v1932
    %v1934 = vlaneseq
    %v1935 = vshrl.u32 %v1934, 7
    %v1936 = vsub.s32 0, %v1935
    %v1937 = vrot.slane %v1897, %v1936
    %v1938 = vlaneseq
    %v1939 = vshrl.u32 %v1938, 7
    %v1940 = vsub.s32 1, %v1939
    %v1941 = vrot.slane %v1897, %v1940
    %v1942 = vlaneseq
    %v1943 = vshrl.u32 %v1942, 7
    %v1944 = vsub.s32 2, %v1943
    %v1945 = vrot.slane %v1897, %v1944
    %v1946 = vlaneseq
    %v1947 = vshrl.u32 %v1946, 7
    %v1948 = vsub.s32 3, %v1947
    %v1949 = vrot.slane %v1897, %v1948
    %v1950 = vlaneseq
    %v1951 = vshrl.u32 %v1950, 7
    %v1952 = vsub.s32 4, %v1951
    %v1953 = vrot.slane %v1897, %v1952
    %v1954 = vlaneseq
    %v1955 = vshrl.u32 %v1954, 7
    %v1956 = vsub.s32 5, %v1955
    %v1957 = vrot.slane %v1897, %v1956
    %v1958 = vlaneseq
    %v1959 = vshrl.u32 %v1958, 7
    %v1960 = vsub.s32 6, %v1959
    %v1961 = vrot.slane %v1897, %v1960
    %v1962 = vlaneseq
    %v1963 = vshrl.u32 %v1962, 7
    %v1964 = vsub.s32 7, %v1963
    %v1965 = vrot.slane %v1897, %v1964
    %v1966 = vlaneseq
    %v1967 = vshrl.u32 %v1966, 7
    %v1968 = vsub.s32 0, %v1967
    %v1969 = vrot.slane %v1898, %v1968
    %v1970 = vlaneseq
    %v1971 = vshrl.u32 %v1970, 7
    %v1972 = vsub.s32 1, %v1971
    %v1973 = vrot.slane %v1898, %v1972
    %v1974 = vlaneseq
    %v1975 = vshrl.u32 %v1974, 7
    %v1976 = vsub.s32 2, %v1975
    %v1977 = vrot.slane %v1898, %v1976
    %v1978 = vlaneseq
    %v1979 = vshrl.u32 %v1978, 7
    %v1980 = vsub.s32 3, %v1979
    %v1981 = vrot.slane %v1898, %v1980
    %v2002 = vadd.f32 %v1876, %v1905
    %v2003 = vadd.f32 %v1877, %v1909
    %v2004 = vadd.f32 %v1878, %v1913
    %v2005 = vadd.f32 %v1879, %v1917
    %v2006 = vadd.f32 %v1880, %v1921
    %v2007 = vadd.f32 %v1881, %v1925
    %v2008 = vadd.f32 %v1882, %v1929
    %v2009 = vadd.f32 %v1883, %v1933
    %v2010 = vadd.f32 %v1884, %v1937
    %v2011 = vadd.f32 %v1885, %v1941
    %v2012 = vadd.f32 %v1886, %v1945
    %v2013 = vadd.f32 %v1887, %v1949
    %v2014 = vadd.f32 %v1888, %v1953
    %v2015 = vadd.f32 %v1889, %v1957
    %v2016 = vadd.f32 %v1890, %v1961
    %v2017 = vadd.f32 %v1891, %v1965
    %v2018 = vadd.f32 %v1892, %v1969
    %v2019 = vadd.f32 %v1893, %v1973
    %v2020 = vadd.f32 %v1894, %v1977
    %v2021 = vadd.f32 %v1895, %v1981
    %v2042 = vcombine.low %v2002, %v2003
    %v2043 = vcombine.low %v2004, %v2005
    %v2045 = vunpack.c.l.s4 1983009808
    %v2046 = vunpack.c.0.s8 %v2045
    %v2047 = vlaneseq
    %v2048 = vshrl.u32 %v2047, 7
    %v2049 = vsub.s32 %v2046, %v2048
    %v2050 = vrot.slane %v2042, %v2049
    %v2052 = vunpack.c.l.s4 1983009808
    %v2053 = vunpack.c.0.s8 %v2052
    %v2054 = vlaneseq
    %v2055 = vshrl.u32 %v2054, 7
    %v2056 = vsub.s32 %v2053, %v2055
    %v2057 = vrot.slane %v2043, %v2056
    %v2058 = vcombine.low %v2050, %v2057
    %v2059 = vcombine.low %v2006, %v2007
    %v2060 = vcombine.low %v2008, %v2009
    %v2062 = vunpack.c.l.s4 1983009808
    %v2063 = vunpack.c.0.s8 %v2062
    %v2064 = vlaneseq
    %v2065 = vshrl.u32 %v2064, 7
    %v2066 = vsub.s32 %v2063, %v2065
    %v2067 = vrot.slane %v2059, %v2066
    %v2069 = vunpack.c.l.s4 1983009808
    %v2070 = vunpack.c.0.s8 %v2069
    %v2071 = vlaneseq
    %v2072 = vshrl.u32 %v2071, 7
    %v2073 = vsub.s32 %v2070, %v2072
    %v2074 = vrot.slane %v2060, %v2073
    %v2075 = vcombine.low %v2067, %v2074
    %v2076 = vcombine.low %v2010, %v2011
    %v2077 = vcombine.low %v2012, %v2013
    %v2079 = vunpack.c.l.s4 1983009808
    %v2080 = vunpack.c.0.s8 %v2079
    %v2081 = vlaneseq
    %v2082 = vshrl.u32 %v2081, 7
    %v2083 = vsub.s32 %v2080, %v2082
    %v2084 = vrot.slane %v2076, %v2083
    %v2086 = vunpack.c.l.s4 1983009808
    %v2087 = vunpack.c.0.s8 %v2086
    %v2088 = vlaneseq
    %v2089 = vshrl.u32 %v2088, 7
    %v2090 = vsub.s32 %v2087, %v2089
    %v2091 = vrot.slane %v2077, %v2090
    %v2092 = vcombine.low %v2084, %v2091
    %v2093 = vcombine.low %v2014, %v2015
    %v2094 = vcombine.low %v2016, %v2017
    %v2096 = vunpack.c.l.s4 1983009808
    %v2097 = vunpack.c.0.s8 %v2096
    %v2098 = vlaneseq
    %v2099 = vshrl.u32 %v2098, 7
    %v2100 = vsub.s32 %v2097, %v2099
    %v2101 = vrot.slane %v2093, %v2100
    %v2103 = vunpack.c.l.s4 1983009808
    %v2104 = vunpack.c.0.s8 %v2103
    %v2105 = vlaneseq
    %v2106 = vshrl.u32 %v2105, 7
    %v2107 = vsub.s32 %v2104, %v2106
    %v2108 = vrot.slane %v2094, %v2107
    %v2109 = vcombine.low %v2101, %v2108
    %v2110 = vcombine.low %v2018, %v2019
    %v2111 = vcombine.low %v2020, %v2021
    %v2113 = vunpack.c.l.s4 1983009808
    %v2114 = vunpack.c.0.s8 %v2113
    %v2115 = vlaneseq
    %v2116 = vshrl.u32 %v2115, 7
    %v2117 = vsub.s32 %v2114, %v2116
    %v2118 = vrot.slane %v2110, %v2117
    %v2120 = vunpack.c.l.s4 1983009808
    %v2121 = vunpack.c.0.s8 %v2120
    %v2122 = vlaneseq
    %v2123 = vshrl.u32 %v2122, 7
    %v2124 = vsub.s32 %v2121, %v2123
    %v2125 = vrot.slane %v2111, %v2124
    %v2126 = vcombine.low %v2118, %v2125
    %2132 = vst [vmem:[#allocation4] sm:$0xff] %v2058
    %2133 = vst [vmem:[#allocation4 + $0x8] sm:$0xff] %v2075
    %2134 = vst [vmem:[#allocation4 + $0x10] sm:$0xff] %v2092
    %2135 = vst [vmem:[#allocation4 + $0x18] sm:$0xff] %v2109
    %2136 = vst [vmem:[#allocation4 + $0x20] sm:$0xff] %v2126
    // Predicated region
    $region62: #{vove_forward.11} parent=1 // pred_check
      _
    $region63: #{vove_forward.11} parent=1 // pred_check_branch
      %2138 = sbr.rel (0) target = $region65
    $region64: #{vove_forward.11} parent=1 // pred_region
      %s2140 = ssub.s32 32, 32
      %2141 = vsyncadd [#allocation3], %s2140
      %s2143 = sshll.u32 [#allocation2], 4
      %s2144 = int_to_ptr.vmem [resolvable:$true] %s2143
      %2146 = dma.vmem_to_hbm [thread:$0]  %s2144, 32, %s15, [#allocation3]
    $region65: #{vove_forward.11} parent=1 // pred_fallthru
      _
    // Predicated region
    $region66: #{vove_forward.11} parent=1 // pred_check
      _
    $region67: #{vove_forward.11} parent=1 // pred_check_branch
      %2148 = sbr.rel (0) target = $region69
    $region68: #{vove_forward.11} parent=1 // pred_region
      %s2150 = ssub.s32 640, 640
      %2151 = vsyncadd [#allocation5], %s2150
      %s2153 = sshll.u32 [#allocation4], 4
      %s2154 = int_to_ptr.vmem [resolvable:$true] %s2153
      %2156 = dma.vmem_to_hbm [thread:$0]  %s2154, 640, %s16, [#allocation5]
    $region69: #{vove_forward.11} parent=1 // pred_fallthru
      _
    // Predicated region
    $region70: #{vove_forward.11} parent=1 // pred_check
      _
    $region71: #{vove_forward.11} parent=1 // pred_check_branch
      %2158 = sbr.rel (0) target = $region73
    $region72: #{vove_forward.11} parent=1 // pred_region
      %2159 = dma.done [#allocation3], 32
    $region73: #{vove_forward.11} parent=1 // pred_fallthru
      _
    // Predicated region
    $region74: #{vove_forward.11} parent=1 // pred_check
      _
    $region75: #{vove_forward.11} parent=1 // pred_check_branch
      %2161 = sbr.rel (0) target = $region77
    $region76: #{vove_forward.11} parent=1 // pred_region
      %2162 = dma.done [#allocation5], 640
    $region77: #{vove_forward.11} parent=1 // pred_fallthru
      _
    %2163 = vsyncpa [#allocation3], 1
    %2164 = vsyncpa [#allocation5], 1

</llo_original>
